<compile_context>
chip_gen: v5e
topology: v5e:2x2
jax: 0.10.0
libtpu: 0.0.40
codegen_flags: <defaults>
</compile_context>

<pallas_src>
import functools
import math

import numpy as np

import jax
import jax.numpy as jnp
from jax import lax
from jax.experimental import pallas as pl
from jax.experimental.pallas import tpu as pltpu  # noqa: F401  (kept per template)

_SQRT_HALF = 1.0 / math.sqrt(2.0)

# Architecture constants matching ResNet(Bottleneck, layers=(1,1,1,1,1)).
_PLANES = (2, 3, 4, 5, 6)
_BLOCKS = (1, 1, 1, 1, 1)
_LAYER_STRIDES = (1, 3, 3, 3, 3)
_EXPANSION = 4


def _gelu(x):
    # Exact erf-based GELU (torch.nn.GELU() default), computed in f32.
    return 0.5 * x * (1.0 + lax.erf(x * _SQRT_HALF))


# ----------------------------- Pallas kernels -----------------------------

def _stem1_kernel(a_ref, w_ref, o_ref):
    """o = gelu(W @ A). W:(64,75) bf16, A:(75,M) bf16, o:(64,M) bf16.

    Transposed product keeps M (= B*Ho*Wo = 578) on the lane axis so the
    output store is lane-dense instead of a masked Cout<=64 store.
    """
    acc = jnp.dot(w_ref[...], a_ref[...], preferred_element_type=jnp.float32)
    o_ref[...] = _gelu(acc).astype(o_ref.dtype)


def _trunk_kernel(*refs, block_meta):
    """Stem conv2 + GELU followed by all Bottleneck blocks, fully fused.

    refs = (a2, w_stem2, [per block: w1, w2, w3, (wd), gt], out).
    Activations are transposed (C, M).  Each 3x3 conv (pad=1, stride=s) is
    sum_t W2[t] @ (h1 @ GT[t]) with GT[t] a 0/1 (M_in, M_out) tap selector.
    `block_meta` is a static tuple of (has_ds, strided, center_idx).
    """
    a2_ref, w_stem2_ref = refs[0], refs[1]
    out_ref = refs[-1]

    # Stem conv2 (5x5/s3/p3, via wrapper-side im2col) + GELU.
    y = _gelu(jnp.dot(w_stem2_ref[...], a2_ref[...],
                      preferred_element_type=jnp.float32))

    cursor = 2
    for has_ds, strided, center_idx in block_meta:
        w1_ref = refs[cursor]
        w2_ref = refs[cursor + 1]
        w3_ref = refs[cursor + 2]
        cursor += 3
        wd_ref = None
        if has_ds:
            wd_ref = refs[cursor]
            cursor += 1
        gt_ref = refs[cursor]
        cursor += 1

        x_b = y.astype(jnp.bfloat16)

        # conv1 (1x1) + GELU
        h1 = _gelu(jnp.dot(w1_ref[...], x_b, preferred_element_type=jnp.float32))
        h1_b = h1.astype(jnp.bfloat16)

        # conv2 (3x3, stride s, pad 1) + GELU, via per-tap selector matmuls.
        acc = None
        for t in range(gt_ref.shape[0]):        # statically unrolled, <= 9 taps
            sel = jnp.dot(h1_b, gt_ref[t], preferred_element_type=jnp.float32)
            part = jnp.dot(w2_ref[t], sel.astype(jnp.bfloat16),
                           preferred_element_type=jnp.float32)
            acc = part if acc is None else acc + part
        h2_b = _gelu(acc).astype(jnp.bfloat16)

        # conv3 (1x1) + GELU
        h3 = _gelu(jnp.dot(w3_ref[...], h2_b, preferred_element_type=jnp.float32))

        # identity / downsample path
        if has_ds:
            if strided:  # stride > 1: gather strided positions (== center tap)
                picked = jnp.dot(x_b, gt_ref[center_idx],
                                 preferred_element_type=jnp.float32)
                picked = picked.astype(jnp.bfloat16)
            else:
                picked = x_b
            ident = jnp.dot(wd_ref[...], picked,
                            preferred_element_type=jnp.float32)
        else:
            ident = y

        # reference: out = gelu(gelu(conv3(.)) + identity)
        y = _gelu(h3 + ident)

    out_ref[...] = y.astype(out_ref.dtype)


# ----------------------------- glue helpers -----------------------------

def _im2col_t(x_cbhw, k, stride, padding):
    """x:(C,B,H,W) -> A^T:(k*k*C, B*Ho*Wo) with K ordered (kh, kw, c)."""
    c, b, h, w = x_cbhw.shape
    xp = jnp.pad(x_cbhw, ((0, 0), (0, 0), (padding, padding), (padding, padding)))
    hp, wp = h + 2 * padding, w + 2 * padding
    ho = (hp - k) // stride + 1
    wo = (wp - k) // stride + 1
    cols = []
    for i in range(k):
        for j in range(k):
            cols.append(lax.slice(
                xp, (0, 0, i, j),
                (c, b, i + (ho - 1) * stride + 1, j + (wo - 1) * stride + 1),
                (1, 1, stride, stride)))
    a = jnp.stack(cols, axis=0)                    # (k*k, C, B, Ho, Wo)
    return a.reshape(k * k * c, b * ho * wo), ho, wo


def _conv3x3_selectors(b, h, w, stride):
    """0/1 tap selectors for a 3x3 / pad=1 / stride=s conv, pruned to taps
    that touch at least one in-bounds input position. Built with numpy at
    trace time (shapes are static); total size <= 173 KB."""
    ho = (h + 2 - 3) // stride + 1
    wo = (w + 2 - 3) // stride + 1
    m_in, m_out = b * h * w, b * ho * wo
    g = np.zeros((9, m_in, m_out), np.float32)
    for t in range(9):
        di, dj = t // 3, t % 3
        for bb in range(b):
            for oh in range(ho):
                ih = oh * stride - 1 + di
                if ih < 0 or ih >= h:
                    continue
                for ow in range(wo):
                    iw = ow * stride - 1 + dj
                    if iw < 0 or iw >= w:
                        continue
                    g[t, (bb * h + ih) * w + iw, (bb * ho + oh) * wo + ow] = 1.0
    active = tuple(t for t in range(9) if g[t].any())
    assert 4 in active  # center tap always in-bounds
    center_idx = active.index(4)  # center tap == stride-s 1x1 downsample gather
    gt = jnp.asarray(g[list(active)], dtype=jnp.bfloat16)
    return gt, active, center_idx, ho, wo


# ----------------------------- parameters -----------------------------

def _kaiming(key, shape):
    # kaiming_normal_(mode='fan_out', nonlinearity='relu')
    c_out, _, kh, kw = shape
    std = math.sqrt(2.0 / (c_out * kh * kw))
    return std * jax.random.normal(key, shape, dtype=jnp.float32)


def make_resnet_params(key):
    """Weights pre-packed into matmul layouts (bf16) once, at creation time."""
    keys = iter(jax.random.split(key, 64))

    w = _kaiming(next(keys), (64, 3, 5, 5))
    conv1 = w.transpose(0, 2, 3, 1).reshape(64, 3 * 25).astype(jnp.bfloat16)
    w = _kaiming(next(keys), (64, 64, 5, 5))
    conv2 = w.transpose(0, 2, 3, 1).reshape(64, 64 * 25).astype(jnp.bfloat16)

    params = {"conv1": conv1, "conv2": conv2, "blocks": []}
    block_strides = []
    inplanes = 64
    for planes, nblocks, stride in zip(_PLANES, _BLOCKS, _LAYER_STRIDES):
        for bidx in range(nblocks):
            s = stride if bidx == 0 else 1
            width = planes                     # base_width=64, groups=1
            cexp = planes * _EXPANSION
            need_ds = (s != 1) or (inplanes != cexp)
            w1 = _kaiming(next(keys), (width, inplanes, 1, 1))
            w2 = _kaiming(next(keys), (width, width, 3, 3))
            w3 = _kaiming(next(keys), (cexp, width, 1, 1))
            blk = {
                "w1": w1.reshape(width, inplanes).astype(jnp.bfloat16),
                # (9, Cout, Cin), tap t = kh*3 + kw
                "w2": w2.transpose(2, 3, 0, 1).reshape(9, width, width)
                        .astype(jnp.bfloat16),
                "w3": w3.reshape(cexp, width).astype(jnp.bfloat16),
                "wd": None,
            }
            if need_ds:
                wd = _kaiming(next(keys), (cexp, inplanes, 1, 1))
                blk["wd"] = wd.reshape(cexp, inplanes).astype(jnp.bfloat16)
            params["blocks"].append(blk)
            block_strides.append(s)
            inplanes = cexp
    return params, tuple(block_strides)


# ----------------------------- forward pass -----------------------------

@functools.partial(jax.jit, static_argnames=("block_strides",))
def resnet_forward(params, x_nchw, *, block_strides):
    b = x_nchw.shape[0]
    x = jnp.transpose(x_nchw, (1, 0, 2, 3)).astype(jnp.bfloat16)  # (C,B,H,W)

    # Stem conv1: 5x5/s3/p3 + GELU (wrapper-side im2col of the raw input).
    a1, h, w = _im2col_t(x, 5, 3, 3)                              # (75, B*17*17)
    y1 = pl.pallas_call(
        _stem1_kernel,
        out_shape=jax.ShapeDtypeStruct((64, b * h * w), jnp.bfloat16),
    )(a1, params["conv1"])

    # im2col for stem conv2; feeds the single fused trunk kernel.
    a2, h, w = _im2col_t(y1.reshape(64, b, h, w), 5, 3, 3)        # (1600, B*7*7)

    # Assemble trunk-kernel operands: stem conv2 + every Bottleneck block.
    trunk_args = [a2, params["conv2"]]
    block_meta = []
    for blk, stride in zip(params["blocks"], block_strides):
        gt, active, center_idx, h, w = _conv3x3_selectors(b, h, w, stride)
        w2_act = blk["w2"] if len(active) == 9 else blk["w2"][jnp.asarray(active)]
        has_ds = blk["wd"] is not None
        trunk_args.extend([blk["w1"], w2_act, blk["w3"]])
        if has_ds:
            trunk_args.append(blk["wd"])
        trunk_args.append(gt)
        block_meta.append((has_ds, stride != 1, center_idx))

    c_out = params["blocks"][-1]["w3"].shape[0]
    m_out = b * h * w
    kernel = functools.partial(_trunk_kernel, block_meta=tuple(block_meta))
    y = pl.pallas_call(
        kernel,
        out_shape=jax.ShapeDtypeStruct((c_out, m_out), jnp.float32),
    )(*trunk_args)

    # (C, B*H*W) -> (B, C, H, W) to match the PyTorch NCHW output.
    return jnp.transpose(y.reshape(c_out, b, h, w), (1, 0, 2, 3))
    # TODO(synk): norm_layer (nn.BatchNorm3d) is constructed in __init__ but
    # never used in the reference forward pass, so it is intentionally omitted.


if __name__ == "__main__":
    key = jax.random.PRNGKey(0)
    k_params, k_x = jax.random.split(key)
    params, block_strides = make_resnet_params(k_params)
    x = jax.random.normal(k_x, (2, 3, 48, 48), dtype=jnp.float32)  # NCHW
    out = resnet_forward(params, x, block_strides=block_strides)
    out = jax.block_until_ready(out)
    assert out.shape == (2, 24, 1, 1), out.shape
    assert bool(jnp.all(jnp.isfinite(out)))
    print("KERNEL_OK")
</pallas_src>

<mosaic_0001>
module attributes {stable_mosaic.version = 11 : i64} {
  func.func @_stem1_kernel(%arg0: memref<75x578xbf16, #tpu.memory_space<vmem>>, %arg1: memref<64x75xbf16, #tpu.memory_space<vmem>>, %arg2: memref<64x578xbf16, #tpu.memory_space<vmem>>) attributes {dimension_semantics = [], scalar_prefetch = 0 : i64, scratch_operands = 0 : i64, tpu.core_type = #tpu.core_type<tc>} {
    %c0 = arith.constant 0 : index
    %c0_0 = arith.constant 0 : index
    %0 = vector.load %arg1[%c0, %c0_0] : memref<64x75xbf16, #tpu.memory_space<vmem>>, vector<64x75xbf16>
    %c0_1 = arith.constant 0 : index
    %c0_2 = arith.constant 0 : index
    %1 = vector.load %arg0[%c0_1, %c0_2] : memref<75x578xbf16, #tpu.memory_space<vmem>>, vector<75x578xbf16>
    %cst = arith.constant dense<0.000000e+00> : vector<64x578xf32>
    %2 = tpu.matmul %0, %1, %cst {dimension_numbers = #tpu.dot_dimension_numbers<[1], [0], [0], [1], [0, 0, 1, 1], [], []>} : vector<64x75xbf16>, vector<75x578xbf16>, vector<64x578xf32> -> vector<64x578xf32>
    %cst_3 = arith.constant 5.000000e-01 : f32
    %3 = vector.broadcast %cst_3 : f32 to vector<64x578xf32>
    %4 = arith.mulf %3, %2 : vector<64x578xf32>
    %cst_4 = arith.constant 0.707106769 : f32
    %5 = vector.broadcast %cst_4 : f32 to vector<64x578xf32>
    %6 = arith.mulf %2, %5 : vector<64x578xf32>
    %7 = math.erf %6 : vector<64x578xf32>
    %cst_5 = arith.constant 1.000000e+00 : f32
    %8 = vector.broadcast %cst_5 : f32 to vector<64x578xf32>
    %9 = arith.addf %8, %7 : vector<64x578xf32>
    %10 = arith.mulf %4, %9 : vector<64x578xf32>
    %11 = arith.truncf %10 : vector<64x578xf32> to vector<64x578xbf16>
    %c0_6 = arith.constant 0 : index
    %c0_7 = arith.constant 0 : index
    %12 = vector.load %arg2[%c0_6, %c0_7] : memref<64x578xbf16, #tpu.memory_space<vmem>>, vector<64x578xbf16>
    tpu.vector_store %arg2[%c0_6, %c0_7], %11 {strides = array<i32>} : memref<64x578xbf16, #tpu.memory_space<vmem>>, vector<64x578xbf16>,
    return
  }
}

module attributes {stable_mosaic.version = 11 : i64} {
  func.func @_trunk_kernel(%arg0: memref<1600x98xbf16, #tpu.memory_space<vmem>>, %arg1: memref<64x1600xbf16, #tpu.memory_space<vmem>>, %arg2: memref<2x64xbf16, #tpu.memory_space<vmem>>, %arg3: memref<9x2x2xbf16, #tpu.memory_space<vmem>>, %arg4: memref<8x2xbf16, #tpu.memory_space<vmem>>, %arg5: memref<8x64xbf16, #tpu.memory_space<vmem>>, %arg6: memref<9x98x98xbf16, #tpu.memory_space<vmem>>, %arg7: memref<3x8xbf16, #tpu.memory_space<vmem>>, %arg8: memref<9x3x3xbf16, #tpu.memory_space<vmem>>, %arg9: memref<12x3xbf16, #tpu.memory_space<vmem>>, %arg10: memref<12x8xbf16, #tpu.memory_space<vmem>>, %arg11: memref<9x98x18xbf16, #tpu.memory_space<vmem>>, %arg12: memref<4x12xbf16, #tpu.memory_space<vmem>>, %arg13: memref<4x4x4xbf16, #tpu.memory_space<vmem>>, %arg14: memref<16x4xbf16, #tpu.memory_space<vmem>>, %arg15: memref<16x12xbf16, #tpu.memory_space<vmem>>, %arg16: memref<4x18x2xbf16, #tpu.memory_space<vmem>>, %arg17: memref<5x16xbf16, #tpu.memory_space<vmem>>, %arg18: memref<1x5x5xbf16, #tpu.memory_space<vmem>>, %arg19: memref<20x5xbf16, #tpu.memory_space<vmem>>, %arg20: memref<20x16xbf16, #tpu.memory_space<vmem>>, %arg21: memref<1x2x2xbf16, #tpu.memory_space<vmem>>, %arg22: memref<6x20xbf16, #tpu.memory_space<vmem>>, %arg23: memref<1x6x6xbf16, #tpu.memory_space<vmem>>, %arg24: memref<24x6xbf16, #tpu.memory_space<vmem>>, %arg25: memref<24x20xbf16, #tpu.memory_space<vmem>>, %arg26: memref<1x2x2xbf16, #tpu.memory_space<vmem>>, %arg27: memref<24x2xf32, #tpu.memory_space<vmem>>) attributes {dimension_semantics = [], scalar_prefetch = 0 : i64, scratch_operands = 0 : i64, tpu.core_type = #tpu.core_type<tc>} {
    %c0 = arith.constant 0 : index
    %c0_0 = arith.constant 0 : index
    %0 = vector.load %arg1[%c0, %c0_0] : memref<64x1600xbf16, #tpu.memory_space<vmem>>, vector<64x1600xbf16>
    %c0_1 = arith.constant 0 : index
    %c0_2 = arith.constant 0 : index
    %1 = vector.load %arg0[%c0_1, %c0_2] : memref<1600x98xbf16, #tpu.memory_space<vmem>>, vector<1600x98xbf16>
    %cst = arith.constant dense<0.000000e+00> : vector<64x98xf32>
    %2 = tpu.matmul %0, %1, %cst {dimension_numbers = #tpu.dot_dimension_numbers<[1], [0], [0], [1], [0, 0, 1, 1], [], []>} : vector<64x1600xbf16>, vector<1600x98xbf16>, vector<64x98xf32> -> vector<64x98xf32>
    %cst_3 = arith.constant 5.000000e-01 : f32
    %3 = vector.broadcast %cst_3 : f32 to vector<64x98xf32>
    %4 = arith.mulf %3, %2 : vector<64x98xf32>
    %cst_4 = arith.constant 0.707106769 : f32
    %5 = vector.broadcast %cst_4 : f32 to vector<64x98xf32>
    %6 = arith.mulf %2, %5 : vector<64x98xf32>
    %7 = math.erf %6 : vector<64x98xf32>
    %cst_5 = arith.constant 1.000000e+00 : f32
    %8 = vector.broadcast %cst_5 : f32 to vector<64x98xf32>
    %9 = arith.addf %8, %7 : vector<64x98xf32>
    %10 = arith.mulf %4, %9 : vector<64x98xf32>
    %11 = arith.truncf %10 : vector<64x98xf32> to vector<64x98xbf16>
    %c0_6 = arith.constant 0 : index
    %c0_7 = arith.constant 0 : index
    %12 = vector.load %arg2[%c0_6, %c0_7] : memref<2x64xbf16, #tpu.memory_space<vmem>>, vector<2x64xbf16>
    %cst_8 = arith.constant dense<0.000000e+00> : vector<2x98xf32>
    %13 = tpu.matmul %12, %11, %cst_8 {dimension_numbers = #tpu.dot_dimension_numbers<[1], [0], [0], [1], [0, 0, 1, 1], [], []>} : vector<2x64xbf16>, vector<64x98xbf16>, vector<2x98xf32> -> vector<2x98xf32>
    %cst_9 = arith.constant 5.000000e-01 : f32
    %14 = vector.broadcast %cst_9 : f32 to vector<2x98xf32>
    %15 = arith.mulf %14, %13 : vector<2x98xf32>
    %cst_10 = arith.constant 0.707106769 : f32
    %16 = vector.broadcast %cst_10 : f32 to vector<2x98xf32>
    %17 = arith.mulf %13, %16 : vector<2x98xf32>
    %18 = math.erf %17 : vector<2x98xf32>
    %cst_11 = arith.constant 1.000000e+00 : f32
    %19 = vector.broadcast %cst_11 : f32 to vector<2x98xf32>
    %20 = arith.addf %19, %18 : vector<2x98xf32>
    %21 = arith.mulf %15, %20 : vector<2x98xf32>
    %22 = arith.truncf %21 : vector<2x98xf32> to vector<2x98xbf16>
    %c0_12 = arith.constant 0 : index
    %c0_13 = arith.constant 0 : index
    %c0_14 = arith.constant 0 : index
    %23 = vector.load %arg6[%c0_12, %c0_13, %c0_14] : memref<9x98x98xbf16, #tpu.memory_space<vmem>>, vector<1x98x98xbf16>
    %24 = vector.shape_cast %23 : vector<1x98x98xbf16> to vector<98x98xbf16>
    %cst_15 = arith.constant dense<0.000000e+00> : vector<2x98xf32>
    %25 = tpu.matmul %22, %24, %cst_15 {dimension_numbers = #tpu.dot_dimension_numbers<[1], [0], [0], [1], [0, 0, 1, 1], [], []>} : vector<2x98xbf16>, vector<98x98xbf16>, vector<2x98xf32> -> vector<2x98xf32>
    %c0_16 = arith.constant 0 : index
    %c0_17 = arith.constant 0 : index
    %c0_18 = arith.constant 0 : index
    %26 = vector.load %arg3[%c0_16, %c0_17, %c0_18] : memref<9x2x2xbf16, #tpu.memory_space<vmem>>, vector<1x2x2xbf16>
    %27 = vector.shape_cast %26 : vector<1x2x2xbf16> to vector<2x2xbf16>
    %28 = arith.truncf %25 : vector<2x98xf32> to vector<2x98xbf16>
    %cst_19 = arith.constant dense<0.000000e+00> : vector<2x98xf32>
    %29 = tpu.matmul %27, %28, %cst_19 {dimension_numbers = #tpu.dot_dimension_numbers<[1], [0], [0], [1], [0, 0, 1, 1], [], []>} : vector<2x2xbf16>, vector<2x98xbf16>, vector<2x98xf32> -> vector<2x98xf32>
    %c1 = arith.constant 1 : index
    %c0_20 = arith.constant 0 : index
    %c0_21 = arith.constant 0 : index
    %30 = vector.load %arg6[%c1, %c0_20, %c0_21] : memref<9x98x98xbf16, #tpu.memory_space<vmem>>, vector<1x98x98xbf16>
    %31 = vector.shape_cast %30 : vector<1x98x98xbf16> to vector<98x98xbf16>
    %cst_22 = arith.constant dense<0.000000e+00> : vector<2x98xf32>
    %32 = tpu.matmul %22, %31, %cst_22 {dimension_numbers = #tpu.dot_dimension_numbers<[1], [0], [0], [1], [0, 0, 1, 1], [], []>} : vector<2x98xbf16>, vector<98x98xbf16>, vector<2x98xf32> -> vector<2x98xf32>
    %c1_23 = arith.constant 1 : index
    %c0_24 = arith.constant 0 : index
    %c0_25 = arith.constant 0 : index
    %33 = vector.load %arg3[%c1_23, %c0_24, %c0_25] : memref<9x2x2xbf16, #tpu.memory_space<vmem>>, vector<1x2x2xbf16>
    %34 = vector.shape_cast %33 : vector<1x2x2xbf16> to vector<2x2xbf16>
    %35 = arith.truncf %32 : vector<2x98xf32> to vector<2x98xbf16>
    %cst_26 = arith.constant dense<0.000000e+00> : vector<2x98xf32>
    %36 = tpu.matmul %34, %35, %cst_26 {dimension_numbers = #tpu.dot_dimension_numbers<[1], [0], [0], [1], [0, 0, 1, 1], [], []>} : vector<2x2xbf16>, vector<2x98xbf16>, vector<2x98xf32> -> vector<2x98xf32>
    %37 = arith.addf %29, %36 : vector<2x98xf32>
    %c2 = arith.constant 2 : index
    %c0_27 = arith.constant 0 : index
    %c0_28 = arith.constant 0 : index
    %38 = vector.load %arg6[%c2, %c0_27, %c0_28] : memref<9x98x98xbf16, #tpu.memory_space<vmem>>, vector<1x98x98xbf16>
    %39 = vector.shape_cast %38 : vector<1x98x98xbf16> to vector<98x98xbf16>
    %cst_29 = arith.constant dense<0.000000e+00> : vector<2x98xf32>
    %40 = tpu.matmul %22, %39, %cst_29 {dimension_numbers = #tpu.dot_dimension_numbers<[1], [0], [0], [1], [0, 0, 1, 1], [], []>} : vector<2x98xbf16>, vector<98x98xbf16>, vector<2x98xf32> -> vector<2x98xf32>
    %c2_30 = arith.constant 2 : index
    %c0_31 = arith.constant 0 : index
    %c0_32 = arith.constant 0 : index
    %41 = vector.load %arg3[%c2_30, %c0_31, %c0_32] : memref<9x2x2xbf16, #tpu.memory_space<vmem>>, vector<1x2x2xbf16>
    %42 = vector.shape_cast %41 : vector<1x2x2xbf16> to vector<2x2xbf16>
    %43 = arith.truncf %40 : vector<2x98xf32> to vector<2x98xbf16>
    %cst_33 = arith.constant dense<0.000000e+00> : vector<2x98xf32>
    %44 = tpu.matmul %42, %43, %cst_33 {dimension_numbers = #tpu.dot_dimension_numbers<[1], [0], [0], [1], [0, 0, 1, 1], [], []>} : vector<2x2xbf16>, vector<2x98xbf16>, vector<2x98xf32> -> vector<2x98xf32>
    %45 = arith.addf %37, %44 : vector<2x98xf32>
    %c3 = arith.constant 3 : index
    %c0_34 = arith.constant 0 : index
    %c0_35 = arith.constant 0 : index
    %46 = vector.load %arg6[%c3, %c0_34, %c0_35] : memref<9x98x98xbf16, #tpu.memory_space<vmem>>, vector<1x98x98xbf16>
    %47 = vector.shape_cast %46 : vector<1x98x98xbf16> to vector<98x98xbf16>
    %cst_36 = arith.constant dense<0.000000e+00> : vector<2x98xf32>
    %48 = tpu.matmul %22, %47, %cst_36 {dimension_numbers = #tpu.dot_dimension_numbers<[1], [0], [0], [1], [0, 0, 1, 1], [], []>} : vector<2x98xbf16>, vector<98x98xbf16>, vector<2x98xf32> -> vector<2x98xf32>
    %c3_37 = arith.constant 3 : index
    %c0_38 = arith.constant 0 : index
    %c0_39 = arith.constant 0 : index
    %49 = vector.load %arg3[%c3_37, %c0_38, %c0_39] : memref<9x2x2xbf16, #tpu.memory_space<vmem>>, vector<1x2x2xbf16>
    %50 = vector.shape_cast %49 : vector<1x2x2xbf16> to vector<2x2xbf16>
    %51 = arith.truncf %48 : vector<2x98xf32> to vector<2x98xbf16>
    %cst_40 = arith.constant dense<0.000000e+00> : vector<2x98xf32>
    %52 = tpu.matmul %50, %51, %cst_40 {dimension_numbers = #tpu.dot_dimension_numbers<[1], [0], [0], [1], [0, 0, 1, 1], [], []>} : vector<2x2xbf16>, vector<2x98xbf16>, vector<2x98xf32> -> vector<2x98xf32>
    %53 = arith.addf %45, %52 : vector<2x98xf32>
    %c4 = arith.constant 4 : index
    %c0_41 = arith.constant 0 : index
    %c0_42 = arith.constant 0 : index
    %54 = vector.load %arg6[%c4, %c0_41, %c0_42] : memref<9x98x98xbf16, #tpu.memory_space<vmem>>, vector<1x98x98xbf16>
    %55 = vector.shape_cast %54 : vector<1x98x98xbf16> to vector<98x98xbf16>
    %cst_43 = arith.constant dense<0.000000e+00> : vector<2x98xf32>
    %56 = tpu.matmul %22, %55, %cst_43 {dimension_numbers = #tpu.dot_dimension_numbers<[1], [0], [0], [1], [0, 0, 1, 1], [], []>} : vector<2x98xbf16>, vector<98x98xbf16>, vector<2x98xf32> -> vector<2x98xf32>
    %c4_44 = arith.constant 4 : index
    %c0_45 = arith.constant 0 : index
    %c0_46 = arith.constant 0 : index
    %57 = vector.load %arg3[%c4_44, %c0_45, %c0_46] : memref<9x2x2xbf16, #tpu.memory_space<vmem>>, vector<1x2x2xbf16>
    %58 = vector.shape_cast %57 : vector<1x2x2xbf16> to vector<2x2xbf16>
    %59 = arith.truncf %56 : vector<2x98xf32> to vector<2x98xbf16>
    %cst_47 = arith.constant dense<0.000000e+00> : vector<2x98xf32>
    %60 = tpu.matmul %58, %59, %cst_47 {dimension_numbers = #tpu.dot_dimension_numbers<[1], [0], [0], [1], [0, 0, 1, 1], [], []>} : vector<2x2xbf16>, vector<2x98xbf16>, vector<2x98xf32> -> vector<2x98xf32>
    %61 = arith.addf %53, %60 : vector<2x98xf32>
    %c5 = arith.constant 5 : index
    %c0_48 = arith.constant 0 : index
    %c0_49 = arith.constant 0 : index
    %62 = vector.load %arg6[%c5, %c0_48, %c0_49] : memref<9x98x98xbf16, #tpu.memory_space<vmem>>, vector<1x98x98xbf16>
    %63 = vector.shape_cast %62 : vector<1x98x98xbf16> to vector<98x98xbf16>
    %cst_50 = arith.constant dense<0.000000e+00> : vector<2x98xf32>
    %64 = tpu.matmul %22, %63, %cst_50 {dimension_numbers = #tpu.dot_dimension_numbers<[1], [0], [0], [1], [0, 0, 1, 1], [], []>} : vector<2x98xbf16>, vector<98x98xbf16>, vector<2x98xf32> -> vector<2x98xf32>
    %c5_51 = arith.constant 5 : index
    %c0_52 = arith.constant 0 : index
    %c0_53 = arith.constant 0 : index
    %65 = vector.load %arg3[%c5_51, %c0_52, %c0_53] : memref<9x2x2xbf16, #tpu.memory_space<vmem>>, vector<1x2x2xbf16>
    %66 = vector.shape_cast %65 : vector<1x2x2xbf16> to vector<2x2xbf16>
    %67 = arith.truncf %64 : vector<2x98xf32> to vector<2x98xbf16>
    %cst_54 = arith.constant dense<0.000000e+00> : vector<2x98xf32>
    %68 = tpu.matmul %66, %67, %cst_54 {dimension_numbers = #tpu.dot_dimension_numbers<[1], [0], [0], [1], [0, 0, 1, 1], [], []>} : vector<2x2xbf16>, vector<2x98xbf16>, vector<2x98xf32> -> vector<2x98xf32>
    %69 = arith.addf %61, %68 : vector<2x98xf32>
    %c6 = arith.constant 6 : index
    %c0_55 = arith.constant 0 : index
    %c0_56 = arith.constant 0 : index
    %70 = vector.load %arg6[%c6, %c0_55, %c0_56] : memref<9x98x98xbf16, #tpu.memory_space<vmem>>, vector<1x98x98xbf16>
    %71 = vector.shape_cast %70 : vector<1x98x98xbf16> to vector<98x98xbf16>
    %cst_57 = arith.constant dense<0.000000e+00> : vector<2x98xf32>
    %72 = tpu.matmul %22, %71, %cst_57 {dimension_numbers = #tpu.dot_dimension_numbers<[1], [0], [0], [1], [0, 0, 1, 1], [], []>} : vector<2x98xbf16>, vector<98x98xbf16>, vector<2x98xf32> -> vector<2x98xf32>
    %c6_58 = arith.constant 6 : index
    %c0_59 = arith.constant 0 : index
    %c0_60 = arith.constant 0 : index
    %73 = vector.load %arg3[%c6_58, %c0_59, %c0_60] : memref<9x2x2xbf16, #tpu.memory_space<vmem>>, vector<1x2x2xbf16>
    %74 = vector.shape_cast %73 : vector<1x2x2xbf16> to vector<2x2xbf16>
    %75 = arith.truncf %72 : vector<2x98xf32> to vector<2x98xbf16>
    %cst_61 = arith.constant dense<0.000000e+00> : vector<2x98xf32>
    %76 = tpu.matmul %74, %75, %cst_61 {dimension_numbers = #tpu.dot_dimension_numbers<[1], [0], [0], [1], [0, 0, 1, 1], [], []>} : vector<2x2xbf16>, vector<2x98xbf16>, vector<2x98xf32> -> vector<2x98xf32>
    %77 = arith.addf %69, %76 : vector<2x98xf32>
    %c7 = arith.constant 7 : index
    %c0_62 = arith.constant 0 : index
    %c0_63 = arith.constant 0 : index
    %78 = vector.load %arg6[%c7, %c0_62, %c0_63] : memref<9x98x98xbf16, #tpu.memory_space<vmem>>, vector<1x98x98xbf16>
    %79 = vector.shape_cast %78 : vector<1x98x98xbf16> to vector<98x98xbf16>
    %cst_64 = arith.constant dense<0.000000e+00> : vector<2x98xf32>
    %80 = tpu.matmul %22, %79, %cst_64 {dimension_numbers = #tpu.dot_dimension_numbers<[1], [0], [0], [1], [0, 0, 1, 1], [], []>} : vector<2x98xbf16>, vector<98x98xbf16>, vector<2x98xf32> -> vector<2x98xf32>
    %c7_65 = arith.constant 7 : index
    %c0_66 = arith.constant 0 : index
    %c0_67 = arith.constant 0 : index
    %81 = vector.load %arg3[%c7_65, %c0_66, %c0_67] : memref<9x2x2xbf16, #tpu.memory_space<vmem>>, vector<1x2x2xbf16>
    %82 = vector.shape_cast %81 : vector<1x2x2xbf16> to vector<2x2xbf16>
    %83 = arith.truncf %80 : vector<2x98xf32> to vector<2x98xbf16>
    %cst_68 = arith.constant dense<0.000000e+00> : vector<2x98xf32>
    %84 = tpu.matmul %82, %83, %cst_68 {dimension_numbers = #tpu.dot_dimension_numbers<[1], [0], [0], [1], [0, 0, 1, 1], [], []>} : vector<2x2xbf16>, vector<2x98xbf16>, vector<2x98xf32> -> vector<2x98xf32>
    %85 = arith.addf %77, %84 : vector<2x98xf32>
    %c8 = arith.constant 8 : index
    %c0_69 = arith.constant 0 : index
    %c0_70 = arith.constant 0 : index
    %86 = vector.load %arg6[%c8, %c0_69, %c0_70] : memref<9x98x98xbf16, #tpu.memory_space<vmem>>, vector<1x98x98xbf16>
    %87 = vector.shape_cast %86 : vector<1x98x98xbf16> to vector<98x98xbf16>
    %cst_71 = arith.constant dense<0.000000e+00> : vector<2x98xf32>
    %88 = tpu.matmul %22, %87, %cst_71 {dimension_numbers = #tpu.dot_dimension_numbers<[1], [0], [0], [1], [0, 0, 1, 1], [], []>} : vector<2x98xbf16>, vector<98x98xbf16>, vector<2x98xf32> -> vector<2x98xf32>
    %c8_72 = arith.constant 8 : index
    %c0_73 = arith.constant 0 : index
    %c0_74 = arith.constant 0 : index
    %89 = vector.load %arg3[%c8_72, %c0_73, %c0_74] : memref<9x2x2xbf16, #tpu.memory_space<vmem>>, vector<1x2x2xbf16>
    %90 = vector.shape_cast %89 : vector<1x2x2xbf16> to vector<2x2xbf16>
    %91 = arith.truncf %88 : vector<2x98xf32> to vector<2x98xbf16>
    %cst_75 = arith.constant dense<0.000000e+00> : vector<2x98xf32>
    %92 = tpu.matmul %90, %91, %cst_75 {dimension_numbers = #tpu.dot_dimension_numbers<[1], [0], [0], [1], [0, 0, 1, 1], [], []>} : vector<2x2xbf16>, vector<2x98xbf16>, vector<2x98xf32> -> vector<2x98xf32>
    %93 = arith.addf %85, %92 : vector<2x98xf32>
    %cst_76 = arith.constant 5.000000e-01 : f32
    %94 = vector.broadcast %cst_76 : f32 to vector<2x98xf32>
    %95 = arith.mulf %94, %93 : vector<2x98xf32>
    %cst_77 = arith.constant 0.707106769 : f32
    %96 = vector.broadcast %cst_77 : f32 to vector<2x98xf32>
    %97 = arith.mulf %93, %96 : vector<2x98xf32>
    %98 = math.erf %97 : vector<2x98xf32>
    %cst_78 = arith.constant 1.000000e+00 : f32
    %99 = vector.broadcast %cst_78 : f32 to vector<2x98xf32>
    %100 = arith.addf %99, %98 : vector<2x98xf32>
    %101 = arith.mulf %95, %100 : vector<2x98xf32>
    %102 = arith.truncf %101 : vector<2x98xf32> to vector<2x98xbf16>
    %c0_79 = arith.constant 0 : index
    %c0_80 = arith.constant 0 : index
    %103 = vector.load %arg4[%c0_79, %c0_80] : memref<8x2xbf16, #tpu.memory_space<vmem>>, vector<8x2xbf16>
    %cst_81 = arith.constant dense<0.000000e+00> : vector<8x98xf32>
    %104 = tpu.matmul %103, %102, %cst_81 {dimension_numbers = #tpu.dot_dimension_numbers<[1], [0], [0], [1], [0, 0, 1, 1], [], []>} : vector<8x2xbf16>, vector<2x98xbf16>, vector<8x98xf32> -> vector<8x98xf32>
    %cst_82 = arith.constant 5.000000e-01 : f32
    %105 = vector.broadcast %cst_82 : f32 to vector<8x98xf32>
    %106 = arith.mulf %105, %104 : vector<8x98xf32>
    %cst_83 = arith.constant 0.707106769 : f32
    %107 = vector.broadcast %cst_83 : f32 to vector<8x98xf32>
    %108 = arith.mulf %104, %107 : vector<8x98xf32>
    %109 = math.erf %108 : vector<8x98xf32>
    %cst_84 = arith.constant 1.000000e+00 : f32
    %110 = vector.broadcast %cst_84 : f32 to vector<8x98xf32>
    %111 = arith.addf %110, %109 : vector<8x98xf32>
    %112 = arith.mulf %106, %111 : vector<8x98xf32>
    %c0_85 = arith.constant 0 : index
    %c0_86 = arith.constant 0 : index
    %113 = vector.load %arg5[%c0_85, %c0_86] : memref<8x64xbf16, #tpu.memory_space<vmem>>, vector<8x64xbf16>
    %cst_87 = arith.constant dense<0.000000e+00> : vector<8x98xf32>
    %114 = tpu.matmul %113, %11, %cst_87 {dimension_numbers = #tpu.dot_dimension_numbers<[1], [0], [0], [1], [0, 0, 1, 1], [], []>} : vector<8x64xbf16>, vector<64x98xbf16>, vector<8x98xf32> -> vector<8x98xf32>
    %115 = arith.addf %112, %114 : vector<8x98xf32>
    %cst_88 = arith.constant 5.000000e-01 : f32
    %116 = vector.broadcast %cst_88 : f32 to vector<8x98xf32>
    %117 = arith.mulf %116, %115 : vector<8x98xf32>
    %cst_89 = arith.constant 0.707106769 : f32
    %118 = vector.broadcast %cst_89 : f32 to vector<8x98xf32>
    %119 = arith.mulf %115, %118 : vector<8x98xf32>
    %120 = math.erf %119 : vector<8x98xf32>
    %cst_90 = arith.constant 1.000000e+00 : f32
    %121 = vector.broadcast %cst_90 : f32 to vector<8x98xf32>
    %122 = arith.addf %121, %120 : vector<8x98xf32>
    %123 = arith.mulf %117, %122 : vector<8x98xf32>
    %124 = arith.truncf %123 : vector<8x98xf32> to vector<8x98xbf16>
    %c0_91 = arith.constant 0 : index
    %c0_92 = arith.constant 0 : index
    %125 = vector.load %arg7[%c0_91, %c0_92] : memref<3x8xbf16, #tpu.memory_space<vmem>>, vector<3x8xbf16>
    %cst_93 = arith.constant dense<0.000000e+00> : vector<3x98xf32>
    %126 = tpu.matmul %125, %124, %cst_93 {dimension_numbers = #tpu.dot_dimension_numbers<[1], [0], [0], [1], [0, 0, 1, 1], [], []>} : vector<3x8xbf16>, vector<8x98xbf16>, vector<3x98xf32> -> vector<3x98xf32>
    %cst_94 = arith.constant 5.000000e-01 : f32
    %127 = vector.broadcast %cst_94 : f32 to vector<3x98xf32>
    %128 = arith.mulf %127, %126 : vector<3x98xf32>
    %cst_95 = arith.constant 0.707106769 : f32
    %129 = vector.broadcast %cst_95 : f32 to vector<3x98xf32>
    %130 = arith.mulf %126, %129 : vector<3x98xf32>
    %131 = math.erf %130 : vector<3x98xf32>
    %cst_96 = arith.constant 1.000000e+00 : f32
    %132 = vector.broadcast %cst_96 : f32 to vector<3x98xf32>
    %133 = arith.addf %132, %131 : vector<3x98xf32>
    %134 = arith.mulf %128, %133 : vector<3x98xf32>
    %135 = arith.truncf %134 : vector<3x98xf32> to vector<3x98xbf16>
    %c0_97 = arith.constant 0 : index
    %c0_98 = arith.constant 0 : index
    %c0_99 = arith.constant 0 : index
    %136 = vector.load %arg11[%c0_97, %c0_98, %c0_99] : memref<9x98x18xbf16, #tpu.memory_space<vmem>>, vector<1x98x18xbf16>
    %137 = vector.shape_cast %136 : vector<1x98x18xbf16> to vector<98x18xbf16>
    %cst_100 = arith.constant dense<0.000000e+00> : vector<3x18xf32>
    %138 = tpu.matmul %135, %137, %cst_100 {dimension_numbers = #tpu.dot_dimension_numbers<[1], [0], [0], [1], [0, 0, 1, 1], [], []>} : vector<3x98xbf16>, vector<98x18xbf16>, vector<3x18xf32> -> vector<3x18xf32>
    %c0_101 = arith.constant 0 : index
    %c0_102 = arith.constant 0 : index
    %c0_103 = arith.constant 0 : index
    %139 = vector.load %arg8[%c0_101, %c0_102, %c0_103] : memref<9x3x3xbf16, #tpu.memory_space<vmem>>, vector<1x3x3xbf16>
    %140 = vector.shape_cast %139 : vector<1x3x3xbf16> to vector<3x3xbf16>
    %141 = arith.truncf %138 : vector<3x18xf32> to vector<3x18xbf16>
    %cst_104 = arith.constant dense<0.000000e+00> : vector<3x18xf32>
    %142 = tpu.matmul %140, %141, %cst_104 {dimension_numbers = #tpu.dot_dimension_numbers<[1], [0], [0], [1], [0, 0, 1, 1], [], []>} : vector<3x3xbf16>, vector<3x18xbf16>, vector<3x18xf32> -> vector<3x18xf32>
    %c1_105 = arith.constant 1 : index
    %c0_106 = arith.constant 0 : index
    %c0_107 = arith.constant 0 : index
    %143 = vector.load %arg11[%c1_105, %c0_106, %c0_107] : memref<9x98x18xbf16, #tpu.memory_space<vmem>>, vector<1x98x18xbf16>
    %144 = vector.shape_cast %143 : vector<1x98x18xbf16> to vector<98x18xbf16>
    %cst_108 = arith.constant dense<0.000000e+00> : vector<3x18xf32>
    %145 = tpu.matmul %135, %144, %cst_108 {dimension_numbers = #tpu.dot_dimension_numbers<[1], [0], [0], [1], [0, 0, 1, 1], [], []>} : vector<3x98xbf16>, vector<98x18xbf16>, vector<3x18xf32> -> vector<3x18xf32>
    %c1_109 = arith.constant 1 : index
    %c0_110 = arith.constant 0 : index
    %c0_111 = arith.constant 0 : index
    %146 = vector.load %arg8[%c1_109, %c0_110, %c0_111] : memref<9x3x3xbf16, #tpu.memory_space<vmem>>, vector<1x3x3xbf16>
    %147 = vector.shape_cast %146 : vector<1x3x3xbf16> to vector<3x3xbf16>
    %148 = arith.truncf %145 : vector<3x18xf32> to vector<3x18xbf16>
    %cst_112 = arith.constant dense<0.000000e+00> : vector<3x18xf32>
    %149 = tpu.matmul %147, %148, %cst_112 {dimension_numbers = #tpu.dot_dimension_numbers<[1], [0], [0], [1], [0, 0, 1, 1], [], []>} : vector<3x3xbf16>, vector<3x18xbf16>, vector<3x18xf32> -> vector<3x18xf32>
    %150 = arith.addf %142, %149 : vector<3x18xf32>
    %c2_113 = arith.constant 2 : index
    %c0_114 = arith.constant 0 : index
    %c0_115 = arith.constant 0 : index
    %151 = vector.load %arg11[%c2_113, %c0_114, %c0_115] : memref<9x98x18xbf16, #tpu.memory_space<vmem>>, vector<1x98x18xbf16>
    %152 = vector.shape_cast %151 : vector<1x98x18xbf16> to vector<98x18xbf16>
    %cst_116 = arith.constant dense<0.000000e+00> : vector<3x18xf32>
    %153 = tpu.matmul %135, %152, %cst_116 {dimension_numbers = #tpu.dot_dimension_numbers<[1], [0], [0], [1], [0, 0, 1, 1], [], []>} : vector<3x98xbf16>, vector<98x18xbf16>, vector<3x18xf32> -> vector<3x18xf32>
    %c2_117 = arith.constant 2 : index
    %c0_118 = arith.constant 0 : index
    %c0_119 = arith.constant 0 : index
    %154 = vector.load %arg8[%c2_117, %c0_118, %c0_119] : memref<9x3x3xbf16, #tpu.memory_space<vmem>>, vector<1x3x3xbf16>
    %155 = vector.shape_cast %154 : vector<1x3x3xbf16> to vector<3x3xbf16>
    %156 = arith.truncf %153 : vector<3x18xf32> to vector<3x18xbf16>
    %cst_120 = arith.constant dense<0.000000e+00> : vector<3x18xf32>
    %157 = tpu.matmul %155, %156, %cst_120 {dimension_numbers = #tpu.dot_dimension_numbers<[1], [0], [0], [1], [0, 0, 1, 1], [], []>} : vector<3x3xbf16>, vector<3x18xbf16>, vector<3x18xf32> -> vector<3x18xf32>
    %158 = arith.addf %150, %157 : vector<3x18xf32>
    %c3_121 = arith.constant 3 : index
    %c0_122 = arith.constant 0 : index
    %c0_123 = arith.constant 0 : index
    %159 = vector.load %arg11[%c3_121, %c0_122, %c0_123] : memref<9x98x18xbf16, #tpu.memory_space<vmem>>, vector<1x98x18xbf16>
    %160 = vector.shape_cast %159 : vector<1x98x18xbf16> to vector<98x18xbf16>
    %cst_124 = arith.constant dense<0.000000e+00> : vector<3x18xf32>
    %161 = tpu.matmul %135, %160, %cst_124 {dimension_numbers = #tpu.dot_dimension_numbers<[1], [0], [0], [1], [0, 0, 1, 1], [], []>} : vector<3x98xbf16>, vector<98x18xbf16>, vector<3x18xf32> -> vector<3x18xf32>
    %c3_125 = arith.constant 3 : index
    %c0_126 = arith.constant 0 : index
    %c0_127 = arith.constant 0 : index
    %162 = vector.load %arg8[%c3_125, %c0_126, %c0_127] : memref<9x3x3xbf16, #tpu.memory_space<vmem>>, vector<1x3x3xbf16>
    %163 = vector.shape_cast %162 : vector<1x3x3xbf16> to vector<3x3xbf16>
    %164 = arith.truncf %161 : vector<3x18xf32> to vector<3x18xbf16>
    %cst_128 = arith.constant dense<0.000000e+00> : vector<3x18xf32>
    %165 = tpu.matmul %163, %164, %cst_128 {dimension_numbers = #tpu.dot_dimension_numbers<[1], [0], [0], [1], [0, 0, 1, 1], [], []>} : vector<3x3xbf16>, vector<3x18xbf16>, vector<3x18xf32> -> vector<3x18xf32>
    %166 = arith.addf %158, %165 : vector<3x18xf32>
    %c4_129 = arith.constant 4 : index
    %c0_130 = arith.constant 0 : index
    %c0_131 = arith.constant 0 : index
    %167 = vector.load %arg11[%c4_129, %c0_130, %c0_131] : memref<9x98x18xbf16, #tpu.memory_space<vmem>>, vector<1x98x18xbf16>
    %168 = vector.shape_cast %167 : vector<1x98x18xbf16> to vector<98x18xbf16>
    %cst_132 = arith.constant dense<0.000000e+00> : vector<3x18xf32>
    %169 = tpu.matmul %135, %168, %cst_132 {dimension_numbers = #tpu.dot_dimension_numbers<[1], [0], [0], [1], [0, 0, 1, 1], [], []>} : vector<3x98xbf16>, vector<98x18xbf16>, vector<3x18xf32> -> vector<3x18xf32>
    %c4_133 = arith.constant 4 : index
    %c0_134 = arith.constant 0 : index
    %c0_135 = arith.constant 0 : index
    %170 = vector.load %arg8[%c4_133, %c0_134, %c0_135] : memref<9x3x3xbf16, #tpu.memory_space<vmem>>, vector<1x3x3xbf16>
    %171 = vector.shape_cast %170 : vector<1x3x3xbf16> to vector<3x3xbf16>
    %172 = arith.truncf %169 : vector<3x18xf32> to vector<3x18xbf16>
    %cst_136 = arith.constant dense<0.000000e+00> : vector<3x18xf32>
    %173 = tpu.matmul %171, %172, %cst_136 {dimension_numbers = #tpu.dot_dimension_numbers<[1], [0], [0], [1], [0, 0, 1, 1], [], []>} : vector<3x3xbf16>, vector<3x18xbf16>, vector<3x18xf32> -> vector<3x18xf32>
    %174 = arith.addf %166, %173 : vector<3x18xf32>
    %c5_137 = arith.constant 5 : index
    %c0_138 = arith.constant 0 : index
    %c0_139 = arith.constant 0 : index
    %175 = vector.load %arg11[%c5_137, %c0_138, %c0_139] : memref<9x98x18xbf16, #tpu.memory_space<vmem>>, vector<1x98x18xbf16>
    %176 = vector.shape_cast %175 : vector<1x98x18xbf16> to vector<98x18xbf16>
    %cst_140 = arith.constant dense<0.000000e+00> : vector<3x18xf32>
    %177 = tpu.matmul %135, %176, %cst_140 {dimension_numbers = #tpu.dot_dimension_numbers<[1], [0], [0], [1], [0, 0, 1, 1], [], []>} : vector<3x98xbf16>, vector<98x18xbf16>, vector<3x18xf32> -> vector<3x18xf32>
    %c5_141 = arith.constant 5 : index
    %c0_142 = arith.constant 0 : index
    %c0_143 = arith.constant 0 : index
    %178 = vector.load %arg8[%c5_141, %c0_142, %c0_143] : memref<9x3x3xbf16, #tpu.memory_space<vmem>>, vector<1x3x3xbf16>
    %179 = vector.shape_cast %178 : vector<1x3x3xbf16> to vector<3x3xbf16>
    %180 = arith.truncf %177 : vector<3x18xf32> to vector<3x18xbf16>
    %cst_144 = arith.constant dense<0.000000e+00> : vector<3x18xf32>
    %181 = tpu.matmul %179, %180, %cst_144 {dimension_numbers = #tpu.dot_dimension_numbers<[1], [0], [0], [1], [0, 0, 1, 1], [], []>} : vector<3x3xbf16>, vector<3x18xbf16>, vector<3x18xf32> -> vector<3x18xf32>
    %182 = arith.addf %174, %181 : vector<3x18xf32>
    %c6_145 = arith.constant 6 : index
    %c0_146 = arith.constant 0 : index
    %c0_147 = arith.constant 0 : index
    %183 = vector.load %arg11[%c6_145, %c0_146, %c0_147] : memref<9x98x18xbf16, #tpu.memory_space<vmem>>, vector<1x98x18xbf16>
    %184 = vector.shape_cast %183 : vector<1x98x18xbf16> to vector<98x18xbf16>
    %cst_148 = arith.constant dense<0.000000e+00> : vector<3x18xf32>
    %185 = tpu.matmul %135, %184, %cst_148 {dimension_numbers = #tpu.dot_dimension_numbers<[1], [0], [0], [1], [0, 0, 1, 1], [], []>} : vector<3x98xbf16>, vector<98x18xbf16>, vector<3x18xf32> -> vector<3x18xf32>
    %c6_149 = arith.constant 6 : index
    %c0_150 = arith.constant 0 : index
    %c0_151 = arith.constant 0 : index
    %186 = vector.load %arg8[%c6_149, %c0_150, %c0_151] : memref<9x3x3xbf16, #tpu.memory_space<vmem>>, vector<1x3x3xbf16>
    %187 = vector.shape_cast %186 : vector<1x3x3xbf16> to vector<3x3xbf16>
    %188 = arith.truncf %185 : vector<3x18xf32> to vector<3x18xbf16>
    %cst_152 = arith.constant dense<0.000000e+00> : vector<3x18xf32>
    %189 = tpu.matmul %187, %188, %cst_152 {dimension_numbers = #tpu.dot_dimension_numbers<[1], [0], [0], [1], [0, 0, 1, 1], [], []>} : vector<3x3xbf16>, vector<3x18xbf16>, vector<3x18xf32> -> vector<3x18xf32>
    %190 = arith.addf %182, %189 : vector<3x18xf32>
    %c7_153 = arith.constant 7 : index
    %c0_154 = arith.constant 0 : index
    %c0_155 = arith.constant 0 : index
    %191 = vector.load %arg11[%c7_153, %c0_154, %c0_155] : memref<9x98x18xbf16, #tpu.memory_space<vmem>>, vector<1x98x18xbf16>
    %192 = vector.shape_cast %191 : vector<1x98x18xbf16> to vector<98x18xbf16>
    %cst_156 = arith.constant dense<0.000000e+00> : vector<3x18xf32>
    %193 = tpu.matmul %135, %192, %cst_156 {dimension_numbers = #tpu.dot_dimension_numbers<[1], [0], [0], [1], [0, 0, 1, 1], [], []>} : vector<3x98xbf16>, vector<98x18xbf16>, vector<3x18xf32> -> vector<3x18xf32>
    %c7_157 = arith.constant 7 : index
    %c0_158 = arith.constant 0 : index
    %c0_159 = arith.constant 0 : index
    %194 = vector.load %arg8[%c7_157, %c0_158, %c0_159] : memref<9x3x3xbf16, #tpu.memory_space<vmem>>, vector<1x3x3xbf16>
    %195 = vector.shape_cast %194 : vector<1x3x3xbf16> to vector<3x3xbf16>
    %196 = arith.truncf %193 : vector<3x18xf32> to vector<3x18xbf16>
    %cst_160 = arith.constant dense<0.000000e+00> : vector<3x18xf32>
    %197 = tpu.matmul %195, %196, %cst_160 {dimension_numbers = #tpu.dot_dimension_numbers<[1], [0], [0], [1], [0, 0, 1, 1], [], []>} : vector<3x3xbf16>, vector<3x18xbf16>, vector<3x18xf32> -> vector<3x18xf32>
    %198 = arith.addf %190, %197 : vector<3x18xf32>
    %c8_161 = arith.constant 8 : index
    %c0_162 = arith.constant 0 : index
    %c0_163 = arith.constant 0 : index
    %199 = vector.load %arg11[%c8_161, %c0_162, %c0_163] : memref<9x98x18xbf16, #tpu.memory_space<vmem>>, vector<1x98x18xbf16>
    %200 = vector.shape_cast %199 : vector<1x98x18xbf16> to vector<98x18xbf16>
    %cst_164 = arith.constant dense<0.000000e+00> : vector<3x18xf32>
    %201 = tpu.matmul %135, %200, %cst_164 {dimension_numbers = #tpu.dot_dimension_numbers<[1], [0], [0], [1], [0, 0, 1, 1], [], []>} : vector<3x98xbf16>, vector<98x18xbf16>, vector<3x18xf32> -> vector<3x18xf32>
    %c8_165 = arith.constant 8 : index
    %c0_166 = arith.constant 0 : index
    %c0_167 = arith.constant 0 : index
    %202 = vector.load %arg8[%c8_165, %c0_166, %c0_167] : memref<9x3x3xbf16, #tpu.memory_space<vmem>>, vector<1x3x3xbf16>
    %203 = vector.shape_cast %202 : vector<1x3x3xbf16> to vector<3x3xbf16>
    %204 = arith.truncf %201 : vector<3x18xf32> to vector<3x18xbf16>
    %cst_168 = arith.constant dense<0.000000e+00> : vector<3x18xf32>
    %205 = tpu.matmul %203, %204, %cst_168 {dimension_numbers = #tpu.dot_dimension_numbers<[1], [0], [0], [1], [0, 0, 1, 1], [], []>} : vector<3x3xbf16>, vector<3x18xbf16>, vector<3x18xf32> -> vector<3x18xf32>
    %206 = arith.addf %198, %205 : vector<3x18xf32>
    %cst_169 = arith.constant 5.000000e-01 : f32
    %207 = vector.broadcast %cst_169 : f32 to vector<3x18xf32>
    %208 = arith.mulf %207, %206 : vector<3x18xf32>
    %cst_170 = arith.constant 0.707106769 : f32
    %209 = vector.broadcast %cst_170 : f32 to vector<3x18xf32>
    %210 = arith.mulf %206, %209 : vector<3x18xf32>
    %211 = math.erf %210 : vector<3x18xf32>
    %cst_171 = arith.constant 1.000000e+00 : f32
    %212 = vector.broadcast %cst_171 : f32 to vector<3x18xf32>
    %213 = arith.addf %212, %211 : vector<3x18xf32>
    %214 = arith.mulf %208, %213 : vector<3x18xf32>
    %215 = arith.truncf %214 : vector<3x18xf32> to vector<3x18xbf16>
    %c0_172 = arith.constant 0 : index
    %c0_173 = arith.constant 0 : index
    %216 = vector.load %arg9[%c0_172, %c0_173] : memref<12x3xbf16, #tpu.memory_space<vmem>>, vector<12x3xbf16>
    %cst_174 = arith.constant dense<0.000000e+00> : vector<12x18xf32>
    %217 = tpu.matmul %216, %215, %cst_174 {dimension_numbers = #tpu.dot_dimension_numbers<[1], [0], [0], [1], [0, 0, 1, 1], [], []>} : vector<12x3xbf16>, vector<3x18xbf16>, vector<12x18xf32> -> vector<12x18xf32>
    %cst_175 = arith.constant 5.000000e-01 : f32
    %218 = vector.broadcast %cst_175 : f32 to vector<12x18xf32>
    %219 = arith.mulf %218, %217 : vector<12x18xf32>
    %cst_176 = arith.constant 0.707106769 : f32
    %220 = vector.broadcast %cst_176 : f32 to vector<12x18xf32>
    %221 = arith.mulf %217, %220 : vector<12x18xf32>
    %222 = math.erf %221 : vector<12x18xf32>
    %cst_177 = arith.constant 1.000000e+00 : f32
    %223 = vector.broadcast %cst_177 : f32 to vector<12x18xf32>
    %224 = arith.addf %223, %222 : vector<12x18xf32>
    %225 = arith.mulf %219, %224 : vector<12x18xf32>
    %c4_178 = arith.constant 4 : index
    %c0_179 = arith.constant 0 : index
    %c0_180 = arith.constant 0 : index
    %226 = vector.load %arg11[%c4_178, %c0_179, %c0_180] : memref<9x98x18xbf16, #tpu.memory_space<vmem>>, vector<1x98x18xbf16>
    %227 = vector.shape_cast %226 : vector<1x98x18xbf16> to vector<98x18xbf16>
    %cst_181 = arith.constant dense<0.000000e+00> : vector<8x18xf32>
    %228 = tpu.matmul %124, %227, %cst_181 {dimension_numbers = #tpu.dot_dimension_numbers<[1], [0], [0], [1], [0, 0, 1, 1], [], []>} : vector<8x98xbf16>, vector<98x18xbf16>, vector<8x18xf32> -> vector<8x18xf32>
    %229 = arith.truncf %228 : vector<8x18xf32> to vector<8x18xbf16>
    %c0_182 = arith.constant 0 : index
    %c0_183 = arith.constant 0 : index
    %230 = vector.load %arg10[%c0_182, %c0_183] : memref<12x8xbf16, #tpu.memory_space<vmem>>, vector<12x8xbf16>
    %cst_184 = arith.constant dense<0.000000e+00> : vector<12x18xf32>
    %231 = tpu.matmul %230, %229, %cst_184 {dimension_numbers = #tpu.dot_dimension_numbers<[1], [0], [0], [1], [0, 0, 1, 1], [], []>} : vector<12x8xbf16>, vector<8x18xbf16>, vector<12x18xf32> -> vector<12x18xf32>
    %232 = arith.addf %225, %231 : vector<12x18xf32>
    %cst_185 = arith.constant 5.000000e-01 : f32
    %233 = vector.broadcast %cst_185 : f32 to vector<12x18xf32>
    %234 = arith.mulf %233, %232 : vector<12x18xf32>
    %cst_186 = arith.constant 0.707106769 : f32
    %235 = vector.broadcast %cst_186 : f32 to vector<12x18xf32>
    %236 = arith.mulf %232, %235 : vector<12x18xf32>
    %237 = math.erf %236 : vector<12x18xf32>
    %cst_187 = arith.constant 1.000000e+00 : f32
    %238 = vector.broadcast %cst_187 : f32 to vector<12x18xf32>
    %239 = arith.addf %238, %237 : vector<12x18xf32>
    %240 = arith.mulf %234, %239 : vector<12x18xf32>
    %241 = arith.truncf %240 : vector<12x18xf32> to vector<12x18xbf16>
    %c0_188 = arith.constant 0 : index
    %c0_189 = arith.constant 0 : index
    %242 = vector.load %arg12[%c0_188, %c0_189] : memref<4x12xbf16, #tpu.memory_space<vmem>>, vector<4x12xbf16>
    %cst_190 = arith.constant dense<0.000000e+00> : vector<4x18xf32>
    %243 = tpu.matmul %242, %241, %cst_190 {dimension_numbers = #tpu.dot_dimension_numbers<[1], [0], [0], [1], [0, 0, 1, 1], [], []>} : vector<4x12xbf16>, vector<12x18xbf16>, vector<4x18xf32> -> vector<4x18xf32>
    %cst_191 = arith.constant 5.000000e-01 : f32
    %244 = vector.broadcast %cst_191 : f32 to vector<4x18xf32>
    %245 = arith.mulf %244, %243 : vector<4x18xf32>
    %cst_192 = arith.constant 0.707106769 : f32
    %246 = vector.broadcast %cst_192 : f32 to vector<4x18xf32>
    %247 = arith.mulf %243, %246 : vector<4x18xf32>
    %248 = math.erf %247 : vector<4x18xf32>
    %cst_193 = arith.constant 1.000000e+00 : f32
    %249 = vector.broadcast %cst_193 : f32 to vector<4x18xf32>
    %250 = arith.addf %249, %248 : vector<4x18xf32>
    %251 = arith.mulf %245, %250 : vector<4x18xf32>
    %252 = arith.truncf %251 : vector<4x18xf32> to vector<4x18xbf16>
    %c0_194 = arith.constant 0 : index
    %c0_195 = arith.constant 0 : index
    %c0_196 = arith.constant 0 : index
    %253 = vector.load %arg16[%c0_194, %c0_195, %c0_196] : memref<4x18x2xbf16, #tpu.memory_space<vmem>>, vector<1x18x2xbf16>
    %254 = vector.shape_cast %253 : vector<1x18x2xbf16> to vector<18x2xbf16>
    %cst_197 = arith.constant dense<0.000000e+00> : vector<4x2xf32>
    %255 = tpu.matmul %252, %254, %cst_197 {dimension_numbers = #tpu.dot_dimension_numbers<[1], [0], [0], [1], [0, 0, 1, 1], [], []>} : vector<4x18xbf16>, vector<18x2xbf16>, vector<4x2xf32> -> vector<4x2xf32>
    %c0_198 = arith.constant 0 : index
    %c0_199 = arith.constant 0 : index
    %c0_200 = arith.constant 0 : index
    %256 = vector.load %arg13[%c0_198, %c0_199, %c0_200] : memref<4x4x4xbf16, #tpu.memory_space<vmem>>, vector<1x4x4xbf16>
    %257 = vector.shape_cast %256 : vector<1x4x4xbf16> to vector<4x4xbf16>
    %258 = arith.truncf %255 : vector<4x2xf32> to vector<4x2xbf16>
    %cst_201 = arith.constant dense<0.000000e+00> : vector<4x2xf32>
    %259 = tpu.matmul %257, %258, %cst_201 {dimension_numbers = #tpu.dot_dimension_numbers<[1], [0], [0], [1], [0, 0, 1, 1], [], []>} : vector<4x4xbf16>, vector<4x2xbf16>, vector<4x2xf32> -> vector<4x2xf32>
    %c1_202 = arith.constant 1 : index
    %c0_203 = arith.constant 0 : index
    %c0_204 = arith.constant 0 : index
    %260 = vector.load %arg16[%c1_202, %c0_203, %c0_204] : memref<4x18x2xbf16, #tpu.memory_space<vmem>>, vector<1x18x2xbf16>
    %261 = vector.shape_cast %260 : vector<1x18x2xbf16> to vector<18x2xbf16>
    %cst_205 = arith.constant dense<0.000000e+00> : vector<4x2xf32>
    %262 = tpu.matmul %252, %261, %cst_205 {dimension_numbers = #tpu.dot_dimension_numbers<[1], [0], [0], [1], [0, 0, 1, 1], [], []>} : vector<4x18xbf16>, vector<18x2xbf16>, vector<4x2xf32> -> vector<4x2xf32>
    %c1_206 = arith.constant 1 : index
    %c0_207 = arith.constant 0 : index
    %c0_208 = arith.constant 0 : index
    %263 = vector.load %arg13[%c1_206, %c0_207, %c0_208] : memref<4x4x4xbf16, #tpu.memory_space<vmem>>, vector<1x4x4xbf16>
    %264 = vector.shape_cast %263 : vector<1x4x4xbf16> to vector<4x4xbf16>
    %265 = arith.truncf %262 : vector<4x2xf32> to vector<4x2xbf16>
    %cst_209 = arith.constant dense<0.000000e+00> : vector<4x2xf32>
    %266 = tpu.matmul %264, %265, %cst_209 {dimension_numbers = #tpu.dot_dimension_numbers<[1], [0], [0], [1], [0, 0, 1, 1], [], []>} : vector<4x4xbf16>, vector<4x2xbf16>, vector<4x2xf32> -> vector<4x2xf32>
    %267 = arith.addf %259, %266 : vector<4x2xf32>
    %c2_210 = arith.constant 2 : index
    %c0_211 = arith.constant 0 : index
    %c0_212 = arith.constant 0 : index
    %268 = vector.load %arg16[%c2_210, %c0_211, %c0_212] : memref<4x18x2xbf16, #tpu.memory_space<vmem>>, vector<1x18x2xbf16>
    %269 = vector.shape_cast %268 : vector<1x18x2xbf16> to vector<18x2xbf16>
    %cst_213 = arith.constant dense<0.000000e+00> : vector<4x2xf32>
    %270 = tpu.matmul %252, %269, %cst_213 {dimension_numbers = #tpu.dot_dimension_numbers<[1], [0], [0], [1], [0, 0, 1, 1], [], []>} : vector<4x18xbf16>, vector<18x2xbf16>, vector<4x2xf32> -> vector<4x2xf32>
    %c2_214 = arith.constant 2 : index
    %c0_215 = arith.constant 0 : index
    %c0_216 = arith.constant 0 : index
    %271 = vector.load %arg13[%c2_214, %c0_215, %c0_216] : memref<4x4x4xbf16, #tpu.memory_space<vmem>>, vector<1x4x4xbf16>
    %272 = vector.shape_cast %271 : vector<1x4x4xbf16> to vector<4x4xbf16>
    %273 = arith.truncf %270 : vector<4x2xf32> to vector<4x2xbf16>
    %cst_217 = arith.constant dense<0.000000e+00> : vector<4x2xf32>
    %274 = tpu.matmul %272, %273, %cst_217 {dimension_numbers = #tpu.dot_dimension_numbers<[1], [0], [0], [1], [0, 0, 1, 1], [], []>} : vector<4x4xbf16>, vector<4x2xbf16>, vector<4x2xf32> -> vector<4x2xf32>
    %275 = arith.addf %267, %274 : vector<4x2xf32>
    %c3_218 = arith.constant 3 : index
    %c0_219 = arith.constant 0 : index
    %c0_220 = arith.constant 0 : index
    %276 = vector.load %arg16[%c3_218, %c0_219, %c0_220] : memref<4x18x2xbf16, #tpu.memory_space<vmem>>, vector<1x18x2xbf16>
    %277 = vector.shape_cast %276 : vector<1x18x2xbf16> to vector<18x2xbf16>
    %cst_221 = arith.constant dense<0.000000e+00> : vector<4x2xf32>
    %278 = tpu.matmul %252, %277, %cst_221 {dimension_numbers = #tpu.dot_dimension_numbers<[1], [0], [0], [1], [0, 0, 1, 1], [], []>} : vector<4x18xbf16>, vector<18x2xbf16>, vector<4x2xf32> -> vector<4x2xf32>
    %c3_222 = arith.constant 3 : index
    %c0_223 = arith.constant 0 : index
    %c0_224 = arith.constant 0 : index
    %279 = vector.load %arg13[%c3_222, %c0_223, %c0_224] : memref<4x4x4xbf16, #tpu.memory_space<vmem>>, vector<1x4x4xbf16>
    %280 = vector.shape_cast %279 : vector<1x4x4xbf16> to vector<4x4xbf16>
    %281 = arith.truncf %278 : vector<4x2xf32> to vector<4x2xbf16>
    %cst_225 = arith.constant dense<0.000000e+00> : vector<4x2xf32>
    %282 = tpu.matmul %280, %281, %cst_225 {dimension_numbers = #tpu.dot_dimension_numbers<[1], [0], [0], [1], [0, 0, 1, 1], [], []>} : vector<4x4xbf16>, vector<4x2xbf16>, vector<4x2xf32> -> vector<4x2xf32>
    %283 = arith.addf %275, %282 : vector<4x2xf32>
    %cst_226 = arith.constant 5.000000e-01 : f32
    %284 = vector.broadcast %cst_226 : f32 to vector<4x2xf32>
    %285 = arith.mulf %284, %283 : vector<4x2xf32>
    %cst_227 = arith.constant 0.707106769 : f32
    %286 = vector.broadcast %cst_227 : f32 to vector<4x2xf32>
    %287 = arith.mulf %283, %286 : vector<4x2xf32>
    %288 = math.erf %287 : vector<4x2xf32>
    %cst_228 = arith.constant 1.000000e+00 : f32
    %289 = vector.broadcast %cst_228 : f32 to vector<4x2xf32>
    %290 = arith.addf %289, %288 : vector<4x2xf32>
    %291 = arith.mulf %285, %290 : vector<4x2xf32>
    %292 = arith.truncf %291 : vector<4x2xf32> to vector<4x2xbf16>
    %c0_229 = arith.constant 0 : index
    %c0_230 = arith.constant 0 : index
    %293 = vector.load %arg14[%c0_229, %c0_230] : memref<16x4xbf16, #tpu.memory_space<vmem>>, vector<16x4xbf16>
    %cst_231 = arith.constant dense<0.000000e+00> : vector<16x2xf32>
    %294 = tpu.matmul %293, %292, %cst_231 {dimension_numbers = #tpu.dot_dimension_numbers<[1], [0], [0], [1], [0, 0, 1, 1], [], []>} : vector<16x4xbf16>, vector<4x2xbf16>, vector<16x2xf32> -> vector<16x2xf32>
    %cst_232 = arith.constant 5.000000e-01 : f32
    %295 = vector.broadcast %cst_232 : f32 to vector<16x2xf32>
    %296 = arith.mulf %295, %294 : vector<16x2xf32>
    %cst_233 = arith.constant 0.707106769 : f32
    %297 = vector.broadcast %cst_233 : f32 to vector<16x2xf32>
    %298 = arith.mulf %294, %297 : vector<16x2xf32>
    %299 = math.erf %298 : vector<16x2xf32>
    %cst_234 = arith.constant 1.000000e+00 : f32
    %300 = vector.broadcast %cst_234 : f32 to vector<16x2xf32>
    %301 = arith.addf %300, %299 : vector<16x2xf32>
    %302 = arith.mulf %296, %301 : vector<16x2xf32>
    %c0_235 = arith.constant 0 : index
    %c0_236 = arith.constant 0 : index
    %c0_237 = arith.constant 0 : index
    %303 = vector.load %arg16[%c0_235, %c0_236, %c0_237] : memref<4x18x2xbf16, #tpu.memory_space<vmem>>, vector<1x18x2xbf16>
    %304 = vector.shape_cast %303 : vector<1x18x2xbf16> to vector<18x2xbf16>
    %cst_238 = arith.constant dense<0.000000e+00> : vector<12x2xf32>
    %305 = tpu.matmul %241, %304, %cst_238 {dimension_numbers = #tpu.dot_dimension_numbers<[1], [0], [0], [1], [0, 0, 1, 1], [], []>} : vector<12x18xbf16>, vector<18x2xbf16>, vector<12x2xf32> -> vector<12x2xf32>
    %306 = arith.truncf %305 : vector<12x2xf32> to vector<12x2xbf16>
    %c0_239 = arith.constant 0 : index
    %c0_240 = arith.constant 0 : index
    %307 = vector.load %arg15[%c0_239, %c0_240] : memref<16x12xbf16, #tpu.memory_space<vmem>>, vector<16x12xbf16>
    %cst_241 = arith.constant dense<0.000000e+00> : vector<16x2xf32>
    %308 = tpu.matmul %307, %306, %cst_241 {dimension_numbers = #tpu.dot_dimension_numbers<[1], [0], [0], [1], [0, 0, 1, 1], [], []>} : vector<16x12xbf16>, vector<12x2xbf16>, vector<16x2xf32> -> vector<16x2xf32>
    %309 = arith.addf %302, %308 : vector<16x2xf32>
    %cst_242 = arith.constant 5.000000e-01 : f32
    %310 = vector.broadcast %cst_242 : f32 to vector<16x2xf32>
    %311 = arith.mulf %310, %309 : vector<16x2xf32>
    %cst_243 = arith.constant 0.707106769 : f32
    %312 = vector.broadcast %cst_243 : f32 to vector<16x2xf32>
    %313 = arith.mulf %309, %312 : vector<16x2xf32>
    %314 = math.erf %313 : vector<16x2xf32>
    %cst_244 = arith.constant 1.000000e+00 : f32
    %315 = vector.broadcast %cst_244 : f32 to vector<16x2xf32>
    %316 = arith.addf %315, %314 : vector<16x2xf32>
    %317 = arith.mulf %311, %316 : vector<16x2xf32>
    %318 = arith.truncf %317 : vector<16x2xf32> to vector<16x2xbf16>
    %c0_245 = arith.constant 0 : index
    %c0_246 = arith.constant 0 : index
    %319 = vector.load %arg17[%c0_245, %c0_246] : memref<5x16xbf16, #tpu.memory_space<vmem>>, vector<5x16xbf16>
    %cst_247 = arith.constant dense<0.000000e+00> : vector<5x2xf32>
    %320 = tpu.matmul %319, %318, %cst_247 {dimension_numbers = #tpu.dot_dimension_numbers<[1], [0], [0], [1], [0, 0, 1, 1], [], []>} : vector<5x16xbf16>, vector<16x2xbf16>, vector<5x2xf32> -> vector<5x2xf32>
    %cst_248 = arith.constant 5.000000e-01 : f32
    %321 = vector.broadcast %cst_248 : f32 to vector<5x2xf32>
    %322 = arith.mulf %321, %320 : vector<5x2xf32>
    %cst_249 = arith.constant 0.707106769 : f32
    %323 = vector.broadcast %cst_249 : f32 to vector<5x2xf32>
    %324 = arith.mulf %320, %323 : vector<5x2xf32>
    %325 = math.erf %324 : vector<5x2xf32>
    %cst_250 = arith.constant 1.000000e+00 : f32
    %326 = vector.broadcast %cst_250 : f32 to vector<5x2xf32>
    %327 = arith.addf %326, %325 : vector<5x2xf32>
    %328 = arith.mulf %322, %327 : vector<5x2xf32>
    %329 = arith.truncf %328 : vector<5x2xf32> to vector<5x2xbf16>
    %c0_251 = arith.constant 0 : index
    %c0_252 = arith.constant 0 : index
    %c0_253 = arith.constant 0 : index
    %330 = vector.load %arg21[%c0_251, %c0_252, %c0_253] : memref<1x2x2xbf16, #tpu.memory_space<vmem>>, vector<1x2x2xbf16>
    %331 = vector.shape_cast %330 : vector<1x2x2xbf16> to vector<2x2xbf16>
    %cst_254 = arith.constant dense<0.000000e+00> : vector<5x2xf32>
    %332 = tpu.matmul %329, %331, %cst_254 {dimension_numbers = #tpu.dot_dimension_numbers<[1], [0], [0], [1], [0, 0, 1, 1], [], []>} : vector<5x2xbf16>, vector<2x2xbf16>, vector<5x2xf32> -> vector<5x2xf32>
    %c0_255 = arith.constant 0 : index
    %c0_256 = arith.constant 0 : index
    %c0_257 = arith.constant 0 : index
    %333 = vector.load %arg18[%c0_255, %c0_256, %c0_257] : memref<1x5x5xbf16, #tpu.memory_space<vmem>>, vector<1x5x5xbf16>
    %334 = vector.shape_cast %333 : vector<1x5x5xbf16> to vector<5x5xbf16>
    %335 = arith.truncf %332 : vector<5x2xf32> to vector<5x2xbf16>
    %cst_258 = arith.constant dense<0.000000e+00> : vector<5x2xf32>
    %336 = tpu.matmul %334, %335, %cst_258 {dimension_numbers = #tpu.dot_dimension_numbers<[1], [0], [0], [1], [0, 0, 1, 1], [], []>} : vector<5x5xbf16>, vector<5x2xbf16>, vector<5x2xf32> -> vector<5x2xf32>
    %cst_259 = arith.constant 5.000000e-01 : f32
    %337 = vector.broadcast %cst_259 : f32 to vector<5x2xf32>
    %338 = arith.mulf %337, %336 : vector<5x2xf32>
    %cst_260 = arith.constant 0.707106769 : f32
    %339 = vector.broadcast %cst_260 : f32 to vector<5x2xf32>
    %340 = arith.mulf %336, %339 : vector<5x2xf32>
    %341 = math.erf %340 : vector<5x2xf32>
    %cst_261 = arith.constant 1.000000e+00 : f32
    %342 = vector.broadcast %cst_261 : f32 to vector<5x2xf32>
    %343 = arith.addf %342, %341 : vector<5x2xf32>
    %344 = arith.mulf %338, %343 : vector<5x2xf32>
    %345 = arith.truncf %344 : vector<5x2xf32> to vector<5x2xbf16>
    %c0_262 = arith.constant 0 : index
    %c0_263 = arith.constant 0 : index
    %346 = vector.load %arg19[%c0_262, %c0_263] : memref<20x5xbf16, #tpu.memory_space<vmem>>, vector<20x5xbf16>
    %cst_264 = arith.constant dense<0.000000e+00> : vector<20x2xf32>
    %347 = tpu.matmul %346, %345, %cst_264 {dimension_numbers = #tpu.dot_dimension_numbers<[1], [0], [0], [1], [0, 0, 1, 1], [], []>} : vector<20x5xbf16>, vector<5x2xbf16>, vector<20x2xf32> -> vector<20x2xf32>
    %cst_265 = arith.constant 5.000000e-01 : f32
    %348 = vector.broadcast %cst_265 : f32 to vector<20x2xf32>
    %349 = arith.mulf %348, %347 : vector<20x2xf32>
    %cst_266 = arith.constant 0.707106769 : f32
    %350 = vector.broadcast %cst_266 : f32 to vector<20x2xf32>
    %351 = arith.mulf %347, %350 : vector<20x2xf32>
    %352 = math.erf %351 : vector<20x2xf32>
    %cst_267 = arith.constant 1.000000e+00 : f32
    %353 = vector.broadcast %cst_267 : f32 to vector<20x2xf32>
    %354 = arith.addf %353, %352 : vector<20x2xf32>
    %355 = arith.mulf %349, %354 : vector<20x2xf32>
    %c0_268 = arith.constant 0 : index
    %c0_269 = arith.constant 0 : index
    %c0_270 = arith.constant 0 : index
    %356 = vector.load %arg21[%c0_268, %c0_269, %c0_270] : memref<1x2x2xbf16, #tpu.memory_space<vmem>>, vector<1x2x2xbf16>
    %357 = vector.shape_cast %356 : vector<1x2x2xbf16> to vector<2x2xbf16>
    %cst_271 = arith.constant dense<0.000000e+00> : vector<16x2xf32>
    %358 = tpu.matmul %318, %357, %cst_271 {dimension_numbers = #tpu.dot_dimension_numbers<[1], [0], [0], [1], [0, 0, 1, 1], [], []>} : vector<16x2xbf16>, vector<2x2xbf16>, vector<16x2xf32> -> vector<16x2xf32>
    %359 = arith.truncf %358 : vector<16x2xf32> to vector<16x2xbf16>
    %c0_272 = arith.constant 0 : index
    %c0_273 = arith.constant 0 : index
    %360 = vector.load %arg20[%c0_272, %c0_273] : memref<20x16xbf16, #tpu.memory_space<vmem>>, vector<20x16xbf16>
    %cst_274 = arith.constant dense<0.000000e+00> : vector<20x2xf32>
    %361 = tpu.matmul %360, %359, %cst_274 {dimension_numbers = #tpu.dot_dimension_numbers<[1], [0], [0], [1], [0, 0, 1, 1], [], []>} : vector<20x16xbf16>, vector<16x2xbf16>, vector<20x2xf32> -> vector<20x2xf32>
    %362 = arith.addf %355, %361 : vector<20x2xf32>
    %cst_275 = arith.constant 5.000000e-01 : f32
    %363 = vector.broadcast %cst_275 : f32 to vector<20x2xf32>
    %364 = arith.mulf %363, %362 : vector<20x2xf32>
    %cst_276 = arith.constant 0.707106769 : f32
    %365 = vector.broadcast %cst_276 : f32 to vector<20x2xf32>
    %366 = arith.mulf %362, %365 : vector<20x2xf32>
    %367 = math.erf %366 : vector<20x2xf32>
    %cst_277 = arith.constant 1.000000e+00 : f32
    %368 = vector.broadcast %cst_277 : f32 to vector<20x2xf32>
    %369 = arith.addf %368, %367 : vector<20x2xf32>
    %370 = arith.mulf %364, %369 : vector<20x2xf32>
    %371 = arith.truncf %370 : vector<20x2xf32> to vector<20x2xbf16>
    %c0_278 = arith.constant 0 : index
    %c0_279 = arith.constant 0 : index
    %372 = vector.load %arg22[%c0_278, %c0_279] : memref<6x20xbf16, #tpu.memory_space<vmem>>, vector<6x20xbf16>
    %cst_280 = arith.constant dense<0.000000e+00> : vector<6x2xf32>
    %373 = tpu.matmul %372, %371, %cst_280 {dimension_numbers = #tpu.dot_dimension_numbers<[1], [0], [0], [1], [0, 0, 1, 1], [], []>} : vector<6x20xbf16>, vector<20x2xbf16>, vector<6x2xf32> -> vector<6x2xf32>
    %cst_281 = arith.constant 5.000000e-01 : f32
    %374 = vector.broadcast %cst_281 : f32 to vector<6x2xf32>
    %375 = arith.mulf %374, %373 : vector<6x2xf32>
    %cst_282 = arith.constant 0.707106769 : f32
    %376 = vector.broadcast %cst_282 : f32 to vector<6x2xf32>
    %377 = arith.mulf %373, %376 : vector<6x2xf32>
    %378 = math.erf %377 : vector<6x2xf32>
    %cst_283 = arith.constant 1.000000e+00 : f32
    %379 = vector.broadcast %cst_283 : f32 to vector<6x2xf32>
    %380 = arith.addf %379, %378 : vector<6x2xf32>
    %381 = arith.mulf %375, %380 : vector<6x2xf32>
    %382 = arith.truncf %381 : vector<6x2xf32> to vector<6x2xbf16>
    %c0_284 = arith.constant 0 : index
    %c0_285 = arith.constant 0 : index
    %c0_286 = arith.constant 0 : index
    %383 = vector.load %arg26[%c0_284, %c0_285, %c0_286] : memref<1x2x2xbf16, #tpu.memory_space<vmem>>, vector<1x2x2xbf16>
    %384 = vector.shape_cast %383 : vector<1x2x2xbf16> to vector<2x2xbf16>
    %cst_287 = arith.constant dense<0.000000e+00> : vector<6x2xf32>
    %385 = tpu.matmul %382, %384, %cst_287 {dimension_numbers = #tpu.dot_dimension_numbers<[1], [0], [0], [1], [0, 0, 1, 1], [], []>} : vector<6x2xbf16>, vector<2x2xbf16>, vector<6x2xf32> -> vector<6x2xf32>
    %c0_288 = arith.constant 0 : index
    %c0_289 = arith.constant 0 : index
    %c0_290 = arith.constant 0 : index
    %386 = vector.load %arg23[%c0_288, %c0_289, %c0_290] : memref<1x6x6xbf16, #tpu.memory_space<vmem>>, vector<1x6x6xbf16>
    %387 = vector.shape_cast %386 : vector<1x6x6xbf16> to vector<6x6xbf16>
    %388 = arith.truncf %385 : vector<6x2xf32> to vector<6x2xbf16>
    %cst_291 = arith.constant dense<0.000000e+00> : vector<6x2xf32>
    %389 = tpu.matmul %387, %388, %cst_291 {dimension_numbers = #tpu.dot_dimension_numbers<[1], [0], [0], [1], [0, 0, 1, 1], [], []>} : vector<6x6xbf16>, vector<6x2xbf16>, vector<6x2xf32> -> vector<6x2xf32>
    %cst_292 = arith.constant 5.000000e-01 : f32
    %390 = vector.broadcast %cst_292 : f32 to vector<6x2xf32>
    %391 = arith.mulf %390, %389 : vector<6x2xf32>
    %cst_293 = arith.constant 0.707106769 : f32
    %392 = vector.broadcast %cst_293 : f32 to vector<6x2xf32>
    %393 = arith.mulf %389, %392 : vector<6x2xf32>
    %394 = math.erf %393 : vector<6x2xf32>
    %cst_294 = arith.constant 1.000000e+00 : f32
    %395 = vector.broadcast %cst_294 : f32 to vector<6x2xf32>
    %396 = arith.addf %395, %394 : vector<6x2xf32>
    %397 = arith.mulf %391, %396 : vector<6x2xf32>
    %398 = arith.truncf %397 : vector<6x2xf32> to vector<6x2xbf16>
    %c0_295 = arith.constant 0 : index
    %c0_296 = arith.constant 0 : index
    %399 = vector.load %arg24[%c0_295, %c0_296] : memref<24x6xbf16, #tpu.memory_space<vmem>>, vector<24x6xbf16>
    %cst_297 = arith.constant dense<0.000000e+00> : vector<24x2xf32>
    %400 = tpu.matmul %399, %398, %cst_297 {dimension_numbers = #tpu.dot_dimension_numbers<[1], [0], [0], [1], [0, 0, 1, 1], [], []>} : vector<24x6xbf16>, vector<6x2xbf16>, vector<24x2xf32> -> vector<24x2xf32>
    %cst_298 = arith.constant 5.000000e-01 : f32
    %401 = vector.broadcast %cst_298 : f32 to vector<24x2xf32>
    %402 = arith.mulf %401, %400 : vector<24x2xf32>
    %cst_299 = arith.constant 0.707106769 : f32
    %403 = vector.broadcast %cst_299 : f32 to vector<24x2xf32>
    %404 = arith.mulf %400, %403 : vector<24x2xf32>
    %405 = math.erf %404 : vector<24x2xf32>
    %cst_300 = arith.constant 1.000000e+00 : f32
    %406 = vector.broadcast %cst_300 : f32 to vector<24x2xf32>
    %407 = arith.addf %406, %405 : vector<24x2xf32>
    %408 = arith.mulf %402, %407 : vector<24x2xf32>
    %c0_301 = arith.constant 0 : index
    %c0_302 = arith.constant 0 : index
    %c0_303 = arith.constant 0 : index
    %409 = vector.load %arg26[%c0_301, %c0_302, %c0_303] : memref<1x2x2xbf16, #tpu.memory_space<vmem>>, vector<1x2x2xbf16>
    %410 = vector.shape_cast %409 : vector<1x2x2xbf16> to vector<2x2xbf16>
    %cst_304 = arith.constant dense<0.000000e+00> : vector<20x2xf32>
    %411 = tpu.matmul %371, %410, %cst_304 {dimension_numbers = #tpu.dot_dimension_numbers<[1], [0], [0], [1], [0, 0, 1, 1], [], []>} : vector<20x2xbf16>, vector<2x2xbf16>, vector<20x2xf32> -> vector<20x2xf32>
    %412 = arith.truncf %411 : vector<20x2xf32> to vector<20x2xbf16>
    %c0_305 = arith.constant 0 : index
    %c0_306 = arith.constant 0 : index
    %413 = vector.load %arg25[%c0_305, %c0_306] : memref<24x20xbf16, #tpu.memory_space<vmem>>, vector<24x20xbf16>
    %cst_307 = arith.constant dense<0.000000e+00> : vector<24x2xf32>
    %414 = tpu.matmul %413, %412, %cst_307 {dimension_numbers = #tpu.dot_dimension_numbers<[1], [0], [0], [1], [0, 0, 1, 1], [], []>} : vector<24x20xbf16>, vector<20x2xbf16>, vector<24x2xf32> -> vector<24x2xf32>
    %415 = arith.addf %408, %414 : vector<24x2xf32>
    %cst_308 = arith.constant 5.000000e-01 : f32
    %416 = vector.broadcast %cst_308 : f32 to vector<24x2xf32>
    %417 = arith.mulf %416, %415 : vector<24x2xf32>
    %cst_309 = arith.constant 0.707106769 : f32
    %418 = vector.broadcast %cst_309 : f32 to vector<24x2xf32>
    %419 = arith.mulf %415, %418 : vector<24x2xf32>
    %420 = math.erf %419 : vector<24x2xf32>
    %cst_310 = arith.constant 1.000000e+00 : f32
    %421 = vector.broadcast %cst_310 : f32 to vector<24x2xf32>
    %422 = arith.addf %421, %420 : vector<24x2xf32>
    %423 = arith.mulf %417, %422 : vector<24x2xf32>
    %c0_311 = arith.constant 0 : index
    %c0_312 = arith.constant 0 : index
    %424 = vector.load %arg27[%c0_311, %c0_312] : memref<24x2xf32, #tpu.memory_space<vmem>>, vector<24x2xf32>
    tpu.vector_store %arg27[%c0_311, %c0_312], %423 {strides = array<i32>} : memref<24x2xf32, #tpu.memory_space<vmem>>, vector<24x2xf32>,
    return
  }
}

</mosaic_0001>

<llo_original>
// kernel: resnet_forward.2
$region0: #{resnet_forward.2}
  #allocation0 [shape = 'u32[]', space=smem, size = 0x4, offset = 0x4, fixed_abs, tag = 'smem constant byte address 0x4 - core index']
  #allocation1 [shape = 'u32[72,128]{1,0:T(1,128)}', space=vmem, size = 0x9000, scoped, tag = 'internal scratch']
  %s0 = inlined_call_operand.vmem [shape: bf16[75,578], index: 0, kind: input, shape index: {}]
  %s1 = inlined_call_operand.vmem [shape: bf16[64,75], index: 1, kind: input, shape index: {}]
  %s2 = inlined_call_operand.vmem [shape: bf16[64,578], index: 2, kind: output, shape index: {}]
  %s3 = sld [smem:[#allocation0]]
  $region18: #{resnet_forward.2} parent=0
    _
  %s5 = ssub.s32 1, %s3
  %s6 = scalar_select 0, %s5, %s3
  // Predicated region
  $region2: #{resnet_forward.2} parent=0 // pred_check
    _
  $region3: #{resnet_forward.2} parent=0 // pred_check_branch
    %8 = sbr.rel (0) target = $region5
  $region4: #{resnet_forward.2} parent=0 // pred_region
    _
  $region5: #{resnet_forward.2} parent=0 // pred_fallthru
    _
  // Predicated region
  $region6: #{resnet_forward.2} parent=0 // pred_check
    _
  $region7: #{resnet_forward.2} parent=0 // pred_check_branch
    %10 = sbr.rel (0) target = $region9
  $region8: #{resnet_forward.2} parent=0 // pred_region
    _
  $region9: #{resnet_forward.2} parent=0 // pred_fallthru
    _
  %v12 = vld [vmem:[%s1] sm:$0xf]
  %v13 = vld [vmem:[%s1 + $0x4] sm:$0xf]
  %v14 = vld [vmem:[%s1 + $0x8] sm:$0xf]
  %v15 = vld [vmem:[%s1 + $0xc] sm:$0xf]
  %v16 = vld [vmem:[%s1 + $0x10] sm:$0xf]
  %v17 = vld [vmem:[%s1 + $0x14] sm:$0xf]
  %v18 = vld [vmem:[%s1 + $0x18] sm:$0xf]
  %v19 = vld [vmem:[%s1 + $0x1c] sm:$0xf]
  %v20 = vld [vmem:[%s0] sm:$0xff]
  %v21 = vld [vmem:[%s0 + $0x8] sm:$0xff]
  %v22 = vld [vmem:[%s0 + $0x10] sm:$0xf]
  %v23 = vld [vmem:[%s0 + $0x14] sm:$0xff]
  %v24 = vld [vmem:[%s0 + $0x1c] sm:$0xff]
  %v25 = vld [vmem:[%s0 + $0x24] sm:$0xf]
  %v26 = vld [vmem:[%s0 + $0x28] sm:$0xff]
  %v27 = vld [vmem:[%s0 + $0x30] sm:$0xff]
  %v28 = vld [vmem:[%s0 + $0x38] sm:$0xf]
  %v29 = vld [vmem:[%s0 + $0x3c] sm:$0xff]
  %v30 = vld [vmem:[%s0 + $0x44] sm:$0xff]
  %v31 = vld [vmem:[%s0 + $0x4c] sm:$0xf]
  %v32 = vld [vmem:[%s0 + $0x50] sm:$0xff]
  %v33 = vld [vmem:[%s0 + $0x58] sm:$0xff]
  %v34 = vld [vmem:[%s0 + $0x60] sm:$0xf]
  %v35 = vld [vmem:[%s0 + $0x64] sm:$0xff]
  %v36 = vld [vmem:[%s0 + $0x6c] sm:$0xff]
  %v37 = vld [vmem:[%s0 + $0x74] sm:$0xf]
  %v38 = vld [vmem:[%s0 + $0x78] sm:$0xff]
  %v39 = vld [vmem:[%s0 + $0x80] sm:$0xff]
  %v40 = vld [vmem:[%s0 + $0x88] sm:$0xf]
  %v41 = vld [vmem:[%s0 + $0x8c] sm:$0xff]
  %v42 = vld [vmem:[%s0 + $0x94] sm:$0xff]
  %v43 = vld [vmem:[%s0 + $0x9c] sm:$0xf]
  %v44 = vld [vmem:[%s0 + $0xa0] sm:$0xff]
  %v45 = vld [vmem:[%s0 + $0xa8] sm:$0xff]
  %v46 = vld [vmem:[%s0 + $0xb0] sm:$0xf]
  %v47 = vld [vmem:[%s0 + $0xb4] sm:$0x33]
  %v48 = vld [vmem:[%s0 + $0xbc] sm:$0x33]
  %v49 = vld [vmem:[%s0 + $0xc4] sm:$0x3]
  %v58 = vunpack.c.l.b16 %v12
  %v59 = vunpack.c.l.b16 %v13
  %v60 = vunpack.c.l.b16 %v14
  %v61 = vunpack.c.l.b16 %v15
  %v62 = vunpack.c.l.b16 %v16
  %v63 = vunpack.c.l.b16 %v17
  %v64 = vunpack.c.l.b16 %v18
  %v65 = vunpack.c.l.b16 %v19
  %v66 = vpack.c.b16 %v59, %v58
  %v67 = vpack.c.b16 %v61, %v60
  %v68 = vpack.c.b16 %v63, %v62
  %v69 = vpack.c.b16 %v65, %v64
  %v100 = vunpack.c.l.b16 %v20
  %v101 = vunpack.c.h.b16 %v20
  %v102 = vunpack.c.l.b16 %v21
  %v103 = vunpack.c.h.b16 %v21
  %v104 = vunpack.c.l.b16 %v22
  %v105 = vunpack.c.l.b16 %v23
  %v106 = vunpack.c.h.b16 %v23
  %v107 = vunpack.c.l.b16 %v24
  %v108 = vunpack.c.h.b16 %v24
  %v109 = vunpack.c.l.b16 %v25
  %v110 = vunpack.c.l.b16 %v26
  %v111 = vunpack.c.h.b16 %v26
  %v112 = vunpack.c.l.b16 %v27
  %v113 = vunpack.c.h.b16 %v27
  %v114 = vunpack.c.l.b16 %v28
  %v115 = vunpack.c.l.b16 %v29
  %v116 = vunpack.c.h.b16 %v29
  %v117 = vunpack.c.l.b16 %v30
  %v118 = vunpack.c.h.b16 %v30
  %v119 = vunpack.c.l.b16 %v31
  %v120 = vunpack.c.l.b16 %v32
  %v121 = vunpack.c.h.b16 %v32
  %v122 = vunpack.c.l.b16 %v33
  %v123 = vunpack.c.h.b16 %v33
  %v124 = vunpack.c.l.b16 %v34
  %v125 = vunpack.c.l.b16 %v35
  %v126 = vunpack.c.h.b16 %v35
  %v127 = vunpack.c.l.b16 %v36
  %v128 = vunpack.c.h.b16 %v36
  %v129 = vunpack.c.l.b16 %v37
  %v130 = vunpack.c.l.b16 %v38
  %v131 = vunpack.c.h.b16 %v38
  %v132 = vunpack.c.l.b16 %v39
  %v133 = vunpack.c.h.b16 %v39
  %v134 = vunpack.c.l.b16 %v40
  %v135 = vunpack.c.l.b16 %v41
  %v136 = vunpack.c.h.b16 %v41
  %v137 = vunpack.c.l.b16 %v42
  %v138 = vunpack.c.h.b16 %v42
  %v139 = vunpack.c.l.b16 %v43
  %v140 = vunpack.c.l.b16 %v44
  %v141 = vunpack.c.h.b16 %v44
  %v142 = vunpack.c.l.b16 %v45
  %v143 = vunpack.c.h.b16 %v45
  %v144 = vunpack.c.l.b16 %v46
  %v145 = vunpack.c.l.b16 %v47
  %v146 = vunpack.c.h.b16 %v47
  %v147 = vunpack.c.l.b16 %v48
  %v148 = vunpack.c.h.b16 %v48
  %v149 = vunpack.c.l.b16 %v49
  %v150 = vpack.c.b16 %v105, %v100
  %v151 = vpack.c.b16 %v106, %v101
  %v152 = vpack.c.b16 %v107, %v102
  %v153 = vpack.c.b16 %v108, %v103
  %v154 = vpack.c.b16 %v109, %v104
  %v155 = vpack.c.b16 %v115, %v110
  %v156 = vpack.c.b16 %v116, %v111
  %v157 = vpack.c.b16 %v117, %v112
  %v158 = vpack.c.b16 %v118, %v113
  %v159 = vpack.c.b16 %v119, %v114
  %v160 = vpack.c.b16 %v125, %v120
  %v161 = vpack.c.b16 %v126, %v121
  %v162 = vpack.c.b16 %v127, %v122
  %v163 = vpack.c.b16 %v128, %v123
  %v164 = vpack.c.b16 %v129, %v124
  %v165 = vpack.c.b16 %v135, %v130
  %v166 = vpack.c.b16 %v136, %v131
  %v167 = vpack.c.b16 %v137, %v132
  %v168 = vpack.c.b16 %v138, %v133
  %v169 = vpack.c.b16 %v139, %v134
  %v170 = vpack.c.b16 %v145, %v140
  %v171 = vpack.c.b16 %v146, %v141
  %v172 = vpack.c.b16 %v147, %v142
  %v173 = vpack.c.b16 %v148, %v143
  %v174 = vpack.c.b16 %v149, %v144
  %vm195 = vcmask 613376
  %v197 = vsel %vm195, %v66, 0
  %v200 = vsel %vm195, %v67, 0
  %v203 = vsel %vm195, %v68, 0
  %v206 = vsel %vm195, %v69, 0
  %vm208 = vcmask 1044480
  %vm209 = vcmask 1045504
  %v210 = vsel %vm208, 4294967295, 65535
  %v211 = vsel %vm209, %v210, 0
  %v213 = vand.u32 %v170, %v211
  %v216 = vand.u32 %v171, %v211
  %v219 = vand.u32 %v172, %v211
  %v222 = vand.u32 %v173, %v211
  %v225 = vand.u32 %v174, %v211
  %227 = vmatpush.bf16.msra.mxu0 0
  %228 = vmatpush.bf16.msra.mxu0 0
  %229 = vmatpush.bf16.msra.mxu0 0
  %230 = vmatpush.bf16.msra.mxu0 %v213
  %231 = vmatpush.bf16.msra.mxu0 %v165
  %232 = vmatpush.bf16.msra.mxu0 %v160
  %233 = vmatpush.bf16.msra.mxu0 %v155
  %234 = vmatpush.bf16.msra.mxu0 %v150
  %235 = vmatmul.bf16.gmra.mxu0 %v197
  %v236 = vpop.f32.mrf.mxu0
  %v237 = vadd.f32 0.0, %v236
  %v238 = vpop.f32.mrf.mxu0
  %v239 = vadd.f32 0.0, %v238
  %240 = vmatmul.bf16.gmra.mxu0 %v200
  %v241 = vpop.f32.mrf.mxu0
  %v242 = vadd.f32 0.0, %v241
  %v243 = vpop.f32.mrf.mxu0
  %v244 = vadd.f32 0.0, %v243
  %245 = vmatmul.bf16.gmra.mxu0 %v203
  %v246 = vpop.f32.mrf.mxu0
  %v247 = vadd.f32 0.0, %v246
  %v248 = vpop.f32.mrf.mxu0
  %v249 = vadd.f32 0.0, %v248
  %250 = vmatmul.bf16.gmra.mxu0 %v206
  %v251 = vpop.f32.mrf.mxu0
  %v252 = vadd.f32 0.0, %v251
  %v253 = vpop.f32.mrf.mxu0
  %v254 = vadd.f32 0.0, %v253
  %255 = vdwg.mxu0
  %256 = vmatpush.bf16.msra.mxu0 0
  %257 = vmatpush.bf16.msra.mxu0 0
  %258 = vmatpush.bf16.msra.mxu0 0
  %259 = vmatpush.bf16.msra.mxu0 %v216
  %260 = vmatpush.bf16.msra.mxu0 %v166
  %261 = vmatpush.bf16.msra.mxu0 %v161
  %262 = vmatpush.bf16.msra.mxu0 %v156
  %263 = vmatpush.bf16.msra.mxu0 %v151
  %264 = vmatmul.bf16.gmra.mxu0 %v197
  %v265 = vpop.f32.mrf.mxu0
  %v266 = vadd.f32 0.0, %v265
  %v267 = vpop.f32.mrf.mxu0
  %v268 = vadd.f32 0.0, %v267
  %269 = vmatmul.bf16.gmra.mxu0 %v200
  %v270 = vpop.f32.mrf.mxu0
  %v271 = vadd.f32 0.0, %v270
  %v272 = vpop.f32.mrf.mxu0
  %v273 = vadd.f32 0.0, %v272
  %274 = vmatmul.bf16.gmra.mxu0 %v203
  %v275 = vpop.f32.mrf.mxu0
  %v276 = vadd.f32 0.0, %v275
  %v277 = vpop.f32.mrf.mxu0
  %v278 = vadd.f32 0.0, %v277
  %279 = vmatmul.bf16.gmra.mxu0 %v206
  %v280 = vpop.f32.mrf.mxu0
  %v281 = vadd.f32 0.0, %v280
  %v282 = vpop.f32.mrf.mxu0
  %v283 = vadd.f32 0.0, %v282
  %284 = vdwg.mxu0
  %285 = vmatpush.bf16.msra.mxu0 0
  %286 = vmatpush.bf16.msra.mxu0 0
  %287 = vmatpush.bf16.msra.mxu0 0
  %288 = vmatpush.bf16.msra.mxu0 %v219
  %289 = vmatpush.bf16.msra.mxu0 %v167
  %290 = vmatpush.bf16.msra.mxu0 %v162
  %291 = vmatpush.bf16.msra.mxu0 %v157
  %292 = vmatpush.bf16.msra.mxu0 %v152
  %293 = vmatmul.bf16.gmra.mxu0 %v197
  %v294 = vpop.f32.mrf.mxu0
  %v295 = vadd.f32 0.0, %v294
  %v296 = vpop.f32.mrf.mxu0
  %v297 = vadd.f32 0.0, %v296
  %298 = vmatmul.bf16.gmra.mxu0 %v200
  %v299 = vpop.f32.mrf.mxu0
  %v300 = vadd.f32 0.0, %v299
  %v301 = vpop.f32.mrf.mxu0
  %v302 = vadd.f32 0.0, %v301
  %303 = vmatmul.bf16.gmra.mxu0 %v203
  %v304 = vpop.f32.mrf.mxu0
  %v305 = vadd.f32 0.0, %v304
  %v306 = vpop.f32.mrf.mxu0
  %v307 = vadd.f32 0.0, %v306
  %308 = vmatmul.bf16.gmra.mxu0 %v206
  %v309 = vpop.f32.mrf.mxu0
  %v310 = vadd.f32 0.0, %v309
  %v311 = vpop.f32.mrf.mxu0
  %v312 = vadd.f32 0.0, %v311
  %313 = vdwg.mxu0
  %314 = vmatpush.bf16.msra.mxu0 0
  %315 = vmatpush.bf16.msra.mxu0 0
  %316 = vmatpush.bf16.msra.mxu0 0
  %317 = vmatpush.bf16.msra.mxu0 %v222
  %318 = vmatpush.bf16.msra.mxu0 %v168
  %319 = vmatpush.bf16.msra.mxu0 %v163
  %320 = vmatpush.bf16.msra.mxu0 %v158
  %321 = vmatpush.bf16.msra.mxu0 %v153
  %322 = vmatmul.bf16.gmra.mxu0 %v197
  %v323 = vpop.f32.mrf.mxu0
  %v324 = vadd.f32 0.0, %v323
  %v325 = vpop.f32.mrf.mxu0
  %v326 = vadd.f32 0.0, %v325
  %327 = vmatmul.bf16.gmra.mxu0 %v200
  %v328 = vpop.f32.mrf.mxu0
  %v329 = vadd.f32 0.0, %v328
  %v330 = vpop.f32.mrf.mxu0
  %v331 = vadd.f32 0.0, %v330
  %332 = vmatmul.bf16.gmra.mxu0 %v203
  %v333 = vpop.f32.mrf.mxu0
  %v334 = vadd.f32 0.0, %v333
  %v335 = vpop.f32.mrf.mxu0
  %v336 = vadd.f32 0.0, %v335
  %337 = vmatmul.bf16.gmra.mxu0 %v206
  %v338 = vpop.f32.mrf.mxu0
  %v339 = vadd.f32 0.0, %v338
  %v340 = vpop.f32.mrf.mxu0
  %v341 = vadd.f32 0.0, %v340
  %342 = vdwg.mxu0
  %343 = vmatpush.bf16.msra.mxu0 0
  %344 = vmatpush.bf16.msra.mxu0 0
  %345 = vmatpush.bf16.msra.mxu0 0
  %346 = vmatpush.bf16.msra.mxu0 %v225
  %347 = vmatpush.bf16.msra.mxu0 %v169
  %348 = vmatpush.bf16.msra.mxu0 %v164
  %349 = vmatpush.bf16.msra.mxu0 %v159
  %350 = vmatpush.bf16.msra.mxu0 %v154
  %351 = vmatmul.bf16.gmra.mxu0 %v197
  %v352 = vpop.f32.mrf.mxu0
  %v353 = vadd.f32 0.0, %v352
  %v354 = vpop.f32.mrf.mxu0
  %v355 = vadd.f32 0.0, %v354
  %356 = vmatmul.bf16.gmra.mxu0 %v200
  %v357 = vpop.f32.mrf.mxu0
  %v358 = vadd.f32 0.0, %v357
  %v359 = vpop.f32.mrf.mxu0
  %v360 = vadd.f32 0.0, %v359
  %361 = vmatmul.bf16.gmra.mxu0 %v203
  %v362 = vpop.f32.mrf.mxu0
  %v363 = vadd.f32 0.0, %v362
  %v364 = vpop.f32.mrf.mxu0
  %v365 = vadd.f32 0.0, %v364
  %366 = vmatmul.bf16.gmra.mxu0 %v206
  %v367 = vpop.f32.mrf.mxu0
  %v368 = vadd.f32 0.0, %v367
  %v369 = vpop.f32.mrf.mxu0
  %v370 = vadd.f32 0.0, %v369
  %371 = vdwg.mxu0
  %v372 = vmul.f32 %v237, 0.5
  %v373 = vmul.f32 %v266, 0.5
  %v374 = vmul.f32 %v295, 0.5
  %v375 = vmul.f32 %v324, 0.5
  %v376 = vmul.f32 %v353, 0.5
  %v377 = vmul.f32 %v239, 0.5
  %v378 = vmul.f32 %v268, 0.5
  %v379 = vmul.f32 %v297, 0.5
  %v380 = vmul.f32 %v326, 0.5
  %v381 = vmul.f32 %v355, 0.5
  %v382 = vmul.f32 %v242, 0.5
  %v383 = vmul.f32 %v271, 0.5
  %v384 = vmul.f32 %v300, 0.5
  %v385 = vmul.f32 %v329, 0.5
  %v386 = vmul.f32 %v358, 0.5
  %v387 = vmul.f32 %v244, 0.5
  %v388 = vmul.f32 %v273, 0.5
  %v389 = vmul.f32 %v302, 0.5
  %v390 = vmul.f32 %v331, 0.5
  %v391 = vmul.f32 %v360, 0.5
  %v392 = vmul.f32 %v247, 0.5
  %v393 = vmul.f32 %v276, 0.5
  %v394 = vmul.f32 %v305, 0.5
  %v395 = vmul.f32 %v334, 0.5
  %v396 = vmul.f32 %v363, 0.5
  %v397 = vmul.f32 %v249, 0.5
  %v398 = vmul.f32 %v278, 0.5
  %v399 = vmul.f32 %v307, 0.5
  %v400 = vmul.f32 %v336, 0.5
  %v401 = vmul.f32 %v365, 0.5
  %v402 = vmul.f32 %v252, 0.5
  %v403 = vmul.f32 %v281, 0.5
  %v404 = vmul.f32 %v310, 0.5
  %v405 = vmul.f32 %v339, 0.5
  %v406 = vmul.f32 %v368, 0.5
  %v407 = vmul.f32 %v254, 0.5
  %v408 = vmul.f32 %v283, 0.5
  %v409 = vmul.f32 %v312, 0.5
  %v410 = vmul.f32 %v341, 0.5
  %v411 = vmul.f32 %v370, 0.5
  %v412 = vmul.f32 %v237, 0.70710677
  %v413 = vmul.f32 %v266, 0.70710677
  %v414 = vmul.f32 %v295, 0.70710677
  %v415 = vmul.f32 %v324, 0.70710677
  %v416 = vmul.f32 %v353, 0.70710677
  %v417 = vmul.f32 %v239, 0.70710677
  %v418 = vmul.f32 %v268, 0.70710677
  %v419 = vmul.f32 %v297, 0.70710677
  %v420 = vmul.f32 %v326, 0.70710677
  %v421 = vmul.f32 %v355, 0.70710677
  %v422 = vmul.f32 %v242, 0.70710677
  %v423 = vmul.f32 %v271, 0.70710677
  %v424 = vmul.f32 %v300, 0.70710677
  %v425 = vmul.f32 %v329, 0.70710677
  %v426 = vmul.f32 %v358, 0.70710677
  %v427 = vmul.f32 %v244, 0.70710677
  %v428 = vmul.f32 %v273, 0.70710677
  %v429 = vmul.f32 %v302, 0.70710677
  %v430 = vmul.f32 %v331, 0.70710677
  %v431 = vmul.f32 %v360, 0.70710677
  %v432 = vmul.f32 %v247, 0.70710677
  %v433 = vmul.f32 %v276, 0.70710677
  %v434 = vmul.f32 %v305, 0.70710677
  %v435 = vmul.f32 %v334, 0.70710677
  %v436 = vmul.f32 %v363, 0.70710677
  %v437 = vmul.f32 %v249, 0.70710677
  %v438 = vmul.f32 %v278, 0.70710677
  %v439 = vmul.f32 %v307, 0.70710677
  %v440 = vmul.f32 %v336, 0.70710677
  %v441 = vmul.f32 %v365, 0.70710677
  %v442 = vmul.f32 %v252, 0.70710677
  %v443 = vmul.f32 %v281, 0.70710677
  %v444 = vmul.f32 %v310, 0.70710677
  %v445 = vmul.f32 %v339, 0.70710677
  %v446 = vmul.f32 %v368, 0.70710677
  %v447 = vmul.f32 %v254, 0.70710677
  %v448 = vmul.f32 %v283, 0.70710677
  %v449 = vmul.f32 %v312, 0.70710677
  %v450 = vmul.f32 %v341, 0.70710677
  %v451 = vmul.f32 %v370, 0.70710677
  %v452 = vmul.f32 %v412, %v412
  %v453 = vmin.f32 16.0, %v452
  %v454 = vmul.f32 %v453, 2.1237322e-06
  %v455 = vadd.f32 %v454, 0.00028619796
  %v456 = vmul.f32 %v453, %v455
  %v457 = vadd.f32 %v456, 0.0036580483
  %v458 = vmul.f32 %v453, %v457
  %v459 = vadd.f32 %v458, 0.05243302
  %v460 = vmul.f32 %v453, %v459
  %v461 = vadd.f32 %v460, 0.18741608
  %v462 = vmul.f32 %v453, %v461
  %v463 = vadd.f32 %v462, 1.1283791
  %v464 = vmul.f32 %v412, %v463
  %v465 = vmul.f32 %v453, 3.8918573e-05
  %v466 = vadd.f32 %v465, 0.001143296
  %v467 = vmul.f32 %v453, %v466
  %v468 = vadd.f32 %v467, 0.014752088
  %v469 = vmul.f32 %v453, %v468
  %v470 = vadd.f32 %v469, 0.112945676
  %v471 = vmul.f32 %v453, %v470
  %v472 = vadd.f32 %v471, 0.4994258
  %v473 = vmul.f32 %v453, %v472
  %v474 = vadd.f32 %v473, 1.0
  %v475 = vrcp.pop %v474
  %v476 = vmul.f32 %v474, %v475
  %v477 = vsub.f32 1.0, %v476
  %v478 = vmul.f32 %v475, %v477
  %v479 = vadd.f32 %v475, %v478
  %vm480 = vweird.f32 %v474
  %vm481 = vweird.f32 %v475
  %vm482 = vmor %vm480, %vm481
  %v483 = vsel %vm482, %v475, %v479
  %v484 = vand.u32 2147483647, %v474
  %vm485 = vcmp.eq.f32.partialorder %v484, 8.507059e+37
  %v486 = vand.u32 %v474, 2147483648
  %v487 = vor.u32 1.1754944e-38, %v486
  %v488 = vsel %vm485, %v487, %v483
  %v489 = vmul.f32 %v464, %v488
  %v490 = vmin.f32 %v489, 1.0
  %v491 = vmax.f32 %v490, -1.0
  %v492 = vmul.f32 %v413, %v413
  %v493 = vmin.f32 16.0, %v492
  %v494 = vmul.f32 %v493, 2.1237322e-06
  %v495 = vadd.f32 %v494, 0.00028619796
  %v496 = vmul.f32 %v493, %v495
  %v497 = vadd.f32 %v496, 0.0036580483
  %v498 = vmul.f32 %v493, %v497
  %v499 = vadd.f32 %v498, 0.05243302
  %v500 = vmul.f32 %v493, %v499
  %v501 = vadd.f32 %v500, 0.18741608
  %v502 = vmul.f32 %v493, %v501
  %v503 = vadd.f32 %v502, 1.1283791
  %v504 = vmul.f32 %v413, %v503
  %v505 = vmul.f32 %v493, 3.8918573e-05
  %v506 = vadd.f32 %v505, 0.001143296
  %v507 = vmul.f32 %v493, %v506
  %v508 = vadd.f32 %v507, 0.014752088
  %v509 = vmul.f32 %v493, %v508
  %v510 = vadd.f32 %v509, 0.112945676
  %v511 = vmul.f32 %v493, %v510
  %v512 = vadd.f32 %v511, 0.4994258
  %v513 = vmul.f32 %v493, %v512
  %v514 = vadd.f32 %v513, 1.0
  %v515 = vrcp.pop %v514
  %v516 = vmul.f32 %v514, %v515
  %v517 = vsub.f32 1.0, %v516
  %v518 = vmul.f32 %v515, %v517
  %v519 = vadd.f32 %v515, %v518
  %vm520 = vweird.f32 %v514
  %vm521 = vweird.f32 %v515
  %vm522 = vmor %vm520, %vm521
  %v523 = vsel %vm522, %v515, %v519
  %v524 = vand.u32 2147483647, %v514
  %vm525 = vcmp.eq.f32.partialorder %v524, 8.507059e+37
  %v526 = vand.u32 %v514, 2147483648
  %v527 = vor.u32 1.1754944e-38, %v526
  %v528 = vsel %vm525, %v527, %v523
  %v529 = vmul.f32 %v504, %v528
  %v530 = vmin.f32 %v529, 1.0
  %v531 = vmax.f32 %v530, -1.0
  %v532 = vmul.f32 %v414, %v414
  %v533 = vmin.f32 16.0, %v532
  %v534 = vmul.f32 %v533, 2.1237322e-06
  %v535 = vadd.f32 %v534, 0.00028619796
  %v536 = vmul.f32 %v533, %v535
  %v537 = vadd.f32 %v536, 0.0036580483
  %v538 = vmul.f32 %v533, %v537
  %v539 = vadd.f32 %v538, 0.05243302
  %v540 = vmul.f32 %v533, %v539
  %v541 = vadd.f32 %v540, 0.18741608
  %v542 = vmul.f32 %v533, %v541
  %v543 = vadd.f32 %v542, 1.1283791
  %v544 = vmul.f32 %v414, %v543
  %v545 = vmul.f32 %v533, 3.8918573e-05
  %v546 = vadd.f32 %v545, 0.001143296
  %v547 = vmul.f32 %v533, %v546
  %v548 = vadd.f32 %v547, 0.014752088
  %v549 = vmul.f32 %v533, %v548
  %v550 = vadd.f32 %v549, 0.112945676
  %v551 = vmul.f32 %v533, %v550
  %v552 = vadd.f32 %v551, 0.4994258
  %v553 = vmul.f32 %v533, %v552
  %v554 = vadd.f32 %v553, 1.0
  %v555 = vrcp.pop %v554
  %v556 = vmul.f32 %v554, %v555
  %v557 = vsub.f32 1.0, %v556
  %v558 = vmul.f32 %v555, %v557
  %v559 = vadd.f32 %v555, %v558
  %vm560 = vweird.f32 %v554
  %vm561 = vweird.f32 %v555
  %vm562 = vmor %vm560, %vm561
  %v563 = vsel %vm562, %v555, %v559
  %v564 = vand.u32 2147483647, %v554
  %vm565 = vcmp.eq.f32.partialorder %v564, 8.507059e+37
  %v566 = vand.u32 %v554, 2147483648
  %v567 = vor.u32 1.1754944e-38, %v566
  %v568 = vsel %vm565, %v567, %v563
  %v569 = vmul.f32 %v544, %v568
  %v570 = vmin.f32 %v569, 1.0
  %v571 = vmax.f32 %v570, -1.0
  %v572 = vmul.f32 %v415, %v415
  %v573 = vmin.f32 16.0, %v572
  %v574 = vmul.f32 %v573, 2.1237322e-06
  %v575 = vadd.f32 %v574, 0.00028619796
  %v576 = vmul.f32 %v573, %v575
  %v577 = vadd.f32 %v576, 0.0036580483
  %v578 = vmul.f32 %v573, %v577
  %v579 = vadd.f32 %v578, 0.05243302
  %v580 = vmul.f32 %v573, %v579
  %v581 = vadd.f32 %v580, 0.18741608
  %v582 = vmul.f32 %v573, %v581
  %v583 = vadd.f32 %v582, 1.1283791
  %v584 = vmul.f32 %v415, %v583
  %v585 = vmul.f32 %v573, 3.8918573e-05
  %v586 = vadd.f32 %v585, 0.001143296
  %v587 = vmul.f32 %v573, %v586
  %v588 = vadd.f32 %v587, 0.014752088
  %v589 = vmul.f32 %v573, %v588
  %v590 = vadd.f32 %v589, 0.112945676
  %v591 = vmul.f32 %v573, %v590
  %v592 = vadd.f32 %v591, 0.4994258
  %v593 = vmul.f32 %v573, %v592
  %v594 = vadd.f32 %v593, 1.0
  %v595 = vrcp.pop %v594
  %v596 = vmul.f32 %v594, %v595
  %v597 = vsub.f32 1.0, %v596
  %v598 = vmul.f32 %v595, %v597
  %v599 = vadd.f32 %v595, %v598
  %vm600 = vweird.f32 %v594
  %vm601 = vweird.f32 %v595
  %vm602 = vmor %vm600, %vm601
  %v603 = vsel %vm602, %v595, %v599
  %v604 = vand.u32 2147483647, %v594
  %vm605 = vcmp.eq.f32.partialorder %v604, 8.507059e+37
  %v606 = vand.u32 %v594, 2147483648
  %v607 = vor.u32 1.1754944e-38, %v606
  %v608 = vsel %vm605, %v607, %v603
  %v609 = vmul.f32 %v584, %v608
  %v610 = vmin.f32 %v609, 1.0
  %v611 = vmax.f32 %v610, -1.0
  %v612 = vmul.f32 %v416, %v416
  %v613 = vmin.f32 16.0, %v612
  %v614 = vmul.f32 %v613, 2.1237322e-06
  %v615 = vadd.f32 %v614, 0.00028619796
  %v616 = vmul.f32 %v613, %v615
  %v617 = vadd.f32 %v616, 0.0036580483
  %v618 = vmul.f32 %v613, %v617
  %v619 = vadd.f32 %v618, 0.05243302
  %v620 = vmul.f32 %v613, %v619
  %v621 = vadd.f32 %v620, 0.18741608
  %v622 = vmul.f32 %v613, %v621
  %v623 = vadd.f32 %v622, 1.1283791
  %v624 = vmul.f32 %v416, %v623
  %v625 = vmul.f32 %v613, 3.8918573e-05
  %v626 = vadd.f32 %v625, 0.001143296
  %v627 = vmul.f32 %v613, %v626
  %v628 = vadd.f32 %v627, 0.014752088
  %v629 = vmul.f32 %v613, %v628
  %v630 = vadd.f32 %v629, 0.112945676
  %v631 = vmul.f32 %v613, %v630
  %v632 = vadd.f32 %v631, 0.4994258
  %v633 = vmul.f32 %v613, %v632
  %v634 = vadd.f32 %v633, 1.0
  %v635 = vrcp.pop %v634
  %v636 = vmul.f32 %v634, %v635
  %v637 = vsub.f32 1.0, %v636
  %v638 = vmul.f32 %v635, %v637
  %v639 = vadd.f32 %v635, %v638
  %vm640 = vweird.f32 %v634
  %vm641 = vweird.f32 %v635
  %vm642 = vmor %vm640, %vm641
  %v643 = vsel %vm642, %v635, %v639
  %v644 = vand.u32 2147483647, %v634
  %vm645 = vcmp.eq.f32.partialorder %v644, 8.507059e+37
  %v646 = vand.u32 %v634, 2147483648
  %v647 = vor.u32 1.1754944e-38, %v646
  %v648 = vsel %vm645, %v647, %v643
  %v649 = vmul.f32 %v624, %v648
  %v650 = vmin.f32 %v649, 1.0
  %v651 = vmax.f32 %v650, -1.0
  %v652 = vmul.f32 %v417, %v417
  %v653 = vmin.f32 16.0, %v652
  %v654 = vmul.f32 %v653, 2.1237322e-06
  %v655 = vadd.f32 %v654, 0.00028619796
  %v656 = vmul.f32 %v653, %v655
  %v657 = vadd.f32 %v656, 0.0036580483
  %v658 = vmul.f32 %v653, %v657
  %v659 = vadd.f32 %v658, 0.05243302
  %v660 = vmul.f32 %v653, %v659
  %v661 = vadd.f32 %v660, 0.18741608
  %v662 = vmul.f32 %v653, %v661
  %v663 = vadd.f32 %v662, 1.1283791
  %v664 = vmul.f32 %v417, %v663
  %v665 = vmul.f32 %v653, 3.8918573e-05
  %v666 = vadd.f32 %v665, 0.001143296
  %v667 = vmul.f32 %v653, %v666
  %v668 = vadd.f32 %v667, 0.014752088
  %v669 = vmul.f32 %v653, %v668
  %v670 = vadd.f32 %v669, 0.112945676
  %v671 = vmul.f32 %v653, %v670
  %v672 = vadd.f32 %v671, 0.4994258
  %v673 = vmul.f32 %v653, %v672
  %v674 = vadd.f32 %v673, 1.0
  %v675 = vrcp.pop %v674
  %v676 = vmul.f32 %v674, %v675
  %v677 = vsub.f32 1.0, %v676
  %v678 = vmul.f32 %v675, %v677
  %v679 = vadd.f32 %v675, %v678
  %vm680 = vweird.f32 %v674
  %vm681 = vweird.f32 %v675
  %vm682 = vmor %vm680, %vm681
  %v683 = vsel %vm682, %v675, %v679
  %v684 = vand.u32 2147483647, %v674
  %vm685 = vcmp.eq.f32.partialorder %v684, 8.507059e+37
  %v686 = vand.u32 %v674, 2147483648
  %v687 = vor.u32 1.1754944e-38, %v686
  %v688 = vsel %vm685, %v687, %v683
  %v689 = vmul.f32 %v664, %v688
  %v690 = vmin.f32 %v689, 1.0
  %v691 = vmax.f32 %v690, -1.0
  %v692 = vmul.f32 %v418, %v418
  %v693 = vmin.f32 16.0, %v692
  %v694 = vmul.f32 %v693, 2.1237322e-06
  %v695 = vadd.f32 %v694, 0.00028619796
  %v696 = vmul.f32 %v693, %v695
  %v697 = vadd.f32 %v696, 0.0036580483
  %v698 = vmul.f32 %v693, %v697
  %v699 = vadd.f32 %v698, 0.05243302
  %v700 = vmul.f32 %v693, %v699
  %v701 = vadd.f32 %v700, 0.18741608
  %v702 = vmul.f32 %v693, %v701
  %v703 = vadd.f32 %v702, 1.1283791
  %v704 = vmul.f32 %v418, %v703
  %v705 = vmul.f32 %v693, 3.8918573e-05
  %v706 = vadd.f32 %v705, 0.001143296
  %v707 = vmul.f32 %v693, %v706
  %v708 = vadd.f32 %v707, 0.014752088
  %v709 = vmul.f32 %v693, %v708
  %v710 = vadd.f32 %v709, 0.112945676
  %v711 = vmul.f32 %v693, %v710
  %v712 = vadd.f32 %v711, 0.4994258
  %v713 = vmul.f32 %v693, %v712
  %v714 = vadd.f32 %v713, 1.0
  %v715 = vrcp.pop %v714
  %v716 = vmul.f32 %v714, %v715
  %v717 = vsub.f32 1.0, %v716
  %v718 = vmul.f32 %v715, %v717
  %v719 = vadd.f32 %v715, %v718
  %vm720 = vweird.f32 %v714
  %vm721 = vweird.f32 %v715
  %vm722 = vmor %vm720, %vm721
  %v723 = vsel %vm722, %v715, %v719
  %v724 = vand.u32 2147483647, %v714
  %vm725 = vcmp.eq.f32.partialorder %v724, 8.507059e+37
  %v726 = vand.u32 %v714, 2147483648
  %v727 = vor.u32 1.1754944e-38, %v726
  %v728 = vsel %vm725, %v727, %v723
  %v729 = vmul.f32 %v704, %v728
  %v730 = vmin.f32 %v729, 1.0
  %v731 = vmax.f32 %v730, -1.0
  %v732 = vmul.f32 %v419, %v419
  %v733 = vmin.f32 16.0, %v732
  %v734 = vmul.f32 %v733, 2.1237322e-06
  %v735 = vadd.f32 %v734, 0.00028619796
  %v736 = vmul.f32 %v733, %v735
  %v737 = vadd.f32 %v736, 0.0036580483
  %v738 = vmul.f32 %v733, %v737
  %v739 = vadd.f32 %v738, 0.05243302
  %v740 = vmul.f32 %v733, %v739
  %v741 = vadd.f32 %v740, 0.18741608
  %v742 = vmul.f32 %v733, %v741
  %v743 = vadd.f32 %v742, 1.1283791
  %v744 = vmul.f32 %v419, %v743
  %v745 = vmul.f32 %v733, 3.8918573e-05
  %v746 = vadd.f32 %v745, 0.001143296
  %v747 = vmul.f32 %v733, %v746
  %v748 = vadd.f32 %v747, 0.014752088
  %v749 = vmul.f32 %v733, %v748
  %v750 = vadd.f32 %v749, 0.112945676
  %v751 = vmul.f32 %v733, %v750
  %v752 = vadd.f32 %v751, 0.4994258
  %v753 = vmul.f32 %v733, %v752
  %v754 = vadd.f32 %v753, 1.0
  %v755 = vrcp.pop %v754
  %v756 = vmul.f32 %v754, %v755
  %v757 = vsub.f32 1.0, %v756
  %v758 = vmul.f32 %v755, %v757
  %v759 = vadd.f32 %v755, %v758
  %vm760 = vweird.f32 %v754
  %vm761 = vweird.f32 %v755
  %vm762 = vmor %vm760, %vm761
  %v763 = vsel %vm762, %v755, %v759
  %v764 = vand.u32 2147483647, %v754
  %vm765 = vcmp.eq.f32.partialorder %v764, 8.507059e+37
  %v766 = vand.u32 %v754, 2147483648
  %v767 = vor.u32 1.1754944e-38, %v766
  %v768 = vsel %vm765, %v767, %v763
  %v769 = vmul.f32 %v744, %v768
  %v770 = vmin.f32 %v769, 1.0
  %v771 = vmax.f32 %v770, -1.0
  %v772 = vmul.f32 %v420, %v420
  %v773 = vmin.f32 16.0, %v772
  %v774 = vmul.f32 %v773, 2.1237322e-06
  %v775 = vadd.f32 %v774, 0.00028619796
  %v776 = vmul.f32 %v773, %v775
  %v777 = vadd.f32 %v776, 0.0036580483
  %v778 = vmul.f32 %v773, %v777
  %v779 = vadd.f32 %v778, 0.05243302
  %v780 = vmul.f32 %v773, %v779
  %v781 = vadd.f32 %v780, 0.18741608
  %v782 = vmul.f32 %v773, %v781
  %v783 = vadd.f32 %v782, 1.1283791
  %v784 = vmul.f32 %v420, %v783
  %v785 = vmul.f32 %v773, 3.8918573e-05
  %v786 = vadd.f32 %v785, 0.001143296
  %v787 = vmul.f32 %v773, %v786
  %v788 = vadd.f32 %v787, 0.014752088
  %v789 = vmul.f32 %v773, %v788
  %v790 = vadd.f32 %v789, 0.112945676
  %v791 = vmul.f32 %v773, %v790
  %v792 = vadd.f32 %v791, 0.4994258
  %v793 = vmul.f32 %v773, %v792
  %v794 = vadd.f32 %v793, 1.0
  %v795 = vrcp.pop %v794
  %v796 = vmul.f32 %v794, %v795
  %v797 = vsub.f32 1.0, %v796
  %v798 = vmul.f32 %v795, %v797
  %v799 = vadd.f32 %v795, %v798
  %vm800 = vweird.f32 %v794
  %vm801 = vweird.f32 %v795
  %vm802 = vmor %vm800, %vm801
  %v803 = vsel %vm802, %v795, %v799
  %v804 = vand.u32 2147483647, %v794
  %vm805 = vcmp.eq.f32.partialorder %v804, 8.507059e+37
  %v806 = vand.u32 %v794, 2147483648
  %v807 = vor.u32 1.1754944e-38, %v806
  %v808 = vsel %vm805, %v807, %v803
  %v809 = vmul.f32 %v784, %v808
  %v810 = vmin.f32 %v809, 1.0
  %v811 = vmax.f32 %v810, -1.0
  %v812 = vmul.f32 %v421, %v421
  %v813 = vmin.f32 16.0, %v812
  %v814 = vmul.f32 %v813, 2.1237322e-06
  %v815 = vadd.f32 %v814, 0.00028619796
  %v816 = vmul.f32 %v813, %v815
  %v817 = vadd.f32 %v816, 0.0036580483
  %v818 = vmul.f32 %v813, %v817
  %v819 = vadd.f32 %v818, 0.05243302
  %v820 = vmul.f32 %v813, %v819
  %v821 = vadd.f32 %v820, 0.18741608
  %v822 = vmul.f32 %v813, %v821
  %v823 = vadd.f32 %v822, 1.1283791
  %v824 = vmul.f32 %v421, %v823
  %v825 = vmul.f32 %v813, 3.8918573e-05
  %v826 = vadd.f32 %v825, 0.001143296
  %v827 = vmul.f32 %v813, %v826
  %v828 = vadd.f32 %v827, 0.014752088
  %v829 = vmul.f32 %v813, %v828
  %v830 = vadd.f32 %v829, 0.112945676
  %v831 = vmul.f32 %v813, %v830
  %v832 = vadd.f32 %v831, 0.4994258
  %v833 = vmul.f32 %v813, %v832
  %v834 = vadd.f32 %v833, 1.0
  %v835 = vrcp.pop %v834
  %v836 = vmul.f32 %v834, %v835
  %v837 = vsub.f32 1.0, %v836
  %v838 = vmul.f32 %v835, %v837
  %v839 = vadd.f32 %v835, %v838
  %vm840 = vweird.f32 %v834
  %vm841 = vweird.f32 %v835
  %vm842 = vmor %vm840, %vm841
  %v843 = vsel %vm842, %v835, %v839
  %v844 = vand.u32 2147483647, %v834
  %vm845 = vcmp.eq.f32.partialorder %v844, 8.507059e+37
  %v846 = vand.u32 %v834, 2147483648
  %v847 = vor.u32 1.1754944e-38, %v846
  %v848 = vsel %vm845, %v847, %v843
  %v849 = vmul.f32 %v824, %v848
  %v850 = vmin.f32 %v849, 1.0
  %v851 = vmax.f32 %v850, -1.0
  %v852 = vmul.f32 %v422, %v422
  %v853 = vmin.f32 16.0, %v852
  %v854 = vmul.f32 %v853, 2.1237322e-06
  %v855 = vadd.f32 %v854, 0.00028619796
  %v856 = vmul.f32 %v853, %v855
  %v857 = vadd.f32 %v856, 0.0036580483
  %v858 = vmul.f32 %v853, %v857
  %v859 = vadd.f32 %v858, 0.05243302
  %v860 = vmul.f32 %v853, %v859
  %v861 = vadd.f32 %v860, 0.18741608
  %v862 = vmul.f32 %v853, %v861
  %v863 = vadd.f32 %v862, 1.1283791
  %v864 = vmul.f32 %v422, %v863
  %v865 = vmul.f32 %v853, 3.8918573e-05
  %v866 = vadd.f32 %v865, 0.001143296
  %v867 = vmul.f32 %v853, %v866
  %v868 = vadd.f32 %v867, 0.014752088
  %v869 = vmul.f32 %v853, %v868
  %v870 = vadd.f32 %v869, 0.112945676
  %v871 = vmul.f32 %v853, %v870
  %v872 = vadd.f32 %v871, 0.4994258
  %v873 = vmul.f32 %v853, %v872
  %v874 = vadd.f32 %v873, 1.0
  %v875 = vrcp.pop %v874
  %v876 = vmul.f32 %v874, %v875
  %v877 = vsub.f32 1.0, %v876
  %v878 = vmul.f32 %v875, %v877
  %v879 = vadd.f32 %v875, %v878
  %vm880 = vweird.f32 %v874
  %vm881 = vweird.f32 %v875
  %vm882 = vmor %vm880, %vm881
  %v883 = vsel %vm882, %v875, %v879
  %v884 = vand.u32 2147483647, %v874
  %vm885 = vcmp.eq.f32.partialorder %v884, 8.507059e+37
  %v886 = vand.u32 %v874, 2147483648
  %v887 = vor.u32 1.1754944e-38, %v886
  %v888 = vsel %vm885, %v887, %v883
  %v889 = vmul.f32 %v864, %v888
  %v890 = vmin.f32 %v889, 1.0
  %v891 = vmax.f32 %v890, -1.0
  %v892 = vmul.f32 %v423, %v423
  %v893 = vmin.f32 16.0, %v892
  %v894 = vmul.f32 %v893, 2.1237322e-06
  %v895 = vadd.f32 %v894, 0.00028619796
  %v896 = vmul.f32 %v893, %v895
  %v897 = vadd.f32 %v896, 0.0036580483
  %v898 = vmul.f32 %v893, %v897
  %v899 = vadd.f32 %v898, 0.05243302
  %v900 = vmul.f32 %v893, %v899
  %v901 = vadd.f32 %v900, 0.18741608
  %v902 = vmul.f32 %v893, %v901
  %v903 = vadd.f32 %v902, 1.1283791
  %v904 = vmul.f32 %v423, %v903
  %v905 = vmul.f32 %v893, 3.8918573e-05
  %v906 = vadd.f32 %v905, 0.001143296
  %v907 = vmul.f32 %v893, %v906
  %v908 = vadd.f32 %v907, 0.014752088
  %v909 = vmul.f32 %v893, %v908
  %v910 = vadd.f32 %v909, 0.112945676
  %v911 = vmul.f32 %v893, %v910
  %v912 = vadd.f32 %v911, 0.4994258
  %v913 = vmul.f32 %v893, %v912
  %v914 = vadd.f32 %v913, 1.0
  %v915 = vrcp.pop %v914
  %v916 = vmul.f32 %v914, %v915
  %v917 = vsub.f32 1.0, %v916
  %v918 = vmul.f32 %v915, %v917
  %v919 = vadd.f32 %v915, %v918
  %vm920 = vweird.f32 %v914
  %vm921 = vweird.f32 %v915
  %vm922 = vmor %vm920, %vm921
  %v923 = vsel %vm922, %v915, %v919
  %v924 = vand.u32 2147483647, %v914
  %vm925 = vcmp.eq.f32.partialorder %v924, 8.507059e+37
  %v926 = vand.u32 %v914, 2147483648
  %v927 = vor.u32 1.1754944e-38, %v926
  %v928 = vsel %vm925, %v927, %v923
  %v929 = vmul.f32 %v904, %v928
  %v930 = vmin.f32 %v929, 1.0
  %v931 = vmax.f32 %v930, -1.0
  %v932 = vmul.f32 %v424, %v424
  %v933 = vmin.f32 16.0, %v932
  %v934 = vmul.f32 %v933, 2.1237322e-06
  %v935 = vadd.f32 %v934, 0.00028619796
  %v936 = vmul.f32 %v933, %v935
  %v937 = vadd.f32 %v936, 0.0036580483
  %v938 = vmul.f32 %v933, %v937
  %v939 = vadd.f32 %v938, 0.05243302
  %v940 = vmul.f32 %v933, %v939
  %v941 = vadd.f32 %v940, 0.18741608
  %v942 = vmul.f32 %v933, %v941
  %v943 = vadd.f32 %v942, 1.1283791
  %v944 = vmul.f32 %v424, %v943
  %v945 = vmul.f32 %v933, 3.8918573e-05
  %v946 = vadd.f32 %v945, 0.001143296
  %v947 = vmul.f32 %v933, %v946
  %v948 = vadd.f32 %v947, 0.014752088
  %v949 = vmul.f32 %v933, %v948
  %v950 = vadd.f32 %v949, 0.112945676
  %v951 = vmul.f32 %v933, %v950
  %v952 = vadd.f32 %v951, 0.4994258
  %v953 = vmul.f32 %v933, %v952
  %v954 = vadd.f32 %v953, 1.0
  %v955 = vrcp.pop %v954
  %v956 = vmul.f32 %v954, %v955
  %v957 = vsub.f32 1.0, %v956
  %v958 = vmul.f32 %v955, %v957
  %v959 = vadd.f32 %v955, %v958
  %vm960 = vweird.f32 %v954
  %vm961 = vweird.f32 %v955
  %vm962 = vmor %vm960, %vm961
  %v963 = vsel %vm962, %v955, %v959
  %v964 = vand.u32 2147483647, %v954
  %vm965 = vcmp.eq.f32.partialorder %v964, 8.507059e+37
  %v966 = vand.u32 %v954, 2147483648
  %v967 = vor.u32 1.1754944e-38, %v966
  %v968 = vsel %vm965, %v967, %v963
  %v969 = vmul.f32 %v944, %v968
  %v970 = vmin.f32 %v969, 1.0
  %v971 = vmax.f32 %v970, -1.0
  %v972 = vmul.f32 %v425, %v425
  %v973 = vmin.f32 16.0, %v972
  %v974 = vmul.f32 %v973, 2.1237322e-06
  %v975 = vadd.f32 %v974, 0.00028619796
  %v976 = vmul.f32 %v973, %v975
  %v977 = vadd.f32 %v976, 0.0036580483
  %v978 = vmul.f32 %v973, %v977
  %v979 = vadd.f32 %v978, 0.05243302
  %v980 = vmul.f32 %v973, %v979
  %v981 = vadd.f32 %v980, 0.18741608
  %v982 = vmul.f32 %v973, %v981
  %v983 = vadd.f32 %v982, 1.1283791
  %v984 = vmul.f32 %v425, %v983
  %v985 = vmul.f32 %v973, 3.8918573e-05
  %v986 = vadd.f32 %v985, 0.001143296
  %v987 = vmul.f32 %v973, %v986
  %v988 = vadd.f32 %v987, 0.014752088
  %v989 = vmul.f32 %v973, %v988
  %v990 = vadd.f32 %v989, 0.112945676
  %v991 = vmul.f32 %v973, %v990
  %v992 = vadd.f32 %v991, 0.4994258
  %v993 = vmul.f32 %v973, %v992
  %v994 = vadd.f32 %v993, 1.0
  %v995 = vrcp.pop %v994
  %v996 = vmul.f32 %v994, %v995
  %v997 = vsub.f32 1.0, %v996
  %v998 = vmul.f32 %v995, %v997
  %v999 = vadd.f32 %v995, %v998
  %vm1000 = vweird.f32 %v994
  %vm1001 = vweird.f32 %v995
  %vm1002 = vmor %vm1000, %vm1001
  %v1003 = vsel %vm1002, %v995, %v999
  %v1004 = vand.u32 2147483647, %v994
  %vm1005 = vcmp.eq.f32.partialorder %v1004, 8.507059e+37
  %v1006 = vand.u32 %v994, 2147483648
  %v1007 = vor.u32 1.1754944e-38, %v1006
  %v1008 = vsel %vm1005, %v1007, %v1003
  %v1009 = vmul.f32 %v984, %v1008
  %v1010 = vmin.f32 %v1009, 1.0
  %v1011 = vmax.f32 %v1010, -1.0
  %v1012 = vmul.f32 %v426, %v426
  %v1013 = vmin.f32 16.0, %v1012
  %v1014 = vmul.f32 %v1013, 2.1237322e-06
  %v1015 = vadd.f32 %v1014, 0.00028619796
  %v1016 = vmul.f32 %v1013, %v1015
  %v1017 = vadd.f32 %v1016, 0.0036580483
  %v1018 = vmul.f32 %v1013, %v1017
  %v1019 = vadd.f32 %v1018, 0.05243302
  %v1020 = vmul.f32 %v1013, %v1019
  %v1021 = vadd.f32 %v1020, 0.18741608
  %v1022 = vmul.f32 %v1013, %v1021
  %v1023 = vadd.f32 %v1022, 1.1283791
  %v1024 = vmul.f32 %v426, %v1023
  %v1025 = vmul.f32 %v1013, 3.8918573e-05
  %v1026 = vadd.f32 %v1025, 0.001143296
  %v1027 = vmul.f32 %v1013, %v1026
  %v1028 = vadd.f32 %v1027, 0.014752088
  %v1029 = vmul.f32 %v1013, %v1028
  %v1030 = vadd.f32 %v1029, 0.112945676
  %v1031 = vmul.f32 %v1013, %v1030
  %v1032 = vadd.f32 %v1031, 0.4994258
  %v1033 = vmul.f32 %v1013, %v1032
  %v1034 = vadd.f32 %v1033, 1.0
  %v1035 = vrcp.pop %v1034
  %v1036 = vmul.f32 %v1034, %v1035
  %v1037 = vsub.f32 1.0, %v1036
  %v1038 = vmul.f32 %v1035, %v1037
  %v1039 = vadd.f32 %v1035, %v1038
  %vm1040 = vweird.f32 %v1034
  %vm1041 = vweird.f32 %v1035
  %vm1042 = vmor %vm1040, %vm1041
  %v1043 = vsel %vm1042, %v1035, %v1039
  %v1044 = vand.u32 2147483647, %v1034
  %vm1045 = vcmp.eq.f32.partialorder %v1044, 8.507059e+37
  %v1046 = vand.u32 %v1034, 2147483648
  %v1047 = vor.u32 1.1754944e-38, %v1046
  %v1048 = vsel %vm1045, %v1047, %v1043
  %v1049 = vmul.f32 %v1024, %v1048
  %v1050 = vmin.f32 %v1049, 1.0
  %v1051 = vmax.f32 %v1050, -1.0
  %v1052 = vmul.f32 %v427, %v427
  %v1053 = vmin.f32 16.0, %v1052
  %v1054 = vmul.f32 %v1053, 2.1237322e-06
  %v1055 = vadd.f32 %v1054, 0.00028619796
  %v1056 = vmul.f32 %v1053, %v1055
  %v1057 = vadd.f32 %v1056, 0.0036580483
  %v1058 = vmul.f32 %v1053, %v1057
  %v1059 = vadd.f32 %v1058, 0.05243302
  %v1060 = vmul.f32 %v1053, %v1059
  %v1061 = vadd.f32 %v1060, 0.18741608
  %v1062 = vmul.f32 %v1053, %v1061
  %v1063 = vadd.f32 %v1062, 1.1283791
  %v1064 = vmul.f32 %v427, %v1063
  %v1065 = vmul.f32 %v1053, 3.8918573e-05
  %v1066 = vadd.f32 %v1065, 0.001143296
  %v1067 = vmul.f32 %v1053, %v1066
  %v1068 = vadd.f32 %v1067, 0.014752088
  %v1069 = vmul.f32 %v1053, %v1068
  %v1070 = vadd.f32 %v1069, 0.112945676
  %v1071 = vmul.f32 %v1053, %v1070
  %v1072 = vadd.f32 %v1071, 0.4994258
  %v1073 = vmul.f32 %v1053, %v1072
  %v1074 = vadd.f32 %v1073, 1.0
  %v1075 = vrcp.pop %v1074
  %v1076 = vmul.f32 %v1074, %v1075
  %v1077 = vsub.f32 1.0, %v1076
  %v1078 = vmul.f32 %v1075, %v1077
  %v1079 = vadd.f32 %v1075, %v1078
  %vm1080 = vweird.f32 %v1074
  %vm1081 = vweird.f32 %v1075
  %vm1082 = vmor %vm1080, %vm1081
  %v1083 = vsel %vm1082, %v1075, %v1079
  %v1084 = vand.u32 2147483647, %v1074
  %vm1085 = vcmp.eq.f32.partialorder %v1084, 8.507059e+37
  %v1086 = vand.u32 %v1074, 2147483648
  %v1087 = vor.u32 1.1754944e-38, %v1086
  %v1088 = vsel %vm1085, %v1087, %v1083
  %v1089 = vmul.f32 %v1064, %v1088
  %v1090 = vmin.f32 %v1089, 1.0
  %v1091 = vmax.f32 %v1090, -1.0
  %v1092 = vmul.f32 %v428, %v428
  %v1093 = vmin.f32 16.0, %v1092
  %v1094 = vmul.f32 %v1093, 2.1237322e-06
  %v1095 = vadd.f32 %v1094, 0.00028619796
  %v1096 = vmul.f32 %v1093, %v1095
  %v1097 = vadd.f32 %v1096, 0.0036580483
  %v1098 = vmul.f32 %v1093, %v1097
  %v1099 = vadd.f32 %v1098, 0.05243302
  %v1100 = vmul.f32 %v1093, %v1099
  %v1101 = vadd.f32 %v1100, 0.18741608
  %v1102 = vmul.f32 %v1093, %v1101
  %v1103 = vadd.f32 %v1102, 1.1283791
  %v1104 = vmul.f32 %v428, %v1103
  %v1105 = vmul.f32 %v1093, 3.8918573e-05
  %v1106 = vadd.f32 %v1105, 0.001143296
  %v1107 = vmul.f32 %v1093, %v1106
  %v1108 = vadd.f32 %v1107, 0.014752088
  %v1109 = vmul.f32 %v1093, %v1108
  %v1110 = vadd.f32 %v1109, 0.112945676
  %v1111 = vmul.f32 %v1093, %v1110
  %v1112 = vadd.f32 %v1111, 0.4994258
  %v1113 = vmul.f32 %v1093, %v1112
  %v1114 = vadd.f32 %v1113, 1.0
  %v1115 = vrcp.pop %v1114
  %v1116 = vmul.f32 %v1114, %v1115
  %v1117 = vsub.f32 1.0, %v1116
  %v1118 = vmul.f32 %v1115, %v1117
  %v1119 = vadd.f32 %v1115, %v1118
  %vm1120 = vweird.f32 %v1114
  %vm1121 = vweird.f32 %v1115
  %vm1122 = vmor %vm1120, %vm1121
  %v1123 = vsel %vm1122, %v1115, %v1119
  %v1124 = vand.u32 2147483647, %v1114
  %vm1125 = vcmp.eq.f32.partialorder %v1124, 8.507059e+37
  %v1126 = vand.u32 %v1114, 2147483648
  %v1127 = vor.u32 1.1754944e-38, %v1126
  %v1128 = vsel %vm1125, %v1127, %v1123
  %v1129 = vmul.f32 %v1104, %v1128
  %v1130 = vmin.f32 %v1129, 1.0
  %v1131 = vmax.f32 %v1130, -1.0
  %v1132 = vmul.f32 %v429, %v429
  %v1133 = vmin.f32 16.0, %v1132
  %v1134 = vmul.f32 %v1133, 2.1237322e-06
  %v1135 = vadd.f32 %v1134, 0.00028619796
  %v1136 = vmul.f32 %v1133, %v1135
  %v1137 = vadd.f32 %v1136, 0.0036580483
  %v1138 = vmul.f32 %v1133, %v1137
  %v1139 = vadd.f32 %v1138, 0.05243302
  %v1140 = vmul.f32 %v1133, %v1139
  %v1141 = vadd.f32 %v1140, 0.18741608
  %v1142 = vmul.f32 %v1133, %v1141
  %v1143 = vadd.f32 %v1142, 1.1283791
  %v1144 = vmul.f32 %v429, %v1143
  %v1145 = vmul.f32 %v1133, 3.8918573e-05
  %v1146 = vadd.f32 %v1145, 0.001143296
  %v1147 = vmul.f32 %v1133, %v1146
  %v1148 = vadd.f32 %v1147, 0.014752088
  %v1149 = vmul.f32 %v1133, %v1148
  %v1150 = vadd.f32 %v1149, 0.112945676
  %v1151 = vmul.f32 %v1133, %v1150
  %v1152 = vadd.f32 %v1151, 0.4994258
  %v1153 = vmul.f32 %v1133, %v1152
  %v1154 = vadd.f32 %v1153, 1.0
  %v1155 = vrcp.pop %v1154
  %v1156 = vmul.f32 %v1154, %v1155
  %v1157 = vsub.f32 1.0, %v1156
  %v1158 = vmul.f32 %v1155, %v1157
  %v1159 = vadd.f32 %v1155, %v1158
  %vm1160 = vweird.f32 %v1154
  %vm1161 = vweird.f32 %v1155
  %vm1162 = vmor %vm1160, %vm1161
  %v1163 = vsel %vm1162, %v1155, %v1159
  %v1164 = vand.u32 2147483647, %v1154
  %vm1165 = vcmp.eq.f32.partialorder %v1164, 8.507059e+37
  %v1166 = vand.u32 %v1154, 2147483648
  %v1167 = vor.u32 1.1754944e-38, %v1166
  %v1168 = vsel %vm1165, %v1167, %v1163
  %v1169 = vmul.f32 %v1144, %v1168
  %v1170 = vmin.f32 %v1169, 1.0
  %v1171 = vmax.f32 %v1170, -1.0
  %v1172 = vmul.f32 %v430, %v430
  %v1173 = vmin.f32 16.0, %v1172
  %v1174 = vmul.f32 %v1173, 2.1237322e-06
  %v1175 = vadd.f32 %v1174, 0.00028619796
  %v1176 = vmul.f32 %v1173, %v1175
  %v1177 = vadd.f32 %v1176, 0.0036580483
  %v1178 = vmul.f32 %v1173, %v1177
  %v1179 = vadd.f32 %v1178, 0.05243302
  %v1180 = vmul.f32 %v1173, %v1179
  %v1181 = vadd.f32 %v1180, 0.18741608
  %v1182 = vmul.f32 %v1173, %v1181
  %v1183 = vadd.f32 %v1182, 1.1283791
  %v1184 = vmul.f32 %v430, %v1183
  %v1185 = vmul.f32 %v1173, 3.8918573e-05
  %v1186 = vadd.f32 %v1185, 0.001143296
  %v1187 = vmul.f32 %v1173, %v1186
  %v1188 = vadd.f32 %v1187, 0.014752088
  %v1189 = vmul.f32 %v1173, %v1188
  %v1190 = vadd.f32 %v1189, 0.112945676
  %v1191 = vmul.f32 %v1173, %v1190
  %v1192 = vadd.f32 %v1191, 0.4994258
  %v1193 = vmul.f32 %v1173, %v1192
  %v1194 = vadd.f32 %v1193, 1.0
  %v1195 = vrcp.pop %v1194
  %v1196 = vmul.f32 %v1194, %v1195
  %v1197 = vsub.f32 1.0, %v1196
  %v1198 = vmul.f32 %v1195, %v1197
  %v1199 = vadd.f32 %v1195, %v1198
  %vm1200 = vweird.f32 %v1194
  %vm1201 = vweird.f32 %v1195
  %vm1202 = vmor %vm1200, %vm1201
  %v1203 = vsel %vm1202, %v1195, %v1199
  %v1204 = vand.u32 2147483647, %v1194
  %vm1205 = vcmp.eq.f32.partialorder %v1204, 8.507059e+37
  %v1206 = vand.u32 %v1194, 2147483648
  %v1207 = vor.u32 1.1754944e-38, %v1206
  %v1208 = vsel %vm1205, %v1207, %v1203
  %v1209 = vmul.f32 %v1184, %v1208
  %v1210 = vmin.f32 %v1209, 1.0
  %v1211 = vmax.f32 %v1210, -1.0
  %v1212 = vmul.f32 %v431, %v431
  %v1213 = vmin.f32 16.0, %v1212
  %v1214 = vmul.f32 %v1213, 2.1237322e-06
  %v1215 = vadd.f32 %v1214, 0.00028619796
  %v1216 = vmul.f32 %v1213, %v1215
  %v1217 = vadd.f32 %v1216, 0.0036580483
  %v1218 = vmul.f32 %v1213, %v1217
  %v1219 = vadd.f32 %v1218, 0.05243302
  %v1220 = vmul.f32 %v1213, %v1219
  %v1221 = vadd.f32 %v1220, 0.18741608
  %v1222 = vmul.f32 %v1213, %v1221
  %v1223 = vadd.f32 %v1222, 1.1283791
  %v1224 = vmul.f32 %v431, %v1223
  %v1225 = vmul.f32 %v1213, 3.8918573e-05
  %v1226 = vadd.f32 %v1225, 0.001143296
  %v1227 = vmul.f32 %v1213, %v1226
  %v1228 = vadd.f32 %v1227, 0.014752088
  %v1229 = vmul.f32 %v1213, %v1228
  %v1230 = vadd.f32 %v1229, 0.112945676
  %v1231 = vmul.f32 %v1213, %v1230
  %v1232 = vadd.f32 %v1231, 0.4994258
  %v1233 = vmul.f32 %v1213, %v1232
  %v1234 = vadd.f32 %v1233, 1.0
  %v1235 = vrcp.pop %v1234
  %v1236 = vmul.f32 %v1234, %v1235
  %v1237 = vsub.f32 1.0, %v1236
  %v1238 = vmul.f32 %v1235, %v1237
  %v1239 = vadd.f32 %v1235, %v1238
  %vm1240 = vweird.f32 %v1234
  %vm1241 = vweird.f32 %v1235
  %vm1242 = vmor %vm1240, %vm1241
  %v1243 = vsel %vm1242, %v1235, %v1239
  %v1244 = vand.u32 2147483647, %v1234
  %vm1245 = vcmp.eq.f32.partialorder %v1244, 8.507059e+37
  %v1246 = vand.u32 %v1234, 2147483648
  %v1247 = vor.u32 1.1754944e-38, %v1246
  %v1248 = vsel %vm1245, %v1247, %v1243
  %v1249 = vmul.f32 %v1224, %v1248
  %v1250 = vmin.f32 %v1249, 1.0
  %v1251 = vmax.f32 %v1250, -1.0
  %v1252 = vmul.f32 %v432, %v432
  %v1253 = vmin.f32 16.0, %v1252
  %v1254 = vmul.f32 %v1253, 2.1237322e-06
  %v1255 = vadd.f32 %v1254, 0.00028619796
  %v1256 = vmul.f32 %v1253, %v1255
  %v1257 = vadd.f32 %v1256, 0.0036580483
  %v1258 = vmul.f32 %v1253, %v1257
  %v1259 = vadd.f32 %v1258, 0.05243302
  %v1260 = vmul.f32 %v1253, %v1259
  %v1261 = vadd.f32 %v1260, 0.18741608
  %v1262 = vmul.f32 %v1253, %v1261
  %v1263 = vadd.f32 %v1262, 1.1283791
  %v1264 = vmul.f32 %v432, %v1263
  %v1265 = vmul.f32 %v1253, 3.8918573e-05
  %v1266 = vadd.f32 %v1265, 0.001143296
  %v1267 = vmul.f32 %v1253, %v1266
  %v1268 = vadd.f32 %v1267, 0.014752088
  %v1269 = vmul.f32 %v1253, %v1268
  %v1270 = vadd.f32 %v1269, 0.112945676
  %v1271 = vmul.f32 %v1253, %v1270
  %v1272 = vadd.f32 %v1271, 0.4994258
  %v1273 = vmul.f32 %v1253, %v1272
  %v1274 = vadd.f32 %v1273, 1.0
  %v1275 = vrcp.pop %v1274
  %v1276 = vmul.f32 %v1274, %v1275
  %v1277 = vsub.f32 1.0, %v1276
  %v1278 = vmul.f32 %v1275, %v1277
  %v1279 = vadd.f32 %v1275, %v1278
  %vm1280 = vweird.f32 %v1274
  %vm1281 = vweird.f32 %v1275
  %vm1282 = vmor %vm1280, %vm1281
  %v1283 = vsel %vm1282, %v1275, %v1279
  %v1284 = vand.u32 2147483647, %v1274
  %vm1285 = vcmp.eq.f32.partialorder %v1284, 8.507059e+37
  %v1286 = vand.u32 %v1274, 2147483648
  %v1287 = vor.u32 1.1754944e-38, %v1286
  %v1288 = vsel %vm1285, %v1287, %v1283
  %v1289 = vmul.f32 %v1264, %v1288
  %v1290 = vmin.f32 %v1289, 1.0
  %v1291 = vmax.f32 %v1290, -1.0
  %v1292 = vmul.f32 %v433, %v433
  %v1293 = vmin.f32 16.0, %v1292
  %v1294 = vmul.f32 %v1293, 2.1237322e-06
  %v1295 = vadd.f32 %v1294, 0.00028619796
  %v1296 = vmul.f32 %v1293, %v1295
  %v1297 = vadd.f32 %v1296, 0.0036580483
  %v1298 = vmul.f32 %v1293, %v1297
  %v1299 = vadd.f32 %v1298, 0.05243302
  %v1300 = vmul.f32 %v1293, %v1299
  %v1301 = vadd.f32 %v1300, 0.18741608
  %v1302 = vmul.f32 %v1293, %v1301
  %v1303 = vadd.f32 %v1302, 1.1283791
  %v1304 = vmul.f32 %v433, %v1303
  %v1305 = vmul.f32 %v1293, 3.8918573e-05
  %v1306 = vadd.f32 %v1305, 0.001143296
  %v1307 = vmul.f32 %v1293, %v1306
  %v1308 = vadd.f32 %v1307, 0.014752088
  %v1309 = vmul.f32 %v1293, %v1308
  %v1310 = vadd.f32 %v1309, 0.112945676
  %v1311 = vmul.f32 %v1293, %v1310
  %v1312 = vadd.f32 %v1311, 0.4994258
  %v1313 = vmul.f32 %v1293, %v1312
  %v1314 = vadd.f32 %v1313, 1.0
  %v1315 = vrcp.pop %v1314
  %v1316 = vmul.f32 %v1314, %v1315
  %v1317 = vsub.f32 1.0, %v1316
  %v1318 = vmul.f32 %v1315, %v1317
  %v1319 = vadd.f32 %v1315, %v1318
  %vm1320 = vweird.f32 %v1314
  %vm1321 = vweird.f32 %v1315
  %vm1322 = vmor %vm1320, %vm1321
  %v1323 = vsel %vm1322, %v1315, %v1319
  %v1324 = vand.u32 2147483647, %v1314
  %vm1325 = vcmp.eq.f32.partialorder %v1324, 8.507059e+37
  %v1326 = vand.u32 %v1314, 2147483648
  %v1327 = vor.u32 1.1754944e-38, %v1326
  %v1328 = vsel %vm1325, %v1327, %v1323
  %v1329 = vmul.f32 %v1304, %v1328
  %v1330 = vmin.f32 %v1329, 1.0
  %v1331 = vmax.f32 %v1330, -1.0
  %v1332 = vmul.f32 %v434, %v434
  %v1333 = vmin.f32 16.0, %v1332
  %v1334 = vmul.f32 %v1333, 2.1237322e-06
  %v1335 = vadd.f32 %v1334, 0.00028619796
  %v1336 = vmul.f32 %v1333, %v1335
  %v1337 = vadd.f32 %v1336, 0.0036580483
  %v1338 = vmul.f32 %v1333, %v1337
  %v1339 = vadd.f32 %v1338, 0.05243302
  %v1340 = vmul.f32 %v1333, %v1339
  %v1341 = vadd.f32 %v1340, 0.18741608
  %v1342 = vmul.f32 %v1333, %v1341
  %v1343 = vadd.f32 %v1342, 1.1283791
  %v1344 = vmul.f32 %v434, %v1343
  %v1345 = vmul.f32 %v1333, 3.8918573e-05
  %v1346 = vadd.f32 %v1345, 0.001143296
  %v1347 = vmul.f32 %v1333, %v1346
  %v1348 = vadd.f32 %v1347, 0.014752088
  %v1349 = vmul.f32 %v1333, %v1348
  %v1350 = vadd.f32 %v1349, 0.112945676
  %v1351 = vmul.f32 %v1333, %v1350
  %v1352 = vadd.f32 %v1351, 0.4994258
  %v1353 = vmul.f32 %v1333, %v1352
  %v1354 = vadd.f32 %v1353, 1.0
  %v1355 = vrcp.pop %v1354
  %v1356 = vmul.f32 %v1354, %v1355
  %v1357 = vsub.f32 1.0, %v1356
  %v1358 = vmul.f32 %v1355, %v1357
  %v1359 = vadd.f32 %v1355, %v1358
  %vm1360 = vweird.f32 %v1354
  %vm1361 = vweird.f32 %v1355
  %vm1362 = vmor %vm1360, %vm1361
  %v1363 = vsel %vm1362, %v1355, %v1359
  %v1364 = vand.u32 2147483647, %v1354
  %vm1365 = vcmp.eq.f32.partialorder %v1364, 8.507059e+37
  %v1366 = vand.u32 %v1354, 2147483648
  %v1367 = vor.u32 1.1754944e-38, %v1366
  %v1368 = vsel %vm1365, %v1367, %v1363
  %v1369 = vmul.f32 %v1344, %v1368
  %v1370 = vmin.f32 %v1369, 1.0
  %v1371 = vmax.f32 %v1370, -1.0
  %v1372 = vmul.f32 %v435, %v435
  %v1373 = vmin.f32 16.0, %v1372
  %v1374 = vmul.f32 %v1373, 2.1237322e-06
  %v1375 = vadd.f32 %v1374, 0.00028619796
  %v1376 = vmul.f32 %v1373, %v1375
  %v1377 = vadd.f32 %v1376, 0.0036580483
  %v1378 = vmul.f32 %v1373, %v1377
  %v1379 = vadd.f32 %v1378, 0.05243302
  %v1380 = vmul.f32 %v1373, %v1379
  %v1381 = vadd.f32 %v1380, 0.18741608
  %v1382 = vmul.f32 %v1373, %v1381
  %v1383 = vadd.f32 %v1382, 1.1283791
  %v1384 = vmul.f32 %v435, %v1383
  %v1385 = vmul.f32 %v1373, 3.8918573e-05
  %v1386 = vadd.f32 %v1385, 0.001143296
  %v1387 = vmul.f32 %v1373, %v1386
  %v1388 = vadd.f32 %v1387, 0.014752088
  %v1389 = vmul.f32 %v1373, %v1388
  %v1390 = vadd.f32 %v1389, 0.112945676
  %v1391 = vmul.f32 %v1373, %v1390
  %v1392 = vadd.f32 %v1391, 0.4994258
  %v1393 = vmul.f32 %v1373, %v1392
  %v1394 = vadd.f32 %v1393, 1.0
  %v1395 = vrcp.pop %v1394
  %v1396 = vmul.f32 %v1394, %v1395
  %v1397 = vsub.f32 1.0, %v1396
  %v1398 = vmul.f32 %v1395, %v1397
  %v1399 = vadd.f32 %v1395, %v1398
  %vm1400 = vweird.f32 %v1394
  %vm1401 = vweird.f32 %v1395
  %vm1402 = vmor %vm1400, %vm1401
  %v1403 = vsel %vm1402, %v1395, %v1399
  %v1404 = vand.u32 2147483647, %v1394
  %vm1405 = vcmp.eq.f32.partialorder %v1404, 8.507059e+37
  %v1406 = vand.u32 %v1394, 2147483648
  %v1407 = vor.u32 1.1754944e-38, %v1406
  %v1408 = vsel %vm1405, %v1407, %v1403
  %v1409 = vmul.f32 %v1384, %v1408
  %v1410 = vmin.f32 %v1409, 1.0
  %v1411 = vmax.f32 %v1410, -1.0
  %v1412 = vmul.f32 %v436, %v436
  %v1413 = vmin.f32 16.0, %v1412
  %v1414 = vmul.f32 %v1413, 2.1237322e-06
  %v1415 = vadd.f32 %v1414, 0.00028619796
  %v1416 = vmul.f32 %v1413, %v1415
  %v1417 = vadd.f32 %v1416, 0.0036580483
  %v1418 = vmul.f32 %v1413, %v1417
  %v1419 = vadd.f32 %v1418, 0.05243302
  %v1420 = vmul.f32 %v1413, %v1419
  %v1421 = vadd.f32 %v1420, 0.18741608
  %v1422 = vmul.f32 %v1413, %v1421
  %v1423 = vadd.f32 %v1422, 1.1283791
  %v1424 = vmul.f32 %v436, %v1423
  %v1425 = vmul.f32 %v1413, 3.8918573e-05
  %v1426 = vadd.f32 %v1425, 0.001143296
  %v1427 = vmul.f32 %v1413, %v1426
  %v1428 = vadd.f32 %v1427, 0.014752088
  %v1429 = vmul.f32 %v1413, %v1428
  %v1430 = vadd.f32 %v1429, 0.112945676
  %v1431 = vmul.f32 %v1413, %v1430
  %v1432 = vadd.f32 %v1431, 0.4994258
  %v1433 = vmul.f32 %v1413, %v1432
  %v1434 = vadd.f32 %v1433, 1.0
  %v1435 = vrcp.pop %v1434
  %v1436 = vmul.f32 %v1434, %v1435
  %v1437 = vsub.f32 1.0, %v1436
  %v1438 = vmul.f32 %v1435, %v1437
  %v1439 = vadd.f32 %v1435, %v1438
  %vm1440 = vweird.f32 %v1434
  %vm1441 = vweird.f32 %v1435
  %vm1442 = vmor %vm1440, %vm1441
  %v1443 = vsel %vm1442, %v1435, %v1439
  %v1444 = vand.u32 2147483647, %v1434
  %vm1445 = vcmp.eq.f32.partialorder %v1444, 8.507059e+37
  %v1446 = vand.u32 %v1434, 2147483648
  %v1447 = vor.u32 1.1754944e-38, %v1446
  %v1448 = vsel %vm1445, %v1447, %v1443
  %v1449 = vmul.f32 %v1424, %v1448
  %v1450 = vmin.f32 %v1449, 1.0
  %v1451 = vmax.f32 %v1450, -1.0
  %v1452 = vmul.f32 %v437, %v437
  %v1453 = vmin.f32 16.0, %v1452
  %v1454 = vmul.f32 %v1453, 2.1237322e-06
  %v1455 = vadd.f32 %v1454, 0.00028619796
  %v1456 = vmul.f32 %v1453, %v1455
  %v1457 = vadd.f32 %v1456, 0.0036580483
  %v1458 = vmul.f32 %v1453, %v1457
  %v1459 = vadd.f32 %v1458, 0.05243302
  %v1460 = vmul.f32 %v1453, %v1459
  %v1461 = vadd.f32 %v1460, 0.18741608
  %v1462 = vmul.f32 %v1453, %v1461
  %v1463 = vadd.f32 %v1462, 1.1283791
  %v1464 = vmul.f32 %v437, %v1463
  %v1465 = vmul.f32 %v1453, 3.8918573e-05
  %v1466 = vadd.f32 %v1465, 0.001143296
  %v1467 = vmul.f32 %v1453, %v1466
  %v1468 = vadd.f32 %v1467, 0.014752088
  %v1469 = vmul.f32 %v1453, %v1468
  %v1470 = vadd.f32 %v1469, 0.112945676
  %v1471 = vmul.f32 %v1453, %v1470
  %v1472 = vadd.f32 %v1471, 0.4994258
  %v1473 = vmul.f32 %v1453, %v1472
  %v1474 = vadd.f32 %v1473, 1.0
  %v1475 = vrcp.pop %v1474
  %v1476 = vmul.f32 %v1474, %v1475
  %v1477 = vsub.f32 1.0, %v1476
  %v1478 = vmul.f32 %v1475, %v1477
  %v1479 = vadd.f32 %v1475, %v1478
  %vm1480 = vweird.f32 %v1474
  %vm1481 = vweird.f32 %v1475
  %vm1482 = vmor %vm1480, %vm1481
  %v1483 = vsel %vm1482, %v1475, %v1479
  %v1484 = vand.u32 2147483647, %v1474
  %vm1485 = vcmp.eq.f32.partialorder %v1484, 8.507059e+37
  %v1486 = vand.u32 %v1474, 2147483648
  %v1487 = vor.u32 1.1754944e-38, %v1486
  %v1488 = vsel %vm1485, %v1487, %v1483
  %v1489 = vmul.f32 %v1464, %v1488
  %v1490 = vmin.f32 %v1489, 1.0
  %v1491 = vmax.f32 %v1490, -1.0
  %v1492 = vmul.f32 %v438, %v438
  %v1493 = vmin.f32 16.0, %v1492
  %v1494 = vmul.f32 %v1493, 2.1237322e-06
  %v1495 = vadd.f32 %v1494, 0.00028619796
  %v1496 = vmul.f32 %v1493, %v1495
  %v1497 = vadd.f32 %v1496, 0.0036580483
  %v1498 = vmul.f32 %v1493, %v1497
  %v1499 = vadd.f32 %v1498, 0.05243302
  %v1500 = vmul.f32 %v1493, %v1499
  %v1501 = vadd.f32 %v1500, 0.18741608
  %v1502 = vmul.f32 %v1493, %v1501
  %v1503 = vadd.f32 %v1502, 1.1283791
  %v1504 = vmul.f32 %v438, %v1503
  %v1505 = vmul.f32 %v1493, 3.8918573e-05
  %v1506 = vadd.f32 %v1505, 0.001143296
  %v1507 = vmul.f32 %v1493, %v1506
  %v1508 = vadd.f32 %v1507, 0.014752088
  %v1509 = vmul.f32 %v1493, %v1508
  %v1510 = vadd.f32 %v1509, 0.112945676
  %v1511 = vmul.f32 %v1493, %v1510
  %v1512 = vadd.f32 %v1511, 0.4994258
  %v1513 = vmul.f32 %v1493, %v1512
  %v1514 = vadd.f32 %v1513, 1.0
  %v1515 = vrcp.pop %v1514
  %v1516 = vmul.f32 %v1514, %v1515
  %v1517 = vsub.f32 1.0, %v1516
  %v1518 = vmul.f32 %v1515, %v1517
  %v1519 = vadd.f32 %v1515, %v1518
  %vm1520 = vweird.f32 %v1514
  %vm1521 = vweird.f32 %v1515
  %vm1522 = vmor %vm1520, %vm1521
  %v1523 = vsel %vm1522, %v1515, %v1519
  %v1524 = vand.u32 2147483647, %v1514
  %vm1525 = vcmp.eq.f32.partialorder %v1524, 8.507059e+37
  %v1526 = vand.u32 %v1514, 2147483648
  %v1527 = vor.u32 1.1754944e-38, %v1526
  %v1528 = vsel %vm1525, %v1527, %v1523
  %v1529 = vmul.f32 %v1504, %v1528
  %v1530 = vmin.f32 %v1529, 1.0
  %v1531 = vmax.f32 %v1530, -1.0
  %v1532 = vmul.f32 %v439, %v439
  %v1533 = vmin.f32 16.0, %v1532
  %v1534 = vmul.f32 %v1533, 2.1237322e-06
  %v1535 = vadd.f32 %v1534, 0.00028619796
  %v1536 = vmul.f32 %v1533, %v1535
  %v1537 = vadd.f32 %v1536, 0.0036580483
  %v1538 = vmul.f32 %v1533, %v1537
  %v1539 = vadd.f32 %v1538, 0.05243302
  %v1540 = vmul.f32 %v1533, %v1539
  %v1541 = vadd.f32 %v1540, 0.18741608
  %v1542 = vmul.f32 %v1533, %v1541
  %v1543 = vadd.f32 %v1542, 1.1283791
  %v1544 = vmul.f32 %v439, %v1543
  %v1545 = vmul.f32 %v1533, 3.8918573e-05
  %v1546 = vadd.f32 %v1545, 0.001143296
  %v1547 = vmul.f32 %v1533, %v1546
  %v1548 = vadd.f32 %v1547, 0.014752088
  %v1549 = vmul.f32 %v1533, %v1548
  %v1550 = vadd.f32 %v1549, 0.112945676
  %v1551 = vmul.f32 %v1533, %v1550
  %v1552 = vadd.f32 %v1551, 0.4994258
  %v1553 = vmul.f32 %v1533, %v1552
  %v1554 = vadd.f32 %v1553, 1.0
  %v1555 = vrcp.pop %v1554
  %v1556 = vmul.f32 %v1554, %v1555
  %v1557 = vsub.f32 1.0, %v1556
  %v1558 = vmul.f32 %v1555, %v1557
  %v1559 = vadd.f32 %v1555, %v1558
  %vm1560 = vweird.f32 %v1554
  %vm1561 = vweird.f32 %v1555
  %vm1562 = vmor %vm1560, %vm1561
  %v1563 = vsel %vm1562, %v1555, %v1559
  %v1564 = vand.u32 2147483647, %v1554
  %vm1565 = vcmp.eq.f32.partialorder %v1564, 8.507059e+37
  %v1566 = vand.u32 %v1554, 2147483648
  %v1567 = vor.u32 1.1754944e-38, %v1566
  %v1568 = vsel %vm1565, %v1567, %v1563
  %v1569 = vmul.f32 %v1544, %v1568
  %v1570 = vmin.f32 %v1569, 1.0
  %v1571 = vmax.f32 %v1570, -1.0
  %v1572 = vmul.f32 %v440, %v440
  %v1573 = vmin.f32 16.0, %v1572
  %v1574 = vmul.f32 %v1573, 2.1237322e-06
  %v1575 = vadd.f32 %v1574, 0.00028619796
  %v1576 = vmul.f32 %v1573, %v1575
  %v1577 = vadd.f32 %v1576, 0.0036580483
  %v1578 = vmul.f32 %v1573, %v1577
  %v1579 = vadd.f32 %v1578, 0.05243302
  %v1580 = vmul.f32 %v1573, %v1579
  %v1581 = vadd.f32 %v1580, 0.18741608
  %v1582 = vmul.f32 %v1573, %v1581
  %v1583 = vadd.f32 %v1582, 1.1283791
  %v1584 = vmul.f32 %v440, %v1583
  %v1585 = vmul.f32 %v1573, 3.8918573e-05
  %v1586 = vadd.f32 %v1585, 0.001143296
  %v1587 = vmul.f32 %v1573, %v1586
  %v1588 = vadd.f32 %v1587, 0.014752088
  %v1589 = vmul.f32 %v1573, %v1588
  %v1590 = vadd.f32 %v1589, 0.112945676
  %v1591 = vmul.f32 %v1573, %v1590
  %v1592 = vadd.f32 %v1591, 0.4994258
  %v1593 = vmul.f32 %v1573, %v1592
  %v1594 = vadd.f32 %v1593, 1.0
  %v1595 = vrcp.pop %v1594
  %v1596 = vmul.f32 %v1594, %v1595
  %v1597 = vsub.f32 1.0, %v1596
  %v1598 = vmul.f32 %v1595, %v1597
  %v1599 = vadd.f32 %v1595, %v1598
  %vm1600 = vweird.f32 %v1594
  %vm1601 = vweird.f32 %v1595
  %vm1602 = vmor %vm1600, %vm1601
  %v1603 = vsel %vm1602, %v1595, %v1599
  %v1604 = vand.u32 2147483647, %v1594
  %vm1605 = vcmp.eq.f32.partialorder %v1604, 8.507059e+37
  %v1606 = vand.u32 %v1594, 2147483648
  %v1607 = vor.u32 1.1754944e-38, %v1606
  %v1608 = vsel %vm1605, %v1607, %v1603
  %v1609 = vmul.f32 %v1584, %v1608
  %v1610 = vmin.f32 %v1609, 1.0
  %v1611 = vmax.f32 %v1610, -1.0
  %v1612 = vmul.f32 %v441, %v441
  %v1613 = vmin.f32 16.0, %v1612
  %v1614 = vmul.f32 %v1613, 2.1237322e-06
  %v1615 = vadd.f32 %v1614, 0.00028619796
  %v1616 = vmul.f32 %v1613, %v1615
  %v1617 = vadd.f32 %v1616, 0.0036580483
  %v1618 = vmul.f32 %v1613, %v1617
  %v1619 = vadd.f32 %v1618, 0.05243302
  %v1620 = vmul.f32 %v1613, %v1619
  %v1621 = vadd.f32 %v1620, 0.18741608
  %v1622 = vmul.f32 %v1613, %v1621
  %v1623 = vadd.f32 %v1622, 1.1283791
  %v1624 = vmul.f32 %v441, %v1623
  %v1625 = vmul.f32 %v1613, 3.8918573e-05
  %v1626 = vadd.f32 %v1625, 0.001143296
  %v1627 = vmul.f32 %v1613, %v1626
  %v1628 = vadd.f32 %v1627, 0.014752088
  %v1629 = vmul.f32 %v1613, %v1628
  %v1630 = vadd.f32 %v1629, 0.112945676
  %v1631 = vmul.f32 %v1613, %v1630
  %v1632 = vadd.f32 %v1631, 0.4994258
  %v1633 = vmul.f32 %v1613, %v1632
  %v1634 = vadd.f32 %v1633, 1.0
  %v1635 = vrcp.pop %v1634
  %v1636 = vmul.f32 %v1634, %v1635
  %v1637 = vsub.f32 1.0, %v1636
  %v1638 = vmul.f32 %v1635, %v1637
  %v1639 = vadd.f32 %v1635, %v1638
  %vm1640 = vweird.f32 %v1634
  %vm1641 = vweird.f32 %v1635
  %vm1642 = vmor %vm1640, %vm1641
  %v1643 = vsel %vm1642, %v1635, %v1639
  %v1644 = vand.u32 2147483647, %v1634
  %vm1645 = vcmp.eq.f32.partialorder %v1644, 8.507059e+37
  %v1646 = vand.u32 %v1634, 2147483648
  %v1647 = vor.u32 1.1754944e-38, %v1646
  %v1648 = vsel %vm1645, %v1647, %v1643
  %v1649 = vmul.f32 %v1624, %v1648
  %v1650 = vmin.f32 %v1649, 1.0
  %v1651 = vmax.f32 %v1650, -1.0
  %v1652 = vmul.f32 %v442, %v442
  %v1653 = vmin.f32 16.0, %v1652
  %v1654 = vmul.f32 %v1653, 2.1237322e-06
  %v1655 = vadd.f32 %v1654, 0.00028619796
  %v1656 = vmul.f32 %v1653, %v1655
  %v1657 = vadd.f32 %v1656, 0.0036580483
  %v1658 = vmul.f32 %v1653, %v1657
  %v1659 = vadd.f32 %v1658, 0.05243302
  %v1660 = vmul.f32 %v1653, %v1659
  %v1661 = vadd.f32 %v1660, 0.18741608
  %v1662 = vmul.f32 %v1653, %v1661
  %v1663 = vadd.f32 %v1662, 1.1283791
  %v1664 = vmul.f32 %v442, %v1663
  %v1665 = vmul.f32 %v1653, 3.8918573e-05
  %v1666 = vadd.f32 %v1665, 0.001143296
  %v1667 = vmul.f32 %v1653, %v1666
  %v1668 = vadd.f32 %v1667, 0.014752088
  %v1669 = vmul.f32 %v1653, %v1668
  %v1670 = vadd.f32 %v1669, 0.112945676
  %v1671 = vmul.f32 %v1653, %v1670
  %v1672 = vadd.f32 %v1671, 0.4994258
  %v1673 = vmul.f32 %v1653, %v1672
  %v1674 = vadd.f32 %v1673, 1.0
  %v1675 = vrcp.pop %v1674
  %v1676 = vmul.f32 %v1674, %v1675
  %v1677 = vsub.f32 1.0, %v1676
  %v1678 = vmul.f32 %v1675, %v1677
  %v1679 = vadd.f32 %v1675, %v1678
  %vm1680 = vweird.f32 %v1674
  %vm1681 = vweird.f32 %v1675
  %vm1682 = vmor %vm1680, %vm1681
  %v1683 = vsel %vm1682, %v1675, %v1679
  %v1684 = vand.u32 2147483647, %v1674
  %vm1685 = vcmp.eq.f32.partialorder %v1684, 8.507059e+37
  %v1686 = vand.u32 %v1674, 2147483648
  %v1687 = vor.u32 1.1754944e-38, %v1686
  %v1688 = vsel %vm1685, %v1687, %v1683
  %v1689 = vmul.f32 %v1664, %v1688
  %v1690 = vmin.f32 %v1689, 1.0
  %v1691 = vmax.f32 %v1690, -1.0
  %v1692 = vmul.f32 %v443, %v443
  %v1693 = vmin.f32 16.0, %v1692
  %v1694 = vmul.f32 %v1693, 2.1237322e-06
  %v1695 = vadd.f32 %v1694, 0.00028619796
  %v1696 = vmul.f32 %v1693, %v1695
  %v1697 = vadd.f32 %v1696, 0.0036580483
  %v1698 = vmul.f32 %v1693, %v1697
  %v1699 = vadd.f32 %v1698, 0.05243302
  %v1700 = vmul.f32 %v1693, %v1699
  %v1701 = vadd.f32 %v1700, 0.18741608
  %v1702 = vmul.f32 %v1693, %v1701
  %v1703 = vadd.f32 %v1702, 1.1283791
  %v1704 = vmul.f32 %v443, %v1703
  %v1705 = vmul.f32 %v1693, 3.8918573e-05
  %v1706 = vadd.f32 %v1705, 0.001143296
  %v1707 = vmul.f32 %v1693, %v1706
  %v1708 = vadd.f32 %v1707, 0.014752088
  %v1709 = vmul.f32 %v1693, %v1708
  %v1710 = vadd.f32 %v1709, 0.112945676
  %v1711 = vmul.f32 %v1693, %v1710
  %v1712 = vadd.f32 %v1711, 0.4994258
  %v1713 = vmul.f32 %v1693, %v1712
  %v1714 = vadd.f32 %v1713, 1.0
  %v1715 = vrcp.pop %v1714
  %v1716 = vmul.f32 %v1714, %v1715
  %v1717 = vsub.f32 1.0, %v1716
  %v1718 = vmul.f32 %v1715, %v1717
  %v1719 = vadd.f32 %v1715, %v1718
  %vm1720 = vweird.f32 %v1714
  %vm1721 = vweird.f32 %v1715
  %vm1722 = vmor %vm1720, %vm1721
  %v1723 = vsel %vm1722, %v1715, %v1719
  %v1724 = vand.u32 2147483647, %v1714
  %vm1725 = vcmp.eq.f32.partialorder %v1724, 8.507059e+37
  %v1726 = vand.u32 %v1714, 2147483648
  %v1727 = vor.u32 1.1754944e-38, %v1726
  %v1728 = vsel %vm1725, %v1727, %v1723
  %v1729 = vmul.f32 %v1704, %v1728
  %v1730 = vmin.f32 %v1729, 1.0
  %v1731 = vmax.f32 %v1730, -1.0
  %v1732 = vmul.f32 %v444, %v444
  %v1733 = vmin.f32 16.0, %v1732
  %v1734 = vmul.f32 %v1733, 2.1237322e-06
  %v1735 = vadd.f32 %v1734, 0.00028619796
  %v1736 = vmul.f32 %v1733, %v1735
  %v1737 = vadd.f32 %v1736, 0.0036580483
  %v1738 = vmul.f32 %v1733, %v1737
  %v1739 = vadd.f32 %v1738, 0.05243302
  %v1740 = vmul.f32 %v1733, %v1739
  %v1741 = vadd.f32 %v1740, 0.18741608
  %v1742 = vmul.f32 %v1733, %v1741
  %v1743 = vadd.f32 %v1742, 1.1283791
  %v1744 = vmul.f32 %v444, %v1743
  %v1745 = vmul.f32 %v1733, 3.8918573e-05
  %v1746 = vadd.f32 %v1745, 0.001143296
  %v1747 = vmul.f32 %v1733, %v1746
  %v1748 = vadd.f32 %v1747, 0.014752088
  %v1749 = vmul.f32 %v1733, %v1748
  %v1750 = vadd.f32 %v1749, 0.112945676
  %v1751 = vmul.f32 %v1733, %v1750
  %v1752 = vadd.f32 %v1751, 0.4994258
  %v1753 = vmul.f32 %v1733, %v1752
  %v1754 = vadd.f32 %v1753, 1.0
  %v1755 = vrcp.pop %v1754
  %v1756 = vmul.f32 %v1754, %v1755
  %v1757 = vsub.f32 1.0, %v1756
  %v1758 = vmul.f32 %v1755, %v1757
  %v1759 = vadd.f32 %v1755, %v1758
  %vm1760 = vweird.f32 %v1754
  %vm1761 = vweird.f32 %v1755
  %vm1762 = vmor %vm1760, %vm1761
  %v1763 = vsel %vm1762, %v1755, %v1759
  %v1764 = vand.u32 2147483647, %v1754
  %vm1765 = vcmp.eq.f32.partialorder %v1764, 8.507059e+37
  %v1766 = vand.u32 %v1754, 2147483648
  %v1767 = vor.u32 1.1754944e-38, %v1766
  %v1768 = vsel %vm1765, %v1767, %v1763
  %v1769 = vmul.f32 %v1744, %v1768
  %v1770 = vmin.f32 %v1769, 1.0
  %v1771 = vmax.f32 %v1770, -1.0
  %v1772 = vmul.f32 %v445, %v445
  %v1773 = vmin.f32 16.0, %v1772
  %v1774 = vmul.f32 %v1773, 2.1237322e-06
  %v1775 = vadd.f32 %v1774, 0.00028619796
  %v1776 = vmul.f32 %v1773, %v1775
  %v1777 = vadd.f32 %v1776, 0.0036580483
  %v1778 = vmul.f32 %v1773, %v1777
  %v1779 = vadd.f32 %v1778, 0.05243302
  %v1780 = vmul.f32 %v1773, %v1779
  %v1781 = vadd.f32 %v1780, 0.18741608
  %v1782 = vmul.f32 %v1773, %v1781
  %v1783 = vadd.f32 %v1782, 1.1283791
  %v1784 = vmul.f32 %v445, %v1783
  %v1785 = vmul.f32 %v1773, 3.8918573e-05
  %v1786 = vadd.f32 %v1785, 0.001143296
  %v1787 = vmul.f32 %v1773, %v1786
  %v1788 = vadd.f32 %v1787, 0.014752088
  %v1789 = vmul.f32 %v1773, %v1788
  %v1790 = vadd.f32 %v1789, 0.112945676
  %v1791 = vmul.f32 %v1773, %v1790
  %v1792 = vadd.f32 %v1791, 0.4994258
  %v1793 = vmul.f32 %v1773, %v1792
  %v1794 = vadd.f32 %v1793, 1.0
  %v1795 = vrcp.pop %v1794
  %v1796 = vmul.f32 %v1794, %v1795
  %v1797 = vsub.f32 1.0, %v1796
  %v1798 = vmul.f32 %v1795, %v1797
  %v1799 = vadd.f32 %v1795, %v1798
  %vm1800 = vweird.f32 %v1794
  %vm1801 = vweird.f32 %v1795
  %vm1802 = vmor %vm1800, %vm1801
  %v1803 = vsel %vm1802, %v1795, %v1799
  %v1804 = vand.u32 2147483647, %v1794
  %vm1805 = vcmp.eq.f32.partialorder %v1804, 8.507059e+37
  %v1806 = vand.u32 %v1794, 2147483648
  %v1807 = vor.u32 1.1754944e-38, %v1806
  %v1808 = vsel %vm1805, %v1807, %v1803
  %v1809 = vmul.f32 %v1784, %v1808
  %v1810 = vmin.f32 %v1809, 1.0
  %v1811 = vmax.f32 %v1810, -1.0
  %v1812 = vmul.f32 %v446, %v446
  %v1813 = vmin.f32 16.0, %v1812
  %v1814 = vmul.f32 %v1813, 2.1237322e-06
  %v1815 = vadd.f32 %v1814, 0.00028619796
  %v1816 = vmul.f32 %v1813, %v1815
  %v1817 = vadd.f32 %v1816, 0.0036580483
  %v1818 = vmul.f32 %v1813, %v1817
  %v1819 = vadd.f32 %v1818, 0.05243302
  %v1820 = vmul.f32 %v1813, %v1819
  %v1821 = vadd.f32 %v1820, 0.18741608
  %v1822 = vmul.f32 %v1813, %v1821
  %v1823 = vadd.f32 %v1822, 1.1283791
  %v1824 = vmul.f32 %v446, %v1823
  %v1825 = vmul.f32 %v1813, 3.8918573e-05
  %v1826 = vadd.f32 %v1825, 0.001143296
  %v1827 = vmul.f32 %v1813, %v1826
  %v1828 = vadd.f32 %v1827, 0.014752088
  %v1829 = vmul.f32 %v1813, %v1828
  %v1830 = vadd.f32 %v1829, 0.112945676
  %v1831 = vmul.f32 %v1813, %v1830
  %v1832 = vadd.f32 %v1831, 0.4994258
  %v1833 = vmul.f32 %v1813, %v1832
  %v1834 = vadd.f32 %v1833, 1.0
  %v1835 = vrcp.pop %v1834
  %v1836 = vmul.f32 %v1834, %v1835
  %v1837 = vsub.f32 1.0, %v1836
  %v1838 = vmul.f32 %v1835, %v1837
  %v1839 = vadd.f32 %v1835, %v1838
  %vm1840 = vweird.f32 %v1834
  %vm1841 = vweird.f32 %v1835
  %vm1842 = vmor %vm1840, %vm1841
  %v1843 = vsel %vm1842, %v1835, %v1839
  %v1844 = vand.u32 2147483647, %v1834
  %vm1845 = vcmp.eq.f32.partialorder %v1844, 8.507059e+37
  %v1846 = vand.u32 %v1834, 2147483648
  %v1847 = vor.u32 1.1754944e-38, %v1846
  %v1848 = vsel %vm1845, %v1847, %v1843
  %v1849 = vmul.f32 %v1824, %v1848
  %v1850 = vmin.f32 %v1849, 1.0
  %v1851 = vmax.f32 %v1850, -1.0
  %v1852 = vmul.f32 %v447, %v447
  %v1853 = vmin.f32 16.0, %v1852
  %v1854 = vmul.f32 %v1853, 2.1237322e-06
  %v1855 = vadd.f32 %v1854, 0.00028619796
  %v1856 = vmul.f32 %v1853, %v1855
  %v1857 = vadd.f32 %v1856, 0.0036580483
  %v1858 = vmul.f32 %v1853, %v1857
  %v1859 = vadd.f32 %v1858, 0.05243302
  %v1860 = vmul.f32 %v1853, %v1859
  %v1861 = vadd.f32 %v1860, 0.18741608
  %v1862 = vmul.f32 %v1853, %v1861
  %v1863 = vadd.f32 %v1862, 1.1283791
  %v1864 = vmul.f32 %v447, %v1863
  %v1865 = vmul.f32 %v1853, 3.8918573e-05
  %v1866 = vadd.f32 %v1865, 0.001143296
  %v1867 = vmul.f32 %v1853, %v1866
  %v1868 = vadd.f32 %v1867, 0.014752088
  %v1869 = vmul.f32 %v1853, %v1868
  %v1870 = vadd.f32 %v1869, 0.112945676
  %v1871 = vmul.f32 %v1853, %v1870
  %v1872 = vadd.f32 %v1871, 0.4994258
  %v1873 = vmul.f32 %v1853, %v1872
  %v1874 = vadd.f32 %v1873, 1.0
  %v1875 = vrcp.pop %v1874
  %v1876 = vmul.f32 %v1874, %v1875
  %v1877 = vsub.f32 1.0, %v1876
  %v1878 = vmul.f32 %v1875, %v1877
  %v1879 = vadd.f32 %v1875, %v1878
  %vm1880 = vweird.f32 %v1874
  %vm1881 = vweird.f32 %v1875
  %vm1882 = vmor %vm1880, %vm1881
  %v1883 = vsel %vm1882, %v1875, %v1879
  %v1884 = vand.u32 2147483647, %v1874
  %vm1885 = vcmp.eq.f32.partialorder %v1884, 8.507059e+37
  %v1886 = vand.u32 %v1874, 2147483648
  %v1887 = vor.u32 1.1754944e-38, %v1886
  %v1888 = vsel %vm1885, %v1887, %v1883
  %v1889 = vmul.f32 %v1864, %v1888
  %v1890 = vmin.f32 %v1889, 1.0
  %v1891 = vmax.f32 %v1890, -1.0
  %v1892 = vmul.f32 %v448, %v448
  %v1893 = vmin.f32 16.0, %v1892
  %v1894 = vmul.f32 %v1893, 2.1237322e-06
  %v1895 = vadd.f32 %v1894, 0.00028619796
  %v1896 = vmul.f32 %v1893, %v1895
  %v1897 = vadd.f32 %v1896, 0.0036580483
  %v1898 = vmul.f32 %v1893, %v1897
  %v1899 = vadd.f32 %v1898, 0.05243302
  %v1900 = vmul.f32 %v1893, %v1899
  %v1901 = vadd.f32 %v1900, 0.18741608
  %v1902 = vmul.f32 %v1893, %v1901
  %v1903 = vadd.f32 %v1902, 1.1283791
  %v1904 = vmul.f32 %v448, %v1903
  %v1905 = vmul.f32 %v1893, 3.8918573e-05
  %v1906 = vadd.f32 %v1905, 0.001143296
  %v1907 = vmul.f32 %v1893, %v1906
  %v1908 = vadd.f32 %v1907, 0.014752088
  %v1909 = vmul.f32 %v1893, %v1908
  %v1910 = vadd.f32 %v1909, 0.112945676
  %v1911 = vmul.f32 %v1893, %v1910
  %v1912 = vadd.f32 %v1911, 0.4994258
  %v1913 = vmul.f32 %v1893, %v1912
  %v1914 = vadd.f32 %v1913, 1.0
  %v1915 = vrcp.pop %v1914
  %v1916 = vmul.f32 %v1914, %v1915
  %v1917 = vsub.f32 1.0, %v1916
  %v1918 = vmul.f32 %v1915, %v1917
  %v1919 = vadd.f32 %v1915, %v1918
  %vm1920 = vweird.f32 %v1914
  %vm1921 = vweird.f32 %v1915
  %vm1922 = vmor %vm1920, %vm1921
  %v1923 = vsel %vm1922, %v1915, %v1919
  %v1924 = vand.u32 2147483647, %v1914
  %vm1925 = vcmp.eq.f32.partialorder %v1924, 8.507059e+37
  %v1926 = vand.u32 %v1914, 2147483648
  %v1927 = vor.u32 1.1754944e-38, %v1926
  %v1928 = vsel %vm1925, %v1927, %v1923
  %v1929 = vmul.f32 %v1904, %v1928
  %v1930 = vmin.f32 %v1929, 1.0
  %v1931 = vmax.f32 %v1930, -1.0
  %v1932 = vmul.f32 %v449, %v449
  %v1933 = vmin.f32 16.0, %v1932
  %v1934 = vmul.f32 %v1933, 2.1237322e-06
  %v1935 = vadd.f32 %v1934, 0.00028619796
  %v1936 = vmul.f32 %v1933, %v1935
  %v1937 = vadd.f32 %v1936, 0.0036580483
  %v1938 = vmul.f32 %v1933, %v1937
  %v1939 = vadd.f32 %v1938, 0.05243302
  %v1940 = vmul.f32 %v1933, %v1939
  %v1941 = vadd.f32 %v1940, 0.18741608
  %v1942 = vmul.f32 %v1933, %v1941
  %v1943 = vadd.f32 %v1942, 1.1283791
  %v1944 = vmul.f32 %v449, %v1943
  %v1945 = vmul.f32 %v1933, 3.8918573e-05
  %v1946 = vadd.f32 %v1945, 0.001143296
  %v1947 = vmul.f32 %v1933, %v1946
  %v1948 = vadd.f32 %v1947, 0.014752088
  %v1949 = vmul.f32 %v1933, %v1948
  %v1950 = vadd.f32 %v1949, 0.112945676
  %v1951 = vmul.f32 %v1933, %v1950
  %v1952 = vadd.f32 %v1951, 0.4994258
  %v1953 = vmul.f32 %v1933, %v1952
  %v1954 = vadd.f32 %v1953, 1.0
  %v1955 = vrcp.pop %v1954
  %v1956 = vmul.f32 %v1954, %v1955
  %v1957 = vsub.f32 1.0, %v1956
  %v1958 = vmul.f32 %v1955, %v1957
  %v1959 = vadd.f32 %v1955, %v1958
  %vm1960 = vweird.f32 %v1954
  %vm1961 = vweird.f32 %v1955
  %vm1962 = vmor %vm1960, %vm1961
  %v1963 = vsel %vm1962, %v1955, %v1959
  %v1964 = vand.u32 2147483647, %v1954
  %vm1965 = vcmp.eq.f32.partialorder %v1964, 8.507059e+37
  %v1966 = vand.u32 %v1954, 2147483648
  %v1967 = vor.u32 1.1754944e-38, %v1966
  %v1968 = vsel %vm1965, %v1967, %v1963
  %v1969 = vmul.f32 %v1944, %v1968
  %v1970 = vmin.f32 %v1969, 1.0
  %v1971 = vmax.f32 %v1970, -1.0
  %v1972 = vmul.f32 %v450, %v450
  %v1973 = vmin.f32 16.0, %v1972
  %v1974 = vmul.f32 %v1973, 2.1237322e-06
  %v1975 = vadd.f32 %v1974, 0.00028619796
  %v1976 = vmul.f32 %v1973, %v1975
  %v1977 = vadd.f32 %v1976, 0.0036580483
  %v1978 = vmul.f32 %v1973, %v1977
  %v1979 = vadd.f32 %v1978, 0.05243302
  %v1980 = vmul.f32 %v1973, %v1979
  %v1981 = vadd.f32 %v1980, 0.18741608
  %v1982 = vmul.f32 %v1973, %v1981
  %v1983 = vadd.f32 %v1982, 1.1283791
  %v1984 = vmul.f32 %v450, %v1983
  %v1985 = vmul.f32 %v1973, 3.8918573e-05
  %v1986 = vadd.f32 %v1985, 0.001143296
  %v1987 = vmul.f32 %v1973, %v1986
  %v1988 = vadd.f32 %v1987, 0.014752088
  %v1989 = vmul.f32 %v1973, %v1988
  %v1990 = vadd.f32 %v1989, 0.112945676
  %v1991 = vmul.f32 %v1973, %v1990
  %v1992 = vadd.f32 %v1991, 0.4994258
  %v1993 = vmul.f32 %v1973, %v1992
  %v1994 = vadd.f32 %v1993, 1.0
  %v1995 = vrcp.pop %v1994
  %v1996 = vmul.f32 %v1994, %v1995
  %v1997 = vsub.f32 1.0, %v1996
  %v1998 = vmul.f32 %v1995, %v1997
  %v1999 = vadd.f32 %v1995, %v1998
  %vm2000 = vweird.f32 %v1994
  %vm2001 = vweird.f32 %v1995
  %vm2002 = vmor %vm2000, %vm2001
  %v2003 = vsel %vm2002, %v1995, %v1999
  %v2004 = vand.u32 2147483647, %v1994
  %vm2005 = vcmp.eq.f32.partialorder %v2004, 8.507059e+37
  %v2006 = vand.u32 %v1994, 2147483648
  %v2007 = vor.u32 1.1754944e-38, %v2006
  %v2008 = vsel %vm2005, %v2007, %v2003
  %v2009 = vmul.f32 %v1984, %v2008
  %v2010 = vmin.f32 %v2009, 1.0
  %v2011 = vmax.f32 %v2010, -1.0
  %v2012 = vmul.f32 %v451, %v451
  %v2013 = vmin.f32 16.0, %v2012
  %v2014 = vmul.f32 %v2013, 2.1237322e-06
  %v2015 = vadd.f32 %v2014, 0.00028619796
  %v2016 = vmul.f32 %v2013, %v2015
  %v2017 = vadd.f32 %v2016, 0.0036580483
  %v2018 = vmul.f32 %v2013, %v2017
  %v2019 = vadd.f32 %v2018, 0.05243302
  %v2020 = vmul.f32 %v2013, %v2019
  %v2021 = vadd.f32 %v2020, 0.18741608
  %v2022 = vmul.f32 %v2013, %v2021
  %v2023 = vadd.f32 %v2022, 1.1283791
  %v2024 = vmul.f32 %v451, %v2023
  %v2025 = vmul.f32 %v2013, 3.8918573e-05
  %v2026 = vadd.f32 %v2025, 0.001143296
  %v2027 = vmul.f32 %v2013, %v2026
  %v2028 = vadd.f32 %v2027, 0.014752088
  %v2029 = vmul.f32 %v2013, %v2028
  %v2030 = vadd.f32 %v2029, 0.112945676
  %v2031 = vmul.f32 %v2013, %v2030
  %v2032 = vadd.f32 %v2031, 0.4994258
  %v2033 = vmul.f32 %v2013, %v2032
  %v2034 = vadd.f32 %v2033, 1.0
  %v2035 = vrcp.pop %v2034
  %v2036 = vmul.f32 %v2034, %v2035
  %v2037 = vsub.f32 1.0, %v2036
  %v2038 = vmul.f32 %v2035, %v2037
  %v2039 = vadd.f32 %v2035, %v2038
  %vm2040 = vweird.f32 %v2034
  %vm2041 = vweird.f32 %v2035
  %vm2042 = vmor %vm2040, %vm2041
  %v2043 = vsel %vm2042, %v2035, %v2039
  %v2044 = vand.u32 2147483647, %v2034
  %vm2045 = vcmp.eq.f32.partialorder %v2044, 8.507059e+37
  %v2046 = vand.u32 %v2034, 2147483648
  %v2047 = vor.u32 1.1754944e-38, %v2046
  %v2048 = vsel %vm2045, %v2047, %v2043
  %v2049 = vmul.f32 %v2024, %v2048
  %v2050 = vmin.f32 %v2049, 1.0
  %v2051 = vmax.f32 %v2050, -1.0
  %v2052 = vadd.f32 %v491, 1.0
  %v2053 = vadd.f32 %v531, 1.0
  %v2054 = vadd.f32 %v571, 1.0
  %v2055 = vadd.f32 %v611, 1.0
  %v2056 = vadd.f32 %v651, 1.0
  %v2057 = vadd.f32 %v691, 1.0
  %v2058 = vadd.f32 %v731, 1.0
  %v2059 = vadd.f32 %v771, 1.0
  %v2060 = vadd.f32 %v811, 1.0
  %v2061 = vadd.f32 %v851, 1.0
  %v2062 = vadd.f32 %v891, 1.0
  %v2063 = vadd.f32 %v931, 1.0
  %v2064 = vadd.f32 %v971, 1.0
  %v2065 = vadd.f32 %v1011, 1.0
  %v2066 = vadd.f32 %v1051, 1.0
  %v2067 = vadd.f32 %v1091, 1.0
  %v2068 = vadd.f32 %v1131, 1.0
  %v2069 = vadd.f32 %v1171, 1.0
  %v2070 = vadd.f32 %v1211, 1.0
  %v2071 = vadd.f32 %v1251, 1.0
  %v2072 = vadd.f32 %v1291, 1.0
  %v2073 = vadd.f32 %v1331, 1.0
  %v2074 = vadd.f32 %v1371, 1.0
  %v2075 = vadd.f32 %v1411, 1.0
  %v2076 = vadd.f32 %v1451, 1.0
  %v2077 = vadd.f32 %v1491, 1.0
  %v2078 = vadd.f32 %v1531, 1.0
  %v2079 = vadd.f32 %v1571, 1.0
  %v2080 = vadd.f32 %v1611, 1.0
  %v2081 = vadd.f32 %v1651, 1.0
  %v2082 = vadd.f32 %v1691, 1.0
  %v2083 = vadd.f32 %v1731, 1.0
  %v2084 = vadd.f32 %v1771, 1.0
  %v2085 = vadd.f32 %v1811, 1.0
  %v2086 = vadd.f32 %v1851, 1.0
  %v2087 = vadd.f32 %v1891, 1.0
  %v2088 = vadd.f32 %v1931, 1.0
  %v2089 = vadd.f32 %v1971, 1.0
  %v2090 = vadd.f32 %v2011, 1.0
  %v2091 = vadd.f32 %v2051, 1.0
  %v2092 = vmul.f32 %v372, %v2052
  %v2093 = vmul.f32 %v373, %v2053
  %v2094 = vmul.f32 %v374, %v2054
  %v2095 = vmul.f32 %v375, %v2055
  %v2096 = vmul.f32 %v376, %v2056
  %v2097 = vmul.f32 %v377, %v2057
  %v2098 = vmul.f32 %v378, %v2058
  %v2099 = vmul.f32 %v379, %v2059
  %v2100 = vmul.f32 %v380, %v2060
  %v2101 = vmul.f32 %v381, %v2061
  %v2102 = vmul.f32 %v382, %v2062
  %v2103 = vmul.f32 %v383, %v2063
  %v2104 = vmul.f32 %v384, %v2064
  %v2105 = vmul.f32 %v385, %v2065
  %v2106 = vmul.f32 %v386, %v2066
  %v2107 = vmul.f32 %v387, %v2067
  %v2108 = vmul.f32 %v388, %v2068
  %v2109 = vmul.f32 %v389, %v2069
  %v2110 = vmul.f32 %v390, %v2070
  %v2111 = vmul.f32 %v391, %v2071
  %v2112 = vmul.f32 %v392, %v2072
  %v2113 = vmul.f32 %v393, %v2073
  %v2114 = vmul.f32 %v394, %v2074
  %v2115 = vmul.f32 %v395, %v2075
  %v2116 = vmul.f32 %v396, %v2076
  %v2117 = vmul.f32 %v397, %v2077
  %v2118 = vmul.f32 %v398, %v2078
  %v2119 = vmul.f32 %v399, %v2079
  %v2120 = vmul.f32 %v400, %v2080
  %v2121 = vmul.f32 %v401, %v2081
  %v2122 = vmul.f32 %v402, %v2082
  %v2123 = vmul.f32 %v403, %v2083
  %v2124 = vmul.f32 %v404, %v2084
  %v2125 = vmul.f32 %v405, %v2085
  %v2126 = vmul.f32 %v406, %v2086
  %v2127 = vmul.f32 %v407, %v2087
  %v2128 = vmul.f32 %v408, %v2088
  %v2129 = vmul.f32 %v409, %v2089
  %v2130 = vmul.f32 %v410, %v2090
  %v2131 = vmul.f32 %v411, %v2091
  %v2132 = vpack.c.bf16 %v2093, %v2092
  %v2133 = vpack.c.bf16 %v2095, %v2094
  %v2134 = vpack.c.bf16 %v2096, %v2096
  %v2135 = vpack.c.bf16 %v2098, %v2097
  %v2136 = vpack.c.bf16 %v2100, %v2099
  %v2137 = vpack.c.bf16 %v2101, %v2101
  %v2138 = vpack.c.bf16 %v2103, %v2102
  %v2139 = vpack.c.bf16 %v2105, %v2104
  %v2140 = vpack.c.bf16 %v2106, %v2106
  %v2141 = vpack.c.bf16 %v2108, %v2107
  %v2142 = vpack.c.bf16 %v2110, %v2109
  %v2143 = vpack.c.bf16 %v2111, %v2111
  %v2144 = vpack.c.bf16 %v2113, %v2112
  %v2145 = vpack.c.bf16 %v2115, %v2114
  %v2146 = vpack.c.bf16 %v2116, %v2116
  %v2147 = vpack.c.bf16 %v2118, %v2117
  %v2148 = vpack.c.bf16 %v2120, %v2119
  %v2149 = vpack.c.bf16 %v2121, %v2121
  %v2150 = vpack.c.bf16 %v2123, %v2122
  %v2151 = vpack.c.bf16 %v2125, %v2124
  %v2152 = vpack.c.bf16 %v2126, %v2126
  %v2153 = vpack.c.bf16 %v2128, %v2127
  %v2154 = vpack.c.bf16 %v2130, %v2129
  %v2155 = vpack.c.bf16 %v2131, %v2131
  %2156 = vst [vmem:[%s2] sm:$0xff] %v2132
  %2157 = vst [vmem:[%s2 + $0x8] sm:$0xff] %v2133
  %vm2158 = vcmask 535552
  %2159 = vst.msk [vmem:[%s2 + $0x10] sm:$0xf] %vm2158, %v2134
  %2160 = vst [vmem:[%s2 + $0x14] sm:$0xff] %v2135
  %2161 = vst [vmem:[%s2 + $0x1c] sm:$0xff] %v2136
  %2162 = vst.msk [vmem:[%s2 + $0x24] sm:$0xf] %vm2158, %v2137
  %2163 = vst [vmem:[%s2 + $0x28] sm:$0xff] %v2138
  %2164 = vst [vmem:[%s2 + $0x30] sm:$0xff] %v2139
  %2165 = vst.msk [vmem:[%s2 + $0x38] sm:$0xf] %vm2158, %v2140
  %2166 = vst [vmem:[%s2 + $0x3c] sm:$0xff] %v2141
  %2167 = vst [vmem:[%s2 + $0x44] sm:$0xff] %v2142
  %2168 = vst.msk [vmem:[%s2 + $0x4c] sm:$0xf] %vm2158, %v2143
  %2169 = vst [vmem:[%s2 + $0x50] sm:$0xff] %v2144
  %2170 = vst [vmem:[%s2 + $0x58] sm:$0xff] %v2145
  %2171 = vst.msk [vmem:[%s2 + $0x60] sm:$0xf] %vm2158, %v2146
  %2172 = vst [vmem:[%s2 + $0x64] sm:$0xff] %v2147
  %2173 = vst [vmem:[%s2 + $0x6c] sm:$0xff] %v2148
  %2174 = vst.msk [vmem:[%s2 + $0x74] sm:$0xf] %vm2158, %v2149
  %2175 = vst [vmem:[%s2 + $0x78] sm:$0xff] %v2150
  %2176 = vst [vmem:[%s2 + $0x80] sm:$0xff] %v2151
  %2177 = vst.msk [vmem:[%s2 + $0x88] sm:$0xf] %vm2158, %v2152
  %2178 = vst [vmem:[%s2 + $0x8c] sm:$0xff] %v2153
  %2179 = vst [vmem:[%s2 + $0x94] sm:$0xff] %v2154
  %2180 = vst.msk [vmem:[%s2 + $0x9c] sm:$0xf] %vm2158, %v2155
  // Predicated region
  $region10: #{resnet_forward.2} parent=0 // pred_check
    _
  $region11: #{resnet_forward.2} parent=0 // pred_check_branch
    %2182 = sbr.rel (0) target = $region13
  $region12: #{resnet_forward.2} parent=0 // pred_region
    _
  $region13: #{resnet_forward.2} parent=0 // pred_fallthru
    _
  // Predicated region
  $region14: #{resnet_forward.2} parent=0 // pred_check
    _
  $region15: #{resnet_forward.2} parent=0 // pred_check_branch
    %2184 = sbr.rel (0) target = $region17
  $region16: #{resnet_forward.2} parent=0 // pred_region
    _
  $region17: #{resnet_forward.2} parent=0 // pred_fallthru
    _

// kernel: resnet_forward.3
$region0: #{resnet_forward.3}
  #allocation0 [shape = 'u32[]', space=smem, size = 0x4, offset = 0x4, fixed_abs, tag = 'smem constant byte address 0x4 - core index']
  #allocation1 [shape = 'u32[72,128]{1,0:T(1,128)}', space=vmem, size = 0x9000, scoped, tag = 'internal scratch']
  %s0 = inlined_call_operand.vmem [shape: bf16[1600,98], index: 0, kind: input, shape index: {}]
  %s1 = inlined_call_operand.vmem [shape: bf16[64,1600], index: 1, kind: input, shape index: {}]
  %s2 = inlined_call_operand.vmem [shape: bf16[2,64], index: 2, kind: input, shape index: {}]
  %s3 = inlined_call_operand.vmem [shape: bf16[9,2,2], index: 3, kind: input, shape index: {}]
  %s4 = inlined_call_operand.vmem [shape: bf16[8,2], index: 4, kind: input, shape index: {}]
  %s5 = inlined_call_operand.vmem [shape: bf16[8,64], index: 5, kind: input, shape index: {}]
  %s6 = inlined_call_operand.vmem [shape: bf16[9,98,98], index: 6, kind: input, shape index: {}]
  %s7 = inlined_call_operand.vmem [shape: bf16[3,8], index: 7, kind: input, shape index: {}]
  %s8 = inlined_call_operand.vmem [shape: bf16[9,3,3], index: 8, kind: input, shape index: {}]
  %s9 = inlined_call_operand.vmem [shape: bf16[12,3], index: 9, kind: input, shape index: {}]
  %s10 = inlined_call_operand.vmem [shape: bf16[12,8], index: 10, kind: input, shape index: {}]
  %s11 = inlined_call_operand.vmem [shape: bf16[9,98,18], index: 11, kind: input, shape index: {}]
  %s12 = inlined_call_operand.vmem [shape: bf16[4,12], index: 12, kind: input, shape index: {}]
  %s13 = inlined_call_operand.vmem [shape: bf16[4,4,4], index: 13, kind: input, shape index: {}]
  %s14 = inlined_call_operand.vmem [shape: bf16[16,4], index: 14, kind: input, shape index: {}]
  %s15 = inlined_call_operand.vmem [shape: bf16[16,12], index: 15, kind: input, shape index: {}]
  %s16 = inlined_call_operand.vmem [shape: bf16[4,18,2], index: 16, kind: input, shape index: {}]
  %s17 = inlined_call_operand.vmem [shape: bf16[5,16], index: 17, kind: input, shape index: {}]
  %s18 = inlined_call_operand.vmem [shape: bf16[1,5,5], index: 18, kind: input, shape index: {}]
  %s19 = inlined_call_operand.vmem [shape: bf16[20,5], index: 19, kind: input, shape index: {}]
  %s20 = inlined_call_operand.vmem [shape: bf16[20,16], index: 20, kind: input, shape index: {}]
  %s21 = inlined_call_operand.vmem [shape: bf16[1,2,2], index: 21, kind: input, shape index: {}, may-alias: {21,26}]
  %s22 = inlined_call_operand.vmem [shape: bf16[6,20], index: 22, kind: input, shape index: {}]
  %s23 = inlined_call_operand.vmem [shape: bf16[1,6,6], index: 23, kind: input, shape index: {}]
  %s24 = inlined_call_operand.vmem [shape: bf16[24,6], index: 24, kind: input, shape index: {}]
  %s25 = inlined_call_operand.vmem [shape: bf16[24,20], index: 25, kind: input, shape index: {}]
  %s26 = inlined_call_operand.vmem [shape: bf16[1,2,2], index: 26, kind: input, shape index: {}, may-alias: {21,26}]
  %s27 = inlined_call_operand.vmem [shape: f32[24,2], index: 27, kind: output, shape index: {}]
  %s28 = sld [smem:[#allocation0]]
  $region118: #{resnet_forward.3} parent=0
    _
  %s30 = ssub.s32 1, %s28
  %s31 = scalar_select 0, %s30, %s28
  // Predicated region
  $region2: #{resnet_forward.3} parent=0 // pred_check
    _
  $region3: #{resnet_forward.3} parent=0 // pred_check_branch
    %33 = sbr.rel (0) target = $region5
  $region4: #{resnet_forward.3} parent=0 // pred_region
    _
  $region5: #{resnet_forward.3} parent=0 // pred_fallthru
    _
  // Predicated region
  $region6: #{resnet_forward.3} parent=0 // pred_check
    _
  $region7: #{resnet_forward.3} parent=0 // pred_check_branch
    %35 = sbr.rel (0) target = $region9
  $region8: #{resnet_forward.3} parent=0 // pred_region
    _
  $region9: #{resnet_forward.3} parent=0 // pred_fallthru
    _
  // Predicated region
  $region10: #{resnet_forward.3} parent=0 // pred_check
    _
  $region11: #{resnet_forward.3} parent=0 // pred_check_branch
    %37 = sbr.rel (0) target = $region13
  $region12: #{resnet_forward.3} parent=0 // pred_region
    _
  $region13: #{resnet_forward.3} parent=0 // pred_fallthru
    _
  // Predicated region
  $region14: #{resnet_forward.3} parent=0 // pred_check
    _
  $region15: #{resnet_forward.3} parent=0 // pred_check_branch
    %39 = sbr.rel (0) target = $region17
  $region16: #{resnet_forward.3} parent=0 // pred_region
    _
  $region17: #{resnet_forward.3} parent=0 // pred_fallthru
    _
  // Predicated region
  $region18: #{resnet_forward.3} parent=0 // pred_check
    _
  $region19: #{resnet_forward.3} parent=0 // pred_check_branch
    %41 = sbr.rel (0) target = $region21
  $region20: #{resnet_forward.3} parent=0 // pred_region
    _
  $region21: #{resnet_forward.3} parent=0 // pred_fallthru
    _
  // Predicated region
  $region22: #{resnet_forward.3} parent=0 // pred_check
    _
  $region23: #{resnet_forward.3} parent=0 // pred_check_branch
    %43 = sbr.rel (0) target = $region25
  $region24: #{resnet_forward.3} parent=0 // pred_region
    _
  $region25: #{resnet_forward.3} parent=0 // pred_fallthru
    _
  // Predicated region
  $region26: #{resnet_forward.3} parent=0 // pred_check
    _
  $region27: #{resnet_forward.3} parent=0 // pred_check_branch
    %45 = sbr.rel (0) target = $region29
  $region28: #{resnet_forward.3} parent=0 // pred_region
    _
  $region29: #{resnet_forward.3} parent=0 // pred_fallthru
    _
  // Predicated region
  $region30: #{resnet_forward.3} parent=0 // pred_check
    _
  $region31: #{resnet_forward.3} parent=0 // pred_check_branch
    %47 = sbr.rel (0) target = $region33
  $region32: #{resnet_forward.3} parent=0 // pred_region
    _
  $region33: #{resnet_forward.3} parent=0 // pred_fallthru
    _
  // Predicated region
  $region34: #{resnet_forward.3} parent=0 // pred_check
    _
  $region35: #{resnet_forward.3} parent=0 // pred_check_branch
    %49 = sbr.rel (0) target = $region37
  $region36: #{resnet_forward.3} parent=0 // pred_region
    _
  $region37: #{resnet_forward.3} parent=0 // pred_fallthru
    _
  // Predicated region
  $region38: #{resnet_forward.3} parent=0 // pred_check
    _
  $region39: #{resnet_forward.3} parent=0 // pred_check_branch
    %51 = sbr.rel (0) target = $region41
  $region40: #{resnet_forward.3} parent=0 // pred_region
    _
  $region41: #{resnet_forward.3} parent=0 // pred_fallthru
    _
  // Predicated region
  $region42: #{resnet_forward.3} parent=0 // pred_check
    _
  $region43: #{resnet_forward.3} parent=0 // pred_check_branch
    %53 = sbr.rel (0) target = $region45
  $region44: #{resnet_forward.3} parent=0 // pred_region
    _
  $region45: #{resnet_forward.3} parent=0 // pred_fallthru
    _
  // Predicated region
  $region46: #{resnet_forward.3} parent=0 // pred_check
    _
  $region47: #{resnet_forward.3} parent=0 // pred_check_branch
    %55 = sbr.rel (0) target = $region49
  $region48: #{resnet_forward.3} parent=0 // pred_region
    _
  $region49: #{resnet_forward.3} parent=0 // pred_fallthru
    _
  // Predicated region
  $region50: #{resnet_forward.3} parent=0 // pred_check
    _
  $region51: #{resnet_forward.3} parent=0 // pred_check_branch
    %57 = sbr.rel (0) target = $region53
  $region52: #{resnet_forward.3} parent=0 // pred_region
    _
  $region53: #{resnet_forward.3} parent=0 // pred_fallthru
    _
  // Predicated region
  $region54: #{resnet_forward.3} parent=0 // pred_check
    _
  $region55: #{resnet_forward.3} parent=0 // pred_check_branch
    %59 = sbr.rel (0) target = $region57
  $region56: #{resnet_forward.3} parent=0 // pred_region
    _
  $region57: #{resnet_forward.3} parent=0 // pred_fallthru
    _
  // Predicated region
  $region58: #{resnet_forward.3} parent=0 // pred_check
    _
  $region59: #{resnet_forward.3} parent=0 // pred_check_branch
    %61 = sbr.rel (0) target = $region61
  $region60: #{resnet_forward.3} parent=0 // pred_region
    _
  $region61: #{resnet_forward.3} parent=0 // pred_fallthru
    _
  // Predicated region
  $region62: #{resnet_forward.3} parent=0 // pred_check
    _
  $region63: #{resnet_forward.3} parent=0 // pred_check_branch
    %63 = sbr.rel (0) target = $region65
  $region64: #{resnet_forward.3} parent=0 // pred_region
    _
  $region65: #{resnet_forward.3} parent=0 // pred_fallthru
    _
  // Predicated region
  $region66: #{resnet_forward.3} parent=0 // pred_check
    _
  $region67: #{resnet_forward.3} parent=0 // pred_check_branch
    %65 = sbr.rel (0) target = $region69
  $region68: #{resnet_forward.3} parent=0 // pred_region
    _
  $region69: #{resnet_forward.3} parent=0 // pred_fallthru
    _
  // Predicated region
  $region70: #{resnet_forward.3} parent=0 // pred_check
    _
  $region71: #{resnet_forward.3} parent=0 // pred_check_branch
    %67 = sbr.rel (0) target = $region73
  $region72: #{resnet_forward.3} parent=0 // pred_region
    _
  $region73: #{resnet_forward.3} parent=0 // pred_fallthru
    _
  // Predicated region
  $region74: #{resnet_forward.3} parent=0 // pred_check
    _
  $region75: #{resnet_forward.3} parent=0 // pred_check_branch
    %69 = sbr.rel (0) target = $region77
  $region76: #{resnet_forward.3} parent=0 // pred_region
    _
  $region77: #{resnet_forward.3} parent=0 // pred_fallthru
    _
  // Predicated region
  $region78: #{resnet_forward.3} parent=0 // pred_check
    _
  $region79: #{resnet_forward.3} parent=0 // pred_check_branch
    %71 = sbr.rel (0) target = $region81
  $region80: #{resnet_forward.3} parent=0 // pred_region
    _
  $region81: #{resnet_forward.3} parent=0 // pred_fallthru
    _
  // Predicated region
  $region82: #{resnet_forward.3} parent=0 // pred_check
    _
  $region83: #{resnet_forward.3} parent=0 // pred_check_branch
    %73 = sbr.rel (0) target = $region85
  $region84: #{resnet_forward.3} parent=0 // pred_region
    _
  $region85: #{resnet_forward.3} parent=0 // pred_fallthru
    _
  // Predicated region
  $region86: #{resnet_forward.3} parent=0 // pred_check
    _
  $region87: #{resnet_forward.3} parent=0 // pred_check_branch
    %75 = sbr.rel (0) target = $region89
  $region88: #{resnet_forward.3} parent=0 // pred_region
    _
  $region89: #{resnet_forward.3} parent=0 // pred_fallthru
    _
  // Predicated region
  $region90: #{resnet_forward.3} parent=0 // pred_check
    _
  $region91: #{resnet_forward.3} parent=0 // pred_check_branch
    %77 = sbr.rel (0) target = $region93
  $region92: #{resnet_forward.3} parent=0 // pred_region
    _
  $region93: #{resnet_forward.3} parent=0 // pred_fallthru
    _
  // Predicated region
  $region94: #{resnet_forward.3} parent=0 // pred_check
    _
  $region95: #{resnet_forward.3} parent=0 // pred_check_branch
    %79 = sbr.rel (0) target = $region97
  $region96: #{resnet_forward.3} parent=0 // pred_region
    _
  $region97: #{resnet_forward.3} parent=0 // pred_fallthru
    _
  // Predicated region
  $region98: #{resnet_forward.3} parent=0 // pred_check
    _
  $region99: #{resnet_forward.3} parent=0 // pred_check_branch
    %81 = sbr.rel (0) target = $region101
  $region100: #{resnet_forward.3} parent=0 // pred_region
    _
  $region101: #{resnet_forward.3} parent=0 // pred_fallthru
    _
  // Predicated region
  $region102: #{resnet_forward.3} parent=0 // pred_check
    _
  $region103: #{resnet_forward.3} parent=0 // pred_check_branch
    %83 = sbr.rel (0) target = $region105
  $region104: #{resnet_forward.3} parent=0 // pred_region
    _
  $region105: #{resnet_forward.3} parent=0 // pred_fallthru
    _
  // Predicated region
  $region106: #{resnet_forward.3} parent=0 // pred_check
    _
  $region107: #{resnet_forward.3} parent=0 // pred_check_branch
    %85 = sbr.rel (0) target = $region109
  $region108: #{resnet_forward.3} parent=0 // pred_region
    _
  $region109: #{resnet_forward.3} parent=0 // pred_fallthru
    _
  %v87 = vld [vmem:[%s1] sm:$0xff]
  %v88 = vld [vmem:[%s1 + $0x8] sm:$0xff]
  %v89 = vld [vmem:[%s1 + $0x10] sm:$0xff]
  %v90 = vld [vmem:[%s1 + $0x18] sm:$0xff]
  %v91 = vld [vmem:[%s1 + $0x20] sm:$0xff]
  %v92 = vld [vmem:[%s1 + $0x28] sm:$0xff]
  %v93 = vld [vmem:[%s1 + $0x30] sm:$0xf]
  %v94 = vld [vmem:[%s1 + $0x34] sm:$0xff]
  %v95 = vld [vmem:[%s1 + $0x3c] sm:$0xff]
  %v96 = vld [vmem:[%s1 + $0x44] sm:$0xff]
  %v97 = vld [vmem:[%s1 + $0x4c] sm:$0xff]
  %v98 = vld [vmem:[%s1 + $0x54] sm:$0xff]
  %v99 = vld [vmem:[%s1 + $0x5c] sm:$0xff]
  %v100 = vld [vmem:[%s1 + $0x64] sm:$0xf]
  %v101 = vld [vmem:[%s1 + $0x68] sm:$0xff]
  %v102 = vld [vmem:[%s1 + $0x70] sm:$0xff]
  %v103 = vld [vmem:[%s1 + $0x78] sm:$0xff]
  %v104 = vld [vmem:[%s1 + $0x80] sm:$0xff]
  %v105 = vld [vmem:[%s1 + $0x88] sm:$0xff]
  %v106 = vld [vmem:[%s1 + $0x90] sm:$0xff]
  %v107 = vld [vmem:[%s1 + $0x98] sm:$0xf]
  %v108 = vld [vmem:[%s1 + $0x9c] sm:$0xff]
  %v109 = vld [vmem:[%s1 + $0xa4] sm:$0xff]
  %v110 = vld [vmem:[%s1 + $0xac] sm:$0xff]
  %v111 = vld [vmem:[%s1 + $0xb4] sm:$0xff]
  %v112 = vld [vmem:[%s1 + $0xbc] sm:$0xff]
  %v113 = vld [vmem:[%s1 + $0xc4] sm:$0xff]
  %v114 = vld [vmem:[%s1 + $0xcc] sm:$0xf]
  %v115 = vld [vmem:[%s1 + $0xd0] sm:$0xff]
  %v116 = vld [vmem:[%s1 + $0xd8] sm:$0xff]
  %v117 = vld [vmem:[%s1 + $0xe0] sm:$0xff]
  %v118 = vld [vmem:[%s1 + $0xe8] sm:$0xff]
  %v119 = vld [vmem:[%s1 + $0xf0] sm:$0xff]
  %v120 = vld [vmem:[%s1 + $0xf8] sm:$0xff]
  %v121 = vld [vmem:[%s1 + $0x100] sm:$0xf]
  %v122 = vld [vmem:[%s1 + $0x104] sm:$0xff]
  %v123 = vld [vmem:[%s1 + $0x10c] sm:$0xff]
  %v124 = vld [vmem:[%s1 + $0x114] sm:$0xff]
  %v125 = vld [vmem:[%s1 + $0x11c] sm:$0xff]
  %v126 = vld [vmem:[%s1 + $0x124] sm:$0xff]
  %v127 = vld [vmem:[%s1 + $0x12c] sm:$0xff]
  %v128 = vld [vmem:[%s1 + $0x134] sm:$0xf]
  %v129 = vld [vmem:[%s1 + $0x138] sm:$0xff]
  %v130 = vld [vmem:[%s1 + $0x140] sm:$0xff]
  %v131 = vld [vmem:[%s1 + $0x148] sm:$0xff]
  %v132 = vld [vmem:[%s1 + $0x150] sm:$0xff]
  %v133 = vld [vmem:[%s1 + $0x158] sm:$0xff]
  %v134 = vld [vmem:[%s1 + $0x160] sm:$0xff]
  %v135 = vld [vmem:[%s1 + $0x168] sm:$0xf]
  %v136 = vld [vmem:[%s1 + $0x16c] sm:$0xff]
  %v137 = vld [vmem:[%s1 + $0x174] sm:$0xff]
  %v138 = vld [vmem:[%s1 + $0x17c] sm:$0xff]
  %v139 = vld [vmem:[%s1 + $0x184] sm:$0xff]
  %v140 = vld [vmem:[%s1 + $0x18c] sm:$0xff]
  %v141 = vld [vmem:[%s1 + $0x194] sm:$0xff]
  %v142 = vld [vmem:[%s1 + $0x19c] sm:$0xf]
  %v143 = vld [vmem:[%s0] sm:$0xf]
  %v144 = vld [vmem:[%s0 + $0x4] sm:$0xf]
  %v145 = vld [vmem:[%s0 + $0x8] sm:$0xf]
  %v146 = vld [vmem:[%s0 + $0xc] sm:$0xf]
  %v147 = vld [vmem:[%s0 + $0x10] sm:$0xf]
  %v148 = vld [vmem:[%s0 + $0x14] sm:$0xf]
  %v149 = vld [vmem:[%s0 + $0x18] sm:$0xf]
  %v150 = vld [vmem:[%s0 + $0x1c] sm:$0xf]
  %v151 = vld [vmem:[%s0 + $0x20] sm:$0xf]
  %v152 = vld [vmem:[%s0 + $0x24] sm:$0xf]
  %v153 = vld [vmem:[%s0 + $0x28] sm:$0xf]
  %v154 = vld [vmem:[%s0 + $0x2c] sm:$0xf]
  %v155 = vld [vmem:[%s0 + $0x30] sm:$0xf]
  %v156 = vld [vmem:[%s0 + $0x34] sm:$0xf]
  %v157 = vld [vmem:[%s0 + $0x38] sm:$0xf]
  %v158 = vld [vmem:[%s0 + $0x3c] sm:$0xf]
  %v159 = vld [vmem:[%s0 + $0x40] sm:$0xf]
  %v160 = vld [vmem:[%s0 + $0x44] sm:$0xf]
  %v161 = vld [vmem:[%s0 + $0x48] sm:$0xf]
  %v162 = vld [vmem:[%s0 + $0x4c] sm:$0xf]
  %v163 = vld [vmem:[%s0 + $0x50] sm:$0xf]
  %v164 = vld [vmem:[%s0 + $0x54] sm:$0xf]
  %v165 = vld [vmem:[%s0 + $0x58] sm:$0xf]
  %v166 = vld [vmem:[%s0 + $0x5c] sm:$0xf]
  %v167 = vld [vmem:[%s0 + $0x60] sm:$0xf]
  %v168 = vld [vmem:[%s0 + $0x64] sm:$0xf]
  %v169 = vld [vmem:[%s0 + $0x68] sm:$0xf]
  %v170 = vld [vmem:[%s0 + $0x6c] sm:$0xf]
  %v171 = vld [vmem:[%s0 + $0x70] sm:$0xf]
  %v172 = vld [vmem:[%s0 + $0x74] sm:$0xf]
  %v173 = vld [vmem:[%s0 + $0x78] sm:$0xf]
  %v174 = vld [vmem:[%s0 + $0x7c] sm:$0xf]
  %v175 = vld [vmem:[%s0 + $0x80] sm:$0xf]
  %v176 = vld [vmem:[%s0 + $0x84] sm:$0xf]
  %v177 = vld [vmem:[%s0 + $0x88] sm:$0xf]
  %v178 = vld [vmem:[%s0 + $0x8c] sm:$0xf]
  %v179 = vld [vmem:[%s0 + $0x90] sm:$0xf]
  %v180 = vld [vmem:[%s0 + $0x94] sm:$0xf]
  %v181 = vld [vmem:[%s0 + $0x98] sm:$0xf]
  %v182 = vld [vmem:[%s0 + $0x9c] sm:$0xf]
  %v183 = vld [vmem:[%s0 + $0xa0] sm:$0xf]
  %v184 = vld [vmem:[%s0 + $0xa4] sm:$0xf]
  %v185 = vld [vmem:[%s0 + $0xa8] sm:$0xf]
  %v186 = vld [vmem:[%s0 + $0xac] sm:$0xf]
  %v187 = vld [vmem:[%s0 + $0xb0] sm:$0xf]
  %v188 = vld [vmem:[%s0 + $0xb4] sm:$0xf]
  %v189 = vld [vmem:[%s0 + $0xb8] sm:$0xf]
  %v190 = vld [vmem:[%s0 + $0xbc] sm:$0xf]
  %v191 = vld [vmem:[%s0 + $0xc0] sm:$0xf]
  %v192 = vld [vmem:[%s0 + $0xc4] sm:$0xf]
  %v193 = vld [vmem:[%s0 + $0xc8] sm:$0xf]
  %v194 = vld [vmem:[%s0 + $0xcc] sm:$0xf]
  %v195 = vld [vmem:[%s0 + $0xd0] sm:$0xf]
  %v196 = vld [vmem:[%s0 + $0xd4] sm:$0xf]
  %v197 = vld [vmem:[%s0 + $0xd8] sm:$0xf]
  %v198 = vld [vmem:[%s0 + $0xdc] sm:$0xf]
  %v199 = vld [vmem:[%s0 + $0xe0] sm:$0xf]
  %v200 = vld [vmem:[%s0 + $0xe4] sm:$0xf]
  %v201 = vld [vmem:[%s0 + $0xe8] sm:$0xf]
  %v202 = vld [vmem:[%s0 + $0xec] sm:$0xf]
  %v203 = vld [vmem:[%s0 + $0xf0] sm:$0xf]
  %v204 = vld [vmem:[%s0 + $0xf4] sm:$0xf]
  %v205 = vld [vmem:[%s0 + $0xf8] sm:$0xf]
  %v206 = vld [vmem:[%s0 + $0xfc] sm:$0xf]
  %v207 = vld [vmem:[%s0 + $0x100] sm:$0xf]
  %v208 = vld [vmem:[%s0 + $0x104] sm:$0xf]
  %v209 = vld [vmem:[%s0 + $0x108] sm:$0xf]
  %v210 = vld [vmem:[%s0 + $0x10c] sm:$0xf]
  %v211 = vld [vmem:[%s0 + $0x110] sm:$0xf]
  %v212 = vld [vmem:[%s0 + $0x114] sm:$0xf]
  %v213 = vld [vmem:[%s0 + $0x118] sm:$0xf]
  %v214 = vld [vmem:[%s0 + $0x11c] sm:$0xf]
  %v215 = vld [vmem:[%s0 + $0x120] sm:$0xf]
  %v216 = vld [vmem:[%s0 + $0x124] sm:$0xf]
  %v217 = vld [vmem:[%s0 + $0x128] sm:$0xf]
  %v218 = vld [vmem:[%s0 + $0x12c] sm:$0xf]
  %v219 = vld [vmem:[%s0 + $0x130] sm:$0xf]
  %v220 = vld [vmem:[%s0 + $0x134] sm:$0xf]
  %v221 = vld [vmem:[%s0 + $0x138] sm:$0xf]
  %v222 = vld [vmem:[%s0 + $0x13c] sm:$0xf]
  %v223 = vld [vmem:[%s0 + $0x140] sm:$0xf]
  %v224 = vld [vmem:[%s0 + $0x144] sm:$0xf]
  %v225 = vld [vmem:[%s0 + $0x148] sm:$0xf]
  %v226 = vld [vmem:[%s0 + $0x14c] sm:$0xf]
  %v227 = vld [vmem:[%s0 + $0x150] sm:$0xf]
  %v228 = vld [vmem:[%s0 + $0x154] sm:$0xf]
  %v229 = vld [vmem:[%s0 + $0x158] sm:$0xf]
  %v230 = vld [vmem:[%s0 + $0x15c] sm:$0xf]
  %v231 = vld [vmem:[%s0 + $0x160] sm:$0xf]
  %v232 = vld [vmem:[%s0 + $0x164] sm:$0xf]
  %v233 = vld [vmem:[%s0 + $0x168] sm:$0xf]
  %v234 = vld [vmem:[%s0 + $0x16c] sm:$0xf]
  %v235 = vld [vmem:[%s0 + $0x170] sm:$0xf]
  %v236 = vld [vmem:[%s0 + $0x174] sm:$0xf]
  %v237 = vld [vmem:[%s0 + $0x178] sm:$0xf]
  %v238 = vld [vmem:[%s0 + $0x17c] sm:$0xf]
  %v239 = vld [vmem:[%s0 + $0x180] sm:$0xf]
  %v240 = vld [vmem:[%s0 + $0x184] sm:$0xf]
  %v241 = vld [vmem:[%s0 + $0x188] sm:$0xf]
  %v242 = vld [vmem:[%s0 + $0x18c] sm:$0xf]
  %v243 = vld [vmem:[%s0 + $0x190] sm:$0xf]
  %v244 = vld [vmem:[%s0 + $0x194] sm:$0xf]
  %v245 = vld [vmem:[%s0 + $0x198] sm:$0xf]
  %v246 = vld [vmem:[%s0 + $0x19c] sm:$0xf]
  %v247 = vld [vmem:[%s0 + $0x1a0] sm:$0xf]
  %v248 = vld [vmem:[%s0 + $0x1a4] sm:$0xf]
  %v249 = vld [vmem:[%s0 + $0x1a8] sm:$0xf]
  %v250 = vld [vmem:[%s0 + $0x1ac] sm:$0xf]
  %v251 = vld [vmem:[%s0 + $0x1b0] sm:$0xf]
  %v252 = vld [vmem:[%s0 + $0x1b4] sm:$0xf]
  %v253 = vld [vmem:[%s0 + $0x1b8] sm:$0xf]
  %v254 = vld [vmem:[%s0 + $0x1bc] sm:$0xf]
  %v255 = vld [vmem:[%s0 + $0x1c0] sm:$0xf]
  %v256 = vld [vmem:[%s0 + $0x1c4] sm:$0xf]
  %v257 = vld [vmem:[%s0 + $0x1c8] sm:$0xf]
  %v258 = vld [vmem:[%s0 + $0x1cc] sm:$0xf]
  %v259 = vld [vmem:[%s0 + $0x1d0] sm:$0xf]
  %v260 = vld [vmem:[%s0 + $0x1d4] sm:$0xf]
  %v261 = vld [vmem:[%s0 + $0x1d8] sm:$0xf]
  %v262 = vld [vmem:[%s0 + $0x1dc] sm:$0xf]
  %v263 = vld [vmem:[%s0 + $0x1e0] sm:$0xf]
  %v264 = vld [vmem:[%s0 + $0x1e4] sm:$0xf]
  %v265 = vld [vmem:[%s0 + $0x1e8] sm:$0xf]
  %v266 = vld [vmem:[%s0 + $0x1ec] sm:$0xf]
  %v267 = vld [vmem:[%s0 + $0x1f0] sm:$0xf]
  %v268 = vld [vmem:[%s0 + $0x1f4] sm:$0xf]
  %v269 = vld [vmem:[%s0 + $0x1f8] sm:$0xf]
  %v270 = vld [vmem:[%s0 + $0x1fc] sm:$0xf]
  %v271 = vld [vmem:[%s0 + $0x200] sm:$0xf]
  %v272 = vld [vmem:[%s0 + $0x204] sm:$0xf]
  %v273 = vld [vmem:[%s0 + $0x208] sm:$0xf]
  %v274 = vld [vmem:[%s0 + $0x20c] sm:$0xf]
  %v275 = vld [vmem:[%s0 + $0x210] sm:$0xf]
  %v276 = vld [vmem:[%s0 + $0x214] sm:$0xf]
  %v277 = vld [vmem:[%s0 + $0x218] sm:$0xf]
  %v278 = vld [vmem:[%s0 + $0x21c] sm:$0xf]
  %v279 = vld [vmem:[%s0 + $0x220] sm:$0xf]
  %v280 = vld [vmem:[%s0 + $0x224] sm:$0xf]
  %v281 = vld [vmem:[%s0 + $0x228] sm:$0xf]
  %v282 = vld [vmem:[%s0 + $0x22c] sm:$0xf]
  %v283 = vld [vmem:[%s0 + $0x230] sm:$0xf]
  %v284 = vld [vmem:[%s0 + $0x234] sm:$0xf]
  %v285 = vld [vmem:[%s0 + $0x238] sm:$0xf]
  %v286 = vld [vmem:[%s0 + $0x23c] sm:$0xf]
  %v287 = vld [vmem:[%s0 + $0x240] sm:$0xf]
  %v288 = vld [vmem:[%s0 + $0x244] sm:$0xf]
  %v289 = vld [vmem:[%s0 + $0x248] sm:$0xf]
  %v290 = vld [vmem:[%s0 + $0x24c] sm:$0xf]
  %v291 = vld [vmem:[%s0 + $0x250] sm:$0xf]
  %v292 = vld [vmem:[%s0 + $0x254] sm:$0xf]
  %v293 = vld [vmem:[%s0 + $0x258] sm:$0xf]
  %v294 = vld [vmem:[%s0 + $0x25c] sm:$0xf]
  %v295 = vld [vmem:[%s0 + $0x260] sm:$0xf]
  %v296 = vld [vmem:[%s0 + $0x264] sm:$0xf]
  %v297 = vld [vmem:[%s0 + $0x268] sm:$0xf]
  %v298 = vld [vmem:[%s0 + $0x26c] sm:$0xf]
  %v299 = vld [vmem:[%s0 + $0x270] sm:$0xf]
  %v300 = vld [vmem:[%s0 + $0x274] sm:$0xf]
  %v301 = vld [vmem:[%s0 + $0x278] sm:$0xf]
  %v302 = vld [vmem:[%s0 + $0x27c] sm:$0xf]
  %v303 = vld [vmem:[%s0 + $0x280] sm:$0xf]
  %v304 = vld [vmem:[%s0 + $0x284] sm:$0xf]
  %v305 = vld [vmem:[%s0 + $0x288] sm:$0xf]
  %v306 = vld [vmem:[%s0 + $0x28c] sm:$0xf]
  %v307 = vld [vmem:[%s0 + $0x290] sm:$0xf]
  %v308 = vld [vmem:[%s0 + $0x294] sm:$0xf]
  %v309 = vld [vmem:[%s0 + $0x298] sm:$0xf]
  %v310 = vld [vmem:[%s0 + $0x29c] sm:$0xf]
  %v311 = vld [vmem:[%s0 + $0x2a0] sm:$0xf]
  %v312 = vld [vmem:[%s0 + $0x2a4] sm:$0xf]
  %v313 = vld [vmem:[%s0 + $0x2a8] sm:$0xf]
  %v314 = vld [vmem:[%s0 + $0x2ac] sm:$0xf]
  %v315 = vld [vmem:[%s0 + $0x2b0] sm:$0xf]
  %v316 = vld [vmem:[%s0 + $0x2b4] sm:$0xf]
  %v317 = vld [vmem:[%s0 + $0x2b8] sm:$0xf]
  %v318 = vld [vmem:[%s0 + $0x2bc] sm:$0xf]
  %v319 = vld [vmem:[%s0 + $0x2c0] sm:$0xf]
  %v320 = vld [vmem:[%s0 + $0x2c4] sm:$0xf]
  %v321 = vld [vmem:[%s0 + $0x2c8] sm:$0xf]
  %v322 = vld [vmem:[%s0 + $0x2cc] sm:$0xf]
  %v323 = vld [vmem:[%s0 + $0x2d0] sm:$0xf]
  %v324 = vld [vmem:[%s0 + $0x2d4] sm:$0xf]
  %v325 = vld [vmem:[%s0 + $0x2d8] sm:$0xf]
  %v326 = vld [vmem:[%s0 + $0x2dc] sm:$0xf]
  %v327 = vld [vmem:[%s0 + $0x2e0] sm:$0xf]
  %v328 = vld [vmem:[%s0 + $0x2e4] sm:$0xf]
  %v329 = vld [vmem:[%s0 + $0x2e8] sm:$0xf]
  %v330 = vld [vmem:[%s0 + $0x2ec] sm:$0xf]
  %v331 = vld [vmem:[%s0 + $0x2f0] sm:$0xf]
  %v332 = vld [vmem:[%s0 + $0x2f4] sm:$0xf]
  %v333 = vld [vmem:[%s0 + $0x2f8] sm:$0xf]
  %v334 = vld [vmem:[%s0 + $0x2fc] sm:$0xf]
  %v335 = vld [vmem:[%s0 + $0x300] sm:$0xf]
  %v336 = vld [vmem:[%s0 + $0x304] sm:$0xf]
  %v337 = vld [vmem:[%s0 + $0x308] sm:$0xf]
  %v338 = vld [vmem:[%s0 + $0x30c] sm:$0xf]
  %v339 = vld [vmem:[%s0 + $0x310] sm:$0xf]
  %v340 = vld [vmem:[%s0 + $0x314] sm:$0xf]
  %v341 = vld [vmem:[%s0 + $0x318] sm:$0xf]
  %v342 = vld [vmem:[%s0 + $0x31c] sm:$0xf]
  %v399 = vunpack.c.l.b16 %v87
  %v400 = vunpack.c.h.b16 %v87
  %v401 = vunpack.c.l.b16 %v88
  %v402 = vunpack.c.h.b16 %v88
  %v403 = vunpack.c.l.b16 %v89
  %v404 = vunpack.c.h.b16 %v89
  %v405 = vunpack.c.l.b16 %v90
  %v406 = vunpack.c.h.b16 %v90
  %v407 = vunpack.c.l.b16 %v91
  %v408 = vunpack.c.h.b16 %v91
  %v409 = vunpack.c.l.b16 %v92
  %v410 = vunpack.c.h.b16 %v92
  %v411 = vunpack.c.l.b16 %v93
  %v412 = vunpack.c.l.b16 %v94
  %v413 = vunpack.c.h.b16 %v94
  %v414 = vunpack.c.l.b16 %v95
  %v415 = vunpack.c.h.b16 %v95
  %v416 = vunpack.c.l.b16 %v96
  %v417 = vunpack.c.h.b16 %v96
  %v418 = vunpack.c.l.b16 %v97
  %v419 = vunpack.c.h.b16 %v97
  %v420 = vunpack.c.l.b16 %v98
  %v421 = vunpack.c.h.b16 %v98
  %v422 = vunpack.c.l.b16 %v99
  %v423 = vunpack.c.h.b16 %v99
  %v424 = vunpack.c.l.b16 %v100
  %v425 = vunpack.c.l.b16 %v101
  %v426 = vunpack.c.h.b16 %v101
  %v427 = vunpack.c.l.b16 %v102
  %v428 = vunpack.c.h.b16 %v102
  %v429 = vunpack.c.l.b16 %v103
  %v430 = vunpack.c.h.b16 %v103
  %v431 = vunpack.c.l.b16 %v104
  %v432 = vunpack.c.h.b16 %v104
  %v433 = vunpack.c.l.b16 %v105
  %v434 = vunpack.c.h.b16 %v105
  %v435 = vunpack.c.l.b16 %v106
  %v436 = vunpack.c.h.b16 %v106
  %v437 = vunpack.c.l.b16 %v107
  %v438 = vunpack.c.l.b16 %v108
  %v439 = vunpack.c.h.b16 %v108
  %v440 = vunpack.c.l.b16 %v109
  %v441 = vunpack.c.h.b16 %v109
  %v442 = vunpack.c.l.b16 %v110
  %v443 = vunpack.c.h.b16 %v110
  %v444 = vunpack.c.l.b16 %v111
  %v445 = vunpack.c.h.b16 %v111
  %v446 = vunpack.c.l.b16 %v112
  %v447 = vunpack.c.h.b16 %v112
  %v448 = vunpack.c.l.b16 %v113
  %v449 = vunpack.c.h.b16 %v113
  %v450 = vunpack.c.l.b16 %v114
  %v451 = vunpack.c.l.b16 %v115
  %v452 = vunpack.c.h.b16 %v115
  %v453 = vunpack.c.l.b16 %v116
  %v454 = vunpack.c.h.b16 %v116
  %v455 = vunpack.c.l.b16 %v117
  %v456 = vunpack.c.h.b16 %v117
  %v457 = vunpack.c.l.b16 %v118
  %v458 = vunpack.c.h.b16 %v118
  %v459 = vunpack.c.l.b16 %v119
  %v460 = vunpack.c.h.b16 %v119
  %v461 = vunpack.c.l.b16 %v120
  %v462 = vunpack.c.h.b16 %v120
  %v463 = vunpack.c.l.b16 %v121
  %v464 = vunpack.c.l.b16 %v122
  %v465 = vunpack.c.h.b16 %v122
  %v466 = vunpack.c.l.b16 %v123
  %v467 = vunpack.c.h.b16 %v123
  %v468 = vunpack.c.l.b16 %v124
  %v469 = vunpack.c.h.b16 %v124
  %v470 = vunpack.c.l.b16 %v125
  %v471 = vunpack.c.h.b16 %v125
  %v472 = vunpack.c.l.b16 %v126
  %v473 = vunpack.c.h.b16 %v126
  %v474 = vunpack.c.l.b16 %v127
  %v475 = vunpack.c.h.b16 %v127
  %v476 = vunpack.c.l.b16 %v128
  %v477 = vunpack.c.l.b16 %v129
  %v478 = vunpack.c.h.b16 %v129
  %v479 = vunpack.c.l.b16 %v130
  %v480 = vunpack.c.h.b16 %v130
  %v481 = vunpack.c.l.b16 %v131
  %v482 = vunpack.c.h.b16 %v131
  %v483 = vunpack.c.l.b16 %v132
  %v484 = vunpack.c.h.b16 %v132
  %v485 = vunpack.c.l.b16 %v133
  %v486 = vunpack.c.h.b16 %v133
  %v487 = vunpack.c.l.b16 %v134
  %v488 = vunpack.c.h.b16 %v134
  %v489 = vunpack.c.l.b16 %v135
  %v490 = vunpack.c.l.b16 %v136
  %v491 = vunpack.c.h.b16 %v136
  %v492 = vunpack.c.l.b16 %v137
  %v493 = vunpack.c.h.b16 %v137
  %v494 = vunpack.c.l.b16 %v138
  %v495 = vunpack.c.h.b16 %v138
  %v496 = vunpack.c.l.b16 %v139
  %v497 = vunpack.c.h.b16 %v139
  %v498 = vunpack.c.l.b16 %v140
  %v499 = vunpack.c.h.b16 %v140
  %v500 = vunpack.c.l.b16 %v141
  %v501 = vunpack.c.h.b16 %v141
  %v502 = vunpack.c.l.b16 %v142
  %v503 = vpack.c.b16 %v412, %v399
  %v504 = vpack.c.b16 %v413, %v400
  %v505 = vpack.c.b16 %v414, %v401
  %v506 = vpack.c.b16 %v415, %v402
  %v507 = vpack.c.b16 %v416, %v403
  %v508 = vpack.c.b16 %v417, %v404
  %v509 = vpack.c.b16 %v418, %v405
  %v510 = vpack.c.b16 %v419, %v406
  %v511 = vpack.c.b16 %v420, %v407
  %v512 = vpack.c.b16 %v421, %v408
  %v513 = vpack.c.b16 %v422, %v409
  %v514 = vpack.c.b16 %v423, %v410
  %v515 = vpack.c.b16 %v424, %v411
  %v516 = vpack.c.b16 %v438, %v425
  %v517 = vpack.c.b16 %v439, %v426
  %v518 = vpack.c.b16 %v440, %v427
  %v519 = vpack.c.b16 %v441, %v428
  %v520 = vpack.c.b16 %v442, %v429
  %v521 = vpack.c.b16 %v443, %v430
  %v522 = vpack.c.b16 %v444, %v431
  %v523 = vpack.c.b16 %v445, %v432
  %v524 = vpack.c.b16 %v446, %v433
  %v525 = vpack.c.b16 %v447, %v434
  %v526 = vpack.c.b16 %v448, %v435
  %v527 = vpack.c.b16 %v449, %v436
  %v528 = vpack.c.b16 %v450, %v437
  %v529 = vpack.c.b16 %v464, %v451
  %v530 = vpack.c.b16 %v465, %v452
  %v531 = vpack.c.b16 %v466, %v453
  %v532 = vpack.c.b16 %v467, %v454
  %v533 = vpack.c.b16 %v468, %v455
  %v534 = vpack.c.b16 %v469, %v456
  %v535 = vpack.c.b16 %v470, %v457
  %v536 = vpack.c.b16 %v471, %v458
  %v537 = vpack.c.b16 %v472, %v459
  %v538 = vpack.c.b16 %v473, %v460
  %v539 = vpack.c.b16 %v474, %v461
  %v540 = vpack.c.b16 %v475, %v462
  %v541 = vpack.c.b16 %v476, %v463
  %v542 = vpack.c.b16 %v490, %v477
  %v543 = vpack.c.b16 %v491, %v478
  %v544 = vpack.c.b16 %v492, %v479
  %v545 = vpack.c.b16 %v493, %v480
  %v546 = vpack.c.b16 %v494, %v481
  %v547 = vpack.c.b16 %v495, %v482
  %v548 = vpack.c.b16 %v496, %v483
  %v549 = vpack.c.b16 %v497, %v484
  %v550 = vpack.c.b16 %v498, %v485
  %v551 = vpack.c.b16 %v499, %v486
  %v552 = vpack.c.b16 %v500, %v487
  %v553 = vpack.c.b16 %v501, %v488
  %v554 = vpack.c.b16 %v502, %v489
  %v803 = vunpack.c.l.b16 %v143
  %v804 = vunpack.c.l.b16 %v144
  %v805 = vunpack.c.l.b16 %v145
  %v806 = vunpack.c.l.b16 %v146
  %v807 = vunpack.c.l.b16 %v147
  %v808 = vunpack.c.l.b16 %v148
  %v809 = vunpack.c.l.b16 %v149
  %v810 = vunpack.c.l.b16 %v150
  %v811 = vunpack.c.l.b16 %v151
  %v812 = vunpack.c.l.b16 %v152
  %v813 = vunpack.c.l.b16 %v153
  %v814 = vunpack.c.l.b16 %v154
  %v815 = vunpack.c.l.b16 %v155
  %v816 = vunpack.c.l.b16 %v156
  %v817 = vunpack.c.l.b16 %v157
  %v818 = vunpack.c.l.b16 %v158
  %v819 = vunpack.c.l.b16 %v159
  %v820 = vunpack.c.l.b16 %v160
  %v821 = vunpack.c.l.b16 %v161
  %v822 = vunpack.c.l.b16 %v162
  %v823 = vunpack.c.l.b16 %v163
  %v824 = vunpack.c.l.b16 %v164
  %v825 = vunpack.c.l.b16 %v165
  %v826 = vunpack.c.l.b16 %v166
  %v827 = vunpack.c.l.b16 %v167
  %v828 = vunpack.c.l.b16 %v168
  %v829 = vunpack.c.l.b16 %v169
  %v830 = vunpack.c.l.b16 %v170
  %v831 = vunpack.c.l.b16 %v171
  %v832 = vunpack.c.l.b16 %v172
  %v833 = vunpack.c.l.b16 %v173
  %v834 = vunpack.c.l.b16 %v174
  %v835 = vunpack.c.l.b16 %v175
  %v836 = vunpack.c.l.b16 %v176
  %v837 = vunpack.c.l.b16 %v177
  %v838 = vunpack.c.l.b16 %v178
  %v839 = vunpack.c.l.b16 %v179
  %v840 = vunpack.c.l.b16 %v180
  %v841 = vunpack.c.l.b16 %v181
  %v842 = vunpack.c.l.b16 %v182
  %v843 = vunpack.c.l.b16 %v183
  %v844 = vunpack.c.l.b16 %v184
  %v845 = vunpack.c.l.b16 %v185
  %v846 = vunpack.c.l.b16 %v186
  %v847 = vunpack.c.l.b16 %v187
  %v848 = vunpack.c.l.b16 %v188
  %v849 = vunpack.c.l.b16 %v189
  %v850 = vunpack.c.l.b16 %v190
  %v851 = vunpack.c.l.b16 %v191
  %v852 = vunpack.c.l.b16 %v192
  %v853 = vunpack.c.l.b16 %v193
  %v854 = vunpack.c.l.b16 %v194
  %v855 = vunpack.c.l.b16 %v195
  %v856 = vunpack.c.l.b16 %v196
  %v857 = vunpack.c.l.b16 %v197
  %v858 = vunpack.c.l.b16 %v198
  %v859 = vunpack.c.l.b16 %v199
  %v860 = vunpack.c.l.b16 %v200
  %v861 = vunpack.c.l.b16 %v201
  %v862 = vunpack.c.l.b16 %v202
  %v863 = vunpack.c.l.b16 %v203
  %v864 = vunpack.c.l.b16 %v204
  %v865 = vunpack.c.l.b16 %v205
  %v866 = vunpack.c.l.b16 %v206
  %v867 = vunpack.c.l.b16 %v207
  %v868 = vunpack.c.l.b16 %v208
  %v869 = vunpack.c.l.b16 %v209
  %v870 = vunpack.c.l.b16 %v210
  %v871 = vunpack.c.l.b16 %v211
  %v872 = vunpack.c.l.b16 %v212
  %v873 = vunpack.c.l.b16 %v213
  %v874 = vunpack.c.l.b16 %v214
  %v875 = vunpack.c.l.b16 %v215
  %v876 = vunpack.c.l.b16 %v216
  %v877 = vunpack.c.l.b16 %v217
  %v878 = vunpack.c.l.b16 %v218
  %v879 = vunpack.c.l.b16 %v219
  %v880 = vunpack.c.l.b16 %v220
  %v881 = vunpack.c.l.b16 %v221
  %v882 = vunpack.c.l.b16 %v222
  %v883 = vunpack.c.l.b16 %v223
  %v884 = vunpack.c.l.b16 %v224
  %v885 = vunpack.c.l.b16 %v225
  %v886 = vunpack.c.l.b16 %v226
  %v887 = vunpack.c.l.b16 %v227
  %v888 = vunpack.c.l.b16 %v228
  %v889 = vunpack.c.l.b16 %v229
  %v890 = vunpack.c.l.b16 %v230
  %v891 = vunpack.c.l.b16 %v231
  %v892 = vunpack.c.l.b16 %v232
  %v893 = vunpack.c.l.b16 %v233
  %v894 = vunpack.c.l.b16 %v234
  %v895 = vunpack.c.l.b16 %v235
  %v896 = vunpack.c.l.b16 %v236
  %v897 = vunpack.c.l.b16 %v237
  %v898 = vunpack.c.l.b16 %v238
  %v899 = vunpack.c.l.b16 %v239
  %v900 = vunpack.c.l.b16 %v240
  %v901 = vunpack.c.l.b16 %v241
  %v902 = vunpack.c.l.b16 %v242
  %v903 = vunpack.c.l.b16 %v243
  %v904 = vunpack.c.l.b16 %v244
  %v905 = vunpack.c.l.b16 %v245
  %v906 = vunpack.c.l.b16 %v246
  %v907 = vunpack.c.l.b16 %v247
  %v908 = vunpack.c.l.b16 %v248
  %v909 = vunpack.c.l.b16 %v249
  %v910 = vunpack.c.l.b16 %v250
  %v911 = vunpack.c.l.b16 %v251
  %v912 = vunpack.c.l.b16 %v252
  %v913 = vunpack.c.l.b16 %v253
  %v914 = vunpack.c.l.b16 %v254
  %v915 = vunpack.c.l.b16 %v255
  %v916 = vunpack.c.l.b16 %v256
  %v917 = vunpack.c.l.b16 %v257
  %v918 = vunpack.c.l.b16 %v258
  %v919 = vunpack.c.l.b16 %v259
  %v920 = vunpack.c.l.b16 %v260
  %v921 = vunpack.c.l.b16 %v261
  %v922 = vunpack.c.l.b16 %v262
  %v923 = vunpack.c.l.b16 %v263
  %v924 = vunpack.c.l.b16 %v264
  %v925 = vunpack.c.l.b16 %v265
  %v926 = vunpack.c.l.b16 %v266
  %v927 = vunpack.c.l.b16 %v267
  %v928 = vunpack.c.l.b16 %v268
  %v929 = vunpack.c.l.b16 %v269
  %v930 = vunpack.c.l.b16 %v270
  %v931 = vunpack.c.l.b16 %v271
  %v932 = vunpack.c.l.b16 %v272
  %v933 = vunpack.c.l.b16 %v273
  %v934 = vunpack.c.l.b16 %v274
  %v935 = vunpack.c.l.b16 %v275
  %v936 = vunpack.c.l.b16 %v276
  %v937 = vunpack.c.l.b16 %v277
  %v938 = vunpack.c.l.b16 %v278
  %v939 = vunpack.c.l.b16 %v279
  %v940 = vunpack.c.l.b16 %v280
  %v941 = vunpack.c.l.b16 %v281
  %v942 = vunpack.c.l.b16 %v282
  %v943 = vunpack.c.l.b16 %v283
  %v944 = vunpack.c.l.b16 %v284
  %v945 = vunpack.c.l.b16 %v285
  %v946 = vunpack.c.l.b16 %v286
  %v947 = vunpack.c.l.b16 %v287
  %v948 = vunpack.c.l.b16 %v288
  %v949 = vunpack.c.l.b16 %v289
  %v950 = vunpack.c.l.b16 %v290
  %v951 = vunpack.c.l.b16 %v291
  %v952 = vunpack.c.l.b16 %v292
  %v953 = vunpack.c.l.b16 %v293
  %v954 = vunpack.c.l.b16 %v294
  %v955 = vunpack.c.l.b16 %v295
  %v956 = vunpack.c.l.b16 %v296
  %v957 = vunpack.c.l.b16 %v297
  %v958 = vunpack.c.l.b16 %v298
  %v959 = vunpack.c.l.b16 %v299
  %v960 = vunpack.c.l.b16 %v300
  %v961 = vunpack.c.l.b16 %v301
  %v962 = vunpack.c.l.b16 %v302
  %v963 = vunpack.c.l.b16 %v303
  %v964 = vunpack.c.l.b16 %v304
  %v965 = vunpack.c.l.b16 %v305
  %v966 = vunpack.c.l.b16 %v306
  %v967 = vunpack.c.l.b16 %v307
  %v968 = vunpack.c.l.b16 %v308
  %v969 = vunpack.c.l.b16 %v309
  %v970 = vunpack.c.l.b16 %v310
  %v971 = vunpack.c.l.b16 %v311
  %v972 = vunpack.c.l.b16 %v312
  %v973 = vunpack.c.l.b16 %v313
  %v974 = vunpack.c.l.b16 %v314
  %v975 = vunpack.c.l.b16 %v315
  %v976 = vunpack.c.l.b16 %v316
  %v977 = vunpack.c.l.b16 %v317
  %v978 = vunpack.c.l.b16 %v318
  %v979 = vunpack.c.l.b16 %v319
  %v980 = vunpack.c.l.b16 %v320
  %v981 = vunpack.c.l.b16 %v321
  %v982 = vunpack.c.l.b16 %v322
  %v983 = vunpack.c.l.b16 %v323
  %v984 = vunpack.c.l.b16 %v324
  %v985 = vunpack.c.l.b16 %v325
  %v986 = vunpack.c.l.b16 %v326
  %v987 = vunpack.c.l.b16 %v327
  %v988 = vunpack.c.l.b16 %v328
  %v989 = vunpack.c.l.b16 %v329
  %v990 = vunpack.c.l.b16 %v330
  %v991 = vunpack.c.l.b16 %v331
  %v992 = vunpack.c.l.b16 %v332
  %v993 = vunpack.c.l.b16 %v333
  %v994 = vunpack.c.l.b16 %v334
  %v995 = vunpack.c.l.b16 %v335
  %v996 = vunpack.c.l.b16 %v336
  %v997 = vunpack.c.l.b16 %v337
  %v998 = vunpack.c.l.b16 %v338
  %v999 = vunpack.c.l.b16 %v339
  %v1000 = vunpack.c.l.b16 %v340
  %v1001 = vunpack.c.l.b16 %v341
  %v1002 = vunpack.c.l.b16 %v342
  %v1003 = vpack.c.b16 %v804, %v803
  %v1004 = vpack.c.b16 %v806, %v805
  %v1005 = vpack.c.b16 %v808, %v807
  %v1006 = vpack.c.b16 %v810, %v809
  %v1007 = vpack.c.b16 %v812, %v811
  %v1008 = vpack.c.b16 %v814, %v813
  %v1009 = vpack.c.b16 %v816, %v815
  %v1010 = vpack.c.b16 %v818, %v817
  %v1011 = vpack.c.b16 %v820, %v819
  %v1012 = vpack.c.b16 %v822, %v821
  %v1013 = vpack.c.b16 %v824, %v823
  %v1014 = vpack.c.b16 %v826, %v825
  %v1015 = vpack.c.b16 %v828, %v827
  %v1016 = vpack.c.b16 %v830, %v829
  %v1017 = vpack.c.b16 %v832, %v831
  %v1018 = vpack.c.b16 %v834, %v833
  %v1019 = vpack.c.b16 %v836, %v835
  %v1020 = vpack.c.b16 %v838, %v837
  %v1021 = vpack.c.b16 %v840, %v839
  %v1022 = vpack.c.b16 %v842, %v841
  %v1023 = vpack.c.b16 %v844, %v843
  %v1024 = vpack.c.b16 %v846, %v845
  %v1025 = vpack.c.b16 %v848, %v847
  %v1026 = vpack.c.b16 %v850, %v849
  %v1027 = vpack.c.b16 %v852, %v851
  %v1028 = vpack.c.b16 %v854, %v853
  %v1029 = vpack.c.b16 %v856, %v855
  %v1030 = vpack.c.b16 %v858, %v857
  %v1031 = vpack.c.b16 %v860, %v859
  %v1032 = vpack.c.b16 %v862, %v861
  %v1033 = vpack.c.b16 %v864, %v863
  %v1034 = vpack.c.b16 %v866, %v865
  %v1035 = vpack.c.b16 %v868, %v867
  %v1036 = vpack.c.b16 %v870, %v869
  %v1037 = vpack.c.b16 %v872, %v871
  %v1038 = vpack.c.b16 %v874, %v873
  %v1039 = vpack.c.b16 %v876, %v875
  %v1040 = vpack.c.b16 %v878, %v877
  %v1041 = vpack.c.b16 %v880, %v879
  %v1042 = vpack.c.b16 %v882, %v881
  %v1043 = vpack.c.b16 %v884, %v883
  %v1044 = vpack.c.b16 %v886, %v885
  %v1045 = vpack.c.b16 %v888, %v887
  %v1046 = vpack.c.b16 %v890, %v889
  %v1047 = vpack.c.b16 %v892, %v891
  %v1048 = vpack.c.b16 %v894, %v893
  %v1049 = vpack.c.b16 %v896, %v895
  %v1050 = vpack.c.b16 %v898, %v897
  %v1051 = vpack.c.b16 %v900, %v899
  %v1052 = vpack.c.b16 %v902, %v901
  %v1053 = vpack.c.b16 %v904, %v903
  %v1054 = vpack.c.b16 %v906, %v905
  %v1055 = vpack.c.b16 %v908, %v907
  %v1056 = vpack.c.b16 %v910, %v909
  %v1057 = vpack.c.b16 %v912, %v911
  %v1058 = vpack.c.b16 %v914, %v913
  %v1059 = vpack.c.b16 %v916, %v915
  %v1060 = vpack.c.b16 %v918, %v917
  %v1061 = vpack.c.b16 %v920, %v919
  %v1062 = vpack.c.b16 %v922, %v921
  %v1063 = vpack.c.b16 %v924, %v923
  %v1064 = vpack.c.b16 %v926, %v925
  %v1065 = vpack.c.b16 %v928, %v927
  %v1066 = vpack.c.b16 %v930, %v929
  %v1067 = vpack.c.b16 %v932, %v931
  %v1068 = vpack.c.b16 %v934, %v933
  %v1069 = vpack.c.b16 %v936, %v935
  %v1070 = vpack.c.b16 %v938, %v937
  %v1071 = vpack.c.b16 %v940, %v939
  %v1072 = vpack.c.b16 %v942, %v941
  %v1073 = vpack.c.b16 %v944, %v943
  %v1074 = vpack.c.b16 %v946, %v945
  %v1075 = vpack.c.b16 %v948, %v947
  %v1076 = vpack.c.b16 %v950, %v949
  %v1077 = vpack.c.b16 %v952, %v951
  %v1078 = vpack.c.b16 %v954, %v953
  %v1079 = vpack.c.b16 %v956, %v955
  %v1080 = vpack.c.b16 %v958, %v957
  %v1081 = vpack.c.b16 %v960, %v959
  %v1082 = vpack.c.b16 %v962, %v961
  %v1083 = vpack.c.b16 %v964, %v963
  %v1084 = vpack.c.b16 %v966, %v965
  %v1085 = vpack.c.b16 %v968, %v967
  %v1086 = vpack.c.b16 %v970, %v969
  %v1087 = vpack.c.b16 %v972, %v971
  %v1088 = vpack.c.b16 %v974, %v973
  %v1089 = vpack.c.b16 %v976, %v975
  %v1090 = vpack.c.b16 %v978, %v977
  %v1091 = vpack.c.b16 %v980, %v979
  %v1092 = vpack.c.b16 %v982, %v981
  %v1093 = vpack.c.b16 %v984, %v983
  %v1094 = vpack.c.b16 %v986, %v985
  %v1095 = vpack.c.b16 %v988, %v987
  %v1096 = vpack.c.b16 %v990, %v989
  %v1097 = vpack.c.b16 %v992, %v991
  %v1098 = vpack.c.b16 %v994, %v993
  %v1099 = vpack.c.b16 %v996, %v995
  %v1100 = vpack.c.b16 %v998, %v997
  %v1101 = vpack.c.b16 %v1000, %v999
  %v1102 = vpack.c.b16 %v1002, %v1001
  %vm1203 = vcmask 523264
  %v1205 = vsel %vm1203, %v515, 0
  %v1208 = vsel %vm1203, %v528, 0
  %v1211 = vsel %vm1203, %v541, 0
  %v1214 = vsel %vm1203, %v554, 0
  %1216 = vmatpush.bf16.msra.mxu0 %v1010
  %1217 = vmatpush.bf16.msra.mxu0 %v1009
  %1218 = vmatpush.bf16.msra.mxu0 %v1008
  %1219 = vmatpush.bf16.msra.mxu0 %v1007
  %1220 = vmatpush.bf16.msra.mxu0 %v1006
  %1221 = vmatpush.bf16.msra.mxu0 %v1005
  %1222 = vmatpush.bf16.msra.mxu0 %v1004
  %1223 = vmatpush.bf16.msra.mxu0 %v1003
  %1224 = vmatmul.bf16.gmra.mxu0 %v503
  %v1225 = vpop.f32.mrf.mxu0
  %v1226 = vadd.f32 0.0, %v1225
  %v1227 = vpop.f32.mrf.mxu0
  %v1228 = vadd.f32 0.0, %v1227
  %1229 = vmatmul.bf16.gmra.mxu0 %v516
  %v1230 = vpop.f32.mrf.mxu0
  %v1231 = vadd.f32 0.0, %v1230
  %v1232 = vpop.f32.mrf.mxu0
  %v1233 = vadd.f32 0.0, %v1232
  %1234 = vmatmul.bf16.gmra.mxu0 %v529
  %v1235 = vpop.f32.mrf.mxu0
  %v1236 = vadd.f32 0.0, %v1235
  %v1237 = vpop.f32.mrf.mxu0
  %v1238 = vadd.f32 0.0, %v1237
  %1239 = vmatmul.bf16.gmra.mxu0 %v542
  %v1240 = vpop.f32.mrf.mxu0
  %v1241 = vadd.f32 0.0, %v1240
  %v1242 = vpop.f32.mrf.mxu0
  %v1243 = vadd.f32 0.0, %v1242
  %1244 = vdwg.mxu0
  %1245 = vmatpush.bf16.msra.mxu0 %v1018
  %1246 = vmatpush.bf16.msra.mxu0 %v1017
  %1247 = vmatpush.bf16.msra.mxu0 %v1016
  %1248 = vmatpush.bf16.msra.mxu0 %v1015
  %1249 = vmatpush.bf16.msra.mxu0 %v1014
  %1250 = vmatpush.bf16.msra.mxu0 %v1013
  %1251 = vmatpush.bf16.msra.mxu0 %v1012
  %1252 = vmatpush.bf16.msra.mxu0 %v1011
  %1253 = vmatmul.bf16.gmra.mxu0 %v504
  %v1254 = vpop.f32.mrf.mxu0
  %v1255 = vadd.f32 %v1226, %v1254
  %v1256 = vpop.f32.mrf.mxu0
  %v1257 = vadd.f32 %v1228, %v1256
  %1258 = vmatmul.bf16.gmra.mxu0 %v517
  %v1259 = vpop.f32.mrf.mxu0
  %v1260 = vadd.f32 %v1231, %v1259
  %v1261 = vpop.f32.mrf.mxu0
  %v1262 = vadd.f32 %v1233, %v1261
  %1263 = vmatmul.bf16.gmra.mxu0 %v530
  %v1264 = vpop.f32.mrf.mxu0
  %v1265 = vadd.f32 %v1236, %v1264
  %v1266 = vpop.f32.mrf.mxu0
  %v1267 = vadd.f32 %v1238, %v1266
  %1268 = vmatmul.bf16.gmra.mxu0 %v543
  %v1269 = vpop.f32.mrf.mxu0
  %v1270 = vadd.f32 %v1241, %v1269
  %v1271 = vpop.f32.mrf.mxu0
  %v1272 = vadd.f32 %v1243, %v1271
  %1273 = vdwg.mxu0
  %1274 = vmatpush.bf16.msra.mxu0 %v1026
  %1275 = vmatpush.bf16.msra.mxu0 %v1025
  %1276 = vmatpush.bf16.msra.mxu0 %v1024
  %1277 = vmatpush.bf16.msra.mxu0 %v1023
  %1278 = vmatpush.bf16.msra.mxu0 %v1022
  %1279 = vmatpush.bf16.msra.mxu0 %v1021
  %1280 = vmatpush.bf16.msra.mxu0 %v1020
  %1281 = vmatpush.bf16.msra.mxu0 %v1019
  %1282 = vmatmul.bf16.gmra.mxu0 %v505
  %v1283 = vpop.f32.mrf.mxu0
  %v1284 = vadd.f32 %v1255, %v1283
  %v1285 = vpop.f32.mrf.mxu0
  %v1286 = vadd.f32 %v1257, %v1285
  %1287 = vmatmul.bf16.gmra.mxu0 %v518
  %v1288 = vpop.f32.mrf.mxu0
  %v1289 = vadd.f32 %v1260, %v1288
  %v1290 = vpop.f32.mrf.mxu0
  %v1291 = vadd.f32 %v1262, %v1290
  %1292 = vmatmul.bf16.gmra.mxu0 %v531
  %v1293 = vpop.f32.mrf.mxu0
  %v1294 = vadd.f32 %v1265, %v1293
  %v1295 = vpop.f32.mrf.mxu0
  %v1296 = vadd.f32 %v1267, %v1295
  %1297 = vmatmul.bf16.gmra.mxu0 %v544
  %v1298 = vpop.f32.mrf.mxu0
  %v1299 = vadd.f32 %v1270, %v1298
  %v1300 = vpop.f32.mrf.mxu0
  %v1301 = vadd.f32 %v1272, %v1300
  %1302 = vdwg.mxu0
  %1303 = vmatpush.bf16.msra.mxu0 %v1034
  %1304 = vmatpush.bf16.msra.mxu0 %v1033
  %1305 = vmatpush.bf16.msra.mxu0 %v1032
  %1306 = vmatpush.bf16.msra.mxu0 %v1031
  %1307 = vmatpush.bf16.msra.mxu0 %v1030
  %1308 = vmatpush.bf16.msra.mxu0 %v1029
  %1309 = vmatpush.bf16.msra.mxu0 %v1028
  %1310 = vmatpush.bf16.msra.mxu0 %v1027
  %1311 = vmatmul.bf16.gmra.mxu0 %v506
  %v1312 = vpop.f32.mrf.mxu0
  %v1313 = vadd.f32 %v1284, %v1312
  %v1314 = vpop.f32.mrf.mxu0
  %v1315 = vadd.f32 %v1286, %v1314
  %1316 = vmatmul.bf16.gmra.mxu0 %v519
  %v1317 = vpop.f32.mrf.mxu0
  %v1318 = vadd.f32 %v1289, %v1317
  %v1319 = vpop.f32.mrf.mxu0
  %v1320 = vadd.f32 %v1291, %v1319
  %1321 = vmatmul.bf16.gmra.mxu0 %v532
  %v1322 = vpop.f32.mrf.mxu0
  %v1323 = vadd.f32 %v1294, %v1322
  %v1324 = vpop.f32.mrf.mxu0
  %v1325 = vadd.f32 %v1296, %v1324
  %1326 = vmatmul.bf16.gmra.mxu0 %v545
  %v1327 = vpop.f32.mrf.mxu0
  %v1328 = vadd.f32 %v1299, %v1327
  %v1329 = vpop.f32.mrf.mxu0
  %v1330 = vadd.f32 %v1301, %v1329
  %1331 = vdwg.mxu0
  %1332 = vmatpush.bf16.msra.mxu0 %v1042
  %1333 = vmatpush.bf16.msra.mxu0 %v1041
  %1334 = vmatpush.bf16.msra.mxu0 %v1040
  %1335 = vmatpush.bf16.msra.mxu0 %v1039
  %1336 = vmatpush.bf16.msra.mxu0 %v1038
  %1337 = vmatpush.bf16.msra.mxu0 %v1037
  %1338 = vmatpush.bf16.msra.mxu0 %v1036
  %1339 = vmatpush.bf16.msra.mxu0 %v1035
  %1340 = vmatmul.bf16.gmra.mxu0 %v507
  %v1341 = vpop.f32.mrf.mxu0
  %v1342 = vadd.f32 %v1313, %v1341
  %v1343 = vpop.f32.mrf.mxu0
  %v1344 = vadd.f32 %v1315, %v1343
  %1345 = vmatmul.bf16.gmra.mxu0 %v520
  %v1346 = vpop.f32.mrf.mxu0
  %v1347 = vadd.f32 %v1318, %v1346
  %v1348 = vpop.f32.mrf.mxu0
  %v1349 = vadd.f32 %v1320, %v1348
  %1350 = vmatmul.bf16.gmra.mxu0 %v533
  %v1351 = vpop.f32.mrf.mxu0
  %v1352 = vadd.f32 %v1323, %v1351
  %v1353 = vpop.f32.mrf.mxu0
  %v1354 = vadd.f32 %v1325, %v1353
  %1355 = vmatmul.bf16.gmra.mxu0 %v546
  %v1356 = vpop.f32.mrf.mxu0
  %v1357 = vadd.f32 %v1328, %v1356
  %v1358 = vpop.f32.mrf.mxu0
  %v1359 = vadd.f32 %v1330, %v1358
  %1360 = vdwg.mxu0
  %1361 = vmatpush.bf16.msra.mxu0 %v1050
  %1362 = vmatpush.bf16.msra.mxu0 %v1049
  %1363 = vmatpush.bf16.msra.mxu0 %v1048
  %1364 = vmatpush.bf16.msra.mxu0 %v1047
  %1365 = vmatpush.bf16.msra.mxu0 %v1046
  %1366 = vmatpush.bf16.msra.mxu0 %v1045
  %1367 = vmatpush.bf16.msra.mxu0 %v1044
  %1368 = vmatpush.bf16.msra.mxu0 %v1043
  %1369 = vmatmul.bf16.gmra.mxu0 %v508
  %v1370 = vpop.f32.mrf.mxu0
  %v1371 = vadd.f32 %v1342, %v1370
  %v1372 = vpop.f32.mrf.mxu0
  %v1373 = vadd.f32 %v1344, %v1372
  %1374 = vmatmul.bf16.gmra.mxu0 %v521
  %v1375 = vpop.f32.mrf.mxu0
  %v1376 = vadd.f32 %v1347, %v1375
  %v1377 = vpop.f32.mrf.mxu0
  %v1378 = vadd.f32 %v1349, %v1377
  %1379 = vmatmul.bf16.gmra.mxu0 %v534
  %v1380 = vpop.f32.mrf.mxu0
  %v1381 = vadd.f32 %v1352, %v1380
  %v1382 = vpop.f32.mrf.mxu0
  %v1383 = vadd.f32 %v1354, %v1382
  %1384 = vmatmul.bf16.gmra.mxu0 %v547
  %v1385 = vpop.f32.mrf.mxu0
  %v1386 = vadd.f32 %v1357, %v1385
  %v1387 = vpop.f32.mrf.mxu0
  %v1388 = vadd.f32 %v1359, %v1387
  %1389 = vdwg.mxu0
  %1390 = vmatpush.bf16.msra.mxu0 %v1058
  %1391 = vmatpush.bf16.msra.mxu0 %v1057
  %1392 = vmatpush.bf16.msra.mxu0 %v1056
  %1393 = vmatpush.bf16.msra.mxu0 %v1055
  %1394 = vmatpush.bf16.msra.mxu0 %v1054
  %1395 = vmatpush.bf16.msra.mxu0 %v1053
  %1396 = vmatpush.bf16.msra.mxu0 %v1052
  %1397 = vmatpush.bf16.msra.mxu0 %v1051
  %1398 = vmatmul.bf16.gmra.mxu0 %v509
  %v1399 = vpop.f32.mrf.mxu0
  %v1400 = vadd.f32 %v1371, %v1399
  %v1401 = vpop.f32.mrf.mxu0
  %v1402 = vadd.f32 %v1373, %v1401
  %1403 = vmatmul.bf16.gmra.mxu0 %v522
  %v1404 = vpop.f32.mrf.mxu0
  %v1405 = vadd.f32 %v1376, %v1404
  %v1406 = vpop.f32.mrf.mxu0
  %v1407 = vadd.f32 %v1378, %v1406
  %1408 = vmatmul.bf16.gmra.mxu0 %v535
  %v1409 = vpop.f32.mrf.mxu0
  %v1410 = vadd.f32 %v1381, %v1409
  %v1411 = vpop.f32.mrf.mxu0
  %v1412 = vadd.f32 %v1383, %v1411
  %1413 = vmatmul.bf16.gmra.mxu0 %v548
  %v1414 = vpop.f32.mrf.mxu0
  %v1415 = vadd.f32 %v1386, %v1414
  %v1416 = vpop.f32.mrf.mxu0
  %v1417 = vadd.f32 %v1388, %v1416
  %1418 = vdwg.mxu0
  %1419 = vmatpush.bf16.msra.mxu0 %v1066
  %1420 = vmatpush.bf16.msra.mxu0 %v1065
  %1421 = vmatpush.bf16.msra.mxu0 %v1064
  %1422 = vmatpush.bf16.msra.mxu0 %v1063
  %1423 = vmatpush.bf16.msra.mxu0 %v1062
  %1424 = vmatpush.bf16.msra.mxu0 %v1061
  %1425 = vmatpush.bf16.msra.mxu0 %v1060
  %1426 = vmatpush.bf16.msra.mxu0 %v1059
  %1427 = vmatmul.bf16.gmra.mxu0 %v510
  %v1428 = vpop.f32.mrf.mxu0
  %v1429 = vadd.f32 %v1400, %v1428
  %v1430 = vpop.f32.mrf.mxu0
  %v1431 = vadd.f32 %v1402, %v1430
  %1432 = vmatmul.bf16.gmra.mxu0 %v523
  %v1433 = vpop.f32.mrf.mxu0
  %v1434 = vadd.f32 %v1405, %v1433
  %v1435 = vpop.f32.mrf.mxu0
  %v1436 = vadd.f32 %v1407, %v1435
  %1437 = vmatmul.bf16.gmra.mxu0 %v536
  %v1438 = vpop.f32.mrf.mxu0
  %v1439 = vadd.f32 %v1410, %v1438
  %v1440 = vpop.f32.mrf.mxu0
  %v1441 = vadd.f32 %v1412, %v1440
  %1442 = vmatmul.bf16.gmra.mxu0 %v549
  %v1443 = vpop.f32.mrf.mxu0
  %v1444 = vadd.f32 %v1415, %v1443
  %v1445 = vpop.f32.mrf.mxu0
  %v1446 = vadd.f32 %v1417, %v1445
  %1447 = vdwg.mxu0
  %1448 = vmatpush.bf16.msra.mxu0 %v1074
  %1449 = vmatpush.bf16.msra.mxu0 %v1073
  %1450 = vmatpush.bf16.msra.mxu0 %v1072
  %1451 = vmatpush.bf16.msra.mxu0 %v1071
  %1452 = vmatpush.bf16.msra.mxu0 %v1070
  %1453 = vmatpush.bf16.msra.mxu0 %v1069
  %1454 = vmatpush.bf16.msra.mxu0 %v1068
  %1455 = vmatpush.bf16.msra.mxu0 %v1067
  %1456 = vmatmul.bf16.gmra.mxu0 %v511
  %v1457 = vpop.f32.mrf.mxu0
  %v1458 = vadd.f32 %v1429, %v1457
  %v1459 = vpop.f32.mrf.mxu0
  %v1460 = vadd.f32 %v1431, %v1459
  %1461 = vmatmul.bf16.gmra.mxu0 %v524
  %v1462 = vpop.f32.mrf.mxu0
  %v1463 = vadd.f32 %v1434, %v1462
  %v1464 = vpop.f32.mrf.mxu0
  %v1465 = vadd.f32 %v1436, %v1464
  %1466 = vmatmul.bf16.gmra.mxu0 %v537
  %v1467 = vpop.f32.mrf.mxu0
  %v1468 = vadd.f32 %v1439, %v1467
  %v1469 = vpop.f32.mrf.mxu0
  %v1470 = vadd.f32 %v1441, %v1469
  %1471 = vmatmul.bf16.gmra.mxu0 %v550
  %v1472 = vpop.f32.mrf.mxu0
  %v1473 = vadd.f32 %v1444, %v1472
  %v1474 = vpop.f32.mrf.mxu0
  %v1475 = vadd.f32 %v1446, %v1474
  %1476 = vdwg.mxu0
  %1477 = vmatpush.bf16.msra.mxu0 %v1082
  %1478 = vmatpush.bf16.msra.mxu0 %v1081
  %1479 = vmatpush.bf16.msra.mxu0 %v1080
  %1480 = vmatpush.bf16.msra.mxu0 %v1079
  %1481 = vmatpush.bf16.msra.mxu0 %v1078
  %1482 = vmatpush.bf16.msra.mxu0 %v1077
  %1483 = vmatpush.bf16.msra.mxu0 %v1076
  %1484 = vmatpush.bf16.msra.mxu0 %v1075
  %1485 = vmatmul.bf16.gmra.mxu0 %v512
  %v1486 = vpop.f32.mrf.mxu0
  %v1487 = vadd.f32 %v1458, %v1486
  %v1488 = vpop.f32.mrf.mxu0
  %v1489 = vadd.f32 %v1460, %v1488
  %1490 = vmatmul.bf16.gmra.mxu0 %v525
  %v1491 = vpop.f32.mrf.mxu0
  %v1492 = vadd.f32 %v1463, %v1491
  %v1493 = vpop.f32.mrf.mxu0
  %v1494 = vadd.f32 %v1465, %v1493
  %1495 = vmatmul.bf16.gmra.mxu0 %v538
  %v1496 = vpop.f32.mrf.mxu0
  %v1497 = vadd.f32 %v1468, %v1496
  %v1498 = vpop.f32.mrf.mxu0
  %v1499 = vadd.f32 %v1470, %v1498
  %1500 = vmatmul.bf16.gmra.mxu0 %v551
  %v1501 = vpop.f32.mrf.mxu0
  %v1502 = vadd.f32 %v1473, %v1501
  %v1503 = vpop.f32.mrf.mxu0
  %v1504 = vadd.f32 %v1475, %v1503
  %1505 = vdwg.mxu0
  %1506 = vmatpush.bf16.msra.mxu0 %v1090
  %1507 = vmatpush.bf16.msra.mxu0 %v1089
  %1508 = vmatpush.bf16.msra.mxu0 %v1088
  %1509 = vmatpush.bf16.msra.mxu0 %v1087
  %1510 = vmatpush.bf16.msra.mxu0 %v1086
  %1511 = vmatpush.bf16.msra.mxu0 %v1085
  %1512 = vmatpush.bf16.msra.mxu0 %v1084
  %1513 = vmatpush.bf16.msra.mxu0 %v1083
  %1514 = vmatmul.bf16.gmra.mxu0 %v513
  %v1515 = vpop.f32.mrf.mxu0
  %v1516 = vadd.f32 %v1487, %v1515
  %v1517 = vpop.f32.mrf.mxu0
  %v1518 = vadd.f32 %v1489, %v1517
  %1519 = vmatmul.bf16.gmra.mxu0 %v526
  %v1520 = vpop.f32.mrf.mxu0
  %v1521 = vadd.f32 %v1492, %v1520
  %v1522 = vpop.f32.mrf.mxu0
  %v1523 = vadd.f32 %v1494, %v1522
  %1524 = vmatmul.bf16.gmra.mxu0 %v539
  %v1525 = vpop.f32.mrf.mxu0
  %v1526 = vadd.f32 %v1497, %v1525
  %v1527 = vpop.f32.mrf.mxu0
  %v1528 = vadd.f32 %v1499, %v1527
  %1529 = vmatmul.bf16.gmra.mxu0 %v552
  %v1530 = vpop.f32.mrf.mxu0
  %v1531 = vadd.f32 %v1502, %v1530
  %v1532 = vpop.f32.mrf.mxu0
  %v1533 = vadd.f32 %v1504, %v1532
  %1534 = vdwg.mxu0
  %1535 = vmatpush.bf16.msra.mxu0 %v1098
  %1536 = vmatpush.bf16.msra.mxu0 %v1097
  %1537 = vmatpush.bf16.msra.mxu0 %v1096
  %1538 = vmatpush.bf16.msra.mxu0 %v1095
  %1539 = vmatpush.bf16.msra.mxu0 %v1094
  %1540 = vmatpush.bf16.msra.mxu0 %v1093
  %1541 = vmatpush.bf16.msra.mxu0 %v1092
  %1542 = vmatpush.bf16.msra.mxu0 %v1091
  %1543 = vmatmul.bf16.gmra.mxu0 %v514
  %v1544 = vpop.f32.mrf.mxu0
  %v1545 = vadd.f32 %v1516, %v1544
  %v1546 = vpop.f32.mrf.mxu0
  %v1547 = vadd.f32 %v1518, %v1546
  %1548 = vmatmul.bf16.gmra.mxu0 %v527
  %v1549 = vpop.f32.mrf.mxu0
  %v1550 = vadd.f32 %v1521, %v1549
  %v1551 = vpop.f32.mrf.mxu0
  %v1552 = vadd.f32 %v1523, %v1551
  %1553 = vmatmul.bf16.gmra.mxu0 %v540
  %v1554 = vpop.f32.mrf.mxu0
  %v1555 = vadd.f32 %v1526, %v1554
  %v1556 = vpop.f32.mrf.mxu0
  %v1557 = vadd.f32 %v1528, %v1556
  %1558 = vmatmul.bf16.gmra.mxu0 %v553
  %v1559 = vpop.f32.mrf.mxu0
  %v1560 = vadd.f32 %v1531, %v1559
  %v1561 = vpop.f32.mrf.mxu0
  %v1562 = vadd.f32 %v1533, %v1561
  %1563 = vdwg.mxu0
  %1564 = vmatpush.bf16.msra.mxu0 0
  %1565 = vmatpush.bf16.msra.mxu0 0
  %1566 = vmatpush.bf16.msra.mxu0 0
  %1567 = vmatpush.bf16.msra.mxu0 0
  %1568 = vmatpush.bf16.msra.mxu0 %v1102
  %1569 = vmatpush.bf16.msra.mxu0 %v1101
  %1570 = vmatpush.bf16.msra.mxu0 %v1100
  %1571 = vmatpush.bf16.msra.mxu0 %v1099
  %1572 = vmatmul.bf16.gmra.mxu0 %v1205
  %v1573 = vpop.f32.mrf.mxu0
  %v1574 = vadd.f32 %v1545, %v1573
  %v1575 = vpop.f32.mrf.mxu0
  %v1576 = vadd.f32 %v1547, %v1575
  %1577 = vmatmul.bf16.gmra.mxu0 %v1208
  %v1578 = vpop.f32.mrf.mxu0
  %v1579 = vadd.f32 %v1550, %v1578
  %v1580 = vpop.f32.mrf.mxu0
  %v1581 = vadd.f32 %v1552, %v1580
  %1582 = vmatmul.bf16.gmra.mxu0 %v1211
  %v1583 = vpop.f32.mrf.mxu0
  %v1584 = vadd.f32 %v1555, %v1583
  %v1585 = vpop.f32.mrf.mxu0
  %v1586 = vadd.f32 %v1557, %v1585
  %1587 = vmatmul.bf16.gmra.mxu0 %v1214
  %v1588 = vpop.f32.mrf.mxu0
  %v1589 = vadd.f32 %v1560, %v1588
  %v1590 = vpop.f32.mrf.mxu0
  %v1591 = vadd.f32 %v1562, %v1590
  %1592 = vdwg.mxu0
  %v1593 = vmul.f32 %v1574, 0.5
  %v1594 = vmul.f32 %v1576, 0.5
  %v1595 = vmul.f32 %v1579, 0.5
  %v1596 = vmul.f32 %v1581, 0.5
  %v1597 = vmul.f32 %v1584, 0.5
  %v1598 = vmul.f32 %v1586, 0.5
  %v1599 = vmul.f32 %v1589, 0.5
  %v1600 = vmul.f32 %v1591, 0.5
  %v1601 = vmul.f32 %v1574, 0.70710677
  %v1602 = vmul.f32 %v1576, 0.70710677
  %v1603 = vmul.f32 %v1579, 0.70710677
  %v1604 = vmul.f32 %v1581, 0.70710677
  %v1605 = vmul.f32 %v1584, 0.70710677
  %v1606 = vmul.f32 %v1586, 0.70710677
  %v1607 = vmul.f32 %v1589, 0.70710677
  %v1608 = vmul.f32 %v1591, 0.70710677
  %v1609 = vmul.f32 %v1601, %v1601
  %v1610 = vmin.f32 16.0, %v1609
  %v1611 = vmul.f32 %v1610, 2.1237322e-06
  %v1612 = vadd.f32 %v1611, 0.00028619796
  %v1613 = vmul.f32 %v1610, %v1612
  %v1614 = vadd.f32 %v1613, 0.0036580483
  %v1615 = vmul.f32 %v1610, %v1614
  %v1616 = vadd.f32 %v1615, 0.05243302
  %v1617 = vmul.f32 %v1610, %v1616
  %v1618 = vadd.f32 %v1617, 0.18741608
  %v1619 = vmul.f32 %v1610, %v1618
  %v1620 = vadd.f32 %v1619, 1.1283791
  %v1621 = vmul.f32 %v1601, %v1620
  %v1622 = vmul.f32 %v1610, 3.8918573e-05
  %v1623 = vadd.f32 %v1622, 0.001143296
  %v1624 = vmul.f32 %v1610, %v1623
  %v1625 = vadd.f32 %v1624, 0.014752088
  %v1626 = vmul.f32 %v1610, %v1625
  %v1627 = vadd.f32 %v1626, 0.112945676
  %v1628 = vmul.f32 %v1610, %v1627
  %v1629 = vadd.f32 %v1628, 0.4994258
  %v1630 = vmul.f32 %v1610, %v1629
  %v1631 = vadd.f32 %v1630, 1.0
  %v1632 = vrcp.pop %v1631
  %v1633 = vmul.f32 %v1631, %v1632
  %v1634 = vsub.f32 1.0, %v1633
  %v1635 = vmul.f32 %v1632, %v1634
  %v1636 = vadd.f32 %v1632, %v1635
  %vm1637 = vweird.f32 %v1631
  %vm1638 = vweird.f32 %v1632
  %vm1639 = vmor %vm1637, %vm1638
  %v1640 = vsel %vm1639, %v1632, %v1636
  %v1641 = vand.u32 2147483647, %v1631
  %vm1642 = vcmp.eq.f32.partialorder %v1641, 8.507059e+37
  %v1643 = vand.u32 %v1631, 2147483648
  %v1644 = vor.u32 1.1754944e-38, %v1643
  %v1645 = vsel %vm1642, %v1644, %v1640
  %v1646 = vmul.f32 %v1621, %v1645
  %v1647 = vmin.f32 %v1646, 1.0
  %v1648 = vmax.f32 %v1647, -1.0
  %v1649 = vmul.f32 %v1602, %v1602
  %v1650 = vmin.f32 16.0, %v1649
  %v1651 = vmul.f32 %v1650, 2.1237322e-06
  %v1652 = vadd.f32 %v1651, 0.00028619796
  %v1653 = vmul.f32 %v1650, %v1652
  %v1654 = vadd.f32 %v1653, 0.0036580483
  %v1655 = vmul.f32 %v1650, %v1654
  %v1656 = vadd.f32 %v1655, 0.05243302
  %v1657 = vmul.f32 %v1650, %v1656
  %v1658 = vadd.f32 %v1657, 0.18741608
  %v1659 = vmul.f32 %v1650, %v1658
  %v1660 = vadd.f32 %v1659, 1.1283791
  %v1661 = vmul.f32 %v1602, %v1660
  %v1662 = vmul.f32 %v1650, 3.8918573e-05
  %v1663 = vadd.f32 %v1662, 0.001143296
  %v1664 = vmul.f32 %v1650, %v1663
  %v1665 = vadd.f32 %v1664, 0.014752088
  %v1666 = vmul.f32 %v1650, %v1665
  %v1667 = vadd.f32 %v1666, 0.112945676
  %v1668 = vmul.f32 %v1650, %v1667
  %v1669 = vadd.f32 %v1668, 0.4994258
  %v1670 = vmul.f32 %v1650, %v1669
  %v1671 = vadd.f32 %v1670, 1.0
  %v1672 = vrcp.pop %v1671
  %v1673 = vmul.f32 %v1671, %v1672
  %v1674 = vsub.f32 1.0, %v1673
  %v1675 = vmul.f32 %v1672, %v1674
  %v1676 = vadd.f32 %v1672, %v1675
  %vm1677 = vweird.f32 %v1671
  %vm1678 = vweird.f32 %v1672
  %vm1679 = vmor %vm1677, %vm1678
  %v1680 = vsel %vm1679, %v1672, %v1676
  %v1681 = vand.u32 2147483647, %v1671
  %vm1682 = vcmp.eq.f32.partialorder %v1681, 8.507059e+37
  %v1683 = vand.u32 %v1671, 2147483648
  %v1684 = vor.u32 1.1754944e-38, %v1683
  %v1685 = vsel %vm1682, %v1684, %v1680
  %v1686 = vmul.f32 %v1661, %v1685
  %v1687 = vmin.f32 %v1686, 1.0
  %v1688 = vmax.f32 %v1687, -1.0
  %v1689 = vmul.f32 %v1603, %v1603
  %v1690 = vmin.f32 16.0, %v1689
  %v1691 = vmul.f32 %v1690, 2.1237322e-06
  %v1692 = vadd.f32 %v1691, 0.00028619796
  %v1693 = vmul.f32 %v1690, %v1692
  %v1694 = vadd.f32 %v1693, 0.0036580483
  %v1695 = vmul.f32 %v1690, %v1694
  %v1696 = vadd.f32 %v1695, 0.05243302
  %v1697 = vmul.f32 %v1690, %v1696
  %v1698 = vadd.f32 %v1697, 0.18741608
  %v1699 = vmul.f32 %v1690, %v1698
  %v1700 = vadd.f32 %v1699, 1.1283791
  %v1701 = vmul.f32 %v1603, %v1700
  %v1702 = vmul.f32 %v1690, 3.8918573e-05
  %v1703 = vadd.f32 %v1702, 0.001143296
  %v1704 = vmul.f32 %v1690, %v1703
  %v1705 = vadd.f32 %v1704, 0.014752088
  %v1706 = vmul.f32 %v1690, %v1705
  %v1707 = vadd.f32 %v1706, 0.112945676
  %v1708 = vmul.f32 %v1690, %v1707
  %v1709 = vadd.f32 %v1708, 0.4994258
  %v1710 = vmul.f32 %v1690, %v1709
  %v1711 = vadd.f32 %v1710, 1.0
  %v1712 = vrcp.pop %v1711
  %v1713 = vmul.f32 %v1711, %v1712
  %v1714 = vsub.f32 1.0, %v1713
  %v1715 = vmul.f32 %v1712, %v1714
  %v1716 = vadd.f32 %v1712, %v1715
  %vm1717 = vweird.f32 %v1711
  %vm1718 = vweird.f32 %v1712
  %vm1719 = vmor %vm1717, %vm1718
  %v1720 = vsel %vm1719, %v1712, %v1716
  %v1721 = vand.u32 2147483647, %v1711
  %vm1722 = vcmp.eq.f32.partialorder %v1721, 8.507059e+37
  %v1723 = vand.u32 %v1711, 2147483648
  %v1724 = vor.u32 1.1754944e-38, %v1723
  %v1725 = vsel %vm1722, %v1724, %v1720
  %v1726 = vmul.f32 %v1701, %v1725
  %v1727 = vmin.f32 %v1726, 1.0
  %v1728 = vmax.f32 %v1727, -1.0
  %v1729 = vmul.f32 %v1604, %v1604
  %v1730 = vmin.f32 16.0, %v1729
  %v1731 = vmul.f32 %v1730, 2.1237322e-06
  %v1732 = vadd.f32 %v1731, 0.00028619796
  %v1733 = vmul.f32 %v1730, %v1732
  %v1734 = vadd.f32 %v1733, 0.0036580483
  %v1735 = vmul.f32 %v1730, %v1734
  %v1736 = vadd.f32 %v1735, 0.05243302
  %v1737 = vmul.f32 %v1730, %v1736
  %v1738 = vadd.f32 %v1737, 0.18741608
  %v1739 = vmul.f32 %v1730, %v1738
  %v1740 = vadd.f32 %v1739, 1.1283791
  %v1741 = vmul.f32 %v1604, %v1740
  %v1742 = vmul.f32 %v1730, 3.8918573e-05
  %v1743 = vadd.f32 %v1742, 0.001143296
  %v1744 = vmul.f32 %v1730, %v1743
  %v1745 = vadd.f32 %v1744, 0.014752088
  %v1746 = vmul.f32 %v1730, %v1745
  %v1747 = vadd.f32 %v1746, 0.112945676
  %v1748 = vmul.f32 %v1730, %v1747
  %v1749 = vadd.f32 %v1748, 0.4994258
  %v1750 = vmul.f32 %v1730, %v1749
  %v1751 = vadd.f32 %v1750, 1.0
  %v1752 = vrcp.pop %v1751
  %v1753 = vmul.f32 %v1751, %v1752
  %v1754 = vsub.f32 1.0, %v1753
  %v1755 = vmul.f32 %v1752, %v1754
  %v1756 = vadd.f32 %v1752, %v1755
  %vm1757 = vweird.f32 %v1751
  %vm1758 = vweird.f32 %v1752
  %vm1759 = vmor %vm1757, %vm1758
  %v1760 = vsel %vm1759, %v1752, %v1756
  %v1761 = vand.u32 2147483647, %v1751
  %vm1762 = vcmp.eq.f32.partialorder %v1761, 8.507059e+37
  %v1763 = vand.u32 %v1751, 2147483648
  %v1764 = vor.u32 1.1754944e-38, %v1763
  %v1765 = vsel %vm1762, %v1764, %v1760
  %v1766 = vmul.f32 %v1741, %v1765
  %v1767 = vmin.f32 %v1766, 1.0
  %v1768 = vmax.f32 %v1767, -1.0
  %v1769 = vmul.f32 %v1605, %v1605
  %v1770 = vmin.f32 16.0, %v1769
  %v1771 = vmul.f32 %v1770, 2.1237322e-06
  %v1772 = vadd.f32 %v1771, 0.00028619796
  %v1773 = vmul.f32 %v1770, %v1772
  %v1774 = vadd.f32 %v1773, 0.0036580483
  %v1775 = vmul.f32 %v1770, %v1774
  %v1776 = vadd.f32 %v1775, 0.05243302
  %v1777 = vmul.f32 %v1770, %v1776
  %v1778 = vadd.f32 %v1777, 0.18741608
  %v1779 = vmul.f32 %v1770, %v1778
  %v1780 = vadd.f32 %v1779, 1.1283791
  %v1781 = vmul.f32 %v1605, %v1780
  %v1782 = vmul.f32 %v1770, 3.8918573e-05
  %v1783 = vadd.f32 %v1782, 0.001143296
  %v1784 = vmul.f32 %v1770, %v1783
  %v1785 = vadd.f32 %v1784, 0.014752088
  %v1786 = vmul.f32 %v1770, %v1785
  %v1787 = vadd.f32 %v1786, 0.112945676
  %v1788 = vmul.f32 %v1770, %v1787
  %v1789 = vadd.f32 %v1788, 0.4994258
  %v1790 = vmul.f32 %v1770, %v1789
  %v1791 = vadd.f32 %v1790, 1.0
  %v1792 = vrcp.pop %v1791
  %v1793 = vmul.f32 %v1791, %v1792
  %v1794 = vsub.f32 1.0, %v1793
  %v1795 = vmul.f32 %v1792, %v1794
  %v1796 = vadd.f32 %v1792, %v1795
  %vm1797 = vweird.f32 %v1791
  %vm1798 = vweird.f32 %v1792
  %vm1799 = vmor %vm1797, %vm1798
  %v1800 = vsel %vm1799, %v1792, %v1796
  %v1801 = vand.u32 2147483647, %v1791
  %vm1802 = vcmp.eq.f32.partialorder %v1801, 8.507059e+37
  %v1803 = vand.u32 %v1791, 2147483648
  %v1804 = vor.u32 1.1754944e-38, %v1803
  %v1805 = vsel %vm1802, %v1804, %v1800
  %v1806 = vmul.f32 %v1781, %v1805
  %v1807 = vmin.f32 %v1806, 1.0
  %v1808 = vmax.f32 %v1807, -1.0
  %v1809 = vmul.f32 %v1606, %v1606
  %v1810 = vmin.f32 16.0, %v1809
  %v1811 = vmul.f32 %v1810, 2.1237322e-06
  %v1812 = vadd.f32 %v1811, 0.00028619796
  %v1813 = vmul.f32 %v1810, %v1812
  %v1814 = vadd.f32 %v1813, 0.0036580483
  %v1815 = vmul.f32 %v1810, %v1814
  %v1816 = vadd.f32 %v1815, 0.05243302
  %v1817 = vmul.f32 %v1810, %v1816
  %v1818 = vadd.f32 %v1817, 0.18741608
  %v1819 = vmul.f32 %v1810, %v1818
  %v1820 = vadd.f32 %v1819, 1.1283791
  %v1821 = vmul.f32 %v1606, %v1820
  %v1822 = vmul.f32 %v1810, 3.8918573e-05
  %v1823 = vadd.f32 %v1822, 0.001143296
  %v1824 = vmul.f32 %v1810, %v1823
  %v1825 = vadd.f32 %v1824, 0.014752088
  %v1826 = vmul.f32 %v1810, %v1825
  %v1827 = vadd.f32 %v1826, 0.112945676
  %v1828 = vmul.f32 %v1810, %v1827
  %v1829 = vadd.f32 %v1828, 0.4994258
  %v1830 = vmul.f32 %v1810, %v1829
  %v1831 = vadd.f32 %v1830, 1.0
  %v1832 = vrcp.pop %v1831
  %v1833 = vmul.f32 %v1831, %v1832
  %v1834 = vsub.f32 1.0, %v1833
  %v1835 = vmul.f32 %v1832, %v1834
  %v1836 = vadd.f32 %v1832, %v1835
  %vm1837 = vweird.f32 %v1831
  %vm1838 = vweird.f32 %v1832
  %vm1839 = vmor %vm1837, %vm1838
  %v1840 = vsel %vm1839, %v1832, %v1836
  %v1841 = vand.u32 2147483647, %v1831
  %vm1842 = vcmp.eq.f32.partialorder %v1841, 8.507059e+37
  %v1843 = vand.u32 %v1831, 2147483648
  %v1844 = vor.u32 1.1754944e-38, %v1843
  %v1845 = vsel %vm1842, %v1844, %v1840
  %v1846 = vmul.f32 %v1821, %v1845
  %v1847 = vmin.f32 %v1846, 1.0
  %v1848 = vmax.f32 %v1847, -1.0
  %v1849 = vmul.f32 %v1607, %v1607
  %v1850 = vmin.f32 16.0, %v1849
  %v1851 = vmul.f32 %v1850, 2.1237322e-06
  %v1852 = vadd.f32 %v1851, 0.00028619796
  %v1853 = vmul.f32 %v1850, %v1852
  %v1854 = vadd.f32 %v1853, 0.0036580483
  %v1855 = vmul.f32 %v1850, %v1854
  %v1856 = vadd.f32 %v1855, 0.05243302
  %v1857 = vmul.f32 %v1850, %v1856
  %v1858 = vadd.f32 %v1857, 0.18741608
  %v1859 = vmul.f32 %v1850, %v1858
  %v1860 = vadd.f32 %v1859, 1.1283791
  %v1861 = vmul.f32 %v1607, %v1860
  %v1862 = vmul.f32 %v1850, 3.8918573e-05
  %v1863 = vadd.f32 %v1862, 0.001143296
  %v1864 = vmul.f32 %v1850, %v1863
  %v1865 = vadd.f32 %v1864, 0.014752088
  %v1866 = vmul.f32 %v1850, %v1865
  %v1867 = vadd.f32 %v1866, 0.112945676
  %v1868 = vmul.f32 %v1850, %v1867
  %v1869 = vadd.f32 %v1868, 0.4994258
  %v1870 = vmul.f32 %v1850, %v1869
  %v1871 = vadd.f32 %v1870, 1.0
  %v1872 = vrcp.pop %v1871
  %v1873 = vmul.f32 %v1871, %v1872
  %v1874 = vsub.f32 1.0, %v1873
  %v1875 = vmul.f32 %v1872, %v1874
  %v1876 = vadd.f32 %v1872, %v1875
  %vm1877 = vweird.f32 %v1871
  %vm1878 = vweird.f32 %v1872
  %vm1879 = vmor %vm1877, %vm1878
  %v1880 = vsel %vm1879, %v1872, %v1876
  %v1881 = vand.u32 2147483647, %v1871
  %vm1882 = vcmp.eq.f32.partialorder %v1881, 8.507059e+37
  %v1883 = vand.u32 %v1871, 2147483648
  %v1884 = vor.u32 1.1754944e-38, %v1883
  %v1885 = vsel %vm1882, %v1884, %v1880
  %v1886 = vmul.f32 %v1861, %v1885
  %v1887 = vmin.f32 %v1886, 1.0
  %v1888 = vmax.f32 %v1887, -1.0
  %v1889 = vmul.f32 %v1608, %v1608
  %v1890 = vmin.f32 16.0, %v1889
  %v1891 = vmul.f32 %v1890, 2.1237322e-06
  %v1892 = vadd.f32 %v1891, 0.00028619796
  %v1893 = vmul.f32 %v1890, %v1892
  %v1894 = vadd.f32 %v1893, 0.0036580483
  %v1895 = vmul.f32 %v1890, %v1894
  %v1896 = vadd.f32 %v1895, 0.05243302
  %v1897 = vmul.f32 %v1890, %v1896
  %v1898 = vadd.f32 %v1897, 0.18741608
  %v1899 = vmul.f32 %v1890, %v1898
  %v1900 = vadd.f32 %v1899, 1.1283791
  %v1901 = vmul.f32 %v1608, %v1900
  %v1902 = vmul.f32 %v1890, 3.8918573e-05
  %v1903 = vadd.f32 %v1902, 0.001143296
  %v1904 = vmul.f32 %v1890, %v1903
  %v1905 = vadd.f32 %v1904, 0.014752088
  %v1906 = vmul.f32 %v1890, %v1905
  %v1907 = vadd.f32 %v1906, 0.112945676
  %v1908 = vmul.f32 %v1890, %v1907
  %v1909 = vadd.f32 %v1908, 0.4994258
  %v1910 = vmul.f32 %v1890, %v1909
  %v1911 = vadd.f32 %v1910, 1.0
  %v1912 = vrcp.pop %v1911
  %v1913 = vmul.f32 %v1911, %v1912
  %v1914 = vsub.f32 1.0, %v1913
  %v1915 = vmul.f32 %v1912, %v1914
  %v1916 = vadd.f32 %v1912, %v1915
  %vm1917 = vweird.f32 %v1911
  %vm1918 = vweird.f32 %v1912
  %vm1919 = vmor %vm1917, %vm1918
  %v1920 = vsel %vm1919, %v1912, %v1916
  %v1921 = vand.u32 2147483647, %v1911
  %vm1922 = vcmp.eq.f32.partialorder %v1921, 8.507059e+37
  %v1923 = vand.u32 %v1911, 2147483648
  %v1924 = vor.u32 1.1754944e-38, %v1923
  %v1925 = vsel %vm1922, %v1924, %v1920
  %v1926 = vmul.f32 %v1901, %v1925
  %v1927 = vmin.f32 %v1926, 1.0
  %v1928 = vmax.f32 %v1927, -1.0
  %v1929 = vadd.f32 %v1648, 1.0
  %v1930 = vadd.f32 %v1688, 1.0
  %v1931 = vadd.f32 %v1728, 1.0
  %v1932 = vadd.f32 %v1768, 1.0
  %v1933 = vadd.f32 %v1808, 1.0
  %v1934 = vadd.f32 %v1848, 1.0
  %v1935 = vadd.f32 %v1888, 1.0
  %v1936 = vadd.f32 %v1928, 1.0
  %v1937 = vmul.f32 %v1593, %v1929
  %v1938 = vmul.f32 %v1594, %v1930
  %v1939 = vmul.f32 %v1595, %v1931
  %v1940 = vmul.f32 %v1596, %v1932
  %v1941 = vmul.f32 %v1597, %v1933
  %v1942 = vmul.f32 %v1598, %v1934
  %v1943 = vmul.f32 %v1599, %v1935
  %v1944 = vmul.f32 %v1600, %v1936
  %v1945 = vpack.c.bf16 %v1938, %v1937
  %v1946 = vpack.c.bf16 %v1940, %v1939
  %v1947 = vpack.c.bf16 %v1942, %v1941
  %v1948 = vpack.c.bf16 %v1944, %v1943
  %v1949 = vld [vmem:[%s2] sm:$0x1]
  %v1951 = vsel %vm1203, %v1949, 0
  %1953 = vmatpush.bf16.msra.mxu0 0
  %1954 = vmatpush.bf16.msra.mxu0 0
  %1955 = vmatpush.bf16.msra.mxu0 0
  %1956 = vmatpush.bf16.msra.mxu0 0
  %1957 = vmatpush.bf16.msra.mxu0 %v1948
  %1958 = vmatpush.bf16.msra.mxu0 %v1947
  %1959 = vmatpush.bf16.msra.mxu0 %v1946
  %1960 = vmatpush.bf16.msra.mxu0 %v1945
  %1961 = vmatmul.bf16.gmra.mxu0 %v1951
  %v1962 = vpop.f32.mrf.mxu0
  %v1963 = vadd.f32 0.0, %v1962
  %v1964 = vpop.f32.mrf.mxu0
  %1965 = vdwg.mxu0
  %v1966 = vmul.f32 %v1963, 0.5
  %v1967 = vmul.f32 %v1963, 0.70710677
  %v1968 = vmul.f32 %v1967, %v1967
  %v1969 = vmin.f32 16.0, %v1968
  %v1970 = vmul.f32 %v1969, 2.1237322e-06
  %v1971 = vadd.f32 %v1970, 0.00028619796
  %v1972 = vmul.f32 %v1969, %v1971
  %v1973 = vadd.f32 %v1972, 0.0036580483
  %v1974 = vmul.f32 %v1969, %v1973
  %v1975 = vadd.f32 %v1974, 0.05243302
  %v1976 = vmul.f32 %v1969, %v1975
  %v1977 = vadd.f32 %v1976, 0.18741608
  %v1978 = vmul.f32 %v1969, %v1977
  %v1979 = vadd.f32 %v1978, 1.1283791
  %v1980 = vmul.f32 %v1967, %v1979
  %v1981 = vmul.f32 %v1969, 3.8918573e-05
  %v1982 = vadd.f32 %v1981, 0.001143296
  %v1983 = vmul.f32 %v1969, %v1982
  %v1984 = vadd.f32 %v1983, 0.014752088
  %v1985 = vmul.f32 %v1969, %v1984
  %v1986 = vadd.f32 %v1985, 0.112945676
  %v1987 = vmul.f32 %v1969, %v1986
  %v1988 = vadd.f32 %v1987, 0.4994258
  %v1989 = vmul.f32 %v1969, %v1988
  %v1990 = vadd.f32 %v1989, 1.0
  %v1991 = vrcp.pop %v1990
  %v1992 = vmul.f32 %v1990, %v1991
  %v1993 = vsub.f32 1.0, %v1992
  %v1994 = vmul.f32 %v1991, %v1993
  %v1995 = vadd.f32 %v1991, %v1994
  %vm1996 = vweird.f32 %v1990
  %vm1997 = vweird.f32 %v1991
  %vm1998 = vmor %vm1996, %vm1997
  %v1999 = vsel %vm1998, %v1991, %v1995
  %v2000 = vand.u32 2147483647, %v1990
  %vm2001 = vcmp.eq.f32.partialorder %v2000, 8.507059e+37
  %v2002 = vand.u32 %v1990, 2147483648
  %v2003 = vor.u32 1.1754944e-38, %v2002
  %v2004 = vsel %vm2001, %v2003, %v1999
  %v2005 = vmul.f32 %v1980, %v2004
  %v2006 = vmin.f32 %v2005, 1.0
  %v2007 = vmax.f32 %v2006, -1.0
  %v2008 = vadd.f32 %v2007, 1.0
  %v2009 = vmul.f32 %v1966, %v2008
  %v2010 = vpack.c.bf16 %v2009, %v2009
  %v2011 = vld [vmem:[%s6] sm:$0xf]
  %v2012 = vld [vmem:[%s6 + $0x4] sm:$0xf]
  %v2013 = vld [vmem:[%s6 + $0x8] sm:$0xf]
  %v2014 = vld [vmem:[%s6 + $0xc] sm:$0xf]
  %v2015 = vld [vmem:[%s6 + $0x10] sm:$0xf]
  %v2016 = vld [vmem:[%s6 + $0x14] sm:$0xf]
  %v2017 = vld [vmem:[%s6 + $0x18] sm:$0xf]
  %v2018 = vld [vmem:[%s6 + $0x1c] sm:$0xf]
  %v2019 = vld [vmem:[%s6 + $0x20] sm:$0xf]
  %v2020 = vld [vmem:[%s6 + $0x24] sm:$0xf]
  %v2021 = vld [vmem:[%s6 + $0x28] sm:$0xf]
  %v2022 = vld [vmem:[%s6 + $0x2c] sm:$0xf]
  %v2023 = vld [vmem:[%s6 + $0x30] sm:$0x1]
  %v2037 = vunpack.c.l.b16 %v2011
  %v2038 = vunpack.c.l.b16 %v2012
  %v2039 = vunpack.c.l.b16 %v2013
  %v2040 = vunpack.c.l.b16 %v2014
  %v2041 = vunpack.c.l.b16 %v2015
  %v2042 = vunpack.c.l.b16 %v2016
  %v2043 = vunpack.c.l.b16 %v2017
  %v2044 = vunpack.c.l.b16 %v2018
  %v2045 = vunpack.c.l.b16 %v2019
  %v2046 = vunpack.c.l.b16 %v2020
  %v2047 = vunpack.c.l.b16 %v2021
  %v2048 = vunpack.c.l.b16 %v2022
  %v2049 = vunpack.c.l.b16 %v2023
  %v2050 = vpack.c.b16 %v2038, %v2037
  %v2051 = vpack.c.b16 %v2040, %v2039
  %v2052 = vpack.c.b16 %v2042, %v2041
  %v2053 = vpack.c.b16 %v2044, %v2043
  %v2054 = vpack.c.b16 %v2046, %v2045
  %v2055 = vpack.c.b16 %v2048, %v2047
  %v2056 = vpack.c.b16 %v2049, %v2049
  %vm2063 = vcmask 801792
  %v2065 = vsel %vm2063, %v2010, 0
  %vm2067 = vcmask 1040384
  %v2069 = vsel %vm2067, %v2056, 0
  %2071 = vmatpush.bf16.msra.mxu0 0
  %2072 = vmatpush.bf16.msra.mxu0 %v2069
  %2073 = vmatpush.bf16.msra.mxu0 %v2055
  %2074 = vmatpush.bf16.msra.mxu0 %v2054
  %2075 = vmatpush.bf16.msra.mxu0 %v2053
  %2076 = vmatpush.bf16.msra.mxu0 %v2052
  %2077 = vmatpush.bf16.msra.mxu0 %v2051
  %2078 = vmatpush.bf16.msra.mxu0 %v2050
  %2079 = vmatmul.bf16.gmra.mxu0 %v2065
  %v2080 = vpop.f32.mrf.mxu0
  %v2081 = vadd.f32 0.0, %v2080
  %v2082 = vpop.f32.mrf.mxu0
  %2083 = vdwg.mxu0
  %v2084 = vld [vmem:[%s3] sm:$0x1]
  %v2085 = vpack.c.bf16 %v2081, %v2081
  %s2086 = scalar_lea.vmem %s6, 52
  %v2087 = vld [vmem:[%s2086] sm:$0xf]
  %v2088 = vld [vmem:[%s2086 + $0x4] sm:$0xf]
  %v2089 = vld [vmem:[%s2086 + $0x8] sm:$0xf]
  %v2090 = vld [vmem:[%s2086 + $0xc] sm:$0xf]
  %v2091 = vld [vmem:[%s2086 + $0x10] sm:$0xf]
  %v2092 = vld [vmem:[%s2086 + $0x14] sm:$0xf]
  %v2093 = vld [vmem:[%s2086 + $0x18] sm:$0xf]
  %v2094 = vld [vmem:[%s2086 + $0x1c] sm:$0xf]
  %v2095 = vld [vmem:[%s2086 + $0x20] sm:$0xf]
  %v2096 = vld [vmem:[%s2086 + $0x24] sm:$0xf]
  %v2097 = vld [vmem:[%s2086 + $0x28] sm:$0xf]
  %v2098 = vld [vmem:[%s2086 + $0x2c] sm:$0xf]
  %v2099 = vld [vmem:[%s2086 + $0x30] sm:$0x1]
  %v2113 = vunpack.c.l.b16 %v2087
  %v2114 = vunpack.c.l.b16 %v2088
  %v2115 = vunpack.c.l.b16 %v2089
  %v2116 = vunpack.c.l.b16 %v2090
  %v2117 = vunpack.c.l.b16 %v2091
  %v2118 = vunpack.c.l.b16 %v2092
  %v2119 = vunpack.c.l.b16 %v2093
  %v2120 = vunpack.c.l.b16 %v2094
  %v2121 = vunpack.c.l.b16 %v2095
  %v2122 = vunpack.c.l.b16 %v2096
  %v2123 = vunpack.c.l.b16 %v2097
  %v2124 = vunpack.c.l.b16 %v2098
  %v2125 = vunpack.c.l.b16 %v2099
  %v2126 = vpack.c.b16 %v2114, %v2113
  %v2127 = vpack.c.b16 %v2116, %v2115
  %v2128 = vpack.c.b16 %v2118, %v2117
  %v2129 = vpack.c.b16 %v2120, %v2119
  %v2130 = vpack.c.b16 %v2122, %v2121
  %v2131 = vpack.c.b16 %v2124, %v2123
  %v2132 = vpack.c.b16 %v2125, %v2125
  %v2140 = vsel %vm2067, %v2132, 0
  %2142 = vmatpush.bf16.msra.mxu0 0
  %2143 = vmatpush.bf16.msra.mxu0 %v2140
  %2144 = vmatpush.bf16.msra.mxu0 %v2131
  %2145 = vmatpush.bf16.msra.mxu0 %v2130
  %2146 = vmatpush.bf16.msra.mxu0 %v2129
  %2147 = vmatpush.bf16.msra.mxu0 %v2128
  %2148 = vmatpush.bf16.msra.mxu0 %v2127
  %2149 = vmatpush.bf16.msra.mxu0 %v2126
  %2150 = vmatmul.bf16.gmra.mxu0 %v2065
  %v2151 = vpop.f32.mrf.mxu0
  %v2152 = vadd.f32 0.0, %v2151
  %v2153 = vpop.f32.mrf.mxu0
  %2154 = vdwg.mxu0
  %s2155 = scalar_lea.vmem %s3, 1
  %v2156 = vld [vmem:[%s2155] sm:$0x1]
  %v2157 = vpack.c.bf16 %v2152, %v2152
  %vm2158 = vcmask 15360
  %v2160 = vsel %vm2158, %v2156, 0
  %v2163 = vsel %vm2067, %v2157, 0
  %2165 = vmatpush.bf16.msra.mxu0 0
  %2166 = vmatpush.bf16.msra.mxu0 0
  %2167 = vmatpush.bf16.msra.mxu0 0
  %2168 = vmatpush.bf16.msra.mxu0 0
  %2169 = vmatpush.bf16.msra.mxu0 0
  %2170 = vmatpush.bf16.msra.mxu0 0
  %2171 = vmatpush.bf16.msra.mxu0 0
  %2172 = vmatpush.bf16.msra.mxu0 %v2163
  %2173 = vmatmul.bf16.gmra.mxu0 %v2160
  %v2174 = vpop.f32.mrf.mxu0
  %v2175 = vadd.f32 0.0, %v2174
  %v2176 = vpop.f32.mrf.mxu0
  %2177 = vdwg.mxu0
  %v2179 = vsel %vm2158, %v2084, 0
  %v2182 = vsel %vm2067, %v2085, 0
  %2184 = vmatpush.bf16.msra.mxu0 0
  %2185 = vmatpush.bf16.msra.mxu0 0
  %2186 = vmatpush.bf16.msra.mxu0 0
  %2187 = vmatpush.bf16.msra.mxu0 0
  %2188 = vmatpush.bf16.msra.mxu0 0
  %2189 = vmatpush.bf16.msra.mxu0 0
  %2190 = vmatpush.bf16.msra.mxu0 0
  %2191 = vmatpush.bf16.msra.mxu0 %v2182
  %2192 = vmatmul.bf16.gmra.mxu0 %v2179
  %v2193 = vpop.f32.mrf.mxu0
  %v2194 = vadd.f32 %v2175, %v2193
  %v2195 = vpop.f32.mrf.mxu0
  %2196 = vdwg.mxu0
  %s2197 = scalar_lea.vmem %s6, 104
  %v2198 = vld [vmem:[%s2197] sm:$0xf]
  %v2199 = vld [vmem:[%s2197 + $0x4] sm:$0xf]
  %v2200 = vld [vmem:[%s2197 + $0x8] sm:$0xf]
  %v2201 = vld [vmem:[%s2197 + $0xc] sm:$0xf]
  %v2202 = vld [vmem:[%s2197 + $0x10] sm:$0xf]
  %v2203 = vld [vmem:[%s2197 + $0x14] sm:$0xf]
  %v2204 = vld [vmem:[%s2197 + $0x18] sm:$0xf]
  %v2205 = vld [vmem:[%s2197 + $0x1c] sm:$0xf]
  %v2206 = vld [vmem:[%s2197 + $0x20] sm:$0xf]
  %v2207 = vld [vmem:[%s2197 + $0x24] sm:$0xf]
  %v2208 = vld [vmem:[%s2197 + $0x28] sm:$0xf]
  %v2209 = vld [vmem:[%s2197 + $0x2c] sm:$0xf]
  %v2210 = vld [vmem:[%s2197 + $0x30] sm:$0x1]
  %v2224 = vunpack.c.l.b16 %v2198
  %v2225 = vunpack.c.l.b16 %v2199
  %v2226 = vunpack.c.l.b16 %v2200
  %v2227 = vunpack.c.l.b16 %v2201
  %v2228 = vunpack.c.l.b16 %v2202
  %v2229 = vunpack.c.l.b16 %v2203
  %v2230 = vunpack.c.l.b16 %v2204
  %v2231 = vunpack.c.l.b16 %v2205
  %v2232 = vunpack.c.l.b16 %v2206
  %v2233 = vunpack.c.l.b16 %v2207
  %v2234 = vunpack.c.l.b16 %v2208
  %v2235 = vunpack.c.l.b16 %v2209
  %v2236 = vunpack.c.l.b16 %v2210
  %v2237 = vpack.c.b16 %v2225, %v2224
  %v2238 = vpack.c.b16 %v2227, %v2226
  %v2239 = vpack.c.b16 %v2229, %v2228
  %v2240 = vpack.c.b16 %v2231, %v2230
  %v2241 = vpack.c.b16 %v2233, %v2232
  %v2242 = vpack.c.b16 %v2235, %v2234
  %v2243 = vpack.c.b16 %v2236, %v2236
  %v2251 = vsel %vm2067, %v2243, 0
  %2253 = vmatpush.bf16.msra.mxu0 0
  %2254 = vmatpush.bf16.msra.mxu0 %v2251
  %2255 = vmatpush.bf16.msra.mxu0 %v2242
  %2256 = vmatpush.bf16.msra.mxu0 %v2241
  %2257 = vmatpush.bf16.msra.mxu0 %v2240
  %2258 = vmatpush.bf16.msra.mxu0 %v2239
  %2259 = vmatpush.bf16.msra.mxu0 %v2238
  %2260 = vmatpush.bf16.msra.mxu0 %v2237
  %2261 = vmatmul.bf16.gmra.mxu0 %v2065
  %v2262 = vpop.f32.mrf.mxu0
  %v2263 = vadd.f32 0.0, %v2262
  %v2264 = vpop.f32.mrf.mxu0
  %2265 = vdwg.mxu0
  %s2266 = scalar_lea.vmem %s3, 2
  %v2267 = vld [vmem:[%s2266] sm:$0x1]
  %v2268 = vpack.c.bf16 %v2263, %v2263
  %v2270 = vsel %vm2158, %v2267, 0
  %v2273 = vsel %vm2067, %v2268, 0
  %2275 = vmatpush.bf16.msra.mxu0 0
  %2276 = vmatpush.bf16.msra.mxu0 0
  %2277 = vmatpush.bf16.msra.mxu0 0
  %2278 = vmatpush.bf16.msra.mxu0 0
  %2279 = vmatpush.bf16.msra.mxu0 0
  %2280 = vmatpush.bf16.msra.mxu0 0
  %2281 = vmatpush.bf16.msra.mxu0 0
  %2282 = vmatpush.bf16.msra.mxu0 %v2273
  %2283 = vmatmul.bf16.gmra.mxu0 %v2270
  %v2284 = vpop.f32.mrf.mxu0
  %v2285 = vadd.f32 0.0, %v2284
  %v2286 = vpop.f32.mrf.mxu0
  %2287 = vdwg.mxu0
  %v2288 = vadd.f32 %v2194, %v2285
  %s2289 = scalar_lea.vmem %s6, 156
  %v2290 = vld [vmem:[%s2289] sm:$0xf]
  %v2291 = vld [vmem:[%s2289 + $0x4] sm:$0xf]
  %v2292 = vld [vmem:[%s2289 + $0x8] sm:$0xf]
  %v2293 = vld [vmem:[%s2289 + $0xc] sm:$0xf]
  %v2294 = vld [vmem:[%s2289 + $0x10] sm:$0xf]
  %v2295 = vld [vmem:[%s2289 + $0x14] sm:$0xf]
  %v2296 = vld [vmem:[%s2289 + $0x18] sm:$0xf]
  %v2297 = vld [vmem:[%s2289 + $0x1c] sm:$0xf]
  %v2298 = vld [vmem:[%s2289 + $0x20] sm:$0xf]
  %v2299 = vld [vmem:[%s2289 + $0x24] sm:$0xf]
  %v2300 = vld [vmem:[%s2289 + $0x28] sm:$0xf]
  %v2301 = vld [vmem:[%s2289 + $0x2c] sm:$0xf]
  %v2302 = vld [vmem:[%s2289 + $0x30] sm:$0x1]
  %v2316 = vunpack.c.l.b16 %v2290
  %v2317 = vunpack.c.l.b16 %v2291
  %v2318 = vunpack.c.l.b16 %v2292
  %v2319 = vunpack.c.l.b16 %v2293
  %v2320 = vunpack.c.l.b16 %v2294
  %v2321 = vunpack.c.l.b16 %v2295
  %v2322 = vunpack.c.l.b16 %v2296
  %v2323 = vunpack.c.l.b16 %v2297
  %v2324 = vunpack.c.l.b16 %v2298
  %v2325 = vunpack.c.l.b16 %v2299
  %v2326 = vunpack.c.l.b16 %v2300
  %v2327 = vunpack.c.l.b16 %v2301
  %v2328 = vunpack.c.l.b16 %v2302
  %v2329 = vpack.c.b16 %v2317, %v2316
  %v2330 = vpack.c.b16 %v2319, %v2318
  %v2331 = vpack.c.b16 %v2321, %v2320
  %v2332 = vpack.c.b16 %v2323, %v2322
  %v2333 = vpack.c.b16 %v2325, %v2324
  %v2334 = vpack.c.b16 %v2327, %v2326
  %v2335 = vpack.c.b16 %v2328, %v2328
  %v2343 = vsel %vm2067, %v2335, 0
  %2345 = vmatpush.bf16.msra.mxu0 0
  %2346 = vmatpush.bf16.msra.mxu0 %v2343
  %2347 = vmatpush.bf16.msra.mxu0 %v2334
  %2348 = vmatpush.bf16.msra.mxu0 %v2333
  %2349 = vmatpush.bf16.msra.mxu0 %v2332
  %2350 = vmatpush.bf16.msra.mxu0 %v2331
  %2351 = vmatpush.bf16.msra.mxu0 %v2330
  %2352 = vmatpush.bf16.msra.mxu0 %v2329
  %2353 = vmatmul.bf16.gmra.mxu0 %v2065
  %v2354 = vpop.f32.mrf.mxu0
  %v2355 = vadd.f32 0.0, %v2354
  %v2356 = vpop.f32.mrf.mxu0
  %2357 = vdwg.mxu0
  %s2358 = scalar_lea.vmem %s3, 3
  %v2359 = vld [vmem:[%s2358] sm:$0x1]
  %v2360 = vpack.c.bf16 %v2355, %v2355
  %v2362 = vsel %vm2158, %v2359, 0
  %v2365 = vsel %vm2067, %v2360, 0
  %2367 = vmatpush.bf16.msra.mxu0 0
  %2368 = vmatpush.bf16.msra.mxu0 0
  %2369 = vmatpush.bf16.msra.mxu0 0
  %2370 = vmatpush.bf16.msra.mxu0 0
  %2371 = vmatpush.bf16.msra.mxu0 0
  %2372 = vmatpush.bf16.msra.mxu0 0
  %2373 = vmatpush.bf16.msra.mxu0 0
  %2374 = vmatpush.bf16.msra.mxu0 %v2365
  %2375 = vmatmul.bf16.gmra.mxu0 %v2362
  %v2376 = vpop.f32.mrf.mxu0
  %v2377 = vadd.f32 0.0, %v2376
  %v2378 = vpop.f32.mrf.mxu0
  %2379 = vdwg.mxu0
  %v2380 = vadd.f32 %v2288, %v2377
  %s2381 = scalar_lea.vmem %s6, 208
  %v2382 = vld [vmem:[%s2381] sm:$0xf]
  %v2383 = vld [vmem:[%s2381 + $0x4] sm:$0xf]
  %v2384 = vld [vmem:[%s2381 + $0x8] sm:$0xf]
  %v2385 = vld [vmem:[%s2381 + $0xc] sm:$0xf]
  %v2386 = vld [vmem:[%s2381 + $0x10] sm:$0xf]
  %v2387 = vld [vmem:[%s2381 + $0x14] sm:$0xf]
  %v2388 = vld [vmem:[%s2381 + $0x18] sm:$0xf]
  %v2389 = vld [vmem:[%s2381 + $0x1c] sm:$0xf]
  %v2390 = vld [vmem:[%s2381 + $0x20] sm:$0xf]
  %v2391 = vld [vmem:[%s2381 + $0x24] sm:$0xf]
  %v2392 = vld [vmem:[%s2381 + $0x28] sm:$0xf]
  %v2393 = vld [vmem:[%s2381 + $0x2c] sm:$0xf]
  %v2394 = vld [vmem:[%s2381 + $0x30] sm:$0x1]
  %v2408 = vunpack.c.l.b16 %v2382
  %v2409 = vunpack.c.l.b16 %v2383
  %v2410 = vunpack.c.l.b16 %v2384
  %v2411 = vunpack.c.l.b16 %v2385
  %v2412 = vunpack.c.l.b16 %v2386
  %v2413 = vunpack.c.l.b16 %v2387
  %v2414 = vunpack.c.l.b16 %v2388
  %v2415 = vunpack.c.l.b16 %v2389
  %v2416 = vunpack.c.l.b16 %v2390
  %v2417 = vunpack.c.l.b16 %v2391
  %v2418 = vunpack.c.l.b16 %v2392
  %v2419 = vunpack.c.l.b16 %v2393
  %v2420 = vunpack.c.l.b16 %v2394
  %v2421 = vpack.c.b16 %v2409, %v2408
  %v2422 = vpack.c.b16 %v2411, %v2410
  %v2423 = vpack.c.b16 %v2413, %v2412
  %v2424 = vpack.c.b16 %v2415, %v2414
  %v2425 = vpack.c.b16 %v2417, %v2416
  %v2426 = vpack.c.b16 %v2419, %v2418
  %v2427 = vpack.c.b16 %v2420, %v2420
  %v2435 = vsel %vm2067, %v2427, 0
  %2437 = vmatpush.bf16.msra.mxu0 0
  %2438 = vmatpush.bf16.msra.mxu0 %v2435
  %2439 = vmatpush.bf16.msra.mxu0 %v2426
  %2440 = vmatpush.bf16.msra.mxu0 %v2425
  %2441 = vmatpush.bf16.msra.mxu0 %v2424
  %2442 = vmatpush.bf16.msra.mxu0 %v2423
  %2443 = vmatpush.bf16.msra.mxu0 %v2422
  %2444 = vmatpush.bf16.msra.mxu0 %v2421
  %2445 = vmatmul.bf16.gmra.mxu0 %v2065
  %v2446 = vpop.f32.mrf.mxu0
  %v2447 = vadd.f32 0.0, %v2446
  %v2448 = vpop.f32.mrf.mxu0
  %2449 = vdwg.mxu0
  %s2450 = scalar_lea.vmem %s3, 4
  %v2451 = vld [vmem:[%s2450] sm:$0x1]
  %v2452 = vpack.c.bf16 %v2447, %v2447
  %v2454 = vsel %vm2158, %v2451, 0
  %v2457 = vsel %vm2067, %v2452, 0
  %2459 = vmatpush.bf16.msra.mxu0 0
  %2460 = vmatpush.bf16.msra.mxu0 0
  %2461 = vmatpush.bf16.msra.mxu0 0
  %2462 = vmatpush.bf16.msra.mxu0 0
  %2463 = vmatpush.bf16.msra.mxu0 0
  %2464 = vmatpush.bf16.msra.mxu0 0
  %2465 = vmatpush.bf16.msra.mxu0 0
  %2466 = vmatpush.bf16.msra.mxu0 %v2457
  %2467 = vmatmul.bf16.gmra.mxu0 %v2454
  %v2468 = vpop.f32.mrf.mxu0
  %v2469 = vadd.f32 0.0, %v2468
  %v2470 = vpop.f32.mrf.mxu0
  %2471 = vdwg.mxu0
  %v2472 = vadd.f32 %v2380, %v2469
  %s2473 = scalar_lea.vmem %s6, 260
  %v2474 = vld [vmem:[%s2473] sm:$0xf]
  %v2475 = vld [vmem:[%s2473 + $0x4] sm:$0xf]
  %v2476 = vld [vmem:[%s2473 + $0x8] sm:$0xf]
  %v2477 = vld [vmem:[%s2473 + $0xc] sm:$0xf]
  %v2478 = vld [vmem:[%s2473 + $0x10] sm:$0xf]
  %v2479 = vld [vmem:[%s2473 + $0x14] sm:$0xf]
  %v2480 = vld [vmem:[%s2473 + $0x18] sm:$0xf]
  %v2481 = vld [vmem:[%s2473 + $0x1c] sm:$0xf]
  %v2482 = vld [vmem:[%s2473 + $0x20] sm:$0xf]
  %v2483 = vld [vmem:[%s2473 + $0x24] sm:$0xf]
  %v2484 = vld [vmem:[%s2473 + $0x28] sm:$0xf]
  %v2485 = vld [vmem:[%s2473 + $0x2c] sm:$0xf]
  %v2486 = vld [vmem:[%s2473 + $0x30] sm:$0x1]
  %v2500 = vunpack.c.l.b16 %v2474
  %v2501 = vunpack.c.l.b16 %v2475
  %v2502 = vunpack.c.l.b16 %v2476
  %v2503 = vunpack.c.l.b16 %v2477
  %v2504 = vunpack.c.l.b16 %v2478
  %v2505 = vunpack.c.l.b16 %v2479
  %v2506 = vunpack.c.l.b16 %v2480
  %v2507 = vunpack.c.l.b16 %v2481
  %v2508 = vunpack.c.l.b16 %v2482
  %v2509 = vunpack.c.l.b16 %v2483
  %v2510 = vunpack.c.l.b16 %v2484
  %v2511 = vunpack.c.l.b16 %v2485
  %v2512 = vunpack.c.l.b16 %v2486
  %v2513 = vpack.c.b16 %v2501, %v2500
  %v2514 = vpack.c.b16 %v2503, %v2502
  %v2515 = vpack.c.b16 %v2505, %v2504
  %v2516 = vpack.c.b16 %v2507, %v2506
  %v2517 = vpack.c.b16 %v2509, %v2508
  %v2518 = vpack.c.b16 %v2511, %v2510
  %v2519 = vpack.c.b16 %v2512, %v2512
  %v2527 = vsel %vm2067, %v2519, 0
  %2529 = vmatpush.bf16.msra.mxu0 0
  %2530 = vmatpush.bf16.msra.mxu0 %v2527
  %2531 = vmatpush.bf16.msra.mxu0 %v2518
  %2532 = vmatpush.bf16.msra.mxu0 %v2517
  %2533 = vmatpush.bf16.msra.mxu0 %v2516
  %2534 = vmatpush.bf16.msra.mxu0 %v2515
  %2535 = vmatpush.bf16.msra.mxu0 %v2514
  %2536 = vmatpush.bf16.msra.mxu0 %v2513
  %2537 = vmatmul.bf16.gmra.mxu0 %v2065
  %v2538 = vpop.f32.mrf.mxu0
  %v2539 = vadd.f32 0.0, %v2538
  %v2540 = vpop.f32.mrf.mxu0
  %2541 = vdwg.mxu0
  %s2542 = scalar_lea.vmem %s3, 5
  %v2543 = vld [vmem:[%s2542] sm:$0x1]
  %v2544 = vpack.c.bf16 %v2539, %v2539
  %v2546 = vsel %vm2158, %v2543, 0
  %v2549 = vsel %vm2067, %v2544, 0
  %2551 = vmatpush.bf16.msra.mxu0 0
  %2552 = vmatpush.bf16.msra.mxu0 0
  %2553 = vmatpush.bf16.msra.mxu0 0
  %2554 = vmatpush.bf16.msra.mxu0 0
  %2555 = vmatpush.bf16.msra.mxu0 0
  %2556 = vmatpush.bf16.msra.mxu0 0
  %2557 = vmatpush.bf16.msra.mxu0 0
  %2558 = vmatpush.bf16.msra.mxu0 %v2549
  %2559 = vmatmul.bf16.gmra.mxu0 %v2546
  %v2560 = vpop.f32.mrf.mxu0
  %v2561 = vadd.f32 0.0, %v2560
  %v2562 = vpop.f32.mrf.mxu0
  %2563 = vdwg.mxu0
  %v2564 = vadd.f32 %v2472, %v2561
  %s2565 = scalar_lea.vmem %s6, 312
  %v2566 = vld [vmem:[%s2565] sm:$0xf]
  %v2567 = vld [vmem:[%s2565 + $0x4] sm:$0xf]
  %v2568 = vld [vmem:[%s2565 + $0x8] sm:$0xf]
  %v2569 = vld [vmem:[%s2565 + $0xc] sm:$0xf]
  %v2570 = vld [vmem:[%s2565 + $0x10] sm:$0xf]
  %v2571 = vld [vmem:[%s2565 + $0x14] sm:$0xf]
  %v2572 = vld [vmem:[%s2565 + $0x18] sm:$0xf]
  %v2573 = vld [vmem:[%s2565 + $0x1c] sm:$0xf]
  %v2574 = vld [vmem:[%s2565 + $0x20] sm:$0xf]
  %v2575 = vld [vmem:[%s2565 + $0x24] sm:$0xf]
  %v2576 = vld [vmem:[%s2565 + $0x28] sm:$0xf]
  %v2577 = vld [vmem:[%s2565 + $0x2c] sm:$0xf]
  %v2578 = vld [vmem:[%s2565 + $0x30] sm:$0x1]
  %v2592 = vunpack.c.l.b16 %v2566
  %v2593 = vunpack.c.l.b16 %v2567
  %v2594 = vunpack.c.l.b16 %v2568
  %v2595 = vunpack.c.l.b16 %v2569
  %v2596 = vunpack.c.l.b16 %v2570
  %v2597 = vunpack.c.l.b16 %v2571
  %v2598 = vunpack.c.l.b16 %v2572
  %v2599 = vunpack.c.l.b16 %v2573
  %v2600 = vunpack.c.l.b16 %v2574
  %v2601 = vunpack.c.l.b16 %v2575
  %v2602 = vunpack.c.l.b16 %v2576
  %v2603 = vunpack.c.l.b16 %v2577
  %v2604 = vunpack.c.l.b16 %v2578
  %v2605 = vpack.c.b16 %v2593, %v2592
  %v2606 = vpack.c.b16 %v2595, %v2594
  %v2607 = vpack.c.b16 %v2597, %v2596
  %v2608 = vpack.c.b16 %v2599, %v2598
  %v2609 = vpack.c.b16 %v2601, %v2600
  %v2610 = vpack.c.b16 %v2603, %v2602
  %v2611 = vpack.c.b16 %v2604, %v2604
  %v2619 = vsel %vm2067, %v2611, 0
  %2621 = vmatpush.bf16.msra.mxu0 0
  %2622 = vmatpush.bf16.msra.mxu0 %v2619
  %2623 = vmatpush.bf16.msra.mxu0 %v2610
  %2624 = vmatpush.bf16.msra.mxu0 %v2609
  %2625 = vmatpush.bf16.msra.mxu0 %v2608
  %2626 = vmatpush.bf16.msra.mxu0 %v2607
  %2627 = vmatpush.bf16.msra.mxu0 %v2606
  %2628 = vmatpush.bf16.msra.mxu0 %v2605
  %2629 = vmatmul.bf16.gmra.mxu0 %v2065
  %v2630 = vpop.f32.mrf.mxu0
  %v2631 = vadd.f32 0.0, %v2630
  %v2632 = vpop.f32.mrf.mxu0
  %2633 = vdwg.mxu0
  %s2634 = scalar_lea.vmem %s3, 6
  %v2635 = vld [vmem:[%s2634] sm:$0x1]
  %v2636 = vpack.c.bf16 %v2631, %v2631
  %v2638 = vsel %vm2158, %v2635, 0
  %v2641 = vsel %vm2067, %v2636, 0
  %2643 = vmatpush.bf16.msra.mxu0 0
  %2644 = vmatpush.bf16.msra.mxu0 0
  %2645 = vmatpush.bf16.msra.mxu0 0
  %2646 = vmatpush.bf16.msra.mxu0 0
  %2647 = vmatpush.bf16.msra.mxu0 0
  %2648 = vmatpush.bf16.msra.mxu0 0
  %2649 = vmatpush.bf16.msra.mxu0 0
  %2650 = vmatpush.bf16.msra.mxu0 %v2641
  %2651 = vmatmul.bf16.gmra.mxu0 %v2638
  %v2652 = vpop.f32.mrf.mxu0
  %v2653 = vadd.f32 0.0, %v2652
  %v2654 = vpop.f32.mrf.mxu0
  %2655 = vdwg.mxu0
  %v2656 = vadd.f32 %v2564, %v2653
  %s2657 = scalar_lea.vmem %s6, 364
  %v2658 = vld [vmem:[%s2657] sm:$0xf]
  %v2659 = vld [vmem:[%s2657 + $0x4] sm:$0xf]
  %v2660 = vld [vmem:[%s2657 + $0x8] sm:$0xf]
  %v2661 = vld [vmem:[%s2657 + $0xc] sm:$0xf]
  %v2662 = vld [vmem:[%s2657 + $0x10] sm:$0xf]
  %v2663 = vld [vmem:[%s2657 + $0x14] sm:$0xf]
  %v2664 = vld [vmem:[%s2657 + $0x18] sm:$0xf]
  %v2665 = vld [vmem:[%s2657 + $0x1c] sm:$0xf]
  %v2666 = vld [vmem:[%s2657 + $0x20] sm:$0xf]
  %v2667 = vld [vmem:[%s2657 + $0x24] sm:$0xf]
  %v2668 = vld [vmem:[%s2657 + $0x28] sm:$0xf]
  %v2669 = vld [vmem:[%s2657 + $0x2c] sm:$0xf]
  %v2670 = vld [vmem:[%s2657 + $0x30] sm:$0x1]
  %v2684 = vunpack.c.l.b16 %v2658
  %v2685 = vunpack.c.l.b16 %v2659
  %v2686 = vunpack.c.l.b16 %v2660
  %v2687 = vunpack.c.l.b16 %v2661
  %v2688 = vunpack.c.l.b16 %v2662
  %v2689 = vunpack.c.l.b16 %v2663
  %v2690 = vunpack.c.l.b16 %v2664
  %v2691 = vunpack.c.l.b16 %v2665
  %v2692 = vunpack.c.l.b16 %v2666
  %v2693 = vunpack.c.l.b16 %v2667
  %v2694 = vunpack.c.l.b16 %v2668
  %v2695 = vunpack.c.l.b16 %v2669
  %v2696 = vunpack.c.l.b16 %v2670
  %v2697 = vpack.c.b16 %v2685, %v2684
  %v2698 = vpack.c.b16 %v2687, %v2686
  %v2699 = vpack.c.b16 %v2689, %v2688
  %v2700 = vpack.c.b16 %v2691, %v2690
  %v2701 = vpack.c.b16 %v2693, %v2692
  %v2702 = vpack.c.b16 %v2695, %v2694
  %v2703 = vpack.c.b16 %v2696, %v2696
  %v2711 = vsel %vm2067, %v2703, 0
  %2713 = vmatpush.bf16.msra.mxu0 0
  %2714 = vmatpush.bf16.msra.mxu0 %v2711
  %2715 = vmatpush.bf16.msra.mxu0 %v2702
  %2716 = vmatpush.bf16.msra.mxu0 %v2701
  %2717 = vmatpush.bf16.msra.mxu0 %v2700
  %2718 = vmatpush.bf16.msra.mxu0 %v2699
  %2719 = vmatpush.bf16.msra.mxu0 %v2698
  %2720 = vmatpush.bf16.msra.mxu0 %v2697
  %2721 = vmatmul.bf16.gmra.mxu0 %v2065
  %v2722 = vpop.f32.mrf.mxu0
  %v2723 = vadd.f32 0.0, %v2722
  %v2724 = vpop.f32.mrf.mxu0
  %2725 = vdwg.mxu0
  %s2726 = scalar_lea.vmem %s3, 7
  %v2727 = vld [vmem:[%s2726] sm:$0x1]
  %v2728 = vpack.c.bf16 %v2723, %v2723
  %v2730 = vsel %vm2158, %v2727, 0
  %v2733 = vsel %vm2067, %v2728, 0
  %2735 = vmatpush.bf16.msra.mxu0 0
  %2736 = vmatpush.bf16.msra.mxu0 0
  %2737 = vmatpush.bf16.msra.mxu0 0
  %2738 = vmatpush.bf16.msra.mxu0 0
  %2739 = vmatpush.bf16.msra.mxu0 0
  %2740 = vmatpush.bf16.msra.mxu0 0
  %2741 = vmatpush.bf16.msra.mxu0 0
  %2742 = vmatpush.bf16.msra.mxu0 %v2733
  %2743 = vmatmul.bf16.gmra.mxu0 %v2730
  %v2744 = vpop.f32.mrf.mxu0
  %v2745 = vadd.f32 0.0, %v2744
  %v2746 = vpop.f32.mrf.mxu0
  %2747 = vdwg.mxu0
  %v2748 = vadd.f32 %v2656, %v2745
  %s2749 = scalar_lea.vmem %s6, 416
  %v2750 = vld [vmem:[%s2749] sm:$0xf]
  %v2751 = vld [vmem:[%s2749 + $0x4] sm:$0xf]
  %v2752 = vld [vmem:[%s2749 + $0x8] sm:$0xf]
  %v2753 = vld [vmem:[%s2749 + $0xc] sm:$0xf]
  %v2754 = vld [vmem:[%s2749 + $0x10] sm:$0xf]
  %v2755 = vld [vmem:[%s2749 + $0x14] sm:$0xf]
  %v2756 = vld [vmem:[%s2749 + $0x18] sm:$0xf]
  %v2757 = vld [vmem:[%s2749 + $0x1c] sm:$0xf]
  %v2758 = vld [vmem:[%s2749 + $0x20] sm:$0xf]
  %v2759 = vld [vmem:[%s2749 + $0x24] sm:$0xf]
  %v2760 = vld [vmem:[%s2749 + $0x28] sm:$0xf]
  %v2761 = vld [vmem:[%s2749 + $0x2c] sm:$0xf]
  %v2762 = vld [vmem:[%s2749 + $0x30] sm:$0x1]
  %v2776 = vunpack.c.l.b16 %v2750
  %v2777 = vunpack.c.l.b16 %v2751
  %v2778 = vunpack.c.l.b16 %v2752
  %v2779 = vunpack.c.l.b16 %v2753
  %v2780 = vunpack.c.l.b16 %v2754
  %v2781 = vunpack.c.l.b16 %v2755
  %v2782 = vunpack.c.l.b16 %v2756
  %v2783 = vunpack.c.l.b16 %v2757
  %v2784 = vunpack.c.l.b16 %v2758
  %v2785 = vunpack.c.l.b16 %v2759
  %v2786 = vunpack.c.l.b16 %v2760
  %v2787 = vunpack.c.l.b16 %v2761
  %v2788 = vunpack.c.l.b16 %v2762
  %v2789 = vpack.c.b16 %v2777, %v2776
  %v2790 = vpack.c.b16 %v2779, %v2778
  %v2791 = vpack.c.b16 %v2781, %v2780
  %v2792 = vpack.c.b16 %v2783, %v2782
  %v2793 = vpack.c.b16 %v2785, %v2784
  %v2794 = vpack.c.b16 %v2787, %v2786
  %v2795 = vpack.c.b16 %v2788, %v2788
  %v2803 = vsel %vm2067, %v2795, 0
  %2805 = vmatpush.bf16.msra.mxu0 0
  %2806 = vmatpush.bf16.msra.mxu0 %v2803
  %2807 = vmatpush.bf16.msra.mxu0 %v2794
  %2808 = vmatpush.bf16.msra.mxu0 %v2793
  %2809 = vmatpush.bf16.msra.mxu0 %v2792
  %2810 = vmatpush.bf16.msra.mxu0 %v2791
  %2811 = vmatpush.bf16.msra.mxu0 %v2790
  %2812 = vmatpush.bf16.msra.mxu0 %v2789
  %2813 = vmatmul.bf16.gmra.mxu0 %v2065
  %v2814 = vpop.f32.mrf.mxu0
  %v2815 = vadd.f32 0.0, %v2814
  %v2816 = vpop.f32.mrf.mxu0
  %2817 = vdwg.mxu0
  %s2818 = scalar_lea.vmem %s3, 8
  %v2819 = vld [vmem:[%s2818] sm:$0x1]
  %v2820 = vpack.c.bf16 %v2815, %v2815
  %v2822 = vsel %vm2158, %v2819, 0
  %v2825 = vsel %vm2067, %v2820, 0
  %2827 = vmatpush.bf16.msra.mxu0 0
  %2828 = vmatpush.bf16.msra.mxu0 0
  %2829 = vmatpush.bf16.msra.mxu0 0
  %2830 = vmatpush.bf16.msra.mxu0 0
  %2831 = vmatpush.bf16.msra.mxu0 0
  %2832 = vmatpush.bf16.msra.mxu0 0
  %2833 = vmatpush.bf16.msra.mxu0 0
  %2834 = vmatpush.bf16.msra.mxu0 %v2825
  %2835 = vmatmul.bf16.gmra.mxu0 %v2822
  %v2836 = vpop.f32.mrf.mxu0
  %v2837 = vadd.f32 0.0, %v2836
  %v2838 = vpop.f32.mrf.mxu0
  %2839 = vdwg.mxu0
  %v2840 = vadd.f32 %v2748, %v2837
  %v2841 = vmul.f32 %v2840, 0.5
  %v2842 = vmul.f32 %v2840, 0.70710677
  %v2843 = vmul.f32 %v2842, %v2842
  %v2844 = vmin.f32 16.0, %v2843
  %v2845 = vmul.f32 %v2844, 2.1237322e-06
  %v2846 = vadd.f32 %v2845, 0.00028619796
  %v2847 = vmul.f32 %v2844, %v2846
  %v2848 = vadd.f32 %v2847, 0.0036580483
  %v2849 = vmul.f32 %v2844, %v2848
  %v2850 = vadd.f32 %v2849, 0.05243302
  %v2851 = vmul.f32 %v2844, %v2850
  %v2852 = vadd.f32 %v2851, 0.18741608
  %v2853 = vmul.f32 %v2844, %v2852
  %v2854 = vadd.f32 %v2853, 1.1283791
  %v2855 = vmul.f32 %v2842, %v2854
  %v2856 = vmul.f32 %v2844, 3.8918573e-05
  %v2857 = vadd.f32 %v2856, 0.001143296
  %v2858 = vmul.f32 %v2844, %v2857
  %v2859 = vadd.f32 %v2858, 0.014752088
  %v2860 = vmul.f32 %v2844, %v2859
  %v2861 = vadd.f32 %v2860, 0.112945676
  %v2862 = vmul.f32 %v2844, %v2861
  %v2863 = vadd.f32 %v2862, 0.4994258
  %v2864 = vmul.f32 %v2844, %v2863
  %v2865 = vadd.f32 %v2864, 1.0
  %v2866 = vrcp.pop %v2865
  %v2867 = vmul.f32 %v2865, %v2866
  %v2868 = vsub.f32 1.0, %v2867
  %v2869 = vmul.f32 %v2866, %v2868
  %v2870 = vadd.f32 %v2866, %v2869
  %vm2871 = vweird.f32 %v2865
  %vm2872 = vweird.f32 %v2866
  %vm2873 = vmor %vm2871, %vm2872
  %v2874 = vsel %vm2873, %v2866, %v2870
  %v2875 = vand.u32 2147483647, %v2865
  %vm2876 = vcmp.eq.f32.partialorder %v2875, 8.507059e+37
  %v2877 = vand.u32 %v2865, 2147483648
  %v2878 = vor.u32 1.1754944e-38, %v2877
  %v2879 = vsel %vm2876, %v2878, %v2874
  %v2880 = vmul.f32 %v2855, %v2879
  %v2881 = vmin.f32 %v2880, 1.0
  %v2882 = vmax.f32 %v2881, -1.0
  %v2883 = vadd.f32 %v2882, 1.0
  %v2884 = vmul.f32 %v2841, %v2883
  %v2885 = vpack.c.bf16 %v2884, %v2884
  %v2886 = vld [vmem:[%s4] sm:$0xf]
  %v2888 = vsel %vm2158, %v2886, 0
  %v2891 = vsel %vm2067, %v2885, 0
  %2893 = vmatpush.bf16.msra.mxu0 0
  %2894 = vmatpush.bf16.msra.mxu0 0
  %2895 = vmatpush.bf16.msra.mxu0 0
  %2896 = vmatpush.bf16.msra.mxu0 0
  %2897 = vmatpush.bf16.msra.mxu0 0
  %2898 = vmatpush.bf16.msra.mxu0 0
  %2899 = vmatpush.bf16.msra.mxu0 0
  %2900 = vmatpush.bf16.msra.mxu0 %v2891
  %2901 = vmatmul.bf16.gmra.mxu0 %v2888
  %v2902 = vpop.f32.mrf.mxu0
  %v2903 = vadd.f32 0.0, %v2902
  %v2904 = vpop.f32.mrf.mxu0
  %2905 = vdwg.mxu0
  %v2906 = vmul.f32 %v2903, 0.5
  %v2907 = vmul.f32 %v2903, 0.70710677
  %v2908 = vmul.f32 %v2907, %v2907
  %v2909 = vmin.f32 16.0, %v2908
  %v2910 = vmul.f32 %v2909, 2.1237322e-06
  %v2911 = vadd.f32 %v2910, 0.00028619796
  %v2912 = vmul.f32 %v2909, %v2911
  %v2913 = vadd.f32 %v2912, 0.0036580483
  %v2914 = vmul.f32 %v2909, %v2913
  %v2915 = vadd.f32 %v2914, 0.05243302
  %v2916 = vmul.f32 %v2909, %v2915
  %v2917 = vadd.f32 %v2916, 0.18741608
  %v2918 = vmul.f32 %v2909, %v2917
  %v2919 = vadd.f32 %v2918, 1.1283791
  %v2920 = vmul.f32 %v2907, %v2919
  %v2921 = vmul.f32 %v2909, 3.8918573e-05
  %v2922 = vadd.f32 %v2921, 0.001143296
  %v2923 = vmul.f32 %v2909, %v2922
  %v2924 = vadd.f32 %v2923, 0.014752088
  %v2925 = vmul.f32 %v2909, %v2924
  %v2926 = vadd.f32 %v2925, 0.112945676
  %v2927 = vmul.f32 %v2909, %v2926
  %v2928 = vadd.f32 %v2927, 0.4994258
  %v2929 = vmul.f32 %v2909, %v2928
  %v2930 = vadd.f32 %v2929, 1.0
  %v2931 = vrcp.pop %v2930
  %v2932 = vmul.f32 %v2930, %v2931
  %v2933 = vsub.f32 1.0, %v2932
  %v2934 = vmul.f32 %v2931, %v2933
  %v2935 = vadd.f32 %v2931, %v2934
  %vm2936 = vweird.f32 %v2930
  %vm2937 = vweird.f32 %v2931
  %vm2938 = vmor %vm2936, %vm2937
  %v2939 = vsel %vm2938, %v2931, %v2935
  %v2940 = vand.u32 2147483647, %v2930
  %vm2941 = vcmp.eq.f32.partialorder %v2940, 8.507059e+37
  %v2942 = vand.u32 %v2930, 2147483648
  %v2943 = vor.u32 1.1754944e-38, %v2942
  %v2944 = vsel %vm2941, %v2943, %v2939
  %v2945 = vmul.f32 %v2920, %v2944
  %v2946 = vmin.f32 %v2945, 1.0
  %v2947 = vmax.f32 %v2946, -1.0
  %v2948 = vadd.f32 %v2947, 1.0
  %v2949 = vmul.f32 %v2906, %v2948
  %v2950 = vld [vmem:[%s5] sm:$0xf]
  %v2952 = vsel %vm1203, %v2950, 0
  %2954 = vmatpush.bf16.msra.mxu0 0
  %2955 = vmatpush.bf16.msra.mxu0 0
  %2956 = vmatpush.bf16.msra.mxu0 0
  %2957 = vmatpush.bf16.msra.mxu0 0
  %2958 = vmatpush.bf16.msra.mxu0 %v1948
  %2959 = vmatpush.bf16.msra.mxu0 %v1947
  %2960 = vmatpush.bf16.msra.mxu0 %v1946
  %2961 = vmatpush.bf16.msra.mxu0 %v1945
  %2962 = vmatmul.bf16.gmra.mxu0 %v2952
  %v2963 = vpop.f32.mrf.mxu0
  %v2964 = vadd.f32 0.0, %v2963
  %v2965 = vpop.f32.mrf.mxu0
  %2966 = vdwg.mxu0
  %v2967 = vadd.f32 %v2949, %v2964
  %v2968 = vmul.f32 %v2967, 0.5
  %v2969 = vmul.f32 %v2967, 0.70710677
  %v2970 = vmul.f32 %v2969, %v2969
  %v2971 = vmin.f32 16.0, %v2970
  %v2972 = vmul.f32 %v2971, 2.1237322e-06
  %v2973 = vadd.f32 %v2972, 0.00028619796
  %v2974 = vmul.f32 %v2971, %v2973
  %v2975 = vadd.f32 %v2974, 0.0036580483
  %v2976 = vmul.f32 %v2971, %v2975
  %v2977 = vadd.f32 %v2976, 0.05243302
  %v2978 = vmul.f32 %v2971, %v2977
  %v2979 = vadd.f32 %v2978, 0.18741608
  %v2980 = vmul.f32 %v2971, %v2979
  %v2981 = vadd.f32 %v2980, 1.1283791
  %v2982 = vmul.f32 %v2969, %v2981
  %v2983 = vmul.f32 %v2971, 3.8918573e-05
  %v2984 = vadd.f32 %v2983, 0.001143296
  %v2985 = vmul.f32 %v2971, %v2984
  %v2986 = vadd.f32 %v2985, 0.014752088
  %v2987 = vmul.f32 %v2971, %v2986
  %v2988 = vadd.f32 %v2987, 0.112945676
  %v2989 = vmul.f32 %v2971, %v2988
  %v2990 = vadd.f32 %v2989, 0.4994258
  %v2991 = vmul.f32 %v2971, %v2990
  %v2992 = vadd.f32 %v2991, 1.0
  %v2993 = vrcp.pop %v2992
  %v2994 = vmul.f32 %v2992, %v2993
  %v2995 = vsub.f32 1.0, %v2994
  %v2996 = vmul.f32 %v2993, %v2995
  %v2997 = vadd.f32 %v2993, %v2996
  %vm2998 = vweird.f32 %v2992
  %vm2999 = vweird.f32 %v2993
  %vm3000 = vmor %vm2998, %vm2999
  %v3001 = vsel %vm3000, %v2993, %v2997
  %v3002 = vand.u32 2147483647, %v2992
  %vm3003 = vcmp.eq.f32.partialorder %v3002, 8.507059e+37
  %v3004 = vand.u32 %v2992, 2147483648
  %v3005 = vor.u32 1.1754944e-38, %v3004
  %v3006 = vsel %vm3003, %v3005, %v3001
  %v3007 = vmul.f32 %v2982, %v3006
  %v3008 = vmin.f32 %v3007, 1.0
  %v3009 = vmax.f32 %v3008, -1.0
  %v3010 = vadd.f32 %v3009, 1.0
  %v3011 = vmul.f32 %v2968, %v3010
  %v3012 = vpack.c.bf16 %v3011, %v3011
  %v3013 = vld [vmem:[%s7] sm:$0x3]
  %vm3014 = vcmask 64512
  %v3016 = vsel %vm3014, %v3013, 0
  %vm3018 = vcmask 1043456
  %v3020 = vsel %vm3018, %v3012, 0
  %3022 = vmatpush.bf16.msra.mxu0 0
  %3023 = vmatpush.bf16.msra.mxu0 0
  %3024 = vmatpush.bf16.msra.mxu0 0
  %3025 = vmatpush.bf16.msra.mxu0 0
  %3026 = vmatpush.bf16.msra.mxu0 0
  %3027 = vmatpush.bf16.msra.mxu0 0
  %3028 = vmatpush.bf16.msra.mxu0 0
  %3029 = vmatpush.bf16.msra.mxu0 %v3020
  %3030 = vmatmul.bf16.gmra.mxu0 %v3016
  %v3031 = vpop.f32.mrf.mxu0
  %v3032 = vadd.f32 0.0, %v3031
  %v3033 = vpop.f32.mrf.mxu0
  %3034 = vdwg.mxu0
  %v3035 = vmul.f32 %v3032, 0.5
  %v3036 = vmul.f32 %v3032, 0.70710677
  %v3037 = vmul.f32 %v3036, %v3036
  %v3038 = vmin.f32 16.0, %v3037
  %v3039 = vmul.f32 %v3038, 2.1237322e-06
  %v3040 = vadd.f32 %v3039, 0.00028619796
  %v3041 = vmul.f32 %v3038, %v3040
  %v3042 = vadd.f32 %v3041, 0.0036580483
  %v3043 = vmul.f32 %v3038, %v3042
  %v3044 = vadd.f32 %v3043, 0.05243302
  %v3045 = vmul.f32 %v3038, %v3044
  %v3046 = vadd.f32 %v3045, 0.18741608
  %v3047 = vmul.f32 %v3038, %v3046
  %v3048 = vadd.f32 %v3047, 1.1283791
  %v3049 = vmul.f32 %v3036, %v3048
  %v3050 = vmul.f32 %v3038, 3.8918573e-05
  %v3051 = vadd.f32 %v3050, 0.001143296
  %v3052 = vmul.f32 %v3038, %v3051
  %v3053 = vadd.f32 %v3052, 0.014752088
  %v3054 = vmul.f32 %v3038, %v3053
  %v3055 = vadd.f32 %v3054, 0.112945676
  %v3056 = vmul.f32 %v3038, %v3055
  %v3057 = vadd.f32 %v3056, 0.4994258
  %v3058 = vmul.f32 %v3038, %v3057
  %v3059 = vadd.f32 %v3058, 1.0
  %v3060 = vrcp.pop %v3059
  %v3061 = vmul.f32 %v3059, %v3060
  %v3062 = vsub.f32 1.0, %v3061
  %v3063 = vmul.f32 %v3060, %v3062
  %v3064 = vadd.f32 %v3060, %v3063
  %vm3065 = vweird.f32 %v3059
  %vm3066 = vweird.f32 %v3060
  %vm3067 = vmor %vm3065, %vm3066
  %v3068 = vsel %vm3067, %v3060, %v3064
  %v3069 = vand.u32 2147483647, %v3059
  %vm3070 = vcmp.eq.f32.partialorder %v3069, 8.507059e+37
  %v3071 = vand.u32 %v3059, 2147483648
  %v3072 = vor.u32 1.1754944e-38, %v3071
  %v3073 = vsel %vm3070, %v3072, %v3068
  %v3074 = vmul.f32 %v3049, %v3073
  %v3075 = vmin.f32 %v3074, 1.0
  %v3076 = vmax.f32 %v3075, -1.0
  %v3077 = vadd.f32 %v3076, 1.0
  %v3078 = vmul.f32 %v3035, %v3077
  %v3079 = vpack.c.bf16 %v3078, %v3078
  %v3080 = vld [vmem:[%s11] sm:$0xf]
  %v3081 = vld [vmem:[%s11 + $0x4] sm:$0xf]
  %v3082 = vld [vmem:[%s11 + $0x8] sm:$0xf]
  %v3083 = vld [vmem:[%s11 + $0xc] sm:$0xf]
  %v3084 = vld [vmem:[%s11 + $0x10] sm:$0xf]
  %v3085 = vld [vmem:[%s11 + $0x14] sm:$0xf]
  %v3086 = vld [vmem:[%s11 + $0x18] sm:$0xf]
  %v3087 = vld [vmem:[%s11 + $0x1c] sm:$0xf]
  %v3088 = vld [vmem:[%s11 + $0x20] sm:$0xf]
  %v3089 = vld [vmem:[%s11 + $0x24] sm:$0xf]
  %v3090 = vld [vmem:[%s11 + $0x28] sm:$0xf]
  %v3091 = vld [vmem:[%s11 + $0x2c] sm:$0xf]
  %v3092 = vld [vmem:[%s11 + $0x30] sm:$0x1]
  %v3106 = vunpack.c.l.b16 %v3080
  %v3107 = vunpack.c.l.b16 %v3081
  %v3108 = vunpack.c.l.b16 %v3082
  %v3109 = vunpack.c.l.b16 %v3083
  %v3110 = vunpack.c.l.b16 %v3084
  %v3111 = vunpack.c.l.b16 %v3085
  %v3112 = vunpack.c.l.b16 %v3086
  %v3113 = vunpack.c.l.b16 %v3087
  %v3114 = vunpack.c.l.b16 %v3088
  %v3115 = vunpack.c.l.b16 %v3089
  %v3116 = vunpack.c.l.b16 %v3090
  %v3117 = vunpack.c.l.b16 %v3091
  %v3118 = vunpack.c.l.b16 %v3092
  %v3119 = vpack.c.b16 %v3107, %v3106
  %v3120 = vpack.c.b16 %v3109, %v3108
  %v3121 = vpack.c.b16 %v3111, %v3110
  %v3122 = vpack.c.b16 %v3113, %v3112
  %v3123 = vpack.c.b16 %v3115, %v3114
  %v3124 = vpack.c.b16 %v3117, %v3116
  %v3125 = vpack.c.b16 %v3118, %v3118
  %v3133 = vsel %vm2063, %v3079, 0
  %v3136 = vsel %vm2067, %v3125, 0
  %3138 = vmatpush.bf16.msra.mxu0 0
  %3139 = vmatpush.bf16.msra.mxu0 %v3136
  %3140 = vmatpush.bf16.msra.mxu0 %v3124
  %3141 = vmatpush.bf16.msra.mxu0 %v3123
  %3142 = vmatpush.bf16.msra.mxu0 %v3122
  %3143 = vmatpush.bf16.msra.mxu0 %v3121
  %3144 = vmatpush.bf16.msra.mxu0 %v3120
  %3145 = vmatpush.bf16.msra.mxu0 %v3119
  %3146 = vmatmul.bf16.gmra.mxu0 %v3133
  %v3147 = vpop.f32.mrf.mxu0
  %v3148 = vadd.f32 0.0, %v3147
  %v3149 = vpop.f32.mrf.mxu0
  %3150 = vdwg.mxu0
  %v3151 = vld [vmem:[%s8] sm:$0x3]
  %v3152 = vpack.c.bf16 %v3148, %v3148
  %s3153 = scalar_lea.vmem %s11, 52
  %v3154 = vld [vmem:[%s3153] sm:$0xf]
  %v3155 = vld [vmem:[%s3153 + $0x4] sm:$0xf]
  %v3156 = vld [vmem:[%s3153 + $0x8] sm:$0xf]
  %v3157 = vld [vmem:[%s3153 + $0xc] sm:$0xf]
  %v3158 = vld [vmem:[%s3153 + $0x10] sm:$0xf]
  %v3159 = vld [vmem:[%s3153 + $0x14] sm:$0xf]
  %v3160 = vld [vmem:[%s3153 + $0x18] sm:$0xf]
  %v3161 = vld [vmem:[%s3153 + $0x1c] sm:$0xf]
  %v3162 = vld [vmem:[%s3153 + $0x20] sm:$0xf]
  %v3163 = vld [vmem:[%s3153 + $0x24] sm:$0xf]
  %v3164 = vld [vmem:[%s3153 + $0x28] sm:$0xf]
  %v3165 = vld [vmem:[%s3153 + $0x2c] sm:$0xf]
  %v3166 = vld [vmem:[%s3153 + $0x30] sm:$0x1]
  %v3180 = vunpack.c.l.b16 %v3154
  %v3181 = vunpack.c.l.b16 %v3155
  %v3182 = vunpack.c.l.b16 %v3156
  %v3183 = vunpack.c.l.b16 %v3157
  %v3184 = vunpack.c.l.b16 %v3158
  %v3185 = vunpack.c.l.b16 %v3159
  %v3186 = vunpack.c.l.b16 %v3160
  %v3187 = vunpack.c.l.b16 %v3161
  %v3188 = vunpack.c.l.b16 %v3162
  %v3189 = vunpack.c.l.b16 %v3163
  %v3190 = vunpack.c.l.b16 %v3164
  %v3191 = vunpack.c.l.b16 %v3165
  %v3192 = vunpack.c.l.b16 %v3166
  %v3193 = vpack.c.b16 %v3181, %v3180
  %v3194 = vpack.c.b16 %v3183, %v3182
  %v3195 = vpack.c.b16 %v3185, %v3184
  %v3196 = vpack.c.b16 %v3187, %v3186
  %v3197 = vpack.c.b16 %v3189, %v3188
  %v3198 = vpack.c.b16 %v3191, %v3190
  %v3199 = vpack.c.b16 %v3192, %v3192
  %v3207 = vsel %vm2067, %v3199, 0
  %3209 = vmatpush.bf16.msra.mxu0 0
  %3210 = vmatpush.bf16.msra.mxu0 %v3207
  %3211 = vmatpush.bf16.msra.mxu0 %v3198
  %3212 = vmatpush.bf16.msra.mxu0 %v3197
  %3213 = vmatpush.bf16.msra.mxu0 %v3196
  %3214 = vmatpush.bf16.msra.mxu0 %v3195
  %3215 = vmatpush.bf16.msra.mxu0 %v3194
  %3216 = vmatpush.bf16.msra.mxu0 %v3193
  %3217 = vmatmul.bf16.gmra.mxu0 %v3133
  %v3218 = vpop.f32.mrf.mxu0
  %v3219 = vadd.f32 0.0, %v3218
  %v3220 = vpop.f32.mrf.mxu0
  %3221 = vdwg.mxu0
  %s3222 = scalar_lea.vmem %s8, 2
  %v3223 = vld [vmem:[%s3222] sm:$0x3]
  %v3224 = vpack.c.bf16 %v3219, %v3219
  %vm3225 = vcmask 23552
  %v3227 = vsel %vm3225, %v3223, 0
  %vm3229 = vcmask 1041408
  %v3230 = vsel %vm2067, 4294967295, 65535
  %v3231 = vsel %vm3229, %v3230, 0
  %v3233 = vand.u32 %v3224, %v3231
  %3235 = vmatpush.bf16.msra.mxu0 0
  %3236 = vmatpush.bf16.msra.mxu0 0
  %3237 = vmatpush.bf16.msra.mxu0 0
  %3238 = vmatpush.bf16.msra.mxu0 0
  %3239 = vmatpush.bf16.msra.mxu0 0
  %3240 = vmatpush.bf16.msra.mxu0 0
  %3241 = vmatpush.bf16.msra.mxu0 0
  %3242 = vmatpush.bf16.msra.mxu0 %v3233
  %3243 = vmatmul.bf16.gmra.mxu0 %v3227
  %v3244 = vpop.f32.mrf.mxu0
  %v3245 = vadd.f32 0.0, %v3244
  %v3246 = vpop.f32.mrf.mxu0
  %3247 = vdwg.mxu0
  %v3249 = vsel %vm3225, %v3151, 0
  %v3252 = vand.u32 %v3152, %v3231
  %3254 = vmatpush.bf16.msra.mxu0 0
  %3255 = vmatpush.bf16.msra.mxu0 0
  %3256 = vmatpush.bf16.msra.mxu0 0
  %3257 = vmatpush.bf16.msra.mxu0 0
  %3258 = vmatpush.bf16.msra.mxu0 0
  %3259 = vmatpush.bf16.msra.mxu0 0
  %3260 = vmatpush.bf16.msra.mxu0 0
  %3261 = vmatpush.bf16.msra.mxu0 %v3252
  %3262 = vmatmul.bf16.gmra.mxu0 %v3249
  %v3263 = vpop.f32.mrf.mxu0
  %v3264 = vadd.f32 %v3245, %v3263
  %v3265 = vpop.f32.mrf.mxu0
  %3266 = vdwg.mxu0
  %s3267 = scalar_lea.vmem %s11, 104
  %v3268 = vld [vmem:[%s3267] sm:$0xf]
  %v3269 = vld [vmem:[%s3267 + $0x4] sm:$0xf]
  %v3270 = vld [vmem:[%s3267 + $0x8] sm:$0xf]
  %v3271 = vld [vmem:[%s3267 + $0xc] sm:$0xf]
  %v3272 = vld [vmem:[%s3267 + $0x10] sm:$0xf]
  %v3273 = vld [vmem:[%s3267 + $0x14] sm:$0xf]
  %v3274 = vld [vmem:[%s3267 + $0x18] sm:$0xf]
  %v3275 = vld [vmem:[%s3267 + $0x1c] sm:$0xf]
  %v3276 = vld [vmem:[%s3267 + $0x20] sm:$0xf]
  %v3277 = vld [vmem:[%s3267 + $0x24] sm:$0xf]
  %v3278 = vld [vmem:[%s3267 + $0x28] sm:$0xf]
  %v3279 = vld [vmem:[%s3267 + $0x2c] sm:$0xf]
  %v3280 = vld [vmem:[%s3267 + $0x30] sm:$0x1]
  %v3294 = vunpack.c.l.b16 %v3268
  %v3295 = vunpack.c.l.b16 %v3269
  %v3296 = vunpack.c.l.b16 %v3270
  %v3297 = vunpack.c.l.b16 %v3271
  %v3298 = vunpack.c.l.b16 %v3272
  %v3299 = vunpack.c.l.b16 %v3273
  %v3300 = vunpack.c.l.b16 %v3274
  %v3301 = vunpack.c.l.b16 %v3275
  %v3302 = vunpack.c.l.b16 %v3276
  %v3303 = vunpack.c.l.b16 %v3277
  %v3304 = vunpack.c.l.b16 %v3278
  %v3305 = vunpack.c.l.b16 %v3279
  %v3306 = vunpack.c.l.b16 %v3280
  %v3307 = vpack.c.b16 %v3295, %v3294
  %v3308 = vpack.c.b16 %v3297, %v3296
  %v3309 = vpack.c.b16 %v3299, %v3298
  %v3310 = vpack.c.b16 %v3301, %v3300
  %v3311 = vpack.c.b16 %v3303, %v3302
  %v3312 = vpack.c.b16 %v3305, %v3304
  %v3313 = vpack.c.b16 %v3306, %v3306
  %v3321 = vsel %vm2067, %v3313, 0
  %3323 = vmatpush.bf16.msra.mxu0 0
  %3324 = vmatpush.bf16.msra.mxu0 %v3321
  %3325 = vmatpush.bf16.msra.mxu0 %v3312
  %3326 = vmatpush.bf16.msra.mxu0 %v3311
  %3327 = vmatpush.bf16.msra.mxu0 %v3310
  %3328 = vmatpush.bf16.msra.mxu0 %v3309
  %3329 = vmatpush.bf16.msra.mxu0 %v3308
  %3330 = vmatpush.bf16.msra.mxu0 %v3307
  %3331 = vmatmul.bf16.gmra.mxu0 %v3133
  %v3332 = vpop.f32.mrf.mxu0
  %v3333 = vadd.f32 0.0, %v3332
  %v3334 = vpop.f32.mrf.mxu0
  %3335 = vdwg.mxu0
  %s3336 = scalar_lea.vmem %s8, 4
  %v3337 = vld [vmem:[%s3336] sm:$0x3]
  %v3338 = vpack.c.bf16 %v3333, %v3333
  %v3340 = vsel %vm3225, %v3337, 0
  %v3343 = vand.u32 %v3338, %v3231
  %3345 = vmatpush.bf16.msra.mxu0 0
  %3346 = vmatpush.bf16.msra.mxu0 0
  %3347 = vmatpush.bf16.msra.mxu0 0
  %3348 = vmatpush.bf16.msra.mxu0 0
  %3349 = vmatpush.bf16.msra.mxu0 0
  %3350 = vmatpush.bf16.msra.mxu0 0
  %3351 = vmatpush.bf16.msra.mxu0 0
  %3352 = vmatpush.bf16.msra.mxu0 %v3343
  %3353 = vmatmul.bf16.gmra.mxu0 %v3340
  %v3354 = vpop.f32.mrf.mxu0
  %v3355 = vadd.f32 0.0, %v3354
  %v3356 = vpop.f32.mrf.mxu0
  %3357 = vdwg.mxu0
  %v3358 = vadd.f32 %v3264, %v3355
  %s3359 = scalar_lea.vmem %s11, 156
  %v3360 = vld [vmem:[%s3359] sm:$0xf]
  %v3361 = vld [vmem:[%s3359 + $0x4] sm:$0xf]
  %v3362 = vld [vmem:[%s3359 + $0x8] sm:$0xf]
  %v3363 = vld [vmem:[%s3359 + $0xc] sm:$0xf]
  %v3364 = vld [vmem:[%s3359 + $0x10] sm:$0xf]
  %v3365 = vld [vmem:[%s3359 + $0x14] sm:$0xf]
  %v3366 = vld [vmem:[%s3359 + $0x18] sm:$0xf]
  %v3367 = vld [vmem:[%s3359 + $0x1c] sm:$0xf]
  %v3368 = vld [vmem:[%s3359 + $0x20] sm:$0xf]
  %v3369 = vld [vmem:[%s3359 + $0x24] sm:$0xf]
  %v3370 = vld [vmem:[%s3359 + $0x28] sm:$0xf]
  %v3371 = vld [vmem:[%s3359 + $0x2c] sm:$0xf]
  %v3372 = vld [vmem:[%s3359 + $0x30] sm:$0x1]
  %v3386 = vunpack.c.l.b16 %v3360
  %v3387 = vunpack.c.l.b16 %v3361
  %v3388 = vunpack.c.l.b16 %v3362
  %v3389 = vunpack.c.l.b16 %v3363
  %v3390 = vunpack.c.l.b16 %v3364
  %v3391 = vunpack.c.l.b16 %v3365
  %v3392 = vunpack.c.l.b16 %v3366
  %v3393 = vunpack.c.l.b16 %v3367
  %v3394 = vunpack.c.l.b16 %v3368
  %v3395 = vunpack.c.l.b16 %v3369
  %v3396 = vunpack.c.l.b16 %v3370
  %v3397 = vunpack.c.l.b16 %v3371
  %v3398 = vunpack.c.l.b16 %v3372
  %v3399 = vpack.c.b16 %v3387, %v3386
  %v3400 = vpack.c.b16 %v3389, %v3388
  %v3401 = vpack.c.b16 %v3391, %v3390
  %v3402 = vpack.c.b16 %v3393, %v3392
  %v3403 = vpack.c.b16 %v3395, %v3394
  %v3404 = vpack.c.b16 %v3397, %v3396
  %v3405 = vpack.c.b16 %v3398, %v3398
  %v3413 = vsel %vm2067, %v3405, 0
  %3415 = vmatpush.bf16.msra.mxu0 0
  %3416 = vmatpush.bf16.msra.mxu0 %v3413
  %3417 = vmatpush.bf16.msra.mxu0 %v3404
  %3418 = vmatpush.bf16.msra.mxu0 %v3403
  %3419 = vmatpush.bf16.msra.mxu0 %v3402
  %3420 = vmatpush.bf16.msra.mxu0 %v3401
  %3421 = vmatpush.bf16.msra.mxu0 %v3400
  %3422 = vmatpush.bf16.msra.mxu0 %v3399
  %3423 = vmatmul.bf16.gmra.mxu0 %v3133
  %v3424 = vpop.f32.mrf.mxu0
  %v3425 = vadd.f32 0.0, %v3424
  %v3426 = vpop.f32.mrf.mxu0
  %3427 = vdwg.mxu0
  %s3428 = scalar_lea.vmem %s8, 6
  %v3429 = vld [vmem:[%s3428] sm:$0x3]
  %v3430 = vpack.c.bf16 %v3425, %v3425
  %v3432 = vsel %vm3225, %v3429, 0
  %v3435 = vand.u32 %v3430, %v3231
  %3437 = vmatpush.bf16.msra.mxu0 0
  %3438 = vmatpush.bf16.msra.mxu0 0
  %3439 = vmatpush.bf16.msra.mxu0 0
  %3440 = vmatpush.bf16.msra.mxu0 0
  %3441 = vmatpush.bf16.msra.mxu0 0
  %3442 = vmatpush.bf16.msra.mxu0 0
  %3443 = vmatpush.bf16.msra.mxu0 0
  %3444 = vmatpush.bf16.msra.mxu0 %v3435
  %3445 = vmatmul.bf16.gmra.mxu0 %v3432
  %v3446 = vpop.f32.mrf.mxu0
  %v3447 = vadd.f32 0.0, %v3446
  %v3448 = vpop.f32.mrf.mxu0
  %3449 = vdwg.mxu0
  %v3450 = vadd.f32 %v3358, %v3447
  %s3451 = scalar_lea.vmem %s11, 208
  %v3452 = vld [vmem:[%s3451] sm:$0xf]
  %v3453 = vld [vmem:[%s3451 + $0x4] sm:$0xf]
  %v3454 = vld [vmem:[%s3451 + $0x8] sm:$0xf]
  %v3455 = vld [vmem:[%s3451 + $0xc] sm:$0xf]
  %v3456 = vld [vmem:[%s3451 + $0x10] sm:$0xf]
  %v3457 = vld [vmem:[%s3451 + $0x14] sm:$0xf]
  %v3458 = vld [vmem:[%s3451 + $0x18] sm:$0xf]
  %v3459 = vld [vmem:[%s3451 + $0x1c] sm:$0xf]
  %v3460 = vld [vmem:[%s3451 + $0x20] sm:$0xf]
  %v3461 = vld [vmem:[%s3451 + $0x24] sm:$0xf]
  %v3462 = vld [vmem:[%s3451 + $0x28] sm:$0xf]
  %v3463 = vld [vmem:[%s3451 + $0x2c] sm:$0xf]
  %v3464 = vld [vmem:[%s3451 + $0x30] sm:$0x1]
  %v3478 = vunpack.c.l.b16 %v3452
  %v3479 = vunpack.c.l.b16 %v3453
  %v3480 = vunpack.c.l.b16 %v3454
  %v3481 = vunpack.c.l.b16 %v3455
  %v3482 = vunpack.c.l.b16 %v3456
  %v3483 = vunpack.c.l.b16 %v3457
  %v3484 = vunpack.c.l.b16 %v3458
  %v3485 = vunpack.c.l.b16 %v3459
  %v3486 = vunpack.c.l.b16 %v3460
  %v3487 = vunpack.c.l.b16 %v3461
  %v3488 = vunpack.c.l.b16 %v3462
  %v3489 = vunpack.c.l.b16 %v3463
  %v3490 = vunpack.c.l.b16 %v3464
  %v3491 = vpack.c.b16 %v3479, %v3478
  %v3492 = vpack.c.b16 %v3481, %v3480
  %v3493 = vpack.c.b16 %v3483, %v3482
  %v3494 = vpack.c.b16 %v3485, %v3484
  %v3495 = vpack.c.b16 %v3487, %v3486
  %v3496 = vpack.c.b16 %v3489, %v3488
  %v3497 = vpack.c.b16 %v3490, %v3490
  %v3505 = vsel %vm2067, %v3497, 0
  %3507 = vmatpush.bf16.msra.mxu0 0
  %3508 = vmatpush.bf16.msra.mxu0 %v3505
  %3509 = vmatpush.bf16.msra.mxu0 %v3496
  %3510 = vmatpush.bf16.msra.mxu0 %v3495
  %3511 = vmatpush.bf16.msra.mxu0 %v3494
  %3512 = vmatpush.bf16.msra.mxu0 %v3493
  %3513 = vmatpush.bf16.msra.mxu0 %v3492
  %3514 = vmatpush.bf16.msra.mxu0 %v3491
  %3515 = vmatmul.bf16.gmra.mxu0 %v3133
  %v3516 = vpop.f32.mrf.mxu0
  %v3517 = vadd.f32 0.0, %v3516
  %v3518 = vpop.f32.mrf.mxu0
  %3519 = vdwg.mxu0
  %s3520 = scalar_lea.vmem %s8, 8
  %v3521 = vld [vmem:[%s3520] sm:$0x3]
  %v3522 = vpack.c.bf16 %v3517, %v3517
  %v3524 = vsel %vm3225, %v3521, 0
  %v3527 = vand.u32 %v3522, %v3231
  %3529 = vmatpush.bf16.msra.mxu0 0
  %3530 = vmatpush.bf16.msra.mxu0 0
  %3531 = vmatpush.bf16.msra.mxu0 0
  %3532 = vmatpush.bf16.msra.mxu0 0
  %3533 = vmatpush.bf16.msra.mxu0 0
  %3534 = vmatpush.bf16.msra.mxu0 0
  %3535 = vmatpush.bf16.msra.mxu0 0
  %3536 = vmatpush.bf16.msra.mxu0 %v3527
  %3537 = vmatmul.bf16.gmra.mxu0 %v3524
  %v3538 = vpop.f32.mrf.mxu0
  %v3539 = vadd.f32 0.0, %v3538
  %v3540 = vpop.f32.mrf.mxu0
  %3541 = vdwg.mxu0
  %v3542 = vadd.f32 %v3450, %v3539
  %s3543 = scalar_lea.vmem %s11, 260
  %v3544 = vld [vmem:[%s3543] sm:$0xf]
  %v3545 = vld [vmem:[%s3543 + $0x4] sm:$0xf]
  %v3546 = vld [vmem:[%s3543 + $0x8] sm:$0xf]
  %v3547 = vld [vmem:[%s3543 + $0xc] sm:$0xf]
  %v3548 = vld [vmem:[%s3543 + $0x10] sm:$0xf]
  %v3549 = vld [vmem:[%s3543 + $0x14] sm:$0xf]
  %v3550 = vld [vmem:[%s3543 + $0x18] sm:$0xf]
  %v3551 = vld [vmem:[%s3543 + $0x1c] sm:$0xf]
  %v3552 = vld [vmem:[%s3543 + $0x20] sm:$0xf]
  %v3553 = vld [vmem:[%s3543 + $0x24] sm:$0xf]
  %v3554 = vld [vmem:[%s3543 + $0x28] sm:$0xf]
  %v3555 = vld [vmem:[%s3543 + $0x2c] sm:$0xf]
  %v3556 = vld [vmem:[%s3543 + $0x30] sm:$0x1]
  %v3570 = vunpack.c.l.b16 %v3544
  %v3571 = vunpack.c.l.b16 %v3545
  %v3572 = vunpack.c.l.b16 %v3546
  %v3573 = vunpack.c.l.b16 %v3547
  %v3574 = vunpack.c.l.b16 %v3548
  %v3575 = vunpack.c.l.b16 %v3549
  %v3576 = vunpack.c.l.b16 %v3550
  %v3577 = vunpack.c.l.b16 %v3551
  %v3578 = vunpack.c.l.b16 %v3552
  %v3579 = vunpack.c.l.b16 %v3553
  %v3580 = vunpack.c.l.b16 %v3554
  %v3581 = vunpack.c.l.b16 %v3555
  %v3582 = vunpack.c.l.b16 %v3556
  %v3583 = vpack.c.b16 %v3571, %v3570
  %v3584 = vpack.c.b16 %v3573, %v3572
  %v3585 = vpack.c.b16 %v3575, %v3574
  %v3586 = vpack.c.b16 %v3577, %v3576
  %v3587 = vpack.c.b16 %v3579, %v3578
  %v3588 = vpack.c.b16 %v3581, %v3580
  %v3589 = vpack.c.b16 %v3582, %v3582
  %v3597 = vsel %vm2067, %v3589, 0
  %3599 = vmatpush.bf16.msra.mxu0 0
  %3600 = vmatpush.bf16.msra.mxu0 %v3597
  %3601 = vmatpush.bf16.msra.mxu0 %v3588
  %3602 = vmatpush.bf16.msra.mxu0 %v3587
  %3603 = vmatpush.bf16.msra.mxu0 %v3586
  %3604 = vmatpush.bf16.msra.mxu0 %v3585
  %3605 = vmatpush.bf16.msra.mxu0 %v3584
  %3606 = vmatpush.bf16.msra.mxu0 %v3583
  %3607 = vmatmul.bf16.gmra.mxu0 %v3133
  %v3608 = vpop.f32.mrf.mxu0
  %v3609 = vadd.f32 0.0, %v3608
  %v3610 = vpop.f32.mrf.mxu0
  %3611 = vdwg.mxu0
  %s3612 = scalar_lea.vmem %s8, 10
  %v3613 = vld [vmem:[%s3612] sm:$0x3]
  %v3614 = vpack.c.bf16 %v3609, %v3609
  %v3616 = vsel %vm3225, %v3613, 0
  %v3619 = vand.u32 %v3614, %v3231
  %3621 = vmatpush.bf16.msra.mxu0 0
  %3622 = vmatpush.bf16.msra.mxu0 0
  %3623 = vmatpush.bf16.msra.mxu0 0
  %3624 = vmatpush.bf16.msra.mxu0 0
  %3625 = vmatpush.bf16.msra.mxu0 0
  %3626 = vmatpush.bf16.msra.mxu0 0
  %3627 = vmatpush.bf16.msra.mxu0 0
  %3628 = vmatpush.bf16.msra.mxu0 %v3619
  %3629 = vmatmul.bf16.gmra.mxu0 %v3616
  %v3630 = vpop.f32.mrf.mxu0
  %v3631 = vadd.f32 0.0, %v3630
  %v3632 = vpop.f32.mrf.mxu0
  %3633 = vdwg.mxu0
  %v3634 = vadd.f32 %v3542, %v3631
  %s3635 = scalar_lea.vmem %s11, 312
  %v3636 = vld [vmem:[%s3635] sm:$0xf]
  %v3637 = vld [vmem:[%s3635 + $0x4] sm:$0xf]
  %v3638 = vld [vmem:[%s3635 + $0x8] sm:$0xf]
  %v3639 = vld [vmem:[%s3635 + $0xc] sm:$0xf]
  %v3640 = vld [vmem:[%s3635 + $0x10] sm:$0xf]
  %v3641 = vld [vmem:[%s3635 + $0x14] sm:$0xf]
  %v3642 = vld [vmem:[%s3635 + $0x18] sm:$0xf]
  %v3643 = vld [vmem:[%s3635 + $0x1c] sm:$0xf]
  %v3644 = vld [vmem:[%s3635 + $0x20] sm:$0xf]
  %v3645 = vld [vmem:[%s3635 + $0x24] sm:$0xf]
  %v3646 = vld [vmem:[%s3635 + $0x28] sm:$0xf]
  %v3647 = vld [vmem:[%s3635 + $0x2c] sm:$0xf]
  %v3648 = vld [vmem:[%s3635 + $0x30] sm:$0x1]
  %v3662 = vunpack.c.l.b16 %v3636
  %v3663 = vunpack.c.l.b16 %v3637
  %v3664 = vunpack.c.l.b16 %v3638
  %v3665 = vunpack.c.l.b16 %v3639
  %v3666 = vunpack.c.l.b16 %v3640
  %v3667 = vunpack.c.l.b16 %v3641
  %v3668 = vunpack.c.l.b16 %v3642
  %v3669 = vunpack.c.l.b16 %v3643
  %v3670 = vunpack.c.l.b16 %v3644
  %v3671 = vunpack.c.l.b16 %v3645
  %v3672 = vunpack.c.l.b16 %v3646
  %v3673 = vunpack.c.l.b16 %v3647
  %v3674 = vunpack.c.l.b16 %v3648
  %v3675 = vpack.c.b16 %v3663, %v3662
  %v3676 = vpack.c.b16 %v3665, %v3664
  %v3677 = vpack.c.b16 %v3667, %v3666
  %v3678 = vpack.c.b16 %v3669, %v3668
  %v3679 = vpack.c.b16 %v3671, %v3670
  %v3680 = vpack.c.b16 %v3673, %v3672
  %v3681 = vpack.c.b16 %v3674, %v3674
  %v3689 = vsel %vm2067, %v3681, 0
  %3691 = vmatpush.bf16.msra.mxu0 0
  %3692 = vmatpush.bf16.msra.mxu0 %v3689
  %3693 = vmatpush.bf16.msra.mxu0 %v3680
  %3694 = vmatpush.bf16.msra.mxu0 %v3679
  %3695 = vmatpush.bf16.msra.mxu0 %v3678
  %3696 = vmatpush.bf16.msra.mxu0 %v3677
  %3697 = vmatpush.bf16.msra.mxu0 %v3676
  %3698 = vmatpush.bf16.msra.mxu0 %v3675
  %3699 = vmatmul.bf16.gmra.mxu0 %v3133
  %v3700 = vpop.f32.mrf.mxu0
  %v3701 = vadd.f32 0.0, %v3700
  %v3702 = vpop.f32.mrf.mxu0
  %3703 = vdwg.mxu0
  %s3704 = scalar_lea.vmem %s8, 12
  %v3705 = vld [vmem:[%s3704] sm:$0x3]
  %v3706 = vpack.c.bf16 %v3701, %v3701
  %v3708 = vsel %vm3225, %v3705, 0
  %v3711 = vand.u32 %v3706, %v3231
  %3713 = vmatpush.bf16.msra.mxu0 0
  %3714 = vmatpush.bf16.msra.mxu0 0
  %3715 = vmatpush.bf16.msra.mxu0 0
  %3716 = vmatpush.bf16.msra.mxu0 0
  %3717 = vmatpush.bf16.msra.mxu0 0
  %3718 = vmatpush.bf16.msra.mxu0 0
  %3719 = vmatpush.bf16.msra.mxu0 0
  %3720 = vmatpush.bf16.msra.mxu0 %v3711
  %3721 = vmatmul.bf16.gmra.mxu0 %v3708
  %v3722 = vpop.f32.mrf.mxu0
  %v3723 = vadd.f32 0.0, %v3722
  %v3724 = vpop.f32.mrf.mxu0
  %3725 = vdwg.mxu0
  %v3726 = vadd.f32 %v3634, %v3723
  %s3727 = scalar_lea.vmem %s11, 364
  %v3728 = vld [vmem:[%s3727] sm:$0xf]
  %v3729 = vld [vmem:[%s3727 + $0x4] sm:$0xf]
  %v3730 = vld [vmem:[%s3727 + $0x8] sm:$0xf]
  %v3731 = vld [vmem:[%s3727 + $0xc] sm:$0xf]
  %v3732 = vld [vmem:[%s3727 + $0x10] sm:$0xf]
  %v3733 = vld [vmem:[%s3727 + $0x14] sm:$0xf]
  %v3734 = vld [vmem:[%s3727 + $0x18] sm:$0xf]
  %v3735 = vld [vmem:[%s3727 + $0x1c] sm:$0xf]
  %v3736 = vld [vmem:[%s3727 + $0x20] sm:$0xf]
  %v3737 = vld [vmem:[%s3727 + $0x24] sm:$0xf]
  %v3738 = vld [vmem:[%s3727 + $0x28] sm:$0xf]
  %v3739 = vld [vmem:[%s3727 + $0x2c] sm:$0xf]
  %v3740 = vld [vmem:[%s3727 + $0x30] sm:$0x1]
  %v3754 = vunpack.c.l.b16 %v3728
  %v3755 = vunpack.c.l.b16 %v3729
  %v3756 = vunpack.c.l.b16 %v3730
  %v3757 = vunpack.c.l.b16 %v3731
  %v3758 = vunpack.c.l.b16 %v3732
  %v3759 = vunpack.c.l.b16 %v3733
  %v3760 = vunpack.c.l.b16 %v3734
  %v3761 = vunpack.c.l.b16 %v3735
  %v3762 = vunpack.c.l.b16 %v3736
  %v3763 = vunpack.c.l.b16 %v3737
  %v3764 = vunpack.c.l.b16 %v3738
  %v3765 = vunpack.c.l.b16 %v3739
  %v3766 = vunpack.c.l.b16 %v3740
  %v3767 = vpack.c.b16 %v3755, %v3754
  %v3768 = vpack.c.b16 %v3757, %v3756
  %v3769 = vpack.c.b16 %v3759, %v3758
  %v3770 = vpack.c.b16 %v3761, %v3760
  %v3771 = vpack.c.b16 %v3763, %v3762
  %v3772 = vpack.c.b16 %v3765, %v3764
  %v3773 = vpack.c.b16 %v3766, %v3766
  %v3781 = vsel %vm2067, %v3773, 0
  %3783 = vmatpush.bf16.msra.mxu0 0
  %3784 = vmatpush.bf16.msra.mxu0 %v3781
  %3785 = vmatpush.bf16.msra.mxu0 %v3772
  %3786 = vmatpush.bf16.msra.mxu0 %v3771
  %3787 = vmatpush.bf16.msra.mxu0 %v3770
  %3788 = vmatpush.bf16.msra.mxu0 %v3769
  %3789 = vmatpush.bf16.msra.mxu0 %v3768
  %3790 = vmatpush.bf16.msra.mxu0 %v3767
  %3791 = vmatmul.bf16.gmra.mxu0 %v3133
  %v3792 = vpop.f32.mrf.mxu0
  %v3793 = vadd.f32 0.0, %v3792
  %v3794 = vpop.f32.mrf.mxu0
  %3795 = vdwg.mxu0
  %s3796 = scalar_lea.vmem %s8, 14
  %v3797 = vld [vmem:[%s3796] sm:$0x3]
  %v3798 = vpack.c.bf16 %v3793, %v3793
  %v3800 = vsel %vm3225, %v3797, 0
  %v3803 = vand.u32 %v3798, %v3231
  %3805 = vmatpush.bf16.msra.mxu0 0
  %3806 = vmatpush.bf16.msra.mxu0 0
  %3807 = vmatpush.bf16.msra.mxu0 0
  %3808 = vmatpush.bf16.msra.mxu0 0
  %3809 = vmatpush.bf16.msra.mxu0 0
  %3810 = vmatpush.bf16.msra.mxu0 0
  %3811 = vmatpush.bf16.msra.mxu0 0
  %3812 = vmatpush.bf16.msra.mxu0 %v3803
  %3813 = vmatmul.bf16.gmra.mxu0 %v3800
  %v3814 = vpop.f32.mrf.mxu0
  %v3815 = vadd.f32 0.0, %v3814
  %v3816 = vpop.f32.mrf.mxu0
  %3817 = vdwg.mxu0
  %v3818 = vadd.f32 %v3726, %v3815
  %s3819 = scalar_lea.vmem %s11, 416
  %v3820 = vld [vmem:[%s3819] sm:$0xf]
  %v3821 = vld [vmem:[%s3819 + $0x4] sm:$0xf]
  %v3822 = vld [vmem:[%s3819 + $0x8] sm:$0xf]
  %v3823 = vld [vmem:[%s3819 + $0xc] sm:$0xf]
  %v3824 = vld [vmem:[%s3819 + $0x10] sm:$0xf]
  %v3825 = vld [vmem:[%s3819 + $0x14] sm:$0xf]
  %v3826 = vld [vmem:[%s3819 + $0x18] sm:$0xf]
  %v3827 = vld [vmem:[%s3819 + $0x1c] sm:$0xf]
  %v3828 = vld [vmem:[%s3819 + $0x20] sm:$0xf]
  %v3829 = vld [vmem:[%s3819 + $0x24] sm:$0xf]
  %v3830 = vld [vmem:[%s3819 + $0x28] sm:$0xf]
  %v3831 = vld [vmem:[%s3819 + $0x2c] sm:$0xf]
  %v3832 = vld [vmem:[%s3819 + $0x30] sm:$0x1]
  %v3846 = vunpack.c.l.b16 %v3820
  %v3847 = vunpack.c.l.b16 %v3821
  %v3848 = vunpack.c.l.b16 %v3822
  %v3849 = vunpack.c.l.b16 %v3823
  %v3850 = vunpack.c.l.b16 %v3824
  %v3851 = vunpack.c.l.b16 %v3825
  %v3852 = vunpack.c.l.b16 %v3826
  %v3853 = vunpack.c.l.b16 %v3827
  %v3854 = vunpack.c.l.b16 %v3828
  %v3855 = vunpack.c.l.b16 %v3829
  %v3856 = vunpack.c.l.b16 %v3830
  %v3857 = vunpack.c.l.b16 %v3831
  %v3858 = vunpack.c.l.b16 %v3832
  %v3859 = vpack.c.b16 %v3847, %v3846
  %v3860 = vpack.c.b16 %v3849, %v3848
  %v3861 = vpack.c.b16 %v3851, %v3850
  %v3862 = vpack.c.b16 %v3853, %v3852
  %v3863 = vpack.c.b16 %v3855, %v3854
  %v3864 = vpack.c.b16 %v3857, %v3856
  %v3865 = vpack.c.b16 %v3858, %v3858
  %v3873 = vsel %vm2067, %v3865, 0
  %3875 = vmatpush.bf16.msra.mxu0 0
  %3876 = vmatpush.bf16.msra.mxu0 %v3873
  %3877 = vmatpush.bf16.msra.mxu0 %v3864
  %3878 = vmatpush.bf16.msra.mxu0 %v3863
  %3879 = vmatpush.bf16.msra.mxu0 %v3862
  %3880 = vmatpush.bf16.msra.mxu0 %v3861
  %3881 = vmatpush.bf16.msra.mxu0 %v3860
  %3882 = vmatpush.bf16.msra.mxu0 %v3859
  %3883 = vmatmul.bf16.gmra.mxu0 %v3133
  %v3884 = vpop.f32.mrf.mxu0
  %v3885 = vadd.f32 0.0, %v3884
  %v3886 = vpop.f32.mrf.mxu0
  %3887 = vdwg.mxu0
  %s3888 = scalar_lea.vmem %s8, 16
  %v3889 = vld [vmem:[%s3888] sm:$0x3]
  %v3890 = vpack.c.bf16 %v3885, %v3885
  %v3892 = vsel %vm3225, %v3889, 0
  %v3895 = vand.u32 %v3890, %v3231
  %3897 = vmatpush.bf16.msra.mxu0 0
  %3898 = vmatpush.bf16.msra.mxu0 0
  %3899 = vmatpush.bf16.msra.mxu0 0
  %3900 = vmatpush.bf16.msra.mxu0 0
  %3901 = vmatpush.bf16.msra.mxu0 0
  %3902 = vmatpush.bf16.msra.mxu0 0
  %3903 = vmatpush.bf16.msra.mxu0 0
  %3904 = vmatpush.bf16.msra.mxu0 %v3895
  %3905 = vmatmul.bf16.gmra.mxu0 %v3892
  %v3906 = vpop.f32.mrf.mxu0
  %v3907 = vadd.f32 0.0, %v3906
  %v3908 = vpop.f32.mrf.mxu0
  %3909 = vdwg.mxu0
  %v3910 = vadd.f32 %v3818, %v3907
  %v3911 = vmul.f32 %v3910, 0.5
  %v3912 = vmul.f32 %v3910, 0.70710677
  %v3913 = vmul.f32 %v3912, %v3912
  %v3914 = vmin.f32 16.0, %v3913
  %v3915 = vmul.f32 %v3914, 2.1237322e-06
  %v3916 = vadd.f32 %v3915, 0.00028619796
  %v3917 = vmul.f32 %v3914, %v3916
  %v3918 = vadd.f32 %v3917, 0.0036580483
  %v3919 = vmul.f32 %v3914, %v3918
  %v3920 = vadd.f32 %v3919, 0.05243302
  %v3921 = vmul.f32 %v3914, %v3920
  %v3922 = vadd.f32 %v3921, 0.18741608
  %v3923 = vmul.f32 %v3914, %v3922
  %v3924 = vadd.f32 %v3923, 1.1283791
  %v3925 = vmul.f32 %v3912, %v3924
  %v3926 = vmul.f32 %v3914, 3.8918573e-05
  %v3927 = vadd.f32 %v3926, 0.001143296
  %v3928 = vmul.f32 %v3914, %v3927
  %v3929 = vadd.f32 %v3928, 0.014752088
  %v3930 = vmul.f32 %v3914, %v3929
  %v3931 = vadd.f32 %v3930, 0.112945676
  %v3932 = vmul.f32 %v3914, %v3931
  %v3933 = vadd.f32 %v3932, 0.4994258
  %v3934 = vmul.f32 %v3914, %v3933
  %v3935 = vadd.f32 %v3934, 1.0
  %v3936 = vrcp.pop %v3935
  %v3937 = vmul.f32 %v3935, %v3936
  %v3938 = vsub.f32 1.0, %v3937
  %v3939 = vmul.f32 %v3936, %v3938
  %v3940 = vadd.f32 %v3936, %v3939
  %vm3941 = vweird.f32 %v3935
  %vm3942 = vweird.f32 %v3936
  %vm3943 = vmor %vm3941, %vm3942
  %v3944 = vsel %vm3943, %v3936, %v3940
  %v3945 = vand.u32 2147483647, %v3935
  %vm3946 = vcmp.eq.f32.partialorder %v3945, 8.507059e+37
  %v3947 = vand.u32 %v3935, 2147483648
  %v3948 = vor.u32 1.1754944e-38, %v3947
  %v3949 = vsel %vm3946, %v3948, %v3944
  %v3950 = vmul.f32 %v3925, %v3949
  %v3951 = vmin.f32 %v3950, 1.0
  %v3952 = vmax.f32 %v3951, -1.0
  %v3953 = vadd.f32 %v3952, 1.0
  %v3954 = vmul.f32 %v3911, %v3953
  %v3955 = vpack.c.bf16 %v3954, %v3954
  %v3956 = vld [vmem:[%s9] sm:$0xf]
  %v3957 = vld [vmem:[%s9 + $0x4] sm:$0x3]
  %v3960 = vunpack.c.l.b16 %v3956
  %v3961 = vunpack.c.l.b16 %v3957
  %v3962 = vpack.c.b16 %v3961, %v3960
  %v3964 = vsel %vm3225, %v3962, 0
  %v3967 = vand.u32 %v3955, %v3231
  %3969 = vmatpush.bf16.msra.mxu0 0
  %3970 = vmatpush.bf16.msra.mxu0 0
  %3971 = vmatpush.bf16.msra.mxu0 0
  %3972 = vmatpush.bf16.msra.mxu0 0
  %3973 = vmatpush.bf16.msra.mxu0 0
  %3974 = vmatpush.bf16.msra.mxu0 0
  %3975 = vmatpush.bf16.msra.mxu0 0
  %3976 = vmatpush.bf16.msra.mxu0 %v3967
  %3977 = vmatmul.bf16.gmra.mxu0 %v3964
  %v3978 = vpop.f32.mrf.mxu0
  %v3979 = vadd.f32 0.0, %v3978
  %v3980 = vpop.f32.mrf.mxu0
  %v3981 = vadd.f32 0.0, %v3980
  %3982 = vdwg.mxu0
  %v3983 = vmul.f32 %v3979, 0.5
  %v3984 = vmul.f32 %v3981, 0.5
  %v3985 = vmul.f32 %v3979, 0.70710677
  %v3986 = vmul.f32 %v3981, 0.70710677
  %v3987 = vmul.f32 %v3985, %v3985
  %v3988 = vmin.f32 16.0, %v3987
  %v3989 = vmul.f32 %v3988, 2.1237322e-06
  %v3990 = vadd.f32 %v3989, 0.00028619796
  %v3991 = vmul.f32 %v3988, %v3990
  %v3992 = vadd.f32 %v3991, 0.0036580483
  %v3993 = vmul.f32 %v3988, %v3992
  %v3994 = vadd.f32 %v3993, 0.05243302
  %v3995 = vmul.f32 %v3988, %v3994
  %v3996 = vadd.f32 %v3995, 0.18741608
  %v3997 = vmul.f32 %v3988, %v3996
  %v3998 = vadd.f32 %v3997, 1.1283791
  %v3999 = vmul.f32 %v3985, %v3998
  %v4000 = vmul.f32 %v3988, 3.8918573e-05
  %v4001 = vadd.f32 %v4000, 0.001143296
  %v4002 = vmul.f32 %v3988, %v4001
  %v4003 = vadd.f32 %v4002, 0.014752088
  %v4004 = vmul.f32 %v3988, %v4003
  %v4005 = vadd.f32 %v4004, 0.112945676
  %v4006 = vmul.f32 %v3988, %v4005
  %v4007 = vadd.f32 %v4006, 0.4994258
  %v4008 = vmul.f32 %v3988, %v4007
  %v4009 = vadd.f32 %v4008, 1.0
  %v4010 = vrcp.pop %v4009
  %v4011 = vmul.f32 %v4009, %v4010
  %v4012 = vsub.f32 1.0, %v4011
  %v4013 = vmul.f32 %v4010, %v4012
  %v4014 = vadd.f32 %v4010, %v4013
  %vm4015 = vweird.f32 %v4009
  %vm4016 = vweird.f32 %v4010
  %vm4017 = vmor %vm4015, %vm4016
  %v4018 = vsel %vm4017, %v4010, %v4014
  %v4019 = vand.u32 2147483647, %v4009
  %vm4020 = vcmp.eq.f32.partialorder %v4019, 8.507059e+37
  %v4021 = vand.u32 %v4009, 2147483648
  %v4022 = vor.u32 1.1754944e-38, %v4021
  %v4023 = vsel %vm4020, %v4022, %v4018
  %v4024 = vmul.f32 %v3999, %v4023
  %v4025 = vmin.f32 %v4024, 1.0
  %v4026 = vmax.f32 %v4025, -1.0
  %v4027 = vmul.f32 %v3986, %v3986
  %v4028 = vmin.f32 16.0, %v4027
  %v4029 = vmul.f32 %v4028, 2.1237322e-06
  %v4030 = vadd.f32 %v4029, 0.00028619796
  %v4031 = vmul.f32 %v4028, %v4030
  %v4032 = vadd.f32 %v4031, 0.0036580483
  %v4033 = vmul.f32 %v4028, %v4032
  %v4034 = vadd.f32 %v4033, 0.05243302
  %v4035 = vmul.f32 %v4028, %v4034
  %v4036 = vadd.f32 %v4035, 0.18741608
  %v4037 = vmul.f32 %v4028, %v4036
  %v4038 = vadd.f32 %v4037, 1.1283791
  %v4039 = vmul.f32 %v3986, %v4038
  %v4040 = vmul.f32 %v4028, 3.8918573e-05
  %v4041 = vadd.f32 %v4040, 0.001143296
  %v4042 = vmul.f32 %v4028, %v4041
  %v4043 = vadd.f32 %v4042, 0.014752088
  %v4044 = vmul.f32 %v4028, %v4043
  %v4045 = vadd.f32 %v4044, 0.112945676
  %v4046 = vmul.f32 %v4028, %v4045
  %v4047 = vadd.f32 %v4046, 0.4994258
  %v4048 = vmul.f32 %v4028, %v4047
  %v4049 = vadd.f32 %v4048, 1.0
  %v4050 = vrcp.pop %v4049
  %v4051 = vmul.f32 %v4049, %v4050
  %v4052 = vsub.f32 1.0, %v4051
  %v4053 = vmul.f32 %v4050, %v4052
  %v4054 = vadd.f32 %v4050, %v4053
  %vm4055 = vweird.f32 %v4049
  %vm4056 = vweird.f32 %v4050
  %vm4057 = vmor %vm4055, %vm4056
  %v4058 = vsel %vm4057, %v4050, %v4054
  %v4059 = vand.u32 2147483647, %v4049
  %vm4060 = vcmp.eq.f32.partialorder %v4059, 8.507059e+37
  %v4061 = vand.u32 %v4049, 2147483648
  %v4062 = vor.u32 1.1754944e-38, %v4061
  %v4063 = vsel %vm4060, %v4062, %v4058
  %v4064 = vmul.f32 %v4039, %v4063
  %v4065 = vmin.f32 %v4064, 1.0
  %v4066 = vmax.f32 %v4065, -1.0
  %v4067 = vadd.f32 %v4026, 1.0
  %v4068 = vadd.f32 %v4066, 1.0
  %v4069 = vmul.f32 %v3983, %v4067
  %v4070 = vmul.f32 %v3984, %v4068
  %v4071 = vsel %vm2063, %v3012, 0
  %4073 = vmatpush.bf16.msra.mxu0 0
  %4074 = vmatpush.bf16.msra.mxu0 %v3505
  %4075 = vmatpush.bf16.msra.mxu0 %v3496
  %4076 = vmatpush.bf16.msra.mxu0 %v3495
  %4077 = vmatpush.bf16.msra.mxu0 %v3494
  %4078 = vmatpush.bf16.msra.mxu0 %v3493
  %4079 = vmatpush.bf16.msra.mxu0 %v3492
  %4080 = vmatpush.bf16.msra.mxu0 %v3491
  %4081 = vmatmul.bf16.gmra.mxu0 %v4071
  %v4082 = vpop.f32.mrf.mxu0
  %v4083 = vadd.f32 0.0, %v4082
  %v4084 = vpop.f32.mrf.mxu0
  %4085 = vdwg.mxu0
  %v4086 = vpack.c.bf16 %v4083, %v4083
  %v4087 = vld [vmem:[%s10] sm:$0xf]
  %v4088 = vld [vmem:[%s10 + $0x4] sm:$0x3]
  %v4091 = vunpack.c.l.b16 %v4087
  %v4092 = vunpack.c.l.b16 %v4088
  %v4093 = vpack.c.b16 %v4092, %v4091
  %v4095 = vsel %vm3014, %v4093, 0
  %v4098 = vsel %vm3018, %v4086, 0
  %4100 = vmatpush.bf16.msra.mxu0 0
  %4101 = vmatpush.bf16.msra.mxu0 0
  %4102 = vmatpush.bf16.msra.mxu0 0
  %4103 = vmatpush.bf16.msra.mxu0 0
  %4104 = vmatpush.bf16.msra.mxu0 0
  %4105 = vmatpush.bf16.msra.mxu0 0
  %4106 = vmatpush.bf16.msra.mxu0 0
  %4107 = vmatpush.bf16.msra.mxu0 %v4098
  %4108 = vmatmul.bf16.gmra.mxu0 %v4095
  %v4109 = vpop.f32.mrf.mxu0
  %v4110 = vadd.f32 0.0, %v4109
  %v4111 = vpop.f32.mrf.mxu0
  %v4112 = vadd.f32 0.0, %v4111
  %4113 = vdwg.mxu0
  %v4114 = vadd.f32 %v4069, %v4110
  %v4115 = vadd.f32 %v4070, %v4112
  %v4116 = vmul.f32 %v4114, 0.5
  %v4117 = vmul.f32 %v4115, 0.5
  %v4118 = vmul.f32 %v4114, 0.70710677
  %v4119 = vmul.f32 %v4115, 0.70710677
  %v4120 = vmul.f32 %v4118, %v4118
  %v4121 = vmin.f32 16.0, %v4120
  %v4122 = vmul.f32 %v4121, 2.1237322e-06
  %v4123 = vadd.f32 %v4122, 0.00028619796
  %v4124 = vmul.f32 %v4121, %v4123
  %v4125 = vadd.f32 %v4124, 0.0036580483
  %v4126 = vmul.f32 %v4121, %v4125
  %v4127 = vadd.f32 %v4126, 0.05243302
  %v4128 = vmul.f32 %v4121, %v4127
  %v4129 = vadd.f32 %v4128, 0.18741608
  %v4130 = vmul.f32 %v4121, %v4129
  %v4131 = vadd.f32 %v4130, 1.1283791
  %v4132 = vmul.f32 %v4118, %v4131
  %v4133 = vmul.f32 %v4121, 3.8918573e-05
  %v4134 = vadd.f32 %v4133, 0.001143296
  %v4135 = vmul.f32 %v4121, %v4134
  %v4136 = vadd.f32 %v4135, 0.014752088
  %v4137 = vmul.f32 %v4121, %v4136
  %v4138 = vadd.f32 %v4137, 0.112945676
  %v4139 = vmul.f32 %v4121, %v4138
  %v4140 = vadd.f32 %v4139, 0.4994258
  %v4141 = vmul.f32 %v4121, %v4140
  %v4142 = vadd.f32 %v4141, 1.0
  %v4143 = vrcp.pop %v4142
  %v4144 = vmul.f32 %v4142, %v4143
  %v4145 = vsub.f32 1.0, %v4144
  %v4146 = vmul.f32 %v4143, %v4145
  %v4147 = vadd.f32 %v4143, %v4146
  %vm4148 = vweird.f32 %v4142
  %vm4149 = vweird.f32 %v4143
  %vm4150 = vmor %vm4148, %vm4149
  %v4151 = vsel %vm4150, %v4143, %v4147
  %v4152 = vand.u32 2147483647, %v4142
  %vm4153 = vcmp.eq.f32.partialorder %v4152, 8.507059e+37
  %v4154 = vand.u32 %v4142, 2147483648
  %v4155 = vor.u32 1.1754944e-38, %v4154
  %v4156 = vsel %vm4153, %v4155, %v4151
  %v4157 = vmul.f32 %v4132, %v4156
  %v4158 = vmin.f32 %v4157, 1.0
  %v4159 = vmax.f32 %v4158, -1.0
  %v4160 = vmul.f32 %v4119, %v4119
  %v4161 = vmin.f32 16.0, %v4160
  %v4162 = vmul.f32 %v4161, 2.1237322e-06
  %v4163 = vadd.f32 %v4162, 0.00028619796
  %v4164 = vmul.f32 %v4161, %v4163
  %v4165 = vadd.f32 %v4164, 0.0036580483
  %v4166 = vmul.f32 %v4161, %v4165
  %v4167 = vadd.f32 %v4166, 0.05243302
  %v4168 = vmul.f32 %v4161, %v4167
  %v4169 = vadd.f32 %v4168, 0.18741608
  %v4170 = vmul.f32 %v4161, %v4169
  %v4171 = vadd.f32 %v4170, 1.1283791
  %v4172 = vmul.f32 %v4119, %v4171
  %v4173 = vmul.f32 %v4161, 3.8918573e-05
  %v4174 = vadd.f32 %v4173, 0.001143296
  %v4175 = vmul.f32 %v4161, %v4174
  %v4176 = vadd.f32 %v4175, 0.014752088
  %v4177 = vmul.f32 %v4161, %v4176
  %v4178 = vadd.f32 %v4177, 0.112945676
  %v4179 = vmul.f32 %v4161, %v4178
  %v4180 = vadd.f32 %v4179, 0.4994258
  %v4181 = vmul.f32 %v4161, %v4180
  %v4182 = vadd.f32 %v4181, 1.0
  %v4183 = vrcp.pop %v4182
  %v4184 = vmul.f32 %v4182, %v4183
  %v4185 = vsub.f32 1.0, %v4184
  %v4186 = vmul.f32 %v4183, %v4185
  %v4187 = vadd.f32 %v4183, %v4186
  %vm4188 = vweird.f32 %v4182
  %vm4189 = vweird.f32 %v4183
  %vm4190 = vmor %vm4188, %vm4189
  %v4191 = vsel %vm4190, %v4183, %v4187
  %v4192 = vand.u32 2147483647, %v4182
  %vm4193 = vcmp.eq.f32.partialorder %v4192, 8.507059e+37
  %v4194 = vand.u32 %v4182, 2147483648
  %v4195 = vor.u32 1.1754944e-38, %v4194
  %v4196 = vsel %vm4193, %v4195, %v4191
  %v4197 = vmul.f32 %v4172, %v4196
  %v4198 = vmin.f32 %v4197, 1.0
  %v4199 = vmax.f32 %v4198, -1.0
  %v4200 = vadd.f32 %v4159, 1.0
  %v4201 = vadd.f32 %v4199, 1.0
  %v4202 = vmul.f32 %v4116, %v4200
  %v4203 = vmul.f32 %v4117, %v4201
  %v4204 = vpack.c.bf16 %v4203, %v4202
  %v4205 = vld [vmem:[%s12] sm:$0x3]
  %vm4206 = vcmask 97280
  %v4208 = vsel %vm4206, %v4205, 0
  %vm4210 = vcmask 1045504
  %v4212 = vsel %vm4210, %v4204, 0
  %4214 = vmatpush.bf16.msra.mxu0 0
  %4215 = vmatpush.bf16.msra.mxu0 0
  %4216 = vmatpush.bf16.msra.mxu0 0
  %4217 = vmatpush.bf16.msra.mxu0 0
  %4218 = vmatpush.bf16.msra.mxu0 0
  %4219 = vmatpush.bf16.msra.mxu0 0
  %4220 = vmatpush.bf16.msra.mxu0 0
  %4221 = vmatpush.bf16.msra.mxu0 %v4212
  %4222 = vmatmul.bf16.gmra.mxu0 %v4208
  %v4223 = vpop.f32.mrf.mxu0
  %v4224 = vadd.f32 0.0, %v4223
  %v4225 = vpop.f32.mrf.mxu0
  %4226 = vdwg.mxu0
  %v4227 = vmul.f32 %v4224, 0.5
  %v4228 = vmul.f32 %v4224, 0.70710677
  %v4229 = vmul.f32 %v4228, %v4228
  %v4230 = vmin.f32 16.0, %v4229
  %v4231 = vmul.f32 %v4230, 2.1237322e-06
  %v4232 = vadd.f32 %v4231, 0.00028619796
  %v4233 = vmul.f32 %v4230, %v4232
  %v4234 = vadd.f32 %v4233, 0.0036580483
  %v4235 = vmul.f32 %v4230, %v4234
  %v4236 = vadd.f32 %v4235, 0.05243302
  %v4237 = vmul.f32 %v4230, %v4236
  %v4238 = vadd.f32 %v4237, 0.18741608
  %v4239 = vmul.f32 %v4230, %v4238
  %v4240 = vadd.f32 %v4239, 1.1283791
  %v4241 = vmul.f32 %v4228, %v4240
  %v4242 = vmul.f32 %v4230, 3.8918573e-05
  %v4243 = vadd.f32 %v4242, 0.001143296
  %v4244 = vmul.f32 %v4230, %v4243
  %v4245 = vadd.f32 %v4244, 0.014752088
  %v4246 = vmul.f32 %v4230, %v4245
  %v4247 = vadd.f32 %v4246, 0.112945676
  %v4248 = vmul.f32 %v4230, %v4247
  %v4249 = vadd.f32 %v4248, 0.4994258
  %v4250 = vmul.f32 %v4230, %v4249
  %v4251 = vadd.f32 %v4250, 1.0
  %v4252 = vrcp.pop %v4251
  %v4253 = vmul.f32 %v4251, %v4252
  %v4254 = vsub.f32 1.0, %v4253
  %v4255 = vmul.f32 %v4252, %v4254
  %v4256 = vadd.f32 %v4252, %v4255
  %vm4257 = vweird.f32 %v4251
  %vm4258 = vweird.f32 %v4252
  %vm4259 = vmor %vm4257, %vm4258
  %v4260 = vsel %vm4259, %v4252, %v4256
  %v4261 = vand.u32 2147483647, %v4251
  %vm4262 = vcmp.eq.f32.partialorder %v4261, 8.507059e+37
  %v4263 = vand.u32 %v4251, 2147483648
  %v4264 = vor.u32 1.1754944e-38, %v4263
  %v4265 = vsel %vm4262, %v4264, %v4260
  %v4266 = vmul.f32 %v4241, %v4265
  %v4267 = vmin.f32 %v4266, 1.0
  %v4268 = vmax.f32 %v4267, -1.0
  %v4269 = vadd.f32 %v4268, 1.0
  %v4270 = vmul.f32 %v4227, %v4269
  %v4271 = vpack.c.bf16 %v4270, %v4270
  %v4272 = vld [vmem:[%s16] sm:$0xf]
  %v4273 = vld [vmem:[%s16 + $0x4] sm:$0xf]
  %v4274 = vld [vmem:[%s16 + $0x8] sm:$0x1]
  %v4278 = vunpack.c.l.b16 %v4272
  %v4279 = vunpack.c.l.b16 %v4273
  %v4280 = vunpack.c.l.b16 %v4274
  %v4281 = vpack.c.b16 %v4279, %v4278
  %v4282 = vpack.c.b16 %v4280, %v4280
  %vm4284 = vcmask 146432
  %v4286 = vsel %vm4284, %v4271, 0
  %v4289 = vsel %vm2067, %v4282, 0
  %4291 = vmatpush.bf16.msra.mxu0 0
  %4292 = vmatpush.bf16.msra.mxu0 0
  %4293 = vmatpush.bf16.msra.mxu0 0
  %4294 = vmatpush.bf16.msra.mxu0 0
  %4295 = vmatpush.bf16.msra.mxu0 0
  %4296 = vmatpush.bf16.msra.mxu0 0
  %4297 = vmatpush.bf16.msra.mxu0 %v4289
  %4298 = vmatpush.bf16.msra.mxu0 %v4281
  %4299 = vmatmul.bf16.gmra.mxu0 %v4286
  %v4300 = vpop.f32.mrf.mxu0
  %v4301 = vadd.f32 0.0, %v4300
  %v4302 = vpop.f32.mrf.mxu0
  %4303 = vdwg.mxu0
  %v4304 = vld [vmem:[%s13] sm:$0x3]
  %v4305 = vpack.c.bf16 %v4301, %v4301
  %s4306 = scalar_lea.vmem %s16, 12
  %v4307 = vld [vmem:[%s4306] sm:$0xf]
  %v4308 = vld [vmem:[%s4306 + $0x4] sm:$0xf]
  %v4309 = vld [vmem:[%s4306 + $0x8] sm:$0x1]
  %v4313 = vunpack.c.l.b16 %v4307
  %v4314 = vunpack.c.l.b16 %v4308
  %v4315 = vunpack.c.l.b16 %v4309
  %v4316 = vpack.c.b16 %v4314, %v4313
  %v4317 = vpack.c.b16 %v4315, %v4315
  %v4320 = vsel %vm2067, %v4317, 0
  %4322 = vmatpush.bf16.msra.mxu0 0
  %4323 = vmatpush.bf16.msra.mxu0 0
  %4324 = vmatpush.bf16.msra.mxu0 0
  %4325 = vmatpush.bf16.msra.mxu0 0
  %4326 = vmatpush.bf16.msra.mxu0 0
  %4327 = vmatpush.bf16.msra.mxu0 0
  %4328 = vmatpush.bf16.msra.mxu0 %v4320
  %4329 = vmatpush.bf16.msra.mxu0 %v4316
  %4330 = vmatmul.bf16.gmra.mxu0 %v4286
  %v4331 = vpop.f32.mrf.mxu0
  %v4332 = vadd.f32 0.0, %v4331
  %v4333 = vpop.f32.mrf.mxu0
  %4334 = vdwg.mxu0
  %s4335 = scalar_lea.vmem %s13, 2
  %v4336 = vld [vmem:[%s4335] sm:$0x3]
  %v4337 = vpack.c.bf16 %v4332, %v4332
  %vm4338 = vcmask 31744
  %v4340 = vsel %vm4338, %v4336, 0
  %v4343 = vsel %vm3229, %v4337, 0
  %4345 = vmatpush.bf16.msra.mxu0 0
  %4346 = vmatpush.bf16.msra.mxu0 0
  %4347 = vmatpush.bf16.msra.mxu0 0
  %4348 = vmatpush.bf16.msra.mxu0 0
  %4349 = vmatpush.bf16.msra.mxu0 0
  %4350 = vmatpush.bf16.msra.mxu0 0
  %4351 = vmatpush.bf16.msra.mxu0 0
  %4352 = vmatpush.bf16.msra.mxu0 %v4343
  %4353 = vmatmul.bf16.gmra.mxu0 %v4340
  %v4354 = vpop.f32.mrf.mxu0
  %v4355 = vadd.f32 0.0, %v4354
  %v4356 = vpop.f32.mrf.mxu0
  %4357 = vdwg.mxu0
  %v4359 = vsel %vm4338, %v4304, 0
  %v4362 = vsel %vm3229, %v4305, 0
  %4364 = vmatpush.bf16.msra.mxu0 0
  %4365 = vmatpush.bf16.msra.mxu0 0
  %4366 = vmatpush.bf16.msra.mxu0 0
  %4367 = vmatpush.bf16.msra.mxu0 0
  %4368 = vmatpush.bf16.msra.mxu0 0
  %4369 = vmatpush.bf16.msra.mxu0 0
  %4370 = vmatpush.bf16.msra.mxu0 0
  %4371 = vmatpush.bf16.msra.mxu0 %v4362
  %4372 = vmatmul.bf16.gmra.mxu0 %v4359
  %v4373 = vpop.f32.mrf.mxu0
  %v4374 = vadd.f32 %v4355, %v4373
  %v4375 = vpop.f32.mrf.mxu0
  %4376 = vdwg.mxu0
  %s4377 = scalar_lea.vmem %s16, 24
  %v4378 = vld [vmem:[%s4377] sm:$0xf]
  %v4379 = vld [vmem:[%s4377 + $0x4] sm:$0xf]
  %v4380 = vld [vmem:[%s4377 + $0x8] sm:$0x1]
  %v4384 = vunpack.c.l.b16 %v4378
  %v4385 = vunpack.c.l.b16 %v4379
  %v4386 = vunpack.c.l.b16 %v4380
  %v4387 = vpack.c.b16 %v4385, %v4384
  %v4388 = vpack.c.b16 %v4386, %v4386
  %v4391 = vsel %vm2067, %v4388, 0
  %4393 = vmatpush.bf16.msra.mxu0 0
  %4394 = vmatpush.bf16.msra.mxu0 0
  %4395 = vmatpush.bf16.msra.mxu0 0
  %4396 = vmatpush.bf16.msra.mxu0 0
  %4397 = vmatpush.bf16.msra.mxu0 0
  %4398 = vmatpush.bf16.msra.mxu0 0
  %4399 = vmatpush.bf16.msra.mxu0 %v4391
  %4400 = vmatpush.bf16.msra.mxu0 %v4387
  %4401 = vmatmul.bf16.gmra.mxu0 %v4286
  %v4402 = vpop.f32.mrf.mxu0
  %v4403 = vadd.f32 0.0, %v4402
  %v4404 = vpop.f32.mrf.mxu0
  %4405 = vdwg.mxu0
  %s4406 = scalar_lea.vmem %s13, 4
  %v4407 = vld [vmem:[%s4406] sm:$0x3]
  %v4408 = vpack.c.bf16 %v4403, %v4403
  %v4410 = vsel %vm4338, %v4407, 0
  %v4413 = vsel %vm3229, %v4408, 0
  %4415 = vmatpush.bf16.msra.mxu0 0
  %4416 = vmatpush.bf16.msra.mxu0 0
  %4417 = vmatpush.bf16.msra.mxu0 0
  %4418 = vmatpush.bf16.msra.mxu0 0
  %4419 = vmatpush.bf16.msra.mxu0 0
  %4420 = vmatpush.bf16.msra.mxu0 0
  %4421 = vmatpush.bf16.msra.mxu0 0
  %4422 = vmatpush.bf16.msra.mxu0 %v4413
  %4423 = vmatmul.bf16.gmra.mxu0 %v4410
  %v4424 = vpop.f32.mrf.mxu0
  %v4425 = vadd.f32 0.0, %v4424
  %v4426 = vpop.f32.mrf.mxu0
  %4427 = vdwg.mxu0
  %v4428 = vadd.f32 %v4374, %v4425
  %s4429 = scalar_lea.vmem %s16, 36
  %v4430 = vld [vmem:[%s4429] sm:$0xf]
  %v4431 = vld [vmem:[%s4429 + $0x4] sm:$0xf]
  %v4432 = vld [vmem:[%s4429 + $0x8] sm:$0x1]
  %v4436 = vunpack.c.l.b16 %v4430
  %v4437 = vunpack.c.l.b16 %v4431
  %v4438 = vunpack.c.l.b16 %v4432
  %v4439 = vpack.c.b16 %v4437, %v4436
  %v4440 = vpack.c.b16 %v4438, %v4438
  %v4443 = vsel %vm2067, %v4440, 0
  %4445 = vmatpush.bf16.msra.mxu0 0
  %4446 = vmatpush.bf16.msra.mxu0 0
  %4447 = vmatpush.bf16.msra.mxu0 0
  %4448 = vmatpush.bf16.msra.mxu0 0
  %4449 = vmatpush.bf16.msra.mxu0 0
  %4450 = vmatpush.bf16.msra.mxu0 0
  %4451 = vmatpush.bf16.msra.mxu0 %v4443
  %4452 = vmatpush.bf16.msra.mxu0 %v4439
  %4453 = vmatmul.bf16.gmra.mxu0 %v4286
  %v4454 = vpop.f32.mrf.mxu0
  %v4455 = vadd.f32 0.0, %v4454
  %v4456 = vpop.f32.mrf.mxu0
  %4457 = vdwg.mxu0
  %s4458 = scalar_lea.vmem %s13, 6
  %v4459 = vld [vmem:[%s4458] sm:$0x3]
  %v4460 = vpack.c.bf16 %v4455, %v4455
  %v4462 = vsel %vm4338, %v4459, 0
  %v4465 = vsel %vm3229, %v4460, 0
  %4467 = vmatpush.bf16.msra.mxu0 0
  %4468 = vmatpush.bf16.msra.mxu0 0
  %4469 = vmatpush.bf16.msra.mxu0 0
  %4470 = vmatpush.bf16.msra.mxu0 0
  %4471 = vmatpush.bf16.msra.mxu0 0
  %4472 = vmatpush.bf16.msra.mxu0 0
  %4473 = vmatpush.bf16.msra.mxu0 0
  %4474 = vmatpush.bf16.msra.mxu0 %v4465
  %4475 = vmatmul.bf16.gmra.mxu0 %v4462
  %v4476 = vpop.f32.mrf.mxu0
  %v4477 = vadd.f32 0.0, %v4476
  %v4478 = vpop.f32.mrf.mxu0
  %4479 = vdwg.mxu0
  %v4480 = vadd.f32 %v4428, %v4477
  %v4481 = vmul.f32 %v4480, 0.5
  %v4482 = vmul.f32 %v4480, 0.70710677
  %v4483 = vmul.f32 %v4482, %v4482
  %v4484 = vmin.f32 16.0, %v4483
  %v4485 = vmul.f32 %v4484, 2.1237322e-06
  %v4486 = vadd.f32 %v4485, 0.00028619796
  %v4487 = vmul.f32 %v4484, %v4486
  %v4488 = vadd.f32 %v4487, 0.0036580483
  %v4489 = vmul.f32 %v4484, %v4488
  %v4490 = vadd.f32 %v4489, 0.05243302
  %v4491 = vmul.f32 %v4484, %v4490
  %v4492 = vadd.f32 %v4491, 0.18741608
  %v4493 = vmul.f32 %v4484, %v4492
  %v4494 = vadd.f32 %v4493, 1.1283791
  %v4495 = vmul.f32 %v4482, %v4494
  %v4496 = vmul.f32 %v4484, 3.8918573e-05
  %v4497 = vadd.f32 %v4496, 0.001143296
  %v4498 = vmul.f32 %v4484, %v4497
  %v4499 = vadd.f32 %v4498, 0.014752088
  %v4500 = vmul.f32 %v4484, %v4499
  %v4501 = vadd.f32 %v4500, 0.112945676
  %v4502 = vmul.f32 %v4484, %v4501
  %v4503 = vadd.f32 %v4502, 0.4994258
  %v4504 = vmul.f32 %v4484, %v4503
  %v4505 = vadd.f32 %v4504, 1.0
  %v4506 = vrcp.pop %v4505
  %v4507 = vmul.f32 %v4505, %v4506
  %v4508 = vsub.f32 1.0, %v4507
  %v4509 = vmul.f32 %v4506, %v4508
  %v4510 = vadd.f32 %v4506, %v4509
  %vm4511 = vweird.f32 %v4505
  %vm4512 = vweird.f32 %v4506
  %vm4513 = vmor %vm4511, %vm4512
  %v4514 = vsel %vm4513, %v4506, %v4510
  %v4515 = vand.u32 2147483647, %v4505
  %vm4516 = vcmp.eq.f32.partialorder %v4515, 8.507059e+37
  %v4517 = vand.u32 %v4505, 2147483648
  %v4518 = vor.u32 1.1754944e-38, %v4517
  %v4519 = vsel %vm4516, %v4518, %v4514
  %v4520 = vmul.f32 %v4495, %v4519
  %v4521 = vmin.f32 %v4520, 1.0
  %v4522 = vmax.f32 %v4521, -1.0
  %v4523 = vadd.f32 %v4522, 1.0
  %v4524 = vmul.f32 %v4481, %v4523
  %v4525 = vpack.c.bf16 %v4524, %v4524
  %v4526 = vld [vmem:[%s14] sm:$0xf]
  %v4527 = vld [vmem:[%s14 + $0x4] sm:$0xf]
  %v4530 = vunpack.c.l.b16 %v4526
  %v4531 = vunpack.c.l.b16 %v4527
  %v4532 = vpack.c.b16 %v4531, %v4530
  %v4534 = vsel %vm4338, %v4532, 0
  %v4537 = vsel %vm3229, %v4525, 0
  %4539 = vmatpush.bf16.msra.mxu0 0
  %4540 = vmatpush.bf16.msra.mxu0 0
  %4541 = vmatpush.bf16.msra.mxu0 0
  %4542 = vmatpush.bf16.msra.mxu0 0
  %4543 = vmatpush.bf16.msra.mxu0 0
  %4544 = vmatpush.bf16.msra.mxu0 0
  %4545 = vmatpush.bf16.msra.mxu0 0
  %4546 = vmatpush.bf16.msra.mxu0 %v4537
  %4547 = vmatmul.bf16.gmra.mxu0 %v4534
  %v4548 = vpop.f32.mrf.mxu0
  %v4549 = vadd.f32 0.0, %v4548
  %v4550 = vpop.f32.mrf.mxu0
  %v4551 = vadd.f32 0.0, %v4550
  %4552 = vdwg.mxu0
  %v4553 = vmul.f32 %v4549, 0.5
  %v4554 = vmul.f32 %v4551, 0.5
  %v4555 = vmul.f32 %v4549, 0.70710677
  %v4556 = vmul.f32 %v4551, 0.70710677
  %v4557 = vmul.f32 %v4555, %v4555
  %v4558 = vmin.f32 16.0, %v4557
  %v4559 = vmul.f32 %v4558, 2.1237322e-06
  %v4560 = vadd.f32 %v4559, 0.00028619796
  %v4561 = vmul.f32 %v4558, %v4560
  %v4562 = vadd.f32 %v4561, 0.0036580483
  %v4563 = vmul.f32 %v4558, %v4562
  %v4564 = vadd.f32 %v4563, 0.05243302
  %v4565 = vmul.f32 %v4558, %v4564
  %v4566 = vadd.f32 %v4565, 0.18741608
  %v4567 = vmul.f32 %v4558, %v4566
  %v4568 = vadd.f32 %v4567, 1.1283791
  %v4569 = vmul.f32 %v4555, %v4568
  %v4570 = vmul.f32 %v4558, 3.8918573e-05
  %v4571 = vadd.f32 %v4570, 0.001143296
  %v4572 = vmul.f32 %v4558, %v4571
  %v4573 = vadd.f32 %v4572, 0.014752088
  %v4574 = vmul.f32 %v4558, %v4573
  %v4575 = vadd.f32 %v4574, 0.112945676
  %v4576 = vmul.f32 %v4558, %v4575
  %v4577 = vadd.f32 %v4576, 0.4994258
  %v4578 = vmul.f32 %v4558, %v4577
  %v4579 = vadd.f32 %v4578, 1.0
  %v4580 = vrcp.pop %v4579
  %v4581 = vmul.f32 %v4579, %v4580
  %v4582 = vsub.f32 1.0, %v4581
  %v4583 = vmul.f32 %v4580, %v4582
  %v4584 = vadd.f32 %v4580, %v4583
  %vm4585 = vweird.f32 %v4579
  %vm4586 = vweird.f32 %v4580
  %vm4587 = vmor %vm4585, %vm4586
  %v4588 = vsel %vm4587, %v4580, %v4584
  %v4589 = vand.u32 2147483647, %v4579
  %vm4590 = vcmp.eq.f32.partialorder %v4589, 8.507059e+37
  %v4591 = vand.u32 %v4579, 2147483648
  %v4592 = vor.u32 1.1754944e-38, %v4591
  %v4593 = vsel %vm4590, %v4592, %v4588
  %v4594 = vmul.f32 %v4569, %v4593
  %v4595 = vmin.f32 %v4594, 1.0
  %v4596 = vmax.f32 %v4595, -1.0
  %v4597 = vmul.f32 %v4556, %v4556
  %v4598 = vmin.f32 16.0, %v4597
  %v4599 = vmul.f32 %v4598, 2.1237322e-06
  %v4600 = vadd.f32 %v4599, 0.00028619796
  %v4601 = vmul.f32 %v4598, %v4600
  %v4602 = vadd.f32 %v4601, 0.0036580483
  %v4603 = vmul.f32 %v4598, %v4602
  %v4604 = vadd.f32 %v4603, 0.05243302
  %v4605 = vmul.f32 %v4598, %v4604
  %v4606 = vadd.f32 %v4605, 0.18741608
  %v4607 = vmul.f32 %v4598, %v4606
  %v4608 = vadd.f32 %v4607, 1.1283791
  %v4609 = vmul.f32 %v4556, %v4608
  %v4610 = vmul.f32 %v4598, 3.8918573e-05
  %v4611 = vadd.f32 %v4610, 0.001143296
  %v4612 = vmul.f32 %v4598, %v4611
  %v4613 = vadd.f32 %v4612, 0.014752088
  %v4614 = vmul.f32 %v4598, %v4613
  %v4615 = vadd.f32 %v4614, 0.112945676
  %v4616 = vmul.f32 %v4598, %v4615
  %v4617 = vadd.f32 %v4616, 0.4994258
  %v4618 = vmul.f32 %v4598, %v4617
  %v4619 = vadd.f32 %v4618, 1.0
  %v4620 = vrcp.pop %v4619
  %v4621 = vmul.f32 %v4619, %v4620
  %v4622 = vsub.f32 1.0, %v4621
  %v4623 = vmul.f32 %v4620, %v4622
  %v4624 = vadd.f32 %v4620, %v4623
  %vm4625 = vweird.f32 %v4619
  %vm4626 = vweird.f32 %v4620
  %vm4627 = vmor %vm4625, %vm4626
  %v4628 = vsel %vm4627, %v4620, %v4624
  %v4629 = vand.u32 2147483647, %v4619
  %vm4630 = vcmp.eq.f32.partialorder %v4629, 8.507059e+37
  %v4631 = vand.u32 %v4619, 2147483648
  %v4632 = vor.u32 1.1754944e-38, %v4631
  %v4633 = vsel %vm4630, %v4632, %v4628
  %v4634 = vmul.f32 %v4609, %v4633
  %v4635 = vmin.f32 %v4634, 1.0
  %v4636 = vmax.f32 %v4635, -1.0
  %v4637 = vadd.f32 %v4596, 1.0
  %v4638 = vadd.f32 %v4636, 1.0
  %v4639 = vmul.f32 %v4553, %v4637
  %v4640 = vmul.f32 %v4554, %v4638
  %v4641 = vsel %vm4284, %v4204, 0
  %4643 = vmatpush.bf16.msra.mxu0 0
  %4644 = vmatpush.bf16.msra.mxu0 0
  %4645 = vmatpush.bf16.msra.mxu0 0
  %4646 = vmatpush.bf16.msra.mxu0 0
  %4647 = vmatpush.bf16.msra.mxu0 0
  %4648 = vmatpush.bf16.msra.mxu0 0
  %4649 = vmatpush.bf16.msra.mxu0 %v4289
  %4650 = vmatpush.bf16.msra.mxu0 %v4281
  %4651 = vmatmul.bf16.gmra.mxu0 %v4641
  %v4652 = vpop.f32.mrf.mxu0
  %v4653 = vadd.f32 0.0, %v4652
  %v4654 = vpop.f32.mrf.mxu0
  %v4655 = vadd.f32 0.0, %v4654
  %4656 = vdwg.mxu0
  %v4657 = vpack.c.bf16 %v4655, %v4653
  %v4658 = vld [vmem:[%s15] sm:$0xf]
  %v4659 = vld [vmem:[%s15 + $0x4] sm:$0xf]
  %v4662 = vunpack.c.l.b16 %v4658
  %v4663 = vunpack.c.l.b16 %v4659
  %v4664 = vpack.c.b16 %v4663, %v4662
  %v4666 = vsel %vm4206, %v4664, 0
  %v4669 = vsel %vm4210, %v4657, 0
  %4671 = vmatpush.bf16.msra.mxu0 0
  %4672 = vmatpush.bf16.msra.mxu0 0
  %4673 = vmatpush.bf16.msra.mxu0 0
  %4674 = vmatpush.bf16.msra.mxu0 0
  %4675 = vmatpush.bf16.msra.mxu0 0
  %4676 = vmatpush.bf16.msra.mxu0 0
  %4677 = vmatpush.bf16.msra.mxu0 0
  %4678 = vmatpush.bf16.msra.mxu0 %v4669
  %4679 = vmatmul.bf16.gmra.mxu0 %v4666
  %v4680 = vpop.f32.mrf.mxu0
  %v4681 = vadd.f32 0.0, %v4680
  %v4682 = vpop.f32.mrf.mxu0
  %v4683 = vadd.f32 0.0, %v4682
  %4684 = vdwg.mxu0
  %v4685 = vadd.f32 %v4639, %v4681
  %v4686 = vadd.f32 %v4640, %v4683
  %v4687 = vmul.f32 %v4685, 0.5
  %v4688 = vmul.f32 %v4686, 0.5
  %v4689 = vmul.f32 %v4685, 0.70710677
  %v4690 = vmul.f32 %v4686, 0.70710677
  %v4691 = vmul.f32 %v4689, %v4689
  %v4692 = vmin.f32 16.0, %v4691
  %v4693 = vmul.f32 %v4692, 2.1237322e-06
  %v4694 = vadd.f32 %v4693, 0.00028619796
  %v4695 = vmul.f32 %v4692, %v4694
  %v4696 = vadd.f32 %v4695, 0.0036580483
  %v4697 = vmul.f32 %v4692, %v4696
  %v4698 = vadd.f32 %v4697, 0.05243302
  %v4699 = vmul.f32 %v4692, %v4698
  %v4700 = vadd.f32 %v4699, 0.18741608
  %v4701 = vmul.f32 %v4692, %v4700
  %v4702 = vadd.f32 %v4701, 1.1283791
  %v4703 = vmul.f32 %v4689, %v4702
  %v4704 = vmul.f32 %v4692, 3.8918573e-05
  %v4705 = vadd.f32 %v4704, 0.001143296
  %v4706 = vmul.f32 %v4692, %v4705
  %v4707 = vadd.f32 %v4706, 0.014752088
  %v4708 = vmul.f32 %v4692, %v4707
  %v4709 = vadd.f32 %v4708, 0.112945676
  %v4710 = vmul.f32 %v4692, %v4709
  %v4711 = vadd.f32 %v4710, 0.4994258
  %v4712 = vmul.f32 %v4692, %v4711
  %v4713 = vadd.f32 %v4712, 1.0
  %v4714 = vrcp.pop %v4713
  %v4715 = vmul.f32 %v4713, %v4714
  %v4716 = vsub.f32 1.0, %v4715
  %v4717 = vmul.f32 %v4714, %v4716
  %v4718 = vadd.f32 %v4714, %v4717
  %vm4719 = vweird.f32 %v4713
  %vm4720 = vweird.f32 %v4714
  %vm4721 = vmor %vm4719, %vm4720
  %v4722 = vsel %vm4721, %v4714, %v4718
  %v4723 = vand.u32 2147483647, %v4713
  %vm4724 = vcmp.eq.f32.partialorder %v4723, 8.507059e+37
  %v4725 = vand.u32 %v4713, 2147483648
  %v4726 = vor.u32 1.1754944e-38, %v4725
  %v4727 = vsel %vm4724, %v4726, %v4722
  %v4728 = vmul.f32 %v4703, %v4727
  %v4729 = vmin.f32 %v4728, 1.0
  %v4730 = vmax.f32 %v4729, -1.0
  %v4731 = vmul.f32 %v4690, %v4690
  %v4732 = vmin.f32 16.0, %v4731
  %v4733 = vmul.f32 %v4732, 2.1237322e-06
  %v4734 = vadd.f32 %v4733, 0.00028619796
  %v4735 = vmul.f32 %v4732, %v4734
  %v4736 = vadd.f32 %v4735, 0.0036580483
  %v4737 = vmul.f32 %v4732, %v4736
  %v4738 = vadd.f32 %v4737, 0.05243302
  %v4739 = vmul.f32 %v4732, %v4738
  %v4740 = vadd.f32 %v4739, 0.18741608
  %v4741 = vmul.f32 %v4732, %v4740
  %v4742 = vadd.f32 %v4741, 1.1283791
  %v4743 = vmul.f32 %v4690, %v4742
  %v4744 = vmul.f32 %v4732, 3.8918573e-05
  %v4745 = vadd.f32 %v4744, 0.001143296
  %v4746 = vmul.f32 %v4732, %v4745
  %v4747 = vadd.f32 %v4746, 0.014752088
  %v4748 = vmul.f32 %v4732, %v4747
  %v4749 = vadd.f32 %v4748, 0.112945676
  %v4750 = vmul.f32 %v4732, %v4749
  %v4751 = vadd.f32 %v4750, 0.4994258
  %v4752 = vmul.f32 %v4732, %v4751
  %v4753 = vadd.f32 %v4752, 1.0
  %v4754 = vrcp.pop %v4753
  %v4755 = vmul.f32 %v4753, %v4754
  %v4756 = vsub.f32 1.0, %v4755
  %v4757 = vmul.f32 %v4754, %v4756
  %v4758 = vadd.f32 %v4754, %v4757
  %vm4759 = vweird.f32 %v4753
  %vm4760 = vweird.f32 %v4754
  %vm4761 = vmor %vm4759, %vm4760
  %v4762 = vsel %vm4761, %v4754, %v4758
  %v4763 = vand.u32 2147483647, %v4753
  %vm4764 = vcmp.eq.f32.partialorder %v4763, 8.507059e+37
  %v4765 = vand.u32 %v4753, 2147483648
  %v4766 = vor.u32 1.1754944e-38, %v4765
  %v4767 = vsel %vm4764, %v4766, %v4762
  %v4768 = vmul.f32 %v4743, %v4767
  %v4769 = vmin.f32 %v4768, 1.0
  %v4770 = vmax.f32 %v4769, -1.0
  %v4771 = vadd.f32 %v4730, 1.0
  %v4772 = vadd.f32 %v4770, 1.0
  %v4773 = vmul.f32 %v4687, %v4771
  %v4774 = vmul.f32 %v4688, %v4772
  %v4775 = vpack.c.bf16 %v4774, %v4773
  %v4776 = vld [vmem:[%s17] sm:$0x7]
  %vm4777 = vcmask 130048
  %v4779 = vsel %vm4777, %v4776, 0
  %4781 = vmatpush.bf16.msra.mxu0 0
  %4782 = vmatpush.bf16.msra.mxu0 0
  %4783 = vmatpush.bf16.msra.mxu0 0
  %4784 = vmatpush.bf16.msra.mxu0 0
  %4785 = vmatpush.bf16.msra.mxu0 0
  %4786 = vmatpush.bf16.msra.mxu0 0
  %4787 = vmatpush.bf16.msra.mxu0 0
  %4788 = vmatpush.bf16.msra.mxu0 %v4775
  %4789 = vmatmul.bf16.gmra.mxu0 %v4779
  %v4790 = vpop.f32.mrf.mxu0
  %v4791 = vadd.f32 0.0, %v4790
  %v4792 = vpop.f32.mrf.mxu0
  %4793 = vdwg.mxu0
  %v4794 = vmul.f32 %v4791, 0.5
  %v4795 = vmul.f32 %v4791, 0.70710677
  %v4796 = vmul.f32 %v4795, %v4795
  %v4797 = vmin.f32 16.0, %v4796
  %v4798 = vmul.f32 %v4797, 2.1237322e-06
  %v4799 = vadd.f32 %v4798, 0.00028619796
  %v4800 = vmul.f32 %v4797, %v4799
  %v4801 = vadd.f32 %v4800, 0.0036580483
  %v4802 = vmul.f32 %v4797, %v4801
  %v4803 = vadd.f32 %v4802, 0.05243302
  %v4804 = vmul.f32 %v4797, %v4803
  %v4805 = vadd.f32 %v4804, 0.18741608
  %v4806 = vmul.f32 %v4797, %v4805
  %v4807 = vadd.f32 %v4806, 1.1283791
  %v4808 = vmul.f32 %v4795, %v4807
  %v4809 = vmul.f32 %v4797, 3.8918573e-05
  %v4810 = vadd.f32 %v4809, 0.001143296
  %v4811 = vmul.f32 %v4797, %v4810
  %v4812 = vadd.f32 %v4811, 0.014752088
  %v4813 = vmul.f32 %v4797, %v4812
  %v4814 = vadd.f32 %v4813, 0.112945676
  %v4815 = vmul.f32 %v4797, %v4814
  %v4816 = vadd.f32 %v4815, 0.4994258
  %v4817 = vmul.f32 %v4797, %v4816
  %v4818 = vadd.f32 %v4817, 1.0
  %v4819 = vrcp.pop %v4818
  %v4820 = vmul.f32 %v4818, %v4819
  %v4821 = vsub.f32 1.0, %v4820
  %v4822 = vmul.f32 %v4819, %v4821
  %v4823 = vadd.f32 %v4819, %v4822
  %vm4824 = vweird.f32 %v4818
  %vm4825 = vweird.f32 %v4819
  %vm4826 = vmor %vm4824, %vm4825
  %v4827 = vsel %vm4826, %v4819, %v4823
  %v4828 = vand.u32 2147483647, %v4818
  %vm4829 = vcmp.eq.f32.partialorder %v4828, 8.507059e+37
  %v4830 = vand.u32 %v4818, 2147483648
  %v4831 = vor.u32 1.1754944e-38, %v4830
  %v4832 = vsel %vm4829, %v4831, %v4827
  %v4833 = vmul.f32 %v4808, %v4832
  %v4834 = vmin.f32 %v4833, 1.0
  %v4835 = vmax.f32 %v4834, -1.0
  %v4836 = vadd.f32 %v4835, 1.0
  %v4837 = vmul.f32 %v4794, %v4836
  %v4838 = vpack.c.bf16 %v4837, %v4837
  %v4839 = vld [vmem:[%s21] sm:$0x1]
  %v4841 = vsel %vm2158, %v4838, 0
  %v4844 = vsel %vm2067, %v4839, 0
  %4846 = vmatpush.bf16.msra.mxu0 0
  %4847 = vmatpush.bf16.msra.mxu0 0
  %4848 = vmatpush.bf16.msra.mxu0 0
  %4849 = vmatpush.bf16.msra.mxu0 0
  %4850 = vmatpush.bf16.msra.mxu0 0
  %4851 = vmatpush.bf16.msra.mxu0 0
  %4852 = vmatpush.bf16.msra.mxu0 0
  %4853 = vmatpush.bf16.msra.mxu0 %v4844
  %4854 = vmatmul.bf16.gmra.mxu0 %v4841
  %v4855 = vpop.f32.mrf.mxu0
  %v4856 = vadd.f32 0.0, %v4855
  %v4857 = vpop.f32.mrf.mxu0
  %4858 = vdwg.mxu0
  %v4859 = vld [vmem:[%s18] sm:$0x7]
  %v4860 = vpack.c.bf16 %v4856, %v4856
  %vm4861 = vcmask 39936
  %v4863 = vsel %vm4861, %v4859, 0
  %vm4865 = vcmask 1042432
  %v4866 = vsel %vm3229, 4294967295, 65535
  %v4867 = vsel %vm4865, %v4866, 0
  %v4869 = vand.u32 %v4860, %v4867
  %4871 = vmatpush.bf16.msra.mxu0 0
  %4872 = vmatpush.bf16.msra.mxu0 0
  %4873 = vmatpush.bf16.msra.mxu0 0
  %4874 = vmatpush.bf16.msra.mxu0 0
  %4875 = vmatpush.bf16.msra.mxu0 0
  %4876 = vmatpush.bf16.msra.mxu0 0
  %4877 = vmatpush.bf16.msra.mxu0 0
  %4878 = vmatpush.bf16.msra.mxu0 %v4869
  %4879 = vmatmul.bf16.gmra.mxu0 %v4863
  %v4880 = vpop.f32.mrf.mxu0
  %v4881 = vadd.f32 0.0, %v4880
  %v4882 = vpop.f32.mrf.mxu0
  %4883 = vdwg.mxu0
  %v4884 = vmul.f32 %v4881, 0.5
  %v4885 = vmul.f32 %v4881, 0.70710677
  %v4886 = vmul.f32 %v4885, %v4885
  %v4887 = vmin.f32 16.0, %v4886
  %v4888 = vmul.f32 %v4887, 2.1237322e-06
  %v4889 = vadd.f32 %v4888, 0.00028619796
  %v4890 = vmul.f32 %v4887, %v4889
  %v4891 = vadd.f32 %v4890, 0.0036580483
  %v4892 = vmul.f32 %v4887, %v4891
  %v4893 = vadd.f32 %v4892, 0.05243302
  %v4894 = vmul.f32 %v4887, %v4893
  %v4895 = vadd.f32 %v4894, 0.18741608
  %v4896 = vmul.f32 %v4887, %v4895
  %v4897 = vadd.f32 %v4896, 1.1283791
  %v4898 = vmul.f32 %v4885, %v4897
  %v4899 = vmul.f32 %v4887, 3.8918573e-05
  %v4900 = vadd.f32 %v4899, 0.001143296
  %v4901 = vmul.f32 %v4887, %v4900
  %v4902 = vadd.f32 %v4901, 0.014752088
  %v4903 = vmul.f32 %v4887, %v4902
  %v4904 = vadd.f32 %v4903, 0.112945676
  %v4905 = vmul.f32 %v4887, %v4904
  %v4906 = vadd.f32 %v4905, 0.4994258
  %v4907 = vmul.f32 %v4887, %v4906
  %v4908 = vadd.f32 %v4907, 1.0
  %v4909 = vrcp.pop %v4908
  %v4910 = vmul.f32 %v4908, %v4909
  %v4911 = vsub.f32 1.0, %v4910
  %v4912 = vmul.f32 %v4909, %v4911
  %v4913 = vadd.f32 %v4909, %v4912
  %vm4914 = vweird.f32 %v4908
  %vm4915 = vweird.f32 %v4909
  %vm4916 = vmor %vm4914, %vm4915
  %v4917 = vsel %vm4916, %v4909, %v4913
  %v4918 = vand.u32 2147483647, %v4908
  %vm4919 = vcmp.eq.f32.partialorder %v4918, 8.507059e+37
  %v4920 = vand.u32 %v4908, 2147483648
  %v4921 = vor.u32 1.1754944e-38, %v4920
  %v4922 = vsel %vm4919, %v4921, %v4917
  %v4923 = vmul.f32 %v4898, %v4922
  %v4924 = vmin.f32 %v4923, 1.0
  %v4925 = vmax.f32 %v4924, -1.0
  %v4926 = vadd.f32 %v4925, 1.0
  %v4927 = vmul.f32 %v4884, %v4926
  %v4928 = vpack.c.bf16 %v4927, %v4927
  %v4929 = vld [vmem:[%s19] sm:$0xf]
  %v4930 = vld [vmem:[%s19 + $0x4] sm:$0xf]
  %v4931 = vld [vmem:[%s19 + $0x8] sm:$0x3]
  %v4935 = vunpack.c.l.b16 %v4929
  %v4936 = vunpack.c.l.b16 %v4930
  %v4937 = vunpack.c.l.b16 %v4931
  %v4938 = vpack.c.b16 %v4936, %v4935
  %v4939 = vpack.c.b16 %v4937, %v4937
  %v4941 = vsel %vm4861, %v4938, 0
  %v4944 = vsel %vm4861, %v4939, 0
  %v4947 = vand.u32 %v4928, %v4867
  %4949 = vmatpush.bf16.msra.mxu0 0
  %4950 = vmatpush.bf16.msra.mxu0 0
  %4951 = vmatpush.bf16.msra.mxu0 0
  %4952 = vmatpush.bf16.msra.mxu0 0
  %4953 = vmatpush.bf16.msra.mxu0 0
  %4954 = vmatpush.bf16.msra.mxu0 0
  %4955 = vmatpush.bf16.msra.mxu0 0
  %4956 = vmatpush.bf16.msra.mxu0 %v4947
  %4957 = vmatmul.bf16.gmra.mxu0 %v4941
  %v4958 = vpop.f32.mrf.mxu0
  %v4959 = vadd.f32 0.0, %v4958
  %v4960 = vpop.f32.mrf.mxu0
  %v4961 = vadd.f32 0.0, %v4960
  %4962 = vmatmul.bf16.gmra.mxu0 %v4944
  %v4963 = vpop.f32.mrf.mxu0
  %v4964 = vadd.f32 0.0, %v4963
  %v4965 = vpop.f32.mrf.mxu0
  %4966 = vdwg.mxu0
  %v4967 = vmul.f32 %v4959, 0.5
  %v4968 = vmul.f32 %v4961, 0.5
  %v4969 = vmul.f32 %v4964, 0.5
  %v4970 = vmul.f32 %v4959, 0.70710677
  %v4971 = vmul.f32 %v4961, 0.70710677
  %v4972 = vmul.f32 %v4964, 0.70710677
  %v4973 = vmul.f32 %v4970, %v4970
  %v4974 = vmin.f32 16.0, %v4973
  %v4975 = vmul.f32 %v4974, 2.1237322e-06
  %v4976 = vadd.f32 %v4975, 0.00028619796
  %v4977 = vmul.f32 %v4974, %v4976
  %v4978 = vadd.f32 %v4977, 0.0036580483
  %v4979 = vmul.f32 %v4974, %v4978
  %v4980 = vadd.f32 %v4979, 0.05243302
  %v4981 = vmul.f32 %v4974, %v4980
  %v4982 = vadd.f32 %v4981, 0.18741608
  %v4983 = vmul.f32 %v4974, %v4982
  %v4984 = vadd.f32 %v4983, 1.1283791
  %v4985 = vmul.f32 %v4970, %v4984
  %v4986 = vmul.f32 %v4974, 3.8918573e-05
  %v4987 = vadd.f32 %v4986, 0.001143296
  %v4988 = vmul.f32 %v4974, %v4987
  %v4989 = vadd.f32 %v4988, 0.014752088
  %v4990 = vmul.f32 %v4974, %v4989
  %v4991 = vadd.f32 %v4990, 0.112945676
  %v4992 = vmul.f32 %v4974, %v4991
  %v4993 = vadd.f32 %v4992, 0.4994258
  %v4994 = vmul.f32 %v4974, %v4993
  %v4995 = vadd.f32 %v4994, 1.0
  %v4996 = vrcp.pop %v4995
  %v4997 = vmul.f32 %v4995, %v4996
  %v4998 = vsub.f32 1.0, %v4997
  %v4999 = vmul.f32 %v4996, %v4998
  %v5000 = vadd.f32 %v4996, %v4999
  %vm5001 = vweird.f32 %v4995
  %vm5002 = vweird.f32 %v4996
  %vm5003 = vmor %vm5001, %vm5002
  %v5004 = vsel %vm5003, %v4996, %v5000
  %v5005 = vand.u32 2147483647, %v4995
  %vm5006 = vcmp.eq.f32.partialorder %v5005, 8.507059e+37
  %v5007 = vand.u32 %v4995, 2147483648
  %v5008 = vor.u32 1.1754944e-38, %v5007
  %v5009 = vsel %vm5006, %v5008, %v5004
  %v5010 = vmul.f32 %v4985, %v5009
  %v5011 = vmin.f32 %v5010, 1.0
  %v5012 = vmax.f32 %v5011, -1.0
  %v5013 = vmul.f32 %v4971, %v4971
  %v5014 = vmin.f32 16.0, %v5013
  %v5015 = vmul.f32 %v5014, 2.1237322e-06
  %v5016 = vadd.f32 %v5015, 0.00028619796
  %v5017 = vmul.f32 %v5014, %v5016
  %v5018 = vadd.f32 %v5017, 0.0036580483
  %v5019 = vmul.f32 %v5014, %v5018
  %v5020 = vadd.f32 %v5019, 0.05243302
  %v5021 = vmul.f32 %v5014, %v5020
  %v5022 = vadd.f32 %v5021, 0.18741608
  %v5023 = vmul.f32 %v5014, %v5022
  %v5024 = vadd.f32 %v5023, 1.1283791
  %v5025 = vmul.f32 %v4971, %v5024
  %v5026 = vmul.f32 %v5014, 3.8918573e-05
  %v5027 = vadd.f32 %v5026, 0.001143296
  %v5028 = vmul.f32 %v5014, %v5027
  %v5029 = vadd.f32 %v5028, 0.014752088
  %v5030 = vmul.f32 %v5014, %v5029
  %v5031 = vadd.f32 %v5030, 0.112945676
  %v5032 = vmul.f32 %v5014, %v5031
  %v5033 = vadd.f32 %v5032, 0.4994258
  %v5034 = vmul.f32 %v5014, %v5033
  %v5035 = vadd.f32 %v5034, 1.0
  %v5036 = vrcp.pop %v5035
  %v5037 = vmul.f32 %v5035, %v5036
  %v5038 = vsub.f32 1.0, %v5037
  %v5039 = vmul.f32 %v5036, %v5038
  %v5040 = vadd.f32 %v5036, %v5039
  %vm5041 = vweird.f32 %v5035
  %vm5042 = vweird.f32 %v5036
  %vm5043 = vmor %vm5041, %vm5042
  %v5044 = vsel %vm5043, %v5036, %v5040
  %v5045 = vand.u32 2147483647, %v5035
  %vm5046 = vcmp.eq.f32.partialorder %v5045, 8.507059e+37
  %v5047 = vand.u32 %v5035, 2147483648
  %v5048 = vor.u32 1.1754944e-38, %v5047
  %v5049 = vsel %vm5046, %v5048, %v5044
  %v5050 = vmul.f32 %v5025, %v5049
  %v5051 = vmin.f32 %v5050, 1.0
  %v5052 = vmax.f32 %v5051, -1.0
  %v5053 = vmul.f32 %v4972, %v4972
  %v5054 = vmin.f32 16.0, %v5053
  %v5055 = vmul.f32 %v5054, 2.1237322e-06
  %v5056 = vadd.f32 %v5055, 0.00028619796
  %v5057 = vmul.f32 %v5054, %v5056
  %v5058 = vadd.f32 %v5057, 0.0036580483
  %v5059 = vmul.f32 %v5054, %v5058
  %v5060 = vadd.f32 %v5059, 0.05243302
  %v5061 = vmul.f32 %v5054, %v5060
  %v5062 = vadd.f32 %v5061, 0.18741608
  %v5063 = vmul.f32 %v5054, %v5062
  %v5064 = vadd.f32 %v5063, 1.1283791
  %v5065 = vmul.f32 %v4972, %v5064
  %v5066 = vmul.f32 %v5054, 3.8918573e-05
  %v5067 = vadd.f32 %v5066, 0.001143296
  %v5068 = vmul.f32 %v5054, %v5067
  %v5069 = vadd.f32 %v5068, 0.014752088
  %v5070 = vmul.f32 %v5054, %v5069
  %v5071 = vadd.f32 %v5070, 0.112945676
  %v5072 = vmul.f32 %v5054, %v5071
  %v5073 = vadd.f32 %v5072, 0.4994258
  %v5074 = vmul.f32 %v5054, %v5073
  %v5075 = vadd.f32 %v5074, 1.0
  %v5076 = vrcp.pop %v5075
  %v5077 = vmul.f32 %v5075, %v5076
  %v5078 = vsub.f32 1.0, %v5077
  %v5079 = vmul.f32 %v5076, %v5078
  %v5080 = vadd.f32 %v5076, %v5079
  %vm5081 = vweird.f32 %v5075
  %vm5082 = vweird.f32 %v5076
  %vm5083 = vmor %vm5081, %vm5082
  %v5084 = vsel %vm5083, %v5076, %v5080
  %v5085 = vand.u32 2147483647, %v5075
  %vm5086 = vcmp.eq.f32.partialorder %v5085, 8.507059e+37
  %v5087 = vand.u32 %v5075, 2147483648
  %v5088 = vor.u32 1.1754944e-38, %v5087
  %v5089 = vsel %vm5086, %v5088, %v5084
  %v5090 = vmul.f32 %v5065, %v5089
  %v5091 = vmin.f32 %v5090, 1.0
  %v5092 = vmax.f32 %v5091, -1.0
  %v5093 = vadd.f32 %v5012, 1.0
  %v5094 = vadd.f32 %v5052, 1.0
  %v5095 = vadd.f32 %v5092, 1.0
  %v5096 = vmul.f32 %v4967, %v5093
  %v5097 = vmul.f32 %v4968, %v5094
  %v5098 = vmul.f32 %v4969, %v5095
  %v5100 = vsel %vm2158, %v4775, 0
  %5102 = vmatpush.bf16.msra.mxu0 0
  %5103 = vmatpush.bf16.msra.mxu0 0
  %5104 = vmatpush.bf16.msra.mxu0 0
  %5105 = vmatpush.bf16.msra.mxu0 0
  %5106 = vmatpush.bf16.msra.mxu0 0
  %5107 = vmatpush.bf16.msra.mxu0 0
  %5108 = vmatpush.bf16.msra.mxu0 0
  %5109 = vmatpush.bf16.msra.mxu0 %v4844
  %5110 = vmatmul.bf16.gmra.mxu0 %v5100
  %v5111 = vpop.f32.mrf.mxu0
  %v5112 = vadd.f32 0.0, %v5111
  %v5113 = vpop.f32.mrf.mxu0
  %v5114 = vadd.f32 0.0, %v5113
  %5115 = vdwg.mxu0
  %v5116 = vpack.c.bf16 %v5114, %v5112
  %v5117 = vld [vmem:[%s20] sm:$0xf]
  %v5118 = vld [vmem:[%s20 + $0x4] sm:$0xf]
  %v5119 = vld [vmem:[%s20 + $0x8] sm:$0x3]
  %v5123 = vunpack.c.l.b16 %v5117
  %v5124 = vunpack.c.l.b16 %v5118
  %v5125 = vunpack.c.l.b16 %v5119
  %v5126 = vpack.c.b16 %v5124, %v5123
  %v5127 = vpack.c.b16 %v5125, %v5125
  %v5129 = vsel %vm4777, %v5126, 0
  %v5132 = vsel %vm4777, %v5127, 0
  %5134 = vmatpush.bf16.msra.mxu0 0
  %5135 = vmatpush.bf16.msra.mxu0 0
  %5136 = vmatpush.bf16.msra.mxu0 0
  %5137 = vmatpush.bf16.msra.mxu0 0
  %5138 = vmatpush.bf16.msra.mxu0 0
  %5139 = vmatpush.bf16.msra.mxu0 0
  %5140 = vmatpush.bf16.msra.mxu0 0
  %5141 = vmatpush.bf16.msra.mxu0 %v5116
  %5142 = vmatmul.bf16.gmra.mxu0 %v5129
  %v5143 = vpop.f32.mrf.mxu0
  %v5144 = vadd.f32 0.0, %v5143
  %v5145 = vpop.f32.mrf.mxu0
  %v5146 = vadd.f32 0.0, %v5145
  %5147 = vmatmul.bf16.gmra.mxu0 %v5132
  %v5148 = vpop.f32.mrf.mxu0
  %v5149 = vadd.f32 0.0, %v5148
  %v5150 = vpop.f32.mrf.mxu0
  %5151 = vdwg.mxu0
  %v5152 = vadd.f32 %v5096, %v5144
  %v5153 = vadd.f32 %v5097, %v5146
  %v5154 = vadd.f32 %v5098, %v5149
  %v5155 = vmul.f32 %v5152, 0.5
  %v5156 = vmul.f32 %v5153, 0.5
  %v5157 = vmul.f32 %v5154, 0.5
  %v5158 = vmul.f32 %v5152, 0.70710677
  %v5159 = vmul.f32 %v5153, 0.70710677
  %v5160 = vmul.f32 %v5154, 0.70710677
  %v5161 = vmul.f32 %v5158, %v5158
  %v5162 = vmin.f32 16.0, %v5161
  %v5163 = vmul.f32 %v5162, 2.1237322e-06
  %v5164 = vadd.f32 %v5163, 0.00028619796
  %v5165 = vmul.f32 %v5162, %v5164
  %v5166 = vadd.f32 %v5165, 0.0036580483
  %v5167 = vmul.f32 %v5162, %v5166
  %v5168 = vadd.f32 %v5167, 0.05243302
  %v5169 = vmul.f32 %v5162, %v5168
  %v5170 = vadd.f32 %v5169, 0.18741608
  %v5171 = vmul.f32 %v5162, %v5170
  %v5172 = vadd.f32 %v5171, 1.1283791
  %v5173 = vmul.f32 %v5158, %v5172
  %v5174 = vmul.f32 %v5162, 3.8918573e-05
  %v5175 = vadd.f32 %v5174, 0.001143296
  %v5176 = vmul.f32 %v5162, %v5175
  %v5177 = vadd.f32 %v5176, 0.014752088
  %v5178 = vmul.f32 %v5162, %v5177
  %v5179 = vadd.f32 %v5178, 0.112945676
  %v5180 = vmul.f32 %v5162, %v5179
  %v5181 = vadd.f32 %v5180, 0.4994258
  %v5182 = vmul.f32 %v5162, %v5181
  %v5183 = vadd.f32 %v5182, 1.0
  %v5184 = vrcp.pop %v5183
  %v5185 = vmul.f32 %v5183, %v5184
  %v5186 = vsub.f32 1.0, %v5185
  %v5187 = vmul.f32 %v5184, %v5186
  %v5188 = vadd.f32 %v5184, %v5187
  %vm5189 = vweird.f32 %v5183
  %vm5190 = vweird.f32 %v5184
  %vm5191 = vmor %vm5189, %vm5190
  %v5192 = vsel %vm5191, %v5184, %v5188
  %v5193 = vand.u32 2147483647, %v5183
  %vm5194 = vcmp.eq.f32.partialorder %v5193, 8.507059e+37
  %v5195 = vand.u32 %v5183, 2147483648
  %v5196 = vor.u32 1.1754944e-38, %v5195
  %v5197 = vsel %vm5194, %v5196, %v5192
  %v5198 = vmul.f32 %v5173, %v5197
  %v5199 = vmin.f32 %v5198, 1.0
  %v5200 = vmax.f32 %v5199, -1.0
  %v5201 = vmul.f32 %v5159, %v5159
  %v5202 = vmin.f32 16.0, %v5201
  %v5203 = vmul.f32 %v5202, 2.1237322e-06
  %v5204 = vadd.f32 %v5203, 0.00028619796
  %v5205 = vmul.f32 %v5202, %v5204
  %v5206 = vadd.f32 %v5205, 0.0036580483
  %v5207 = vmul.f32 %v5202, %v5206
  %v5208 = vadd.f32 %v5207, 0.05243302
  %v5209 = vmul.f32 %v5202, %v5208
  %v5210 = vadd.f32 %v5209, 0.18741608
  %v5211 = vmul.f32 %v5202, %v5210
  %v5212 = vadd.f32 %v5211, 1.1283791
  %v5213 = vmul.f32 %v5159, %v5212
  %v5214 = vmul.f32 %v5202, 3.8918573e-05
  %v5215 = vadd.f32 %v5214, 0.001143296
  %v5216 = vmul.f32 %v5202, %v5215
  %v5217 = vadd.f32 %v5216, 0.014752088
  %v5218 = vmul.f32 %v5202, %v5217
  %v5219 = vadd.f32 %v5218, 0.112945676
  %v5220 = vmul.f32 %v5202, %v5219
  %v5221 = vadd.f32 %v5220, 0.4994258
  %v5222 = vmul.f32 %v5202, %v5221
  %v5223 = vadd.f32 %v5222, 1.0
  %v5224 = vrcp.pop %v5223
  %v5225 = vmul.f32 %v5223, %v5224
  %v5226 = vsub.f32 1.0, %v5225
  %v5227 = vmul.f32 %v5224, %v5226
  %v5228 = vadd.f32 %v5224, %v5227
  %vm5229 = vweird.f32 %v5223
  %vm5230 = vweird.f32 %v5224
  %vm5231 = vmor %vm5229, %vm5230
  %v5232 = vsel %vm5231, %v5224, %v5228
  %v5233 = vand.u32 2147483647, %v5223
  %vm5234 = vcmp.eq.f32.partialorder %v5233, 8.507059e+37
  %v5235 = vand.u32 %v5223, 2147483648
  %v5236 = vor.u32 1.1754944e-38, %v5235
  %v5237 = vsel %vm5234, %v5236, %v5232
  %v5238 = vmul.f32 %v5213, %v5237
  %v5239 = vmin.f32 %v5238, 1.0
  %v5240 = vmax.f32 %v5239, -1.0
  %v5241 = vmul.f32 %v5160, %v5160
  %v5242 = vmin.f32 16.0, %v5241
  %v5243 = vmul.f32 %v5242, 2.1237322e-06
  %v5244 = vadd.f32 %v5243, 0.00028619796
  %v5245 = vmul.f32 %v5242, %v5244
  %v5246 = vadd.f32 %v5245, 0.0036580483
  %v5247 = vmul.f32 %v5242, %v5246
  %v5248 = vadd.f32 %v5247, 0.05243302
  %v5249 = vmul.f32 %v5242, %v5248
  %v5250 = vadd.f32 %v5249, 0.18741608
  %v5251 = vmul.f32 %v5242, %v5250
  %v5252 = vadd.f32 %v5251, 1.1283791
  %v5253 = vmul.f32 %v5160, %v5252
  %v5254 = vmul.f32 %v5242, 3.8918573e-05
  %v5255 = vadd.f32 %v5254, 0.001143296
  %v5256 = vmul.f32 %v5242, %v5255
  %v5257 = vadd.f32 %v5256, 0.014752088
  %v5258 = vmul.f32 %v5242, %v5257
  %v5259 = vadd.f32 %v5258, 0.112945676
  %v5260 = vmul.f32 %v5242, %v5259
  %v5261 = vadd.f32 %v5260, 0.4994258
  %v5262 = vmul.f32 %v5242, %v5261
  %v5263 = vadd.f32 %v5262, 1.0
  %v5264 = vrcp.pop %v5263
  %v5265 = vmul.f32 %v5263, %v5264
  %v5266 = vsub.f32 1.0, %v5265
  %v5267 = vmul.f32 %v5264, %v5266
  %v5268 = vadd.f32 %v5264, %v5267
  %vm5269 = vweird.f32 %v5263
  %vm5270 = vweird.f32 %v5264
  %vm5271 = vmor %vm5269, %vm5270
  %v5272 = vsel %vm5271, %v5264, %v5268
  %v5273 = vand.u32 2147483647, %v5263
  %vm5274 = vcmp.eq.f32.partialorder %v5273, 8.507059e+37
  %v5275 = vand.u32 %v5263, 2147483648
  %v5276 = vor.u32 1.1754944e-38, %v5275
  %v5277 = vsel %vm5274, %v5276, %v5272
  %v5278 = vmul.f32 %v5253, %v5277
  %v5279 = vmin.f32 %v5278, 1.0
  %v5280 = vmax.f32 %v5279, -1.0
  %v5281 = vadd.f32 %v5200, 1.0
  %v5282 = vadd.f32 %v5240, 1.0
  %v5283 = vadd.f32 %v5280, 1.0
  %v5284 = vmul.f32 %v5155, %v5281
  %v5285 = vmul.f32 %v5156, %v5282
  %v5286 = vmul.f32 %v5157, %v5283
  %v5287 = vpack.c.bf16 %v5285, %v5284
  %v5288 = vpack.c.bf16 %v5286, %v5286
  %v5289 = vld [vmem:[%s22] sm:$0x7]
  %vm5290 = vcmask 162816
  %v5292 = vsel %vm5290, %v5289, 0
  %v5295 = vsel %vm3229, %v5288, 0
  %5297 = vmatpush.bf16.msra.mxu0 0
  %5298 = vmatpush.bf16.msra.mxu0 0
  %5299 = vmatpush.bf16.msra.mxu0 0
  %5300 = vmatpush.bf16.msra.mxu0 0
  %5301 = vmatpush.bf16.msra.mxu0 0
  %5302 = vmatpush.bf16.msra.mxu0 0
  %5303 = vmatpush.bf16.msra.mxu0 %v5295
  %5304 = vmatpush.bf16.msra.mxu0 %v5287
  %5305 = vmatmul.bf16.gmra.mxu0 %v5292
  %v5306 = vpop.f32.mrf.mxu0
  %v5307 = vadd.f32 0.0, %v5306
  %v5308 = vpop.f32.mrf.mxu0
  %5309 = vdwg.mxu0
  %v5310 = vmul.f32 %v5307, 0.5
  %v5311 = vmul.f32 %v5307, 0.70710677
  %v5312 = vmul.f32 %v5311, %v5311
  %v5313 = vmin.f32 16.0, %v5312
  %v5314 = vmul.f32 %v5313, 2.1237322e-06
  %v5315 = vadd.f32 %v5314, 0.00028619796
  %v5316 = vmul.f32 %v5313, %v5315
  %v5317 = vadd.f32 %v5316, 0.0036580483
  %v5318 = vmul.f32 %v5313, %v5317
  %v5319 = vadd.f32 %v5318, 0.05243302
  %v5320 = vmul.f32 %v5313, %v5319
  %v5321 = vadd.f32 %v5320, 0.18741608
  %v5322 = vmul.f32 %v5313, %v5321
  %v5323 = vadd.f32 %v5322, 1.1283791
  %v5324 = vmul.f32 %v5311, %v5323
  %v5325 = vmul.f32 %v5313, 3.8918573e-05
  %v5326 = vadd.f32 %v5325, 0.001143296
  %v5327 = vmul.f32 %v5313, %v5326
  %v5328 = vadd.f32 %v5327, 0.014752088
  %v5329 = vmul.f32 %v5313, %v5328
  %v5330 = vadd.f32 %v5329, 0.112945676
  %v5331 = vmul.f32 %v5313, %v5330
  %v5332 = vadd.f32 %v5331, 0.4994258
  %v5333 = vmul.f32 %v5313, %v5332
  %v5334 = vadd.f32 %v5333, 1.0
  %v5335 = vrcp.pop %v5334
  %v5336 = vmul.f32 %v5334, %v5335
  %v5337 = vsub.f32 1.0, %v5336
  %v5338 = vmul.f32 %v5335, %v5337
  %v5339 = vadd.f32 %v5335, %v5338
  %vm5340 = vweird.f32 %v5334
  %vm5341 = vweird.f32 %v5335
  %vm5342 = vmor %vm5340, %vm5341
  %v5343 = vsel %vm5342, %v5335, %v5339
  %v5344 = vand.u32 2147483647, %v5334
  %vm5345 = vcmp.eq.f32.partialorder %v5344, 8.507059e+37
  %v5346 = vand.u32 %v5334, 2147483648
  %v5347 = vor.u32 1.1754944e-38, %v5346
  %v5348 = vsel %vm5345, %v5347, %v5343
  %v5349 = vmul.f32 %v5324, %v5348
  %v5350 = vmin.f32 %v5349, 1.0
  %v5351 = vmax.f32 %v5350, -1.0
  %v5352 = vadd.f32 %v5351, 1.0
  %v5353 = vmul.f32 %v5310, %v5352
  %v5354 = vpack.c.bf16 %v5353, %v5353
  %v5355 = vld [vmem:[%s26] sm:$0x1]
  %v5357 = vsel %vm2158, %v5354, 0
  %v5360 = vsel %vm2067, %v5355, 0
  %5362 = vmatpush.bf16.msra.mxu0 0
  %5363 = vmatpush.bf16.msra.mxu0 0
  %5364 = vmatpush.bf16.msra.mxu0 0
  %5365 = vmatpush.bf16.msra.mxu0 0
  %5366 = vmatpush.bf16.msra.mxu0 0
  %5367 = vmatpush.bf16.msra.mxu0 0
  %5368 = vmatpush.bf16.msra.mxu0 0
  %5369 = vmatpush.bf16.msra.mxu0 %v5360
  %5370 = vmatmul.bf16.gmra.mxu0 %v5357
  %v5371 = vpop.f32.mrf.mxu0
  %v5372 = vadd.f32 0.0, %v5371
  %v5373 = vpop.f32.mrf.mxu0
  %5374 = vdwg.mxu0
  %v5375 = vld [vmem:[%s23] sm:$0x7]
  %v5376 = vpack.c.bf16 %v5372, %v5372
  %vm5377 = vcmask 48128
  %v5379 = vsel %vm5377, %v5375, 0
  %v5382 = vsel %vm4865, %v5376, 0
  %5384 = vmatpush.bf16.msra.mxu0 0
  %5385 = vmatpush.bf16.msra.mxu0 0
  %5386 = vmatpush.bf16.msra.mxu0 0
  %5387 = vmatpush.bf16.msra.mxu0 0
  %5388 = vmatpush.bf16.msra.mxu0 0
  %5389 = vmatpush.bf16.msra.mxu0 0
  %5390 = vmatpush.bf16.msra.mxu0 0
  %5391 = vmatpush.bf16.msra.mxu0 %v5382
  %5392 = vmatmul.bf16.gmra.mxu0 %v5379
  %v5393 = vpop.f32.mrf.mxu0
  %v5394 = vadd.f32 0.0, %v5393
  %v5395 = vpop.f32.mrf.mxu0
  %5396 = vdwg.mxu0
  %v5397 = vmul.f32 %v5394, 0.5
  %v5398 = vmul.f32 %v5394, 0.70710677
  %v5399 = vmul.f32 %v5398, %v5398
  %v5400 = vmin.f32 16.0, %v5399
  %v5401 = vmul.f32 %v5400, 2.1237322e-06
  %v5402 = vadd.f32 %v5401, 0.00028619796
  %v5403 = vmul.f32 %v5400, %v5402
  %v5404 = vadd.f32 %v5403, 0.0036580483
  %v5405 = vmul.f32 %v5400, %v5404
  %v5406 = vadd.f32 %v5405, 0.05243302
  %v5407 = vmul.f32 %v5400, %v5406
  %v5408 = vadd.f32 %v5407, 0.18741608
  %v5409 = vmul.f32 %v5400, %v5408
  %v5410 = vadd.f32 %v5409, 1.1283791
  %v5411 = vmul.f32 %v5398, %v5410
  %v5412 = vmul.f32 %v5400, 3.8918573e-05
  %v5413 = vadd.f32 %v5412, 0.001143296
  %v5414 = vmul.f32 %v5400, %v5413
  %v5415 = vadd.f32 %v5414, 0.014752088
  %v5416 = vmul.f32 %v5400, %v5415
  %v5417 = vadd.f32 %v5416, 0.112945676
  %v5418 = vmul.f32 %v5400, %v5417
  %v5419 = vadd.f32 %v5418, 0.4994258
  %v5420 = vmul.f32 %v5400, %v5419
  %v5421 = vadd.f32 %v5420, 1.0
  %v5422 = vrcp.pop %v5421
  %v5423 = vmul.f32 %v5421, %v5422
  %v5424 = vsub.f32 1.0, %v5423
  %v5425 = vmul.f32 %v5422, %v5424
  %v5426 = vadd.f32 %v5422, %v5425
  %vm5427 = vweird.f32 %v5421
  %vm5428 = vweird.f32 %v5422
  %vm5429 = vmor %vm5427, %vm5428
  %v5430 = vsel %vm5429, %v5422, %v5426
  %v5431 = vand.u32 2147483647, %v5421
  %vm5432 = vcmp.eq.f32.partialorder %v5431, 8.507059e+37
  %v5433 = vand.u32 %v5421, 2147483648
  %v5434 = vor.u32 1.1754944e-38, %v5433
  %v5435 = vsel %vm5432, %v5434, %v5430
  %v5436 = vmul.f32 %v5411, %v5435
  %v5437 = vmin.f32 %v5436, 1.0
  %v5438 = vmax.f32 %v5437, -1.0
  %v5439 = vadd.f32 %v5438, 1.0
  %v5440 = vmul.f32 %v5397, %v5439
  %v5441 = vpack.c.bf16 %v5440, %v5440
  %v5442 = vld [vmem:[%s24] sm:$0xf]
  %v5443 = vld [vmem:[%s24 + $0x4] sm:$0xf]
  %v5444 = vld [vmem:[%s24 + $0x8] sm:$0xf]
  %v5448 = vunpack.c.l.b16 %v5442
  %v5449 = vunpack.c.l.b16 %v5443
  %v5450 = vunpack.c.l.b16 %v5444
  %v5451 = vpack.c.b16 %v5449, %v5448
  %v5452 = vpack.c.b16 %v5450, %v5450
  %v5454 = vsel %vm5377, %v5451, 0
  %v5457 = vsel %vm5377, %v5452, 0
  %v5460 = vsel %vm4865, %v5441, 0
  %5462 = vmatpush.bf16.msra.mxu0 0
  %5463 = vmatpush.bf16.msra.mxu0 0
  %5464 = vmatpush.bf16.msra.mxu0 0
  %5465 = vmatpush.bf16.msra.mxu0 0
  %5466 = vmatpush.bf16.msra.mxu0 0
  %5467 = vmatpush.bf16.msra.mxu0 0
  %5468 = vmatpush.bf16.msra.mxu0 0
  %5469 = vmatpush.bf16.msra.mxu0 %v5460
  %5470 = vmatmul.bf16.gmra.mxu0 %v5454
  %v5471 = vpop.f32.mrf.mxu0
  %v5472 = vadd.f32 0.0, %v5471
  %v5473 = vpop.f32.mrf.mxu0
  %v5474 = vadd.f32 0.0, %v5473
  %5475 = vmatmul.bf16.gmra.mxu0 %v5457
  %v5476 = vpop.f32.mrf.mxu0
  %v5477 = vadd.f32 0.0, %v5476
  %v5478 = vpop.f32.mrf.mxu0
  %5479 = vdwg.mxu0
  %v5480 = vmul.f32 %v5472, 0.5
  %v5481 = vmul.f32 %v5474, 0.5
  %v5482 = vmul.f32 %v5477, 0.5
  %v5483 = vmul.f32 %v5472, 0.70710677
  %v5484 = vmul.f32 %v5474, 0.70710677
  %v5485 = vmul.f32 %v5477, 0.70710677
  %v5486 = vmul.f32 %v5483, %v5483
  %v5487 = vmin.f32 16.0, %v5486
  %v5488 = vmul.f32 %v5487, 2.1237322e-06
  %v5489 = vadd.f32 %v5488, 0.00028619796
  %v5490 = vmul.f32 %v5487, %v5489
  %v5491 = vadd.f32 %v5490, 0.0036580483
  %v5492 = vmul.f32 %v5487, %v5491
  %v5493 = vadd.f32 %v5492, 0.05243302
  %v5494 = vmul.f32 %v5487, %v5493
  %v5495 = vadd.f32 %v5494, 0.18741608
  %v5496 = vmul.f32 %v5487, %v5495
  %v5497 = vadd.f32 %v5496, 1.1283791
  %v5498 = vmul.f32 %v5483, %v5497
  %v5499 = vmul.f32 %v5487, 3.8918573e-05
  %v5500 = vadd.f32 %v5499, 0.001143296
  %v5501 = vmul.f32 %v5487, %v5500
  %v5502 = vadd.f32 %v5501, 0.014752088
  %v5503 = vmul.f32 %v5487, %v5502
  %v5504 = vadd.f32 %v5503, 0.112945676
  %v5505 = vmul.f32 %v5487, %v5504
  %v5506 = vadd.f32 %v5505, 0.4994258
  %v5507 = vmul.f32 %v5487, %v5506
  %v5508 = vadd.f32 %v5507, 1.0
  %v5509 = vrcp.pop %v5508
  %v5510 = vmul.f32 %v5508, %v5509
  %v5511 = vsub.f32 1.0, %v5510
  %v5512 = vmul.f32 %v5509, %v5511
  %v5513 = vadd.f32 %v5509, %v5512
  %vm5514 = vweird.f32 %v5508
  %vm5515 = vweird.f32 %v5509
  %vm5516 = vmor %vm5514, %vm5515
  %v5517 = vsel %vm5516, %v5509, %v5513
  %v5518 = vand.u32 2147483647, %v5508
  %vm5519 = vcmp.eq.f32.partialorder %v5518, 8.507059e+37
  %v5520 = vand.u32 %v5508, 2147483648
  %v5521 = vor.u32 1.1754944e-38, %v5520
  %v5522 = vsel %vm5519, %v5521, %v5517
  %v5523 = vmul.f32 %v5498, %v5522
  %v5524 = vmin.f32 %v5523, 1.0
  %v5525 = vmax.f32 %v5524, -1.0
  %v5526 = vmul.f32 %v5484, %v5484
  %v5527 = vmin.f32 16.0, %v5526
  %v5528 = vmul.f32 %v5527, 2.1237322e-06
  %v5529 = vadd.f32 %v5528, 0.00028619796
  %v5530 = vmul.f32 %v5527, %v5529
  %v5531 = vadd.f32 %v5530, 0.0036580483
  %v5532 = vmul.f32 %v5527, %v5531
  %v5533 = vadd.f32 %v5532, 0.05243302
  %v5534 = vmul.f32 %v5527, %v5533
  %v5535 = vadd.f32 %v5534, 0.18741608
  %v5536 = vmul.f32 %v5527, %v5535
  %v5537 = vadd.f32 %v5536, 1.1283791
  %v5538 = vmul.f32 %v5484, %v5537
  %v5539 = vmul.f32 %v5527, 3.8918573e-05
  %v5540 = vadd.f32 %v5539, 0.001143296
  %v5541 = vmul.f32 %v5527, %v5540
  %v5542 = vadd.f32 %v5541, 0.014752088
  %v5543 = vmul.f32 %v5527, %v5542
  %v5544 = vadd.f32 %v5543, 0.112945676
  %v5545 = vmul.f32 %v5527, %v5544
  %v5546 = vadd.f32 %v5545, 0.4994258
  %v5547 = vmul.f32 %v5527, %v5546
  %v5548 = vadd.f32 %v5547, 1.0
  %v5549 = vrcp.pop %v5548
  %v5550 = vmul.f32 %v5548, %v5549
  %v5551 = vsub.f32 1.0, %v5550
  %v5552 = vmul.f32 %v5549, %v5551
  %v5553 = vadd.f32 %v5549, %v5552
  %vm5554 = vweird.f32 %v5548
  %vm5555 = vweird.f32 %v5549
  %vm5556 = vmor %vm5554, %vm5555
  %v5557 = vsel %vm5556, %v5549, %v5553
  %v5558 = vand.u32 2147483647, %v5548
  %vm5559 = vcmp.eq.f32.partialorder %v5558, 8.507059e+37
  %v5560 = vand.u32 %v5548, 2147483648
  %v5561 = vor.u32 1.1754944e-38, %v5560
  %v5562 = vsel %vm5559, %v5561, %v5557
  %v5563 = vmul.f32 %v5538, %v5562
  %v5564 = vmin.f32 %v5563, 1.0
  %v5565 = vmax.f32 %v5564, -1.0
  %v5566 = vmul.f32 %v5485, %v5485
  %v5567 = vmin.f32 16.0, %v5566
  %v5568 = vmul.f32 %v5567, 2.1237322e-06
  %v5569 = vadd.f32 %v5568, 0.00028619796
  %v5570 = vmul.f32 %v5567, %v5569
  %v5571 = vadd.f32 %v5570, 0.0036580483
  %v5572 = vmul.f32 %v5567, %v5571
  %v5573 = vadd.f32 %v5572, 0.05243302
  %v5574 = vmul.f32 %v5567, %v5573
  %v5575 = vadd.f32 %v5574, 0.18741608
  %v5576 = vmul.f32 %v5567, %v5575
  %v5577 = vadd.f32 %v5576, 1.1283791
  %v5578 = vmul.f32 %v5485, %v5577
  %v5579 = vmul.f32 %v5567, 3.8918573e-05
  %v5580 = vadd.f32 %v5579, 0.001143296
  %v5581 = vmul.f32 %v5567, %v5580
  %v5582 = vadd.f32 %v5581, 0.014752088
  %v5583 = vmul.f32 %v5567, %v5582
  %v5584 = vadd.f32 %v5583, 0.112945676
  %v5585 = vmul.f32 %v5567, %v5584
  %v5586 = vadd.f32 %v5585, 0.4994258
  %v5587 = vmul.f32 %v5567, %v5586
  %v5588 = vadd.f32 %v5587, 1.0
  %v5589 = vrcp.pop %v5588
  %v5590 = vmul.f32 %v5588, %v5589
  %v5591 = vsub.f32 1.0, %v5590
  %v5592 = vmul.f32 %v5589, %v5591
  %v5593 = vadd.f32 %v5589, %v5592
  %vm5594 = vweird.f32 %v5588
  %vm5595 = vweird.f32 %v5589
  %vm5596 = vmor %vm5594, %vm5595
  %v5597 = vsel %vm5596, %v5589, %v5593
  %v5598 = vand.u32 2147483647, %v5588
  %vm5599 = vcmp.eq.f32.partialorder %v5598, 8.507059e+37
  %v5600 = vand.u32 %v5588, 2147483648
  %v5601 = vor.u32 1.1754944e-38, %v5600
  %v5602 = vsel %vm5599, %v5601, %v5597
  %v5603 = vmul.f32 %v5578, %v5602
  %v5604 = vmin.f32 %v5603, 1.0
  %v5605 = vmax.f32 %v5604, -1.0
  %v5606 = vadd.f32 %v5525, 1.0
  %v5607 = vadd.f32 %v5565, 1.0
  %v5608 = vadd.f32 %v5605, 1.0
  %v5609 = vmul.f32 %v5480, %v5606
  %v5610 = vmul.f32 %v5481, %v5607
  %v5611 = vmul.f32 %v5482, %v5608
  %v5613 = vsel %vm2158, %v5287, 0
  %v5615 = vsel %vm2158, %v5288, 0
  %5617 = vmatpush.bf16.msra.mxu0 0
  %5618 = vmatpush.bf16.msra.mxu0 0
  %5619 = vmatpush.bf16.msra.mxu0 0
  %5620 = vmatpush.bf16.msra.mxu0 0
  %5621 = vmatpush.bf16.msra.mxu0 0
  %5622 = vmatpush.bf16.msra.mxu0 0
  %5623 = vmatpush.bf16.msra.mxu0 0
  %5624 = vmatpush.bf16.msra.mxu0 %v5360
  %5625 = vmatmul.bf16.gmra.mxu0 %v5613
  %v5626 = vpop.f32.mrf.mxu0
  %v5627 = vadd.f32 0.0, %v5626
  %v5628 = vpop.f32.mrf.mxu0
  %v5629 = vadd.f32 0.0, %v5628
  %5630 = vmatmul.bf16.gmra.mxu0 %v5615
  %v5631 = vpop.f32.mrf.mxu0
  %v5632 = vadd.f32 0.0, %v5631
  %v5633 = vpop.f32.mrf.mxu0
  %5634 = vdwg.mxu0
  %v5635 = vpack.c.bf16 %v5629, %v5627
  %v5636 = vpack.c.bf16 %v5632, %v5632
  %v5637 = vld [vmem:[%s25] sm:$0xf]
  %v5638 = vld [vmem:[%s25 + $0x4] sm:$0xf]
  %v5639 = vld [vmem:[%s25 + $0x8] sm:$0xf]
  %v5643 = vunpack.c.l.b16 %v5637
  %v5644 = vunpack.c.l.b16 %v5638
  %v5645 = vunpack.c.l.b16 %v5639
  %v5646 = vpack.c.b16 %v5644, %v5643
  %v5647 = vpack.c.b16 %v5645, %v5645
  %v5649 = vsel %vm5290, %v5646, 0
  %v5652 = vsel %vm5290, %v5647, 0
  %v5655 = vsel %vm3229, %v5636, 0
  %5657 = vmatpush.bf16.msra.mxu0 0
  %5658 = vmatpush.bf16.msra.mxu0 0
  %5659 = vmatpush.bf16.msra.mxu0 0
  %5660 = vmatpush.bf16.msra.mxu0 0
  %5661 = vmatpush.bf16.msra.mxu0 0
  %5662 = vmatpush.bf16.msra.mxu0 0
  %5663 = vmatpush.bf16.msra.mxu0 %v5655
  %5664 = vmatpush.bf16.msra.mxu0 %v5635
  %5665 = vmatmul.bf16.gmra.mxu0 %v5649
  %v5666 = vpop.f32.mrf.mxu0
  %v5667 = vadd.f32 0.0, %v5666
  %v5668 = vpop.f32.mrf.mxu0
  %v5669 = vadd.f32 0.0, %v5668
  %5670 = vmatmul.bf16.gmra.mxu0 %v5652
  %v5671 = vpop.f32.mrf.mxu0
  %v5672 = vadd.f32 0.0, %v5671
  %v5673 = vpop.f32.mrf.mxu0
  %5674 = vdwg.mxu0
  %v5675 = vadd.f32 %v5609, %v5667
  %v5676 = vadd.f32 %v5610, %v5669
  %v5677 = vadd.f32 %v5611, %v5672
  %v5678 = vmul.f32 %v5675, 0.5
  %v5679 = vmul.f32 %v5676, 0.5
  %v5680 = vmul.f32 %v5677, 0.5
  %v5681 = vmul.f32 %v5675, 0.70710677
  %v5682 = vmul.f32 %v5676, 0.70710677
  %v5683 = vmul.f32 %v5677, 0.70710677
  %v5684 = vmul.f32 %v5681, %v5681
  %v5685 = vmin.f32 16.0, %v5684
  %v5686 = vmul.f32 %v5685, 2.1237322e-06
  %v5687 = vadd.f32 %v5686, 0.00028619796
  %v5688 = vmul.f32 %v5685, %v5687
  %v5689 = vadd.f32 %v5688, 0.0036580483
  %v5690 = vmul.f32 %v5685, %v5689
  %v5691 = vadd.f32 %v5690, 0.05243302
  %v5692 = vmul.f32 %v5685, %v5691
  %v5693 = vadd.f32 %v5692, 0.18741608
  %v5694 = vmul.f32 %v5685, %v5693
  %v5695 = vadd.f32 %v5694, 1.1283791
  %v5696 = vmul.f32 %v5681, %v5695
  %v5697 = vmul.f32 %v5685, 3.8918573e-05
  %v5698 = vadd.f32 %v5697, 0.001143296
  %v5699 = vmul.f32 %v5685, %v5698
  %v5700 = vadd.f32 %v5699, 0.014752088
  %v5701 = vmul.f32 %v5685, %v5700
  %v5702 = vadd.f32 %v5701, 0.112945676
  %v5703 = vmul.f32 %v5685, %v5702
  %v5704 = vadd.f32 %v5703, 0.4994258
  %v5705 = vmul.f32 %v5685, %v5704
  %v5706 = vadd.f32 %v5705, 1.0
  %v5707 = vrcp.pop %v5706
  %v5708 = vmul.f32 %v5706, %v5707
  %v5709 = vsub.f32 1.0, %v5708
  %v5710 = vmul.f32 %v5707, %v5709
  %v5711 = vadd.f32 %v5707, %v5710
  %vm5712 = vweird.f32 %v5706
  %vm5713 = vweird.f32 %v5707
  %vm5714 = vmor %vm5712, %vm5713
  %v5715 = vsel %vm5714, %v5707, %v5711
  %v5716 = vand.u32 2147483647, %v5706
  %vm5717 = vcmp.eq.f32.partialorder %v5716, 8.507059e+37
  %v5718 = vand.u32 %v5706, 2147483648
  %v5719 = vor.u32 1.1754944e-38, %v5718
  %v5720 = vsel %vm5717, %v5719, %v5715
  %v5721 = vmul.f32 %v5696, %v5720
  %v5722 = vmin.f32 %v5721, 1.0
  %v5723 = vmax.f32 %v5722, -1.0
  %v5724 = vmul.f32 %v5682, %v5682
  %v5725 = vmin.f32 16.0, %v5724
  %v5726 = vmul.f32 %v5725, 2.1237322e-06
  %v5727 = vadd.f32 %v5726, 0.00028619796
  %v5728 = vmul.f32 %v5725, %v5727
  %v5729 = vadd.f32 %v5728, 0.0036580483
  %v5730 = vmul.f32 %v5725, %v5729
  %v5731 = vadd.f32 %v5730, 0.05243302
  %v5732 = vmul.f32 %v5725, %v5731
  %v5733 = vadd.f32 %v5732, 0.18741608
  %v5734 = vmul.f32 %v5725, %v5733
  %v5735 = vadd.f32 %v5734, 1.1283791
  %v5736 = vmul.f32 %v5682, %v5735
  %v5737 = vmul.f32 %v5725, 3.8918573e-05
  %v5738 = vadd.f32 %v5737, 0.001143296
  %v5739 = vmul.f32 %v5725, %v5738
  %v5740 = vadd.f32 %v5739, 0.014752088
  %v5741 = vmul.f32 %v5725, %v5740
  %v5742 = vadd.f32 %v5741, 0.112945676
  %v5743 = vmul.f32 %v5725, %v5742
  %v5744 = vadd.f32 %v5743, 0.4994258
  %v5745 = vmul.f32 %v5725, %v5744
  %v5746 = vadd.f32 %v5745, 1.0
  %v5747 = vrcp.pop %v5746
  %v5748 = vmul.f32 %v5746, %v5747
  %v5749 = vsub.f32 1.0, %v5748
  %v5750 = vmul.f32 %v5747, %v5749
  %v5751 = vadd.f32 %v5747, %v5750
  %vm5752 = vweird.f32 %v5746
  %vm5753 = vweird.f32 %v5747
  %vm5754 = vmor %vm5752, %vm5753
  %v5755 = vsel %vm5754, %v5747, %v5751
  %v5756 = vand.u32 2147483647, %v5746
  %vm5757 = vcmp.eq.f32.partialorder %v5756, 8.507059e+37
  %v5758 = vand.u32 %v5746, 2147483648
  %v5759 = vor.u32 1.1754944e-38, %v5758
  %v5760 = vsel %vm5757, %v5759, %v5755
  %v5761 = vmul.f32 %v5736, %v5760
  %v5762 = vmin.f32 %v5761, 1.0
  %v5763 = vmax.f32 %v5762, -1.0
  %v5764 = vmul.f32 %v5683, %v5683
  %v5765 = vmin.f32 16.0, %v5764
  %v5766 = vmul.f32 %v5765, 2.1237322e-06
  %v5767 = vadd.f32 %v5766, 0.00028619796
  %v5768 = vmul.f32 %v5765, %v5767
  %v5769 = vadd.f32 %v5768, 0.0036580483
  %v5770 = vmul.f32 %v5765, %v5769
  %v5771 = vadd.f32 %v5770, 0.05243302
  %v5772 = vmul.f32 %v5765, %v5771
  %v5773 = vadd.f32 %v5772, 0.18741608
  %v5774 = vmul.f32 %v5765, %v5773
  %v5775 = vadd.f32 %v5774, 1.1283791
  %v5776 = vmul.f32 %v5683, %v5775
  %v5777 = vmul.f32 %v5765, 3.8918573e-05
  %v5778 = vadd.f32 %v5777, 0.001143296
  %v5779 = vmul.f32 %v5765, %v5778
  %v5780 = vadd.f32 %v5779, 0.014752088
  %v5781 = vmul.f32 %v5765, %v5780
  %v5782 = vadd.f32 %v5781, 0.112945676
  %v5783 = vmul.f32 %v5765, %v5782
  %v5784 = vadd.f32 %v5783, 0.4994258
  %v5785 = vmul.f32 %v5765, %v5784
  %v5786 = vadd.f32 %v5785, 1.0
  %v5787 = vrcp.pop %v5786
  %v5788 = vmul.f32 %v5786, %v5787
  %v5789 = vsub.f32 1.0, %v5788
  %v5790 = vmul.f32 %v5787, %v5789
  %v5791 = vadd.f32 %v5787, %v5790
  %vm5792 = vweird.f32 %v5786
  %vm5793 = vweird.f32 %v5787
  %vm5794 = vmor %vm5792, %vm5793
  %v5795 = vsel %vm5794, %v5787, %v5791
  %v5796 = vand.u32 2147483647, %v5786
  %vm5797 = vcmp.eq.f32.partialorder %v5796, 8.507059e+37
  %v5798 = vand.u32 %v5786, 2147483648
  %v5799 = vor.u32 1.1754944e-38, %v5798
  %v5800 = vsel %vm5797, %v5799, %v5795
  %v5801 = vmul.f32 %v5776, %v5800
  %v5802 = vmin.f32 %v5801, 1.0
  %v5803 = vmax.f32 %v5802, -1.0
  %v5804 = vadd.f32 %v5723, 1.0
  %v5805 = vadd.f32 %v5763, 1.0
  %v5806 = vadd.f32 %v5803, 1.0
  %v5807 = vmul.f32 %v5678, %v5804
  %v5808 = vmul.f32 %v5679, %v5805
  %v5809 = vmul.f32 %v5680, %v5806
  %5810 = vst.msk [vmem:[%s27] sm:$0xff] %vm2158, %v5807
  %5811 = vst.msk [vmem:[%s27 + $0x8] sm:$0xff] %vm2158, %v5808
  %5812 = vst.msk [vmem:[%s27 + $0x10] sm:$0xff] %vm2158, %v5809
  // Predicated region
  $region110: #{resnet_forward.3} parent=0 // pred_check
    _
  $region111: #{resnet_forward.3} parent=0 // pred_check_branch
    %5814 = sbr.rel (0) target = $region113
  $region112: #{resnet_forward.3} parent=0 // pred_region
    _
  $region113: #{resnet_forward.3} parent=0 // pred_fallthru
    _
  // Predicated region
  $region114: #{resnet_forward.3} parent=0 // pred_check
    _
  $region115: #{resnet_forward.3} parent=0 // pred_check_branch
    %5816 = sbr.rel (0) target = $region117
  $region116: #{resnet_forward.3} parent=0 // pred_region
    _
  $region117: #{resnet_forward.3} parent=0 // pred_fallthru
    _

</llo_original>
